<compile_context>
chip_gen: v6e
topology: v6e:2x2x1
jax: 0.10.0
libtpu: 0.0.40
codegen_flags: <defaults>
</compile_context>

<pallas_src>
import functools

import jax
import jax.numpy as jnp
from jax.experimental import pallas as pl
from jax.experimental.pallas import tpu as pltpu


# ------------------------------ fused kernel --------------------------------

def _block35_kernel(x_ref, ml_ref, mr_ref,
                    ws_ref, os_ref,
                    wg1_ref, ob1_ref, wg21_ref, ob21_ref, wg22_ref, ob22_ref,
                    wf_ref, bias_ref,
                    o_ref, grp_ref, cat_ref,
                    *, W, HW, PW, B_TILE):
    """One grid step = B_TILE images; all intermediates stay in VMEM.

    x_ref   : (M, 320) f32, M = B_TILE*HW  (images flattened to rows)
    grp_ref : (HW + 2*PW, 192) bf16.  The three kh taps of a 3x3 conv live at
              lane offsets 0/64/128 as row-shifted copies of the conv input,
              so each dw tap is ONE contiguous (HW, 192) window -> K=192.
    cat_ref : (M, 128) bf16 holding [x0 | x1 | x2] for the fused final 1x1.
    """
    # ---- fused 1x1 stems: one (M,320)x(320,160) bf16 matmul (t1 | t2 | x0) --
    xb = x_ref[...].astype(jnp.bfloat16)                         # (M, 320)
    stem = jnp.dot(xb, ws_ref[...], preferred_element_type=jnp.float32)
    stem = jnp.maximum(stem + os_ref[...], 0.0).astype(jnp.bfloat16)  # (M,160)

    cat_ref[:, 0:32] = stem[:, 128:160]                          # branch0 -> x0

    # Hoisted edge-mask broadcasts (values 0/1, exact in bf16).
    mask_l = jnp.broadcast_to(ml_ref[...], (HW, 192))            # zero where w == 0
    mask_r = jnp.broadcast_to(mr_ref[...], (HW, 192))            # zero where w == W-1
    zhalo = jnp.zeros((W + 1, 192), jnp.bfloat16)

    def conv3x3(tb, wg_ref, off_ref):
        """3x3 / stride 1 / pad 1 conv of one image; tb: (HW, 64) bf16."""
        # Re-zero ONLY the top/bottom halo rows, every call (the previous
        # call's tap stores dirty them).  Never gate this on program_id():
        # with a "parallel" grid each TensorCore owns its own scratch.
        grp_ref[PW - 1:PW + W, :] = zhalo
        grp_ref[PW + HW - W:PW + HW + 1, :] = zhalo
        # Row-shifted copies: lanes 0:64 = kh=0 (dh=-1), 64:128 = kh=1,
        # 128:192 = kh=2.  Then the (dh, dw) tap of output row r lives at
        # scratch row PW + r + dw for all three kh groups simultaneously.
        grp_ref[PW + W:PW + W + HW, 0:64] = tb
        grp_ref[PW:PW + HW, 64:128] = tb
        grp_ref[PW - W:PW - W + HW, 128:192] = tb
        # Three K=192 matmuls (dw = -1, 0, +1).
        acc = jnp.dot(grp_ref[PW - 1:PW - 1 + HW, :] * mask_l, wg_ref[0],
                      preferred_element_type=jnp.float32)
        acc = acc + jnp.dot(grp_ref[PW:PW + HW, :], wg_ref[1],
                            preferred_element_type=jnp.float32)
        acc = acc + jnp.dot(grp_ref[PW + 1:PW + 1 + HW, :] * mask_r, wg_ref[2],
                            preferred_element_type=jnp.float32)
        return jnp.maximum(acc + off_ref[...], 0.0).astype(jnp.bfloat16)

    # ---- 3x3 branches, one image at a time (they share grp_ref) ----
    for b in range(B_TILE):
        r0 = b * HW
        t1 = stem[r0:r0 + HW, 0:64]                              # branch1 stem
        t2 = stem[r0:r0 + HW, 64:128]                            # branch2 stem
        x1 = conv3x3(t1, wg1_ref, ob1_ref)                       # (HW, 32)
        cat_ref[r0:r0 + HW, 32:64] = x1
        t2 = conv3x3(t2, wg21_ref, ob21_ref)                     # (HW, 64)
        x2 = conv3x3(t2, wg22_ref, ob22_ref)                     # (HW, 64)
        cat_ref[r0:r0 + HW, 64:128] = x2

    # ---- concat + final 1x1 (K=128) + bias + residual + ReLU ----
    # `scale` is folded into wf/bias at prep time.  Column-tiled epilogue:
    # the residual is re-read per 128-lane slice so no (M,320) f32 stays live.
    for c0 in range(0, 320, 128):
        cw = min(128, 320 - c0)
        acc = jnp.dot(cat_ref[...], wf_ref[:, c0:c0 + cw],
                      preferred_element_type=jnp.float32)
        out = acc + bias_ref[:, c0:c0 + cw] + x_ref[:, c0:c0 + cw]
        o_ref[:, c0:c0 + cw] = jnp.maximum(out, 0.0)


# ---------------------- parameter init & BN folding -------------------------

def init_basic_conv(key, cin, cout, ksize):
    kw_, kg, kb, km, kv = jax.random.split(key, 5)
    w = 0.05 * jax.random.normal(kw_, (cout, cin, ksize, ksize), jnp.float32)
    gamma = 1.0 + 0.1 * jax.random.normal(kg, (cout,), jnp.float32)
    beta = 0.1 * jax.random.normal(kb, (cout,), jnp.float32)
    mean = 0.1 * jax.random.normal(km, (cout,), jnp.float32)
    var = jnp.abs(jax.random.normal(kv, (cout,), jnp.float32)) + 0.5
    return dict(w=w, gamma=gamma, beta=beta, mean=mean, var=var)


def init_block35(key):
    ks = jax.random.split(key, 8)
    return {
        "b0":   init_basic_conv(ks[0], 320, 32, 1),
        "b1_0": init_basic_conv(ks[1], 320, 32, 1),
        "b1_1": init_basic_conv(ks[2], 32, 32, 3),
        "b2_0": init_basic_conv(ks[3], 320, 32, 1),
        "b2_1": init_basic_conv(ks[4], 32, 48, 3),
        "b2_2": init_basic_conv(ks[5], 48, 64, 3),
        "conv2d_w": 0.05 * jax.random.normal(ks[6], (320, 128, 1, 1), jnp.float32),
        "conv2d_b": 0.05 * jax.random.normal(ks[7], (320,), jnp.float32),
    }


def _fold_bn(p):
    # TODO(synk): BatchNorm replicated in eval mode (folded running stats);
    # training-mode batch statistics are not reproduced.
    eps = 1e-3
    s = p["gamma"] / jnp.sqrt(p["var"] + eps)
    off = p["beta"] - p["mean"] * s
    w = p["w"] * s[:, None, None, None]              # (cout, cin, kh, kw)
    return w, off


def _prep_1x1(p, cout_pad):
    w, off = _fold_bn(p)                             # (cout, cin, 1, 1)
    cout, cin = w.shape[0], w.shape[1]
    w2 = w.reshape(cout, cin).T                      # (cin, cout)
    if cout_pad > cout:
        w2 = jnp.pad(w2, ((0, 0), (0, cout_pad - cout)))
        off = jnp.pad(off, (0, cout_pad - cout))
    return w2, off


def _prep_3x3(p, cin_pad, cout_pad):
    w, off = _fold_bn(p)                             # (cout, cin, 3, 3)
    cout, cin = w.shape[0], w.shape[1]
    w = jnp.pad(w, ((0, cout_pad - cout), (0, cin_pad - cin), (0, 0), (0, 0)))
    # (kw, kh, cin, cout) -> (3, 3*cin_pad, cout): row = kh*cin_pad + c,
    # matching the grouped-operand lane layout (kh blocks of 64 lanes).
    wg = jnp.transpose(w, (3, 2, 1, 0)).reshape(3, 3 * cin_pad, cout_pad)
    off = jnp.pad(off, (0, cout_pad - cout))
    return wg.astype(jnp.bfloat16), off.reshape(1, -1).astype(jnp.float32)


def _pick_btile(n, hw):
    """Largest divisor of n keeping per-step block modest and tiling legal."""
    best = 1
    for d in range(1, n + 1):
        if n % d:
            continue
        m = d * hw
        if m * 320 * 4 > (2 << 20) or m > 2048:
            continue
        if (m % 8) and (n // d != 1):
            continue
        best = d
    return best


# ------------------------------ forward pass --------------------------------

def block35_forward(params, x_nchw, scale=1.0):
    N, C, H, W = x_nchw.shape
    assert C == 320, "Block35 requires 320 input channels"
    HW = H * W
    PW = ((W + 1 + 7) // 8) * 8                      # halo rows above/below slab
    B_TILE = _pick_btile(N, HW)
    M = B_TILE * HW

    # NCHW -> rows of channels: (N*HW, 320); channels land on the lane axis.
    x = jnp.transpose(x_nchw, (0, 2, 3, 1)).reshape(N * HW, 320)

    # Fused stem weight: [branch1_0 (pad 64) | branch2_0 (pad 64) | branch0].
    w10, o10 = _prep_1x1(params["b1_0"], 64)
    w20, o20 = _prep_1x1(params["b2_0"], 64)
    w0, o0 = _prep_1x1(params["b0"], 32)
    w_stem = jnp.concatenate([w10, w20, w0], axis=1).astype(jnp.bfloat16)  # (320,160)
    o_stem = jnp.concatenate([o10, o20, o0]).reshape(1, -1).astype(jnp.float32)

    # Grouped 3x3 weights: (kw-tap, 3*64 kh-major/cin-minor, cout).
    wg11, ob11 = _prep_3x3(params["b1_1"], 64, 32)
    wg21, ob21 = _prep_3x3(params["b2_1"], 64, 64)
    wg22, ob22 = _prep_3x3(params["b2_2"], 64, 64)

    # Final 1x1: fold `scale` into weight and bias at prep time.
    wf = (params["conv2d_w"].reshape(320, 128).T * scale).astype(jnp.bfloat16)
    bias = (params["conv2d_b"] * scale).reshape(1, -1).astype(jnp.float32)

    # Edge masks for the flattened-HW shifted windows (dw = +-1 wraps rows).
    wcol = jnp.arange(HW, dtype=jnp.int32) % W
    mask_l = (wcol != 0).astype(jnp.bfloat16).reshape(HW, 1)
    mask_r = (wcol != W - 1).astype(jnp.bfloat16).reshape(HW, 1)

    operands = (x, mask_l, mask_r, w_stem, o_stem,
                wg11, ob11, wg21, ob21, wg22, ob22, wf, bias)

    def _full(shape):
        nd = len(shape)
        return pl.BlockSpec(shape, lambda n, _nd=nd: (0,) * _nd)

    in_specs = [pl.BlockSpec((M, 320), lambda n: (n, 0))]
    in_specs += [_full(op.shape) for op in operands[1:]]

    out = pl.pallas_call(
        functools.partial(_block35_kernel, W=W, HW=HW, PW=PW, B_TILE=B_TILE),
        out_shape=jax.ShapeDtypeStruct((N * HW, 320), jnp.float32),
        grid=(N // B_TILE,),
        in_specs=in_specs,
        out_specs=pl.BlockSpec((M, 320), lambda n: (n, 0)),
        scratch_shapes=[pltpu.VMEM((HW + 2 * PW, 192), jnp.bfloat16),
                        pltpu.VMEM((M, 128), jnp.bfloat16)],
        compiler_params=pltpu.CompilerParams(
            dimension_semantics=("parallel",),
            vmem_limit_bytes=32 * 1024 * 1024),
    )(*operands)

    return jnp.transpose(out.reshape(N, H, W, 320), (0, 3, 1, 2))   # -> NCHW


# ------------------------------ reference (f32) ------------------------------

def _basic_conv_ref(x, p, padding):
    y = jax.lax.conv_general_dilated(
        x, p["w"], window_strides=(1, 1),
        padding=[(padding, padding), (padding, padding)],
        dimension_numbers=("NCHW", "OIHW", "NCHW"))
    eps = 1e-3
    s = (p["gamma"] / jnp.sqrt(p["var"] + eps))[None, :, None, None]
    y = (y - p["mean"][None, :, None, None]) * s + p["beta"][None, :, None, None]
    return jnp.maximum(y, 0.0)


def block35_reference(params, x, scale):
    x0 = _basic_conv_ref(x, params["b0"], 0)
    x1 = _basic_conv_ref(x, params["b1_0"], 0)
    x1 = _basic_conv_ref(x1, params["b1_1"], 1)
    x2 = _basic_conv_ref(x, params["b2_0"], 0)
    x2 = _basic_conv_ref(x2, params["b2_1"], 1)
    x2 = _basic_conv_ref(x2, params["b2_2"], 1)
    cat = jnp.concatenate([x0, x1, x2], axis=1)
    out = jax.lax.conv_general_dilated(
        cat, params["conv2d_w"], window_strides=(1, 1),
        padding=[(0, 0), (0, 0)],
        dimension_numbers=("NCHW", "OIHW", "NCHW"))
    out = out + params["conv2d_b"][None, :, None, None]
    out = out * scale + x
    return jnp.maximum(out, 0.0)


if __name__ == "__main__":
    key = jax.random.PRNGKey(0)
    k_params, k_x = jax.random.split(key)
    params = init_block35(k_params)
    # Block35 requires 320 input channels; keep batch/spatial small.
    x = jax.random.normal(k_x, (2, 320, 8, 8), jnp.float32)

    fwd = jax.jit(block35_forward, static_argnames=("scale",))
    out = jax.block_until_ready(fwd(params, x, scale=0.17))
    assert out.shape == (2, 320, 8, 8)
    assert bool(jnp.all(jnp.isfinite(out)))

    ref = block35_reference(params, x, 0.17)
    err = float(jnp.max(jnp.abs(out - ref)))
    assert err < 1e-1, f"max abs error vs reference: {err}"
    print("KERNEL_OK")
</pallas_src>

<mosaic_0001>
module attributes {stable_mosaic.version = 11 : i64} {
  func.func @_block35_kernel(%arg0: i32, %arg1: memref<128x320xf32, #tpu.memory_space<vmem>>, %arg2: memref<64x1xbf16, #tpu.memory_space<vmem>>, %arg3: memref<64x1xbf16, #tpu.memory_space<vmem>>, %arg4: memref<320x160xbf16, #tpu.memory_space<vmem>>, %arg5: memref<1x160xf32, #tpu.memory_space<vmem>>, %arg6: memref<3x192x32xbf16, #tpu.memory_space<vmem>>, %arg7: memref<1x32xf32, #tpu.memory_space<vmem>>, %arg8: memref<3x192x64xbf16, #tpu.memory_space<vmem>>, %arg9: memref<1x64xf32, #tpu.memory_space<vmem>>, %arg10: memref<3x192x64xbf16, #tpu.memory_space<vmem>>, %arg11: memref<1x64xf32, #tpu.memory_space<vmem>>, %arg12: memref<128x320xbf16, #tpu.memory_space<vmem>>, %arg13: memref<1x320xf32, #tpu.memory_space<vmem>>, %arg14: memref<128x320xf32, #tpu.memory_space<vmem>>, %arg15: memref<96x192xbf16, #tpu.memory_space<vmem>>, %arg16: memref<128x128xbf16, #tpu.memory_space<vmem>>) attributes {dimension_semantics = [#tpu.dimension_semantics<parallel>], iteration_bounds = array<i64: 1>, scalar_prefetch = 0 : i64, scratch_operands = 2 : i64, tpu.core_type = #tpu.core_type<tc>, window_params = [{transform_indices = @transform_0, window_bounds = array<i64: 128, 320>}, {pipeline_mode = #tpu.pipeline_mode<synchronous>, transform_indices = @transform_1, window_bounds = array<i64: 64, 1>}, {pipeline_mode = #tpu.pipeline_mode<synchronous>, transform_indices = @transform_2, window_bounds = array<i64: 64, 1>}, {pipeline_mode = #tpu.pipeline_mode<synchronous>, transform_indices = @transform_3, window_bounds = array<i64: 320, 160>}, {pipeline_mode = #tpu.pipeline_mode<synchronous>, transform_indices = @transform_4, window_bounds = array<i64: 1, 160>}, {pipeline_mode = #tpu.pipeline_mode<synchronous>, transform_indices = @transform_5, window_bounds = array<i64: 3, 192, 32>}, {pipeline_mode = #tpu.pipeline_mode<synchronous>, transform_indices = @transform_6, window_bounds = array<i64: 1, 32>}, {pipeline_mode = #tpu.pipeline_mode<synchronous>, transform_indices = @transform_7, window_bounds = array<i64: 3, 192, 64>}, {pipeline_mode = #tpu.pipeline_mode<synchronous>, transform_indices = @transform_8, window_bounds = array<i64: 1, 64>}, {pipeline_mode = #tpu.pipeline_mode<synchronous>, transform_indices = @transform_9, window_bounds = array<i64: 3, 192, 64>}, {pipeline_mode = #tpu.pipeline_mode<synchronous>, transform_indices = @transform_10, window_bounds = array<i64: 1, 64>}, {pipeline_mode = #tpu.pipeline_mode<synchronous>, transform_indices = @transform_11, window_bounds = array<i64: 128, 320>}, {pipeline_mode = #tpu.pipeline_mode<synchronous>, transform_indices = @transform_12, window_bounds = array<i64: 1, 320>}, {transform_indices = @transform_13, window_bounds = array<i64: 128, 320>}]} {
    %c0 = arith.constant 0 : index
    %c0_0 = arith.constant 0 : index
    %0 = vector.load %arg1[%c0, %c0_0] : memref<128x320xf32, #tpu.memory_space<vmem>>, vector<128x320xf32>
    %1 = arith.truncf %0 : vector<128x320xf32> to vector<128x320xbf16>
    %c0_1 = arith.constant 0 : index
    %c0_2 = arith.constant 0 : index
    %2 = vector.load %arg4[%c0_1, %c0_2] : memref<320x160xbf16, #tpu.memory_space<vmem>>, vector<320x160xbf16>
    %cst = arith.constant dense<0.000000e+00> : vector<128x160xf32>
    %3 = tpu.matmul %1, %2, %cst {dimension_numbers = #tpu.dot_dimension_numbers<[1], [0], [0], [1], [0, 0, 1, 1], [], []>} : vector<128x320xbf16>, vector<320x160xbf16>, vector<128x160xf32> -> vector<128x160xf32>
    %c0_3 = arith.constant 0 : index
    %c0_4 = arith.constant 0 : index
    %4 = vector.load %arg5[%c0_3, %c0_4] : memref<1x160xf32, #tpu.memory_space<vmem>>, vector<1x160xf32>
    %5 = vector.broadcast %4 : vector<1x160xf32> to vector<128x160xf32>
    %6 = arith.addf %3, %5 : vector<128x160xf32>
    %cst_5 = arith.constant 0.000000e+00 : f32
    %7 = vector.broadcast %cst_5 : f32 to vector<128x160xf32>
    %8 = arith.maximumf %6, %7 : vector<128x160xf32>
    %9 = arith.truncf %8 : vector<128x160xf32> to vector<128x160xbf16>
    %10 = vector.extract_strided_slice %9 {offsets = [0, 128], sizes = [128, 32], strides = [1, 1]} : vector<128x160xbf16> to vector<128x32xbf16>
    %c0_6 = arith.constant 0 : index
    %c0_7 = arith.constant 0 : index
    %11 = vector.load %arg16[%c0_6, %c0_7] : memref<128x128xbf16, #tpu.memory_space<vmem>>, vector<128x32xbf16>
    tpu.vector_store %arg16[%c0_6, %c0_7], %10 {strides = array<i32>} : memref<128x128xbf16, #tpu.memory_space<vmem>>, vector<128x32xbf16>,
    %c0_8 = arith.constant 0 : index
    %c0_9 = arith.constant 0 : index
    %12 = vector.load %arg2[%c0_8, %c0_9] : memref<64x1xbf16, #tpu.memory_space<vmem>>, vector<64x1xbf16>
    %13 = vector.shape_cast %12 : vector<64x1xbf16> to vector<64x1xbf16>
    %14 = vector.broadcast %13 : vector<64x1xbf16> to vector<64x192xbf16>
    %c0_10 = arith.constant 0 : index
    %c0_11 = arith.constant 0 : index
    %15 = vector.load %arg3[%c0_10, %c0_11] : memref<64x1xbf16, #tpu.memory_space<vmem>>, vector<64x1xbf16>
    %16 = vector.shape_cast %15 : vector<64x1xbf16> to vector<64x1xbf16>
    %17 = vector.broadcast %16 : vector<64x1xbf16> to vector<64x192xbf16>
    %cst_12 = arith.constant 0.000000e+00 : bf16
    %18 = vector.broadcast %cst_12 : bf16 to vector<9x192xbf16>
    %19 = vector.extract_strided_slice %9 {offsets = [0, 0], sizes = [64, 64], strides = [1, 1]} : vector<128x160xbf16> to vector<64x64xbf16>
    %20 = vector.extract_strided_slice %9 {offsets = [0, 64], sizes = [64, 64], strides = [1, 1]} : vector<128x160xbf16> to vector<64x64xbf16>
    %c15 = arith.constant 15 : index
    %c0_13 = arith.constant 0 : index
    %21 = vector.load %arg15[%c15, %c0_13] : memref<96x192xbf16, #tpu.memory_space<vmem>>, vector<9x192xbf16>
    tpu.vector_store %arg15[%c15, %c0_13], %18 {strides = array<i32>} : memref<96x192xbf16, #tpu.memory_space<vmem>>, vector<9x192xbf16>,
    %c72 = arith.constant 72 : index
    %c0_14 = arith.constant 0 : index
    %22 = vector.load %arg15[%c72, %c0_14] : memref<96x192xbf16, #tpu.memory_space<vmem>>, vector<9x192xbf16>
    tpu.vector_store %arg15[%c72, %c0_14], %18 {strides = array<i32>} : memref<96x192xbf16, #tpu.memory_space<vmem>>, vector<9x192xbf16>,
    %c24 = arith.constant 24 : index
    %c0_15 = arith.constant 0 : index
    %23 = vector.load %arg15[%c24, %c0_15] : memref<96x192xbf16, #tpu.memory_space<vmem>>, vector<64x64xbf16>
    tpu.vector_store %arg15[%c24, %c0_15], %19 {strides = array<i32>} : memref<96x192xbf16, #tpu.memory_space<vmem>>, vector<64x64xbf16>,
    %c16 = arith.constant 16 : index
    %c64 = arith.constant 64 : index
    %24 = vector.load %arg15[%c16, %c64] : memref<96x192xbf16, #tpu.memory_space<vmem>>, vector<64x64xbf16>
    tpu.vector_store %arg15[%c16, %c64], %19 {strides = array<i32>} : memref<96x192xbf16, #tpu.memory_space<vmem>>, vector<64x64xbf16>,
    %c8 = arith.constant 8 : index
    %c128 = arith.constant 128 : index
    %25 = vector.load %arg15[%c8, %c128] : memref<96x192xbf16, #tpu.memory_space<vmem>>, vector<64x64xbf16>
    tpu.vector_store %arg15[%c8, %c128], %19 {strides = array<i32>} : memref<96x192xbf16, #tpu.memory_space<vmem>>, vector<64x64xbf16>,
    %c15_16 = arith.constant 15 : index
    %c0_17 = arith.constant 0 : index
    %26 = vector.load %arg15[%c15_16, %c0_17] : memref<96x192xbf16, #tpu.memory_space<vmem>>, vector<64x192xbf16>
    %27 = arith.mulf %26, %14 : vector<64x192xbf16>
    %c0_18 = arith.constant 0 : index
    %c0_19 = arith.constant 0 : index
    %c0_20 = arith.constant 0 : index
    %28 = vector.load %arg6[%c0_18, %c0_19, %c0_20] : memref<3x192x32xbf16, #tpu.memory_space<vmem>>, vector<1x192x32xbf16>
    %29 = vector.shape_cast %28 : vector<1x192x32xbf16> to vector<192x32xbf16>
    %cst_21 = arith.constant dense<0.000000e+00> : vector<64x32xf32>
    %30 = tpu.matmul %27, %29, %cst_21 {dimension_numbers = #tpu.dot_dimension_numbers<[1], [0], [0], [1], [0, 0, 1, 1], [], []>} : vector<64x192xbf16>, vector<192x32xbf16>, vector<64x32xf32> -> vector<64x32xf32>
    %c16_22 = arith.constant 16 : index
    %c0_23 = arith.constant 0 : index
    %31 = vector.load %arg15[%c16_22, %c0_23] : memref<96x192xbf16, #tpu.memory_space<vmem>>, vector<64x192xbf16>
    %c1 = arith.constant 1 : index
    %c0_24 = arith.constant 0 : index
    %c0_25 = arith.constant 0 : index
    %32 = vector.load %arg6[%c1, %c0_24, %c0_25] : memref<3x192x32xbf16, #tpu.memory_space<vmem>>, vector<1x192x32xbf16>
    %33 = vector.shape_cast %32 : vector<1x192x32xbf16> to vector<192x32xbf16>
    %cst_26 = arith.constant dense<0.000000e+00> : vector<64x32xf32>
    %34 = tpu.matmul %31, %33, %cst_26 {dimension_numbers = #tpu.dot_dimension_numbers<[1], [0], [0], [1], [0, 0, 1, 1], [], []>} : vector<64x192xbf16>, vector<192x32xbf16>, vector<64x32xf32> -> vector<64x32xf32>
    %35 = arith.addf %30, %34 : vector<64x32xf32>
    %c17 = arith.constant 17 : index
    %c0_27 = arith.constant 0 : index
    %36 = vector.load %arg15[%c17, %c0_27] : memref<96x192xbf16, #tpu.memory_space<vmem>>, vector<64x192xbf16>
    %37 = arith.mulf %36, %17 : vector<64x192xbf16>
    %c2 = arith.constant 2 : index
    %c0_28 = arith.constant 0 : index
    %c0_29 = arith.constant 0 : index
    %38 = vector.load %arg6[%c2, %c0_28, %c0_29] : memref<3x192x32xbf16, #tpu.memory_space<vmem>>, vector<1x192x32xbf16>
    %39 = vector.shape_cast %38 : vector<1x192x32xbf16> to vector<192x32xbf16>
    %cst_30 = arith.constant dense<0.000000e+00> : vector<64x32xf32>
    %40 = tpu.matmul %37, %39, %cst_30 {dimension_numbers = #tpu.dot_dimension_numbers<[1], [0], [0], [1], [0, 0, 1, 1], [], []>} : vector<64x192xbf16>, vector<192x32xbf16>, vector<64x32xf32> -> vector<64x32xf32>
    %41 = arith.addf %35, %40 : vector<64x32xf32>
    %c0_31 = arith.constant 0 : index
    %c0_32 = arith.constant 0 : index
    %42 = vector.load %arg7[%c0_31, %c0_32] : memref<1x32xf32, #tpu.memory_space<vmem>>, vector<1x32xf32>
    %43 = vector.broadcast %42 : vector<1x32xf32> to vector<64x32xf32>
    %44 = arith.addf %41, %43 : vector<64x32xf32>
    %cst_33 = arith.constant 0.000000e+00 : f32
    %45 = vector.broadcast %cst_33 : f32 to vector<64x32xf32>
    %46 = arith.maximumf %44, %45 : vector<64x32xf32>
    %47 = arith.truncf %46 : vector<64x32xf32> to vector<64x32xbf16>
    %c0_34 = arith.constant 0 : index
    %c32 = arith.constant 32 : index
    %48 = vector.load %arg16[%c0_34, %c32] : memref<128x128xbf16, #tpu.memory_space<vmem>>, vector<64x32xbf16>
    tpu.vector_store %arg16[%c0_34, %c32], %47 {strides = array<i32>} : memref<128x128xbf16, #tpu.memory_space<vmem>>, vector<64x32xbf16>,
    %c15_35 = arith.constant 15 : index
    %c0_36 = arith.constant 0 : index
    %49 = vector.load %arg15[%c15_35, %c0_36] : memref<96x192xbf16, #tpu.memory_space<vmem>>, vector<9x192xbf16>
    tpu.vector_store %arg15[%c15_35, %c0_36], %18 {strides = array<i32>} : memref<96x192xbf16, #tpu.memory_space<vmem>>, vector<9x192xbf16>,
    %c72_37 = arith.constant 72 : index
    %c0_38 = arith.constant 0 : index
    %50 = vector.load %arg15[%c72_37, %c0_38] : memref<96x192xbf16, #tpu.memory_space<vmem>>, vector<9x192xbf16>
    tpu.vector_store %arg15[%c72_37, %c0_38], %18 {strides = array<i32>} : memref<96x192xbf16, #tpu.memory_space<vmem>>, vector<9x192xbf16>,
    %c24_39 = arith.constant 24 : index
    %c0_40 = arith.constant 0 : index
    %51 = vector.load %arg15[%c24_39, %c0_40] : memref<96x192xbf16, #tpu.memory_space<vmem>>, vector<64x64xbf16>
    tpu.vector_store %arg15[%c24_39, %c0_40], %20 {strides = array<i32>} : memref<96x192xbf16, #tpu.memory_space<vmem>>, vector<64x64xbf16>,
    %c16_41 = arith.constant 16 : index
    %c64_42 = arith.constant 64 : index
    %52 = vector.load %arg15[%c16_41, %c64_42] : memref<96x192xbf16, #tpu.memory_space<vmem>>, vector<64x64xbf16>
    tpu.vector_store %arg15[%c16_41, %c64_42], %20 {strides = array<i32>} : memref<96x192xbf16, #tpu.memory_space<vmem>>, vector<64x64xbf16>,
    %c8_43 = arith.constant 8 : index
    %c128_44 = arith.constant 128 : index
    %53 = vector.load %arg15[%c8_43, %c128_44] : memref<96x192xbf16, #tpu.memory_space<vmem>>, vector<64x64xbf16>
    tpu.vector_store %arg15[%c8_43, %c128_44], %20 {strides = array<i32>} : memref<96x192xbf16, #tpu.memory_space<vmem>>, vector<64x64xbf16>,
    %c15_45 = arith.constant 15 : index
    %c0_46 = arith.constant 0 : index
    %54 = vector.load %arg15[%c15_45, %c0_46] : memref<96x192xbf16, #tpu.memory_space<vmem>>, vector<64x192xbf16>
    %55 = arith.mulf %54, %14 : vector<64x192xbf16>
    %c0_47 = arith.constant 0 : index
    %c0_48 = arith.constant 0 : index
    %c0_49 = arith.constant 0 : index
    %56 = vector.load %arg8[%c0_47, %c0_48, %c0_49] : memref<3x192x64xbf16, #tpu.memory_space<vmem>>, vector<1x192x64xbf16>
    %57 = vector.shape_cast %56 : vector<1x192x64xbf16> to vector<192x64xbf16>
    %cst_50 = arith.constant dense<0.000000e+00> : vector<64x64xf32>
    %58 = tpu.matmul %55, %57, %cst_50 {dimension_numbers = #tpu.dot_dimension_numbers<[1], [0], [0], [1], [0, 0, 1, 1], [], []>} : vector<64x192xbf16>, vector<192x64xbf16>, vector<64x64xf32> -> vector<64x64xf32>
    %c16_51 = arith.constant 16 : index
    %c0_52 = arith.constant 0 : index
    %59 = vector.load %arg15[%c16_51, %c0_52] : memref<96x192xbf16, #tpu.memory_space<vmem>>, vector<64x192xbf16>
    %c1_53 = arith.constant 1 : index
    %c0_54 = arith.constant 0 : index
    %c0_55 = arith.constant 0 : index
    %60 = vector.load %arg8[%c1_53, %c0_54, %c0_55] : memref<3x192x64xbf16, #tpu.memory_space<vmem>>, vector<1x192x64xbf16>
    %61 = vector.shape_cast %60 : vector<1x192x64xbf16> to vector<192x64xbf16>
    %cst_56 = arith.constant dense<0.000000e+00> : vector<64x64xf32>
    %62 = tpu.matmul %59, %61, %cst_56 {dimension_numbers = #tpu.dot_dimension_numbers<[1], [0], [0], [1], [0, 0, 1, 1], [], []>} : vector<64x192xbf16>, vector<192x64xbf16>, vector<64x64xf32> -> vector<64x64xf32>
    %63 = arith.addf %58, %62 : vector<64x64xf32>
    %c17_57 = arith.constant 17 : index
    %c0_58 = arith.constant 0 : index
    %64 = vector.load %arg15[%c17_57, %c0_58] : memref<96x192xbf16, #tpu.memory_space<vmem>>, vector<64x192xbf16>
    %65 = arith.mulf %64, %17 : vector<64x192xbf16>
    %c2_59 = arith.constant 2 : index
    %c0_60 = arith.constant 0 : index
    %c0_61 = arith.constant 0 : index
    %66 = vector.load %arg8[%c2_59, %c0_60, %c0_61] : memref<3x192x64xbf16, #tpu.memory_space<vmem>>, vector<1x192x64xbf16>
    %67 = vector.shape_cast %66 : vector<1x192x64xbf16> to vector<192x64xbf16>
    %cst_62 = arith.constant dense<0.000000e+00> : vector<64x64xf32>
    %68 = tpu.matmul %65, %67, %cst_62 {dimension_numbers = #tpu.dot_dimension_numbers<[1], [0], [0], [1], [0, 0, 1, 1], [], []>} : vector<64x192xbf16>, vector<192x64xbf16>, vector<64x64xf32> -> vector<64x64xf32>
    %69 = arith.addf %63, %68 : vector<64x64xf32>
    %c0_63 = arith.constant 0 : index
    %c0_64 = arith.constant 0 : index
    %70 = vector.load %arg9[%c0_63, %c0_64] : memref<1x64xf32, #tpu.memory_space<vmem>>, vector<1x64xf32>
    %71 = vector.broadcast %70 : vector<1x64xf32> to vector<64x64xf32>
    %72 = arith.addf %69, %71 : vector<64x64xf32>
    %cst_65 = arith.constant 0.000000e+00 : f32
    %73 = vector.broadcast %cst_65 : f32 to vector<64x64xf32>
    %74 = arith.maximumf %72, %73 : vector<64x64xf32>
    %75 = arith.truncf %74 : vector<64x64xf32> to vector<64x64xbf16>
    %c15_66 = arith.constant 15 : index
    %c0_67 = arith.constant 0 : index
    %76 = vector.load %arg15[%c15_66, %c0_67] : memref<96x192xbf16, #tpu.memory_space<vmem>>, vector<9x192xbf16>
    tpu.vector_store %arg15[%c15_66, %c0_67], %18 {strides = array<i32>} : memref<96x192xbf16, #tpu.memory_space<vmem>>, vector<9x192xbf16>,
    %c72_68 = arith.constant 72 : index
    %c0_69 = arith.constant 0 : index
    %77 = vector.load %arg15[%c72_68, %c0_69] : memref<96x192xbf16, #tpu.memory_space<vmem>>, vector<9x192xbf16>
    tpu.vector_store %arg15[%c72_68, %c0_69], %18 {strides = array<i32>} : memref<96x192xbf16, #tpu.memory_space<vmem>>, vector<9x192xbf16>,
    %c24_70 = arith.constant 24 : index
    %c0_71 = arith.constant 0 : index
    %78 = vector.load %arg15[%c24_70, %c0_71] : memref<96x192xbf16, #tpu.memory_space<vmem>>, vector<64x64xbf16>
    tpu.vector_store %arg15[%c24_70, %c0_71], %75 {strides = array<i32>} : memref<96x192xbf16, #tpu.memory_space<vmem>>, vector<64x64xbf16>,
    %c16_72 = arith.constant 16 : index
    %c64_73 = arith.constant 64 : index
    %79 = vector.load %arg15[%c16_72, %c64_73] : memref<96x192xbf16, #tpu.memory_space<vmem>>, vector<64x64xbf16>
    tpu.vector_store %arg15[%c16_72, %c64_73], %75 {strides = array<i32>} : memref<96x192xbf16, #tpu.memory_space<vmem>>, vector<64x64xbf16>,
    %c8_74 = arith.constant 8 : index
    %c128_75 = arith.constant 128 : index
    %80 = vector.load %arg15[%c8_74, %c128_75] : memref<96x192xbf16, #tpu.memory_space<vmem>>, vector<64x64xbf16>
    tpu.vector_store %arg15[%c8_74, %c128_75], %75 {strides = array<i32>} : memref<96x192xbf16, #tpu.memory_space<vmem>>, vector<64x64xbf16>,
    %c15_76 = arith.constant 15 : index
    %c0_77 = arith.constant 0 : index
    %81 = vector.load %arg15[%c15_76, %c0_77] : memref<96x192xbf16, #tpu.memory_space<vmem>>, vector<64x192xbf16>
    %82 = arith.mulf %81, %14 : vector<64x192xbf16>
    %c0_78 = arith.constant 0 : index
    %c0_79 = arith.constant 0 : index
    %c0_80 = arith.constant 0 : index
    %83 = vector.load %arg10[%c0_78, %c0_79, %c0_80] : memref<3x192x64xbf16, #tpu.memory_space<vmem>>, vector<1x192x64xbf16>
    %84 = vector.shape_cast %83 : vector<1x192x64xbf16> to vector<192x64xbf16>
    %cst_81 = arith.constant dense<0.000000e+00> : vector<64x64xf32>
    %85 = tpu.matmul %82, %84, %cst_81 {dimension_numbers = #tpu.dot_dimension_numbers<[1], [0], [0], [1], [0, 0, 1, 1], [], []>} : vector<64x192xbf16>, vector<192x64xbf16>, vector<64x64xf32> -> vector<64x64xf32>
    %c16_82 = arith.constant 16 : index
    %c0_83 = arith.constant 0 : index
    %86 = vector.load %arg15[%c16_82, %c0_83] : memref<96x192xbf16, #tpu.memory_space<vmem>>, vector<64x192xbf16>
    %c1_84 = arith.constant 1 : index
    %c0_85 = arith.constant 0 : index
    %c0_86 = arith.constant 0 : index
    %87 = vector.load %arg10[%c1_84, %c0_85, %c0_86] : memref<3x192x64xbf16, #tpu.memory_space<vmem>>, vector<1x192x64xbf16>
    %88 = vector.shape_cast %87 : vector<1x192x64xbf16> to vector<192x64xbf16>
    %cst_87 = arith.constant dense<0.000000e+00> : vector<64x64xf32>
    %89 = tpu.matmul %86, %88, %cst_87 {dimension_numbers = #tpu.dot_dimension_numbers<[1], [0], [0], [1], [0, 0, 1, 1], [], []>} : vector<64x192xbf16>, vector<192x64xbf16>, vector<64x64xf32> -> vector<64x64xf32>
    %90 = arith.addf %85, %89 : vector<64x64xf32>
    %c17_88 = arith.constant 17 : index
    %c0_89 = arith.constant 0 : index
    %91 = vector.load %arg15[%c17_88, %c0_89] : memref<96x192xbf16, #tpu.memory_space<vmem>>, vector<64x192xbf16>
    %92 = arith.mulf %91, %17 : vector<64x192xbf16>
    %c2_90 = arith.constant 2 : index
    %c0_91 = arith.constant 0 : index
    %c0_92 = arith.constant 0 : index
    %93 = vector.load %arg10[%c2_90, %c0_91, %c0_92] : memref<3x192x64xbf16, #tpu.memory_space<vmem>>, vector<1x192x64xbf16>
    %94 = vector.shape_cast %93 : vector<1x192x64xbf16> to vector<192x64xbf16>
    %cst_93 = arith.constant dense<0.000000e+00> : vector<64x64xf32>
    %95 = tpu.matmul %92, %94, %cst_93 {dimension_numbers = #tpu.dot_dimension_numbers<[1], [0], [0], [1], [0, 0, 1, 1], [], []>} : vector<64x192xbf16>, vector<192x64xbf16>, vector<64x64xf32> -> vector<64x64xf32>
    %96 = arith.addf %90, %95 : vector<64x64xf32>
    %c0_94 = arith.constant 0 : index
    %c0_95 = arith.constant 0 : index
    %97 = vector.load %arg11[%c0_94, %c0_95] : memref<1x64xf32, #tpu.memory_space<vmem>>, vector<1x64xf32>
    %98 = vector.broadcast %97 : vector<1x64xf32> to vector<64x64xf32>
    %99 = arith.addf %96, %98 : vector<64x64xf32>
    %cst_96 = arith.constant 0.000000e+00 : f32
    %100 = vector.broadcast %cst_96 : f32 to vector<64x64xf32>
    %101 = arith.maximumf %99, %100 : vector<64x64xf32>
    %102 = arith.truncf %101 : vector<64x64xf32> to vector<64x64xbf16>
    %c0_97 = arith.constant 0 : index
    %c64_98 = arith.constant 64 : index
    %103 = vector.load %arg16[%c0_97, %c64_98] : memref<128x128xbf16, #tpu.memory_space<vmem>>, vector<64x64xbf16>
    tpu.vector_store %arg16[%c0_97, %c64_98], %102 {strides = array<i32>} : memref<128x128xbf16, #tpu.memory_space<vmem>>, vector<64x64xbf16>,
    %104 = vector.extract_strided_slice %9 {offsets = [64, 0], sizes = [64, 64], strides = [1, 1]} : vector<128x160xbf16> to vector<64x64xbf16>
    %105 = vector.extract_strided_slice %9 {offsets = [64, 64], sizes = [64, 64], strides = [1, 1]} : vector<128x160xbf16> to vector<64x64xbf16>
    %c15_99 = arith.constant 15 : index
    %c0_100 = arith.constant 0 : index
    %106 = vector.load %arg15[%c15_99, %c0_100] : memref<96x192xbf16, #tpu.memory_space<vmem>>, vector<9x192xbf16>
    tpu.vector_store %arg15[%c15_99, %c0_100], %18 {strides = array<i32>} : memref<96x192xbf16, #tpu.memory_space<vmem>>, vector<9x192xbf16>,
    %c72_101 = arith.constant 72 : index
    %c0_102 = arith.constant 0 : index
    %107 = vector.load %arg15[%c72_101, %c0_102] : memref<96x192xbf16, #tpu.memory_space<vmem>>, vector<9x192xbf16>
    tpu.vector_store %arg15[%c72_101, %c0_102], %18 {strides = array<i32>} : memref<96x192xbf16, #tpu.memory_space<vmem>>, vector<9x192xbf16>,
    %c24_103 = arith.constant 24 : index
    %c0_104 = arith.constant 0 : index
    %108 = vector.load %arg15[%c24_103, %c0_104] : memref<96x192xbf16, #tpu.memory_space<vmem>>, vector<64x64xbf16>
    tpu.vector_store %arg15[%c24_103, %c0_104], %104 {strides = array<i32>} : memref<96x192xbf16, #tpu.memory_space<vmem>>, vector<64x64xbf16>,
    %c16_105 = arith.constant 16 : index
    %c64_106 = arith.constant 64 : index
    %109 = vector.load %arg15[%c16_105, %c64_106] : memref<96x192xbf16, #tpu.memory_space<vmem>>, vector<64x64xbf16>
    tpu.vector_store %arg15[%c16_105, %c64_106], %104 {strides = array<i32>} : memref<96x192xbf16, #tpu.memory_space<vmem>>, vector<64x64xbf16>,
    %c8_107 = arith.constant 8 : index
    %c128_108 = arith.constant 128 : index
    %110 = vector.load %arg15[%c8_107, %c128_108] : memref<96x192xbf16, #tpu.memory_space<vmem>>, vector<64x64xbf16>
    tpu.vector_store %arg15[%c8_107, %c128_108], %104 {strides = array<i32>} : memref<96x192xbf16, #tpu.memory_space<vmem>>, vector<64x64xbf16>,
    %c15_109 = arith.constant 15 : index
    %c0_110 = arith.constant 0 : index
    %111 = vector.load %arg15[%c15_109, %c0_110] : memref<96x192xbf16, #tpu.memory_space<vmem>>, vector<64x192xbf16>
    %112 = arith.mulf %111, %14 : vector<64x192xbf16>
    %c0_111 = arith.constant 0 : index
    %c0_112 = arith.constant 0 : index
    %c0_113 = arith.constant 0 : index
    %113 = vector.load %arg6[%c0_111, %c0_112, %c0_113] : memref<3x192x32xbf16, #tpu.memory_space<vmem>>, vector<1x192x32xbf16>
    %114 = vector.shape_cast %113 : vector<1x192x32xbf16> to vector<192x32xbf16>
    %cst_114 = arith.constant dense<0.000000e+00> : vector<64x32xf32>
    %115 = tpu.matmul %112, %114, %cst_114 {dimension_numbers = #tpu.dot_dimension_numbers<[1], [0], [0], [1], [0, 0, 1, 1], [], []>} : vector<64x192xbf16>, vector<192x32xbf16>, vector<64x32xf32> -> vector<64x32xf32>
    %c16_115 = arith.constant 16 : index
    %c0_116 = arith.constant 0 : index
    %116 = vector.load %arg15[%c16_115, %c0_116] : memref<96x192xbf16, #tpu.memory_space<vmem>>, vector<64x192xbf16>
    %c1_117 = arith.constant 1 : index
    %c0_118 = arith.constant 0 : index
    %c0_119 = arith.constant 0 : index
    %117 = vector.load %arg6[%c1_117, %c0_118, %c0_119] : memref<3x192x32xbf16, #tpu.memory_space<vmem>>, vector<1x192x32xbf16>
    %118 = vector.shape_cast %117 : vector<1x192x32xbf16> to vector<192x32xbf16>
    %cst_120 = arith.constant dense<0.000000e+00> : vector<64x32xf32>
    %119 = tpu.matmul %116, %118, %cst_120 {dimension_numbers = #tpu.dot_dimension_numbers<[1], [0], [0], [1], [0, 0, 1, 1], [], []>} : vector<64x192xbf16>, vector<192x32xbf16>, vector<64x32xf32> -> vector<64x32xf32>
    %120 = arith.addf %115, %119 : vector<64x32xf32>
    %c17_121 = arith.constant 17 : index
    %c0_122 = arith.constant 0 : index
    %121 = vector.load %arg15[%c17_121, %c0_122] : memref<96x192xbf16, #tpu.memory_space<vmem>>, vector<64x192xbf16>
    %122 = arith.mulf %121, %17 : vector<64x192xbf16>
    %c2_123 = arith.constant 2 : index
    %c0_124 = arith.constant 0 : index
    %c0_125 = arith.constant 0 : index
    %123 = vector.load %arg6[%c2_123, %c0_124, %c0_125] : memref<3x192x32xbf16, #tpu.memory_space<vmem>>, vector<1x192x32xbf16>
    %124 = vector.shape_cast %123 : vector<1x192x32xbf16> to vector<192x32xbf16>
    %cst_126 = arith.constant dense<0.000000e+00> : vector<64x32xf32>
    %125 = tpu.matmul %122, %124, %cst_126 {dimension_numbers = #tpu.dot_dimension_numbers<[1], [0], [0], [1], [0, 0, 1, 1], [], []>} : vector<64x192xbf16>, vector<192x32xbf16>, vector<64x32xf32> -> vector<64x32xf32>
    %126 = arith.addf %120, %125 : vector<64x32xf32>
    %c0_127 = arith.constant 0 : index
    %c0_128 = arith.constant 0 : index
    %127 = vector.load %arg7[%c0_127, %c0_128] : memref<1x32xf32, #tpu.memory_space<vmem>>, vector<1x32xf32>
    %128 = vector.broadcast %127 : vector<1x32xf32> to vector<64x32xf32>
    %129 = arith.addf %126, %128 : vector<64x32xf32>
    %cst_129 = arith.constant 0.000000e+00 : f32
    %130 = vector.broadcast %cst_129 : f32 to vector<64x32xf32>
    %131 = arith.maximumf %129, %130 : vector<64x32xf32>
    %132 = arith.truncf %131 : vector<64x32xf32> to vector<64x32xbf16>
    %c64_130 = arith.constant 64 : index
    %c32_131 = arith.constant 32 : index
    %133 = vector.load %arg16[%c64_130, %c32_131] : memref<128x128xbf16, #tpu.memory_space<vmem>>, vector<64x32xbf16>
    tpu.vector_store %arg16[%c64_130, %c32_131], %132 {strides = array<i32>} : memref<128x128xbf16, #tpu.memory_space<vmem>>, vector<64x32xbf16>,
    %c15_132 = arith.constant 15 : index
    %c0_133 = arith.constant 0 : index
    %134 = vector.load %arg15[%c15_132, %c0_133] : memref<96x192xbf16, #tpu.memory_space<vmem>>, vector<9x192xbf16>
    tpu.vector_store %arg15[%c15_132, %c0_133], %18 {strides = array<i32>} : memref<96x192xbf16, #tpu.memory_space<vmem>>, vector<9x192xbf16>,
    %c72_134 = arith.constant 72 : index
    %c0_135 = arith.constant 0 : index
    %135 = vector.load %arg15[%c72_134, %c0_135] : memref<96x192xbf16, #tpu.memory_space<vmem>>, vector<9x192xbf16>
    tpu.vector_store %arg15[%c72_134, %c0_135], %18 {strides = array<i32>} : memref<96x192xbf16, #tpu.memory_space<vmem>>, vector<9x192xbf16>,
    %c24_136 = arith.constant 24 : index
    %c0_137 = arith.constant 0 : index
    %136 = vector.load %arg15[%c24_136, %c0_137] : memref<96x192xbf16, #tpu.memory_space<vmem>>, vector<64x64xbf16>
    tpu.vector_store %arg15[%c24_136, %c0_137], %105 {strides = array<i32>} : memref<96x192xbf16, #tpu.memory_space<vmem>>, vector<64x64xbf16>,
    %c16_138 = arith.constant 16 : index
    %c64_139 = arith.constant 64 : index
    %137 = vector.load %arg15[%c16_138, %c64_139] : memref<96x192xbf16, #tpu.memory_space<vmem>>, vector<64x64xbf16>
    tpu.vector_store %arg15[%c16_138, %c64_139], %105 {strides = array<i32>} : memref<96x192xbf16, #tpu.memory_space<vmem>>, vector<64x64xbf16>,
    %c8_140 = arith.constant 8 : index
    %c128_141 = arith.constant 128 : index
    %138 = vector.load %arg15[%c8_140, %c128_141] : memref<96x192xbf16, #tpu.memory_space<vmem>>, vector<64x64xbf16>
    tpu.vector_store %arg15[%c8_140, %c128_141], %105 {strides = array<i32>} : memref<96x192xbf16, #tpu.memory_space<vmem>>, vector<64x64xbf16>,
    %c15_142 = arith.constant 15 : index
    %c0_143 = arith.constant 0 : index
    %139 = vector.load %arg15[%c15_142, %c0_143] : memref<96x192xbf16, #tpu.memory_space<vmem>>, vector<64x192xbf16>
    %140 = arith.mulf %139, %14 : vector<64x192xbf16>
    %c0_144 = arith.constant 0 : index
    %c0_145 = arith.constant 0 : index
    %c0_146 = arith.constant 0 : index
    %141 = vector.load %arg8[%c0_144, %c0_145, %c0_146] : memref<3x192x64xbf16, #tpu.memory_space<vmem>>, vector<1x192x64xbf16>
    %142 = vector.shape_cast %141 : vector<1x192x64xbf16> to vector<192x64xbf16>
    %cst_147 = arith.constant dense<0.000000e+00> : vector<64x64xf32>
    %143 = tpu.matmul %140, %142, %cst_147 {dimension_numbers = #tpu.dot_dimension_numbers<[1], [0], [0], [1], [0, 0, 1, 1], [], []>} : vector<64x192xbf16>, vector<192x64xbf16>, vector<64x64xf32> -> vector<64x64xf32>
    %c16_148 = arith.constant 16 : index
    %c0_149 = arith.constant 0 : index
    %144 = vector.load %arg15[%c16_148, %c0_149] : memref<96x192xbf16, #tpu.memory_space<vmem>>, vector<64x192xbf16>
    %c1_150 = arith.constant 1 : index
    %c0_151 = arith.constant 0 : index
    %c0_152 = arith.constant 0 : index
    %145 = vector.load %arg8[%c1_150, %c0_151, %c0_152] : memref<3x192x64xbf16, #tpu.memory_space<vmem>>, vector<1x192x64xbf16>
    %146 = vector.shape_cast %145 : vector<1x192x64xbf16> to vector<192x64xbf16>
    %cst_153 = arith.constant dense<0.000000e+00> : vector<64x64xf32>
    %147 = tpu.matmul %144, %146, %cst_153 {dimension_numbers = #tpu.dot_dimension_numbers<[1], [0], [0], [1], [0, 0, 1, 1], [], []>} : vector<64x192xbf16>, vector<192x64xbf16>, vector<64x64xf32> -> vector<64x64xf32>
    %148 = arith.addf %143, %147 : vector<64x64xf32>
    %c17_154 = arith.constant 17 : index
    %c0_155 = arith.constant 0 : index
    %149 = vector.load %arg15[%c17_154, %c0_155] : memref<96x192xbf16, #tpu.memory_space<vmem>>, vector<64x192xbf16>
    %150 = arith.mulf %149, %17 : vector<64x192xbf16>
    %c2_156 = arith.constant 2 : index
    %c0_157 = arith.constant 0 : index
    %c0_158 = arith.constant 0 : index
    %151 = vector.load %arg8[%c2_156, %c0_157, %c0_158] : memref<3x192x64xbf16, #tpu.memory_space<vmem>>, vector<1x192x64xbf16>
    %152 = vector.shape_cast %151 : vector<1x192x64xbf16> to vector<192x64xbf16>
    %cst_159 = arith.constant dense<0.000000e+00> : vector<64x64xf32>
    %153 = tpu.matmul %150, %152, %cst_159 {dimension_numbers = #tpu.dot_dimension_numbers<[1], [0], [0], [1], [0, 0, 1, 1], [], []>} : vector<64x192xbf16>, vector<192x64xbf16>, vector<64x64xf32> -> vector<64x64xf32>
    %154 = arith.addf %148, %153 : vector<64x64xf32>
    %c0_160 = arith.constant 0 : index
    %c0_161 = arith.constant 0 : index
    %155 = vector.load %arg9[%c0_160, %c0_161] : memref<1x64xf32, #tpu.memory_space<vmem>>, vector<1x64xf32>
    %156 = vector.broadcast %155 : vector<1x64xf32> to vector<64x64xf32>
    %157 = arith.addf %154, %156 : vector<64x64xf32>
    %cst_162 = arith.constant 0.000000e+00 : f32
    %158 = vector.broadcast %cst_162 : f32 to vector<64x64xf32>
    %159 = arith.maximumf %157, %158 : vector<64x64xf32>
    %160 = arith.truncf %159 : vector<64x64xf32> to vector<64x64xbf16>
    %c15_163 = arith.constant 15 : index
    %c0_164 = arith.constant 0 : index
    %161 = vector.load %arg15[%c15_163, %c0_164] : memref<96x192xbf16, #tpu.memory_space<vmem>>, vector<9x192xbf16>
    tpu.vector_store %arg15[%c15_163, %c0_164], %18 {strides = array<i32>} : memref<96x192xbf16, #tpu.memory_space<vmem>>, vector<9x192xbf16>,
    %c72_165 = arith.constant 72 : index
    %c0_166 = arith.constant 0 : index
    %162 = vector.load %arg15[%c72_165, %c0_166] : memref<96x192xbf16, #tpu.memory_space<vmem>>, vector<9x192xbf16>
    tpu.vector_store %arg15[%c72_165, %c0_166], %18 {strides = array<i32>} : memref<96x192xbf16, #tpu.memory_space<vmem>>, vector<9x192xbf16>,
    %c24_167 = arith.constant 24 : index
    %c0_168 = arith.constant 0 : index
    %163 = vector.load %arg15[%c24_167, %c0_168] : memref<96x192xbf16, #tpu.memory_space<vmem>>, vector<64x64xbf16>
    tpu.vector_store %arg15[%c24_167, %c0_168], %160 {strides = array<i32>} : memref<96x192xbf16, #tpu.memory_space<vmem>>, vector<64x64xbf16>,
    %c16_169 = arith.constant 16 : index
    %c64_170 = arith.constant 64 : index
    %164 = vector.load %arg15[%c16_169, %c64_170] : memref<96x192xbf16, #tpu.memory_space<vmem>>, vector<64x64xbf16>
    tpu.vector_store %arg15[%c16_169, %c64_170], %160 {strides = array<i32>} : memref<96x192xbf16, #tpu.memory_space<vmem>>, vector<64x64xbf16>,
    %c8_171 = arith.constant 8 : index
    %c128_172 = arith.constant 128 : index
    %165 = vector.load %arg15[%c8_171, %c128_172] : memref<96x192xbf16, #tpu.memory_space<vmem>>, vector<64x64xbf16>
    tpu.vector_store %arg15[%c8_171, %c128_172], %160 {strides = array<i32>} : memref<96x192xbf16, #tpu.memory_space<vmem>>, vector<64x64xbf16>,
    %c15_173 = arith.constant 15 : index
    %c0_174 = arith.constant 0 : index
    %166 = vector.load %arg15[%c15_173, %c0_174] : memref<96x192xbf16, #tpu.memory_space<vmem>>, vector<64x192xbf16>
    %167 = arith.mulf %166, %14 : vector<64x192xbf16>
    %c0_175 = arith.constant 0 : index
    %c0_176 = arith.constant 0 : index
    %c0_177 = arith.constant 0 : index
    %168 = vector.load %arg10[%c0_175, %c0_176, %c0_177] : memref<3x192x64xbf16, #tpu.memory_space<vmem>>, vector<1x192x64xbf16>
    %169 = vector.shape_cast %168 : vector<1x192x64xbf16> to vector<192x64xbf16>
    %cst_178 = arith.constant dense<0.000000e+00> : vector<64x64xf32>
    %170 = tpu.matmul %167, %169, %cst_178 {dimension_numbers = #tpu.dot_dimension_numbers<[1], [0], [0], [1], [0, 0, 1, 1], [], []>} : vector<64x192xbf16>, vector<192x64xbf16>, vector<64x64xf32> -> vector<64x64xf32>
    %c16_179 = arith.constant 16 : index
    %c0_180 = arith.constant 0 : index
    %171 = vector.load %arg15[%c16_179, %c0_180] : memref<96x192xbf16, #tpu.memory_space<vmem>>, vector<64x192xbf16>
    %c1_181 = arith.constant 1 : index
    %c0_182 = arith.constant 0 : index
    %c0_183 = arith.constant 0 : index
    %172 = vector.load %arg10[%c1_181, %c0_182, %c0_183] : memref<3x192x64xbf16, #tpu.memory_space<vmem>>, vector<1x192x64xbf16>
    %173 = vector.shape_cast %172 : vector<1x192x64xbf16> to vector<192x64xbf16>
    %cst_184 = arith.constant dense<0.000000e+00> : vector<64x64xf32>
    %174 = tpu.matmul %171, %173, %cst_184 {dimension_numbers = #tpu.dot_dimension_numbers<[1], [0], [0], [1], [0, 0, 1, 1], [], []>} : vector<64x192xbf16>, vector<192x64xbf16>, vector<64x64xf32> -> vector<64x64xf32>
    %175 = arith.addf %170, %174 : vector<64x64xf32>
    %c17_185 = arith.constant 17 : index
    %c0_186 = arith.constant 0 : index
    %176 = vector.load %arg15[%c17_185, %c0_186] : memref<96x192xbf16, #tpu.memory_space<vmem>>, vector<64x192xbf16>
    %177 = arith.mulf %176, %17 : vector<64x192xbf16>
    %c2_187 = arith.constant 2 : index
    %c0_188 = arith.constant 0 : index
    %c0_189 = arith.constant 0 : index
    %178 = vector.load %arg10[%c2_187, %c0_188, %c0_189] : memref<3x192x64xbf16, #tpu.memory_space<vmem>>, vector<1x192x64xbf16>
    %179 = vector.shape_cast %178 : vector<1x192x64xbf16> to vector<192x64xbf16>
    %cst_190 = arith.constant dense<0.000000e+00> : vector<64x64xf32>
    %180 = tpu.matmul %177, %179, %cst_190 {dimension_numbers = #tpu.dot_dimension_numbers<[1], [0], [0], [1], [0, 0, 1, 1], [], []>} : vector<64x192xbf16>, vector<192x64xbf16>, vector<64x64xf32> -> vector<64x64xf32>
    %181 = arith.addf %175, %180 : vector<64x64xf32>
    %c0_191 = arith.constant 0 : index
    %c0_192 = arith.constant 0 : index
    %182 = vector.load %arg11[%c0_191, %c0_192] : memref<1x64xf32, #tpu.memory_space<vmem>>, vector<1x64xf32>
    %183 = vector.broadcast %182 : vector<1x64xf32> to vector<64x64xf32>
    %184 = arith.addf %181, %183 : vector<64x64xf32>
    %cst_193 = arith.constant 0.000000e+00 : f32
    %185 = vector.broadcast %cst_193 : f32 to vector<64x64xf32>
    %186 = arith.maximumf %184, %185 : vector<64x64xf32>
    %187 = arith.truncf %186 : vector<64x64xf32> to vector<64x64xbf16>
    %c64_194 = arith.constant 64 : index
    %c64_195 = arith.constant 64 : index
    %188 = vector.load %arg16[%c64_194, %c64_195] : memref<128x128xbf16, #tpu.memory_space<vmem>>, vector<64x64xbf16>
    tpu.vector_store %arg16[%c64_194, %c64_195], %187 {strides = array<i32>} : memref<128x128xbf16, #tpu.memory_space<vmem>>, vector<64x64xbf16>,
    %c0_196 = arith.constant 0 : index
    %c0_197 = arith.constant 0 : index
    %189 = vector.load %arg16[%c0_196, %c0_197] : memref<128x128xbf16, #tpu.memory_space<vmem>>, vector<128x128xbf16>
    %c0_198 = arith.constant 0 : index
    %c0_199 = arith.constant 0 : index
    %190 = vector.load %arg12[%c0_198, %c0_199] : memref<128x320xbf16, #tpu.memory_space<vmem>>, vector<128x128xbf16>
    %cst_200 = arith.constant dense<0.000000e+00> : vector<128x128xf32>
    %191 = tpu.matmul %189, %190, %cst_200 {dimension_numbers = #tpu.dot_dimension_numbers<[1], [0], [0], [1], [0, 0, 1, 1], [], []>} : vector<128x128xbf16>, vector<128x128xbf16>, vector<128x128xf32> -> vector<128x128xf32>
    %c0_201 = arith.constant 0 : index
    %c0_202 = arith.constant 0 : index
    %192 = vector.load %arg13[%c0_201, %c0_202] : memref<1x320xf32, #tpu.memory_space<vmem>>, vector<1x128xf32>
    %193 = vector.broadcast %192 : vector<1x128xf32> to vector<128x128xf32>
    %194 = arith.addf %191, %193 : vector<128x128xf32>
    %c0_203 = arith.constant 0 : index
    %c0_204 = arith.constant 0 : index
    %195 = vector.load %arg1[%c0_203, %c0_204] : memref<128x320xf32, #tpu.memory_space<vmem>>, vector<128x128xf32>
    %196 = arith.addf %194, %195 : vector<128x128xf32>
    %cst_205 = arith.constant 0.000000e+00 : f32
    %197 = vector.broadcast %cst_205 : f32 to vector<128x128xf32>
    %198 = arith.maximumf %196, %197 : vector<128x128xf32>
    %c0_206 = arith.constant 0 : index
    %c0_207 = arith.constant 0 : index
    %199 = vector.load %arg14[%c0_206, %c0_207] : memref<128x320xf32, #tpu.memory_space<vmem>>, vector<128x128xf32>
    tpu.vector_store %arg14[%c0_206, %c0_207], %198 {strides = array<i32>} : memref<128x320xf32, #tpu.memory_space<vmem>>, vector<128x128xf32>,
    %c0_208 = arith.constant 0 : index
    %c0_209 = arith.constant 0 : index
    %200 = vector.load %arg16[%c0_208, %c0_209] : memref<128x128xbf16, #tpu.memory_space<vmem>>, vector<128x128xbf16>
    %c0_210 = arith.constant 0 : index
    %c128_211 = arith.constant 128 : index
    %201 = vector.load %arg12[%c0_210, %c128_211] : memref<128x320xbf16, #tpu.memory_space<vmem>>, vector<128x128xbf16>
    %cst_212 = arith.constant dense<0.000000e+00> : vector<128x128xf32>
    %202 = tpu.matmul %200, %201, %cst_212 {dimension_numbers = #tpu.dot_dimension_numbers<[1], [0], [0], [1], [0, 0, 1, 1], [], []>} : vector<128x128xbf16>, vector<128x128xbf16>, vector<128x128xf32> -> vector<128x128xf32>
    %c0_213 = arith.constant 0 : index
    %c128_214 = arith.constant 128 : index
    %203 = vector.load %arg13[%c0_213, %c128_214] : memref<1x320xf32, #tpu.memory_space<vmem>>, vector<1x128xf32>
    %204 = vector.broadcast %203 : vector<1x128xf32> to vector<128x128xf32>
    %205 = arith.addf %202, %204 : vector<128x128xf32>
    %c0_215 = arith.constant 0 : index
    %c128_216 = arith.constant 128 : index
    %206 = vector.load %arg1[%c0_215, %c128_216] : memref<128x320xf32, #tpu.memory_space<vmem>>, vector<128x128xf32>
    %207 = arith.addf %205, %206 : vector<128x128xf32>
    %cst_217 = arith.constant 0.000000e+00 : f32
    %208 = vector.broadcast %cst_217 : f32 to vector<128x128xf32>
    %209 = arith.maximumf %207, %208 : vector<128x128xf32>
    %c0_218 = arith.constant 0 : index
    %c128_219 = arith.constant 128 : index
    %210 = vector.load %arg14[%c0_218, %c128_219] : memref<128x320xf32, #tpu.memory_space<vmem>>, vector<128x128xf32>
    tpu.vector_store %arg14[%c0_218, %c128_219], %209 {strides = array<i32>} : memref<128x320xf32, #tpu.memory_space<vmem>>, vector<128x128xf32>,
    %c0_220 = arith.constant 0 : index
    %c0_221 = arith.constant 0 : index
    %211 = vector.load %arg16[%c0_220, %c0_221] : memref<128x128xbf16, #tpu.memory_space<vmem>>, vector<128x128xbf16>
    %c0_222 = arith.constant 0 : index
    %c256 = arith.constant 256 : index
    %212 = vector.load %arg12[%c0_222, %c256] : memref<128x320xbf16, #tpu.memory_space<vmem>>, vector<128x64xbf16>
    %cst_223 = arith.constant dense<0.000000e+00> : vector<128x64xf32>
    %213 = tpu.matmul %211, %212, %cst_223 {dimension_numbers = #tpu.dot_dimension_numbers<[1], [0], [0], [1], [0, 0, 1, 1], [], []>} : vector<128x128xbf16>, vector<128x64xbf16>, vector<128x64xf32> -> vector<128x64xf32>
    %c0_224 = arith.constant 0 : index
    %c256_225 = arith.constant 256 : index
    %214 = vector.load %arg13[%c0_224, %c256_225] : memref<1x320xf32, #tpu.memory_space<vmem>>, vector<1x64xf32>
    %215 = vector.broadcast %214 : vector<1x64xf32> to vector<128x64xf32>
    %216 = arith.addf %213, %215 : vector<128x64xf32>
    %c0_226 = arith.constant 0 : index
    %c256_227 = arith.constant 256 : index
    %217 = vector.load %arg1[%c0_226, %c256_227] : memref<128x320xf32, #tpu.memory_space<vmem>>, vector<128x64xf32>
    %218 = arith.addf %216, %217 : vector<128x64xf32>
    %cst_228 = arith.constant 0.000000e+00 : f32
    %219 = vector.broadcast %cst_228 : f32 to vector<128x64xf32>
    %220 = arith.maximumf %218, %219 : vector<128x64xf32>
    %c0_229 = arith.constant 0 : index
    %c256_230 = arith.constant 256 : index
    %221 = vector.load %arg14[%c0_229, %c256_230] : memref<128x320xf32, #tpu.memory_space<vmem>>, vector<128x64xf32>
    tpu.vector_store %arg14[%c0_229, %c256_230], %220 {strides = array<i32>} : memref<128x320xf32, #tpu.memory_space<vmem>>, vector<128x64xf32>,
    return
  }
  func.func @transform_0(%arg0: i32) -> (i32, i32) {
    %c0_i32 = arith.constant 0 : i32
    %c0_i32_0 = arith.constant 0 : i32
    return %arg0, %c0_i32 : i32, i32
  }
  func.func @transform_1(%arg0: i32) -> (i32, i32) {
    %c0_i32 = arith.constant 0 : i32
    %c0_i32_0 = arith.constant 0 : i32
    %c0_i32_1 = arith.constant 0 : i32
    return %c0_i32, %c0_i32_0 : i32, i32
  }
  func.func @transform_2(%arg0: i32) -> (i32, i32) {
    %c0_i32 = arith.constant 0 : i32
    %c0_i32_0 = arith.constant 0 : i32
    %c0_i32_1 = arith.constant 0 : i32
    return %c0_i32, %c0_i32_0 : i32, i32
  }
  func.func @transform_3(%arg0: i32) -> (i32, i32) {
    %c0_i32 = arith.constant 0 : i32
    %c0_i32_0 = arith.constant 0 : i32
    %c0_i32_1 = arith.constant 0 : i32
    return %c0_i32, %c0_i32_0 : i32, i32
  }
  func.func @transform_4(%arg0: i32) -> (i32, i32) {
    %c0_i32 = arith.constant 0 : i32
    %c0_i32_0 = arith.constant 0 : i32
    %c0_i32_1 = arith.constant 0 : i32
    return %c0_i32, %c0_i32_0 : i32, i32
  }
  func.func @transform_5(%arg0: i32) -> (i32, i32, i32) {
    %c0_i32 = arith.constant 0 : i32
    %c0_i32_0 = arith.constant 0 : i32
    %c0_i32_1 = arith.constant 0 : i32
    %c0_i32_2 = arith.constant 0 : i32
    return %c0_i32, %c0_i32_0, %c0_i32_1 : i32, i32, i32
  }
  func.func @transform_6(%arg0: i32) -> (i32, i32) {
    %c0_i32 = arith.constant 0 : i32
    %c0_i32_0 = arith.constant 0 : i32
    %c0_i32_1 = arith.constant 0 : i32
    return %c0_i32, %c0_i32_0 : i32, i32
  }
  func.func @transform_7(%arg0: i32) -> (i32, i32, i32) {
    %c0_i32 = arith.constant 0 : i32
    %c0_i32_0 = arith.constant 0 : i32
    %c0_i32_1 = arith.constant 0 : i32
    %c0_i32_2 = arith.constant 0 : i32
    return %c0_i32, %c0_i32_0, %c0_i32_1 : i32, i32, i32
  }
  func.func @transform_8(%arg0: i32) -> (i32, i32) {
    %c0_i32 = arith.constant 0 : i32
    %c0_i32_0 = arith.constant 0 : i32
    %c0_i32_1 = arith.constant 0 : i32
    return %c0_i32, %c0_i32_0 : i32, i32
  }
  func.func @transform_9(%arg0: i32) -> (i32, i32, i32) {
    %c0_i32 = arith.constant 0 : i32
    %c0_i32_0 = arith.constant 0 : i32
    %c0_i32_1 = arith.constant 0 : i32
    %c0_i32_2 = arith.constant 0 : i32
    return %c0_i32, %c0_i32_0, %c0_i32_1 : i32, i32, i32
  }
  func.func @transform_10(%arg0: i32) -> (i32, i32) {
    %c0_i32 = arith.constant 0 : i32
    %c0_i32_0 = arith.constant 0 : i32
    %c0_i32_1 = arith.constant 0 : i32
    return %c0_i32, %c0_i32_0 : i32, i32
  }
  func.func @transform_11(%arg0: i32) -> (i32, i32) {
    %c0_i32 = arith.constant 0 : i32
    %c0_i32_0 = arith.constant 0 : i32
    %c0_i32_1 = arith.constant 0 : i32
    return %c0_i32, %c0_i32_0 : i32, i32
  }
  func.func @transform_12(%arg0: i32) -> (i32, i32) {
    %c0_i32 = arith.constant 0 : i32
    %c0_i32_0 = arith.constant 0 : i32
    %c0_i32_1 = arith.constant 0 : i32
    return %c0_i32, %c0_i32_0 : i32, i32
  }
  func.func @transform_13(%arg0: i32) -> (i32, i32) {
    %c0_i32 = arith.constant 0 : i32
    %c0_i32_0 = arith.constant 0 : i32
    return %arg0, %c0_i32 : i32, i32
  }
}

</mosaic_0001>

<llo_original>
// kernel: block35_forward.1
$region0: #{block35_forward.1}
  #allocation0 [shape = 'u32[]', space=smem, size = 0x4, offset = 0x4, fixed_abs, tag = 'smem constant byte address 0x4 - core index']
  #allocation1 [shape = 'u32[144,128]{1,0:T(1,128)}', space=vmem, size = 0x12000, scoped, tag = 'internal scratch']
  #allocation2 [shape = 'bf16[96,192]{1,0:T(8,128)(2,1)}', space=vmem, size = 0xc000, scoped, tag = 'scratch operand']
  #allocation3 [shape = 'bf16[128,128]{1,0:T(8,128)(2,1)}', space=vmem, size = 0x8000, scoped, tag = 'scratch operand']
  %s0 = inlined_call_operand.vmem [shape: f32[128,320], index: 0, kind: input, shape index: {}]
  %s1 = inlined_call_operand.vmem [shape: bf16[64,1], index: 1, kind: input, shape index: {}]
  %s2 = inlined_call_operand.vmem [shape: bf16[64,1], index: 2, kind: input, shape index: {}]
  %s3 = inlined_call_operand.vmem [shape: bf16[320,160], index: 3, kind: input, shape index: {}]
  %s4 = inlined_call_operand.vmem [shape: f32[1,160], index: 4, kind: input, shape index: {}]
  %s5 = inlined_call_operand.vmem [shape: bf16[3,192,32], index: 5, kind: input, shape index: {}]
  %s6 = inlined_call_operand.vmem [shape: f32[1,32], index: 6, kind: input, shape index: {}]
  %s7 = inlined_call_operand.vmem [shape: bf16[3,192,64], index: 7, kind: input, shape index: {}]
  %s8 = inlined_call_operand.vmem [shape: f32[1,64], index: 8, kind: input, shape index: {}]
  %s9 = inlined_call_operand.vmem [shape: bf16[3,192,64], index: 9, kind: input, shape index: {}]
  %s10 = inlined_call_operand.vmem [shape: f32[1,64], index: 10, kind: input, shape index: {}]
  %s11 = inlined_call_operand.vmem [shape: bf16[128,320], index: 11, kind: input, shape index: {}]
  %s12 = inlined_call_operand.vmem [shape: f32[1,320], index: 12, kind: input, shape index: {}]
  %s13 = inlined_call_operand.hbm [shape: f32[128,320], index: 13, kind: output, shape index: {}]
  %s14 = sld [smem:[#allocation0]]
  $region62: #{block35_forward.1} parent=0
    _
  %s16 = ssub.s32 1, %s14
  %s17 = scalar_select 0, %s16, %s14
  $region1: #{block35_forward.1} parent=0
    #allocation4 [shape = 'u8[196608]{0}', space=vmem, size = 0x30000, scoped, tag = 'output window, operand 0, single buffered']
    #allocation5 [shape = 's32[1]{0}', space=sflag, size = 0x4, scoped, tag = 'scoped memory for block35_forward.1']
    %18 = vsyncpa [#allocation5], 0
    // Predicated region
    $region2: #{block35_forward.1} parent=1 // pred_check
      _
    $region3: #{block35_forward.1} parent=1 // pred_check_branch
      %20 = sbr.rel (0) target = $region5
    $region4: #{block35_forward.1} parent=1 // pred_region
      _
    $region5: #{block35_forward.1} parent=1 // pred_fallthru
      _
    // Predicated region
    $region6: #{block35_forward.1} parent=1 // pred_check
      _
    $region7: #{block35_forward.1} parent=1 // pred_check_branch
      %22 = sbr.rel (0) target = $region9
    $region8: #{block35_forward.1} parent=1 // pred_region
      _
    $region9: #{block35_forward.1} parent=1 // pred_fallthru
      _
    // Predicated region
    $region10: #{block35_forward.1} parent=1 // pred_check
      _
    $region11: #{block35_forward.1} parent=1 // pred_check_branch
      %24 = sbr.rel (0) target = $region13
    $region12: #{block35_forward.1} parent=1 // pred_region
      _
    $region13: #{block35_forward.1} parent=1 // pred_fallthru
      _
    // Predicated region
    $region14: #{block35_forward.1} parent=1 // pred_check
      _
    $region15: #{block35_forward.1} parent=1 // pred_check_branch
      %26 = sbr.rel (0) target = $region17
    $region16: #{block35_forward.1} parent=1 // pred_region
      _
    $region17: #{block35_forward.1} parent=1 // pred_fallthru
      _
    // Predicated region
    $region18: #{block35_forward.1} parent=1 // pred_check
      _
    $region19: #{block35_forward.1} parent=1 // pred_check_branch
      %28 = sbr.rel (0) target = $region21
    $region20: #{block35_forward.1} parent=1 // pred_region
      _
    $region21: #{block35_forward.1} parent=1 // pred_fallthru
      _
    // Predicated region
    $region22: #{block35_forward.1} parent=1 // pred_check
      _
    $region23: #{block35_forward.1} parent=1 // pred_check_branch
      %30 = sbr.rel (0) target = $region25
    $region24: #{block35_forward.1} parent=1 // pred_region
      _
    $region25: #{block35_forward.1} parent=1 // pred_fallthru
      _
    // Predicated region
    $region26: #{block35_forward.1} parent=1 // pred_check
      _
    $region27: #{block35_forward.1} parent=1 // pred_check_branch
      %32 = sbr.rel (0) target = $region29
    $region28: #{block35_forward.1} parent=1 // pred_region
      _
    $region29: #{block35_forward.1} parent=1 // pred_fallthru
      _
    // Predicated region
    $region30: #{block35_forward.1} parent=1 // pred_check
      _
    $region31: #{block35_forward.1} parent=1 // pred_check_branch
      %34 = sbr.rel (0) target = $region33
    $region32: #{block35_forward.1} parent=1 // pred_region
      _
    $region33: #{block35_forward.1} parent=1 // pred_fallthru
      _
    // Predicated region
    $region34: #{block35_forward.1} parent=1 // pred_check
      _
    $region35: #{block35_forward.1} parent=1 // pred_check_branch
      %36 = sbr.rel (0) target = $region37
    $region36: #{block35_forward.1} parent=1 // pred_region
      _
    $region37: #{block35_forward.1} parent=1 // pred_fallthru
      _
    // Predicated region
    $region38: #{block35_forward.1} parent=1 // pred_check
      _
    $region39: #{block35_forward.1} parent=1 // pred_check_branch
      %38 = sbr.rel (0) target = $region41
    $region40: #{block35_forward.1} parent=1 // pred_region
      _
    $region41: #{block35_forward.1} parent=1 // pred_fallthru
      _
    // Predicated region
    $region42: #{block35_forward.1} parent=1 // pred_check
      _
    $region43: #{block35_forward.1} parent=1 // pred_check_branch
      %40 = sbr.rel (0) target = $region45
    $region44: #{block35_forward.1} parent=1 // pred_region
      _
    $region45: #{block35_forward.1} parent=1 // pred_fallthru
      _
    // Predicated region
    $region46: #{block35_forward.1} parent=1 // pred_check
      _
    $region47: #{block35_forward.1} parent=1 // pred_check_branch
      %42 = sbr.rel (0) target = $region49
    $region48: #{block35_forward.1} parent=1 // pred_region
      _
    $region49: #{block35_forward.1} parent=1 // pred_fallthru
      _
    // Predicated region
    $region50: #{block35_forward.1} parent=1 // pred_check
      _
    $region51: #{block35_forward.1} parent=1 // pred_check_branch
      %44 = sbr.rel (0) target = $region53
    $region52: #{block35_forward.1} parent=1 // pred_region
      _
    $region53: #{block35_forward.1} parent=1 // pred_fallthru
      _
    %v46 = vld [vmem:[%s0] sm:$0xff]
    %v47 = vld [vmem:[%s0 + $0x8] sm:$0xff]
    %v48 = vld [vmem:[%s0 + $0x10] sm:$0xff]
    %v49 = vld [vmem:[%s0 + $0x18] sm:$0xff]
    %v50 = vld [vmem:[%s0 + $0x20] sm:$0xff]
    %v51 = vld [vmem:[%s0 + $0x28] sm:$0xff]
    %v52 = vld [vmem:[%s0 + $0x30] sm:$0xff]
    %v53 = vld [vmem:[%s0 + $0x38] sm:$0xff]
    %v54 = vld [vmem:[%s0 + $0x40] sm:$0xff]
    %v55 = vld [vmem:[%s0 + $0x48] sm:$0xff]
    %v56 = vld [vmem:[%s0 + $0x50] sm:$0xff]
    %v57 = vld [vmem:[%s0 + $0x58] sm:$0xff]
    %v58 = vld [vmem:[%s0 + $0x60] sm:$0xff]
    %v59 = vld [vmem:[%s0 + $0x68] sm:$0xff]
    %v60 = vld [vmem:[%s0 + $0x70] sm:$0xff]
    %v61 = vld [vmem:[%s0 + $0x78] sm:$0xff]
    %v62 = vld [vmem:[%s0 + $0x80] sm:$0xff]
    %v63 = vld [vmem:[%s0 + $0x88] sm:$0xff]
    %v64 = vld [vmem:[%s0 + $0x90] sm:$0xff]
    %v65 = vld [vmem:[%s0 + $0x98] sm:$0xff]
    %v66 = vld [vmem:[%s0 + $0xa0] sm:$0xff]
    %v67 = vld [vmem:[%s0 + $0xa8] sm:$0xff]
    %v68 = vld [vmem:[%s0 + $0xb0] sm:$0xff]
    %v69 = vld [vmem:[%s0 + $0xb8] sm:$0xff]
    %v70 = vld [vmem:[%s0 + $0xc0] sm:$0xff]
    %v71 = vld [vmem:[%s0 + $0xc8] sm:$0xff]
    %v72 = vld [vmem:[%s0 + $0xd0] sm:$0xff]
    %v73 = vld [vmem:[%s0 + $0xd8] sm:$0xff]
    %v74 = vld [vmem:[%s0 + $0xe0] sm:$0xff]
    %v75 = vld [vmem:[%s0 + $0xe8] sm:$0xff]
    %v76 = vld [vmem:[%s0 + $0xf0] sm:$0xff]
    %v77 = vld [vmem:[%s0 + $0xf8] sm:$0xff]
    %v78 = vld [vmem:[%s0 + $0x100] sm:$0xff]
    %v79 = vld [vmem:[%s0 + $0x108] sm:$0xff]
    %v80 = vld [vmem:[%s0 + $0x110] sm:$0xff]
    %v81 = vld [vmem:[%s0 + $0x118] sm:$0xff]
    %v82 = vld [vmem:[%s0 + $0x120] sm:$0xff]
    %v83 = vld [vmem:[%s0 + $0x128] sm:$0xff]
    %v84 = vld [vmem:[%s0 + $0x130] sm:$0xff]
    %v85 = vld [vmem:[%s0 + $0x138] sm:$0xff]
    %v86 = vld [vmem:[%s0 + $0x140] sm:$0xff]
    %v87 = vld [vmem:[%s0 + $0x148] sm:$0xff]
    %v88 = vld [vmem:[%s0 + $0x150] sm:$0xff]
    %v89 = vld [vmem:[%s0 + $0x158] sm:$0xff]
    %v90 = vld [vmem:[%s0 + $0x160] sm:$0xff]
    %v91 = vld [vmem:[%s0 + $0x168] sm:$0xff]
    %v92 = vld [vmem:[%s0 + $0x170] sm:$0xff]
    %v93 = vld [vmem:[%s0 + $0x178] sm:$0xff]
    %v94 = vpack.c.bf16 %v49, %v46
    %v95 = vpack.c.bf16 %v50, %v47
    %v96 = vpack.c.bf16 %v51, %v48
    %v97 = vpack.c.bf16 %v55, %v52
    %v98 = vpack.c.bf16 %v56, %v53
    %v99 = vpack.c.bf16 %v57, %v54
    %v100 = vpack.c.bf16 %v61, %v58
    %v101 = vpack.c.bf16 %v62, %v59
    %v102 = vpack.c.bf16 %v63, %v60
    %v103 = vpack.c.bf16 %v67, %v64
    %v104 = vpack.c.bf16 %v68, %v65
    %v105 = vpack.c.bf16 %v69, %v66
    %v106 = vpack.c.bf16 %v73, %v70
    %v107 = vpack.c.bf16 %v74, %v71
    %v108 = vpack.c.bf16 %v75, %v72
    %v109 = vpack.c.bf16 %v79, %v76
    %v110 = vpack.c.bf16 %v80, %v77
    %v111 = vpack.c.bf16 %v81, %v78
    %v112 = vpack.c.bf16 %v85, %v82
    %v113 = vpack.c.bf16 %v86, %v83
    %v114 = vpack.c.bf16 %v87, %v84
    %v115 = vpack.c.bf16 %v91, %v88
    %v116 = vpack.c.bf16 %v92, %v89
    %v117 = vpack.c.bf16 %v93, %v90
    %v118 = vld [vmem:[%s3] sm:$0xff]
    %v119 = vld [vmem:[%s3 + $0x8] sm:$0xff]
    %v120 = vld [vmem:[%s3 + $0x10] sm:$0xff]
    %v121 = vld [vmem:[%s3 + $0x18] sm:$0xff]
    %v122 = vld [vmem:[%s3 + $0x20] sm:$0xff]
    %v123 = vld [vmem:[%s3 + $0x28] sm:$0xff]
    %v124 = vld [vmem:[%s3 + $0x30] sm:$0xff]
    %v125 = vld [vmem:[%s3 + $0x38] sm:$0xff]
    %v126 = vld [vmem:[%s3 + $0x40] sm:$0xff]
    %v127 = vld [vmem:[%s3 + $0x48] sm:$0xff]
    %v128 = vld [vmem:[%s3 + $0x50] sm:$0xff]
    %v129 = vld [vmem:[%s3 + $0x58] sm:$0xff]
    %v130 = vld [vmem:[%s3 + $0x60] sm:$0xff]
    %v131 = vld [vmem:[%s3 + $0x68] sm:$0xff]
    %v132 = vld [vmem:[%s3 + $0x70] sm:$0xff]
    %v133 = vld [vmem:[%s3 + $0x78] sm:$0xff]
    %v134 = vld [vmem:[%s3 + $0x80] sm:$0xff]
    %v135 = vld [vmem:[%s3 + $0x88] sm:$0xff]
    %v136 = vld [vmem:[%s3 + $0x90] sm:$0xff]
    %v137 = vld [vmem:[%s3 + $0x98] sm:$0xff]
    %v138 = vld [vmem:[%s3 + $0xa0] sm:$0xff]
    %v139 = vld [vmem:[%s3 + $0xa8] sm:$0xff]
    %v140 = vld [vmem:[%s3 + $0xb0] sm:$0xff]
    %v141 = vld [vmem:[%s3 + $0xb8] sm:$0xff]
    %v142 = vld [vmem:[%s3 + $0xc0] sm:$0xff]
    %v143 = vld [vmem:[%s3 + $0xc8] sm:$0xff]
    %v144 = vld [vmem:[%s3 + $0xd0] sm:$0xff]
    %v145 = vld [vmem:[%s3 + $0xd8] sm:$0xff]
    %v146 = vld [vmem:[%s3 + $0xe0] sm:$0xff]
    %v147 = vld [vmem:[%s3 + $0xe8] sm:$0xff]
    %v148 = vld [vmem:[%s3 + $0xf0] sm:$0xff]
    %v149 = vld [vmem:[%s3 + $0xf8] sm:$0xff]
    %v150 = vld [vmem:[%s3 + $0x100] sm:$0xff]
    %v151 = vld [vmem:[%s3 + $0x108] sm:$0xff]
    %v152 = vld [vmem:[%s3 + $0x110] sm:$0xff]
    %v153 = vld [vmem:[%s3 + $0x118] sm:$0xff]
    %v154 = vld [vmem:[%s3 + $0x120] sm:$0xff]
    %v155 = vld [vmem:[%s3 + $0x128] sm:$0xff]
    %v156 = vld [vmem:[%s3 + $0x130] sm:$0xff]
    %v157 = vld [vmem:[%s3 + $0x138] sm:$0xff]
    %v158 = vld [vmem:[%s4] sm:$0x3]
    %v160 = vlaneseq
    %v161 = vshrl.u32 %v160, 7
    %v162 = vsub.s32 0, %v161
    %v163 = vrot.slane %v158, %v162
    %v164 = vlaneseq
    %v165 = vshrl.u32 %v164, 7
    %v166 = vsub.s32 1, %v165
    %v167 = vrot.slane %v158, %v166
    %v210 = vunpack.c.l.b16 %v118
    %v211 = vunpack.c.h.b16 %v118
    %v212 = vunpack.c.l.b16 %v119
    %v213 = vunpack.c.h.b16 %v119
    %v214 = vunpack.c.l.b16 %v120
    %v215 = vunpack.c.h.b16 %v120
    %v216 = vunpack.c.l.b16 %v121
    %v217 = vunpack.c.h.b16 %v121
    %v218 = vunpack.c.l.b16 %v122
    %v219 = vunpack.c.h.b16 %v122
    %v220 = vunpack.c.l.b16 %v123
    %v221 = vunpack.c.h.b16 %v123
    %v222 = vunpack.c.l.b16 %v124
    %v223 = vunpack.c.h.b16 %v124
    %v224 = vunpack.c.l.b16 %v125
    %v225 = vunpack.c.h.b16 %v125
    %v226 = vunpack.c.l.b16 %v126
    %v227 = vunpack.c.h.b16 %v126
    %v228 = vunpack.c.l.b16 %v127
    %v229 = vunpack.c.h.b16 %v127
    %v230 = vunpack.c.l.b16 %v128
    %v231 = vunpack.c.h.b16 %v128
    %v232 = vunpack.c.l.b16 %v129
    %v233 = vunpack.c.h.b16 %v129
    %v234 = vunpack.c.l.b16 %v130
    %v235 = vunpack.c.h.b16 %v130
    %v236 = vunpack.c.l.b16 %v131
    %v237 = vunpack.c.h.b16 %v131
    %v238 = vunpack.c.l.b16 %v132
    %v239 = vunpack.c.h.b16 %v132
    %v240 = vunpack.c.l.b16 %v133
    %v241 = vunpack.c.h.b16 %v133
    %v242 = vunpack.c.l.b16 %v134
    %v243 = vunpack.c.h.b16 %v134
    %v244 = vunpack.c.l.b16 %v135
    %v245 = vunpack.c.h.b16 %v135
    %v246 = vunpack.c.l.b16 %v136
    %v247 = vunpack.c.h.b16 %v136
    %v248 = vunpack.c.l.b16 %v137
    %v249 = vunpack.c.h.b16 %v137
    %v250 = vunpack.c.l.b16 %v138
    %v251 = vunpack.c.h.b16 %v138
    %v252 = vunpack.c.l.b16 %v139
    %v253 = vunpack.c.h.b16 %v139
    %v254 = vunpack.c.l.b16 %v140
    %v255 = vunpack.c.h.b16 %v140
    %v256 = vunpack.c.l.b16 %v141
    %v257 = vunpack.c.h.b16 %v141
    %v258 = vunpack.c.l.b16 %v142
    %v259 = vunpack.c.h.b16 %v142
    %v260 = vunpack.c.l.b16 %v143
    %v261 = vunpack.c.h.b16 %v143
    %v262 = vunpack.c.l.b16 %v144
    %v263 = vunpack.c.h.b16 %v144
    %v264 = vunpack.c.l.b16 %v145
    %v265 = vunpack.c.h.b16 %v145
    %v266 = vunpack.c.l.b16 %v146
    %v267 = vunpack.c.h.b16 %v146
    %v268 = vunpack.c.l.b16 %v147
    %v269 = vunpack.c.h.b16 %v147
    %v270 = vunpack.c.l.b16 %v148
    %v271 = vunpack.c.h.b16 %v148
    %v272 = vunpack.c.l.b16 %v149
    %v273 = vunpack.c.h.b16 %v149
    %v274 = vunpack.c.l.b16 %v150
    %v275 = vunpack.c.h.b16 %v150
    %v276 = vunpack.c.l.b16 %v151
    %v277 = vunpack.c.h.b16 %v151
    %v278 = vunpack.c.l.b16 %v152
    %v279 = vunpack.c.h.b16 %v152
    %v280 = vunpack.c.l.b16 %v153
    %v281 = vunpack.c.h.b16 %v153
    %v282 = vunpack.c.l.b16 %v154
    %v283 = vunpack.c.h.b16 %v154
    %v284 = vunpack.c.l.b16 %v155
    %v285 = vunpack.c.h.b16 %v155
    %v286 = vunpack.c.l.b16 %v156
    %v287 = vunpack.c.h.b16 %v156
    %v288 = vunpack.c.l.b16 %v157
    %v289 = vunpack.c.h.b16 %v157
    %v290 = vpack.c.b16 %v212, %v210
    %v291 = vpack.c.b16 %v213, %v211
    %v292 = vpack.c.b16 %v216, %v214
    %v293 = vpack.c.b16 %v217, %v215
    %v294 = vpack.c.b16 %v220, %v218
    %v295 = vpack.c.b16 %v221, %v219
    %v296 = vpack.c.b16 %v224, %v222
    %v297 = vpack.c.b16 %v225, %v223
    %v298 = vpack.c.b16 %v228, %v226
    %v299 = vpack.c.b16 %v229, %v227
    %v300 = vpack.c.b16 %v232, %v230
    %v301 = vpack.c.b16 %v233, %v231
    %v302 = vpack.c.b16 %v236, %v234
    %v303 = vpack.c.b16 %v237, %v235
    %v304 = vpack.c.b16 %v240, %v238
    %v305 = vpack.c.b16 %v241, %v239
    %v306 = vpack.c.b16 %v244, %v242
    %v307 = vpack.c.b16 %v245, %v243
    %v308 = vpack.c.b16 %v248, %v246
    %v309 = vpack.c.b16 %v249, %v247
    %v310 = vpack.c.b16 %v252, %v250
    %v311 = vpack.c.b16 %v253, %v251
    %v312 = vpack.c.b16 %v256, %v254
    %v313 = vpack.c.b16 %v257, %v255
    %v314 = vpack.c.b16 %v260, %v258
    %v315 = vpack.c.b16 %v261, %v259
    %v316 = vpack.c.b16 %v264, %v262
    %v317 = vpack.c.b16 %v265, %v263
    %v318 = vpack.c.b16 %v268, %v266
    %v319 = vpack.c.b16 %v269, %v267
    %v320 = vpack.c.b16 %v272, %v270
    %v321 = vpack.c.b16 %v273, %v271
    %v322 = vpack.c.b16 %v276, %v274
    %v323 = vpack.c.b16 %v277, %v275
    %v324 = vpack.c.b16 %v280, %v278
    %v325 = vpack.c.b16 %v281, %v279
    %v326 = vpack.c.b16 %v284, %v282
    %v327 = vpack.c.b16 %v285, %v283
    %v328 = vpack.c.b16 %v288, %v286
    %v329 = vpack.c.b16 %v289, %v287
    %vm370 = vcmask 523264
    %v372 = vsel %vm370, %v96, 0
    %v375 = vsel %vm370, %v99, 0
    %v378 = vsel %vm370, %v102, 0
    %v381 = vsel %vm370, %v105, 0
    %v384 = vsel %vm370, %v108, 0
    %v387 = vsel %vm370, %v111, 0
    %v390 = vsel %vm370, %v114, 0
    %v393 = vsel %vm370, %v117, 0
    %395 = vmatprep.subr.bf16.mxu0 %v305
    %396 = vmatpush1.bf16.msra.mxu0 %v304
    %397 = vmatprep.subr.bf16.mxu0 %v303
    %398 = vmatpush1.bf16.msra.mxu0 %v302
    %399 = vmatprep.subr.bf16.mxu0 %v301
    %400 = vmatpush1.bf16.msra.mxu0 %v300
    %401 = vmatprep.subr.bf16.mxu0 %v299
    %402 = vmatpush1.bf16.msra.mxu0 %v298
    %403 = vmatprep.subr.bf16.mxu0 %v297
    %404 = vmatpush1.bf16.msra.mxu0 %v296
    %405 = vmatprep.subr.bf16.mxu0 %v295
    %406 = vmatpush1.bf16.msra.mxu0 %v294
    %407 = vmatprep.subr.bf16.mxu0 %v293
    %408 = vmatpush1.bf16.msra.mxu0 %v292
    %409 = vmatprep.subr.bf16.mxu0 %v291
    %410 = vmatpush1.bf16.msra.mxu0 %v290
    %411 = vmatprep.subr.bf16.mxu0 %v321
    %412 = vmatpush2.bf16.msra.mxu0 %v320
    %413 = vmatprep.subr.bf16.mxu0 %v319
    %414 = vmatpush2.bf16.msra.mxu0 %v318
    %415 = vmatprep.subr.bf16.mxu0 %v317
    %416 = vmatpush2.bf16.msra.mxu0 %v316
    %417 = vmatprep.subr.bf16.mxu0 %v315
    %418 = vmatpush2.bf16.msra.mxu0 %v314
    %419 = vmatprep.subr.bf16.mxu0 %v313
    %420 = vmatpush2.bf16.msra.mxu0 %v312
    %421 = vmatprep.subr.bf16.mxu0 %v311
    %422 = vmatpush2.bf16.msra.mxu0 %v310
    %423 = vmatprep.subr.bf16.mxu0 %v309
    %424 = vmatpush2.bf16.msra.mxu0 %v308
    %425 = vmatprep.subr.bf16.mxu0 %v307
    %426 = vmatpush2.bf16.msra.mxu0 %v306
    %427 = vmatprep.mubr.bf16.mxu0 %v95
    %428 = vmatmul.mubr.bf16.gmra.mxu0 %v94
    %v429 = vpop.f32.mrf.mxu0
    %v430 = vadd.f32 %v163, %v429
    %v431 = vpop.f32.mrf.mxu0
    %v432 = vadd.f32 %v167, %v431
    %v433 = vpop.f32.mrf.mxu0
    %v434 = vadd.f32 %v163, %v433
    %v435 = vpop.f32.mrf.mxu0
    %v436 = vadd.f32 %v167, %v435
    %437 = vmatprep.mubr.bf16.mxu0 %v98
    %438 = vmatmul.mubr.bf16.gmra.mxu0 %v97
    %v439 = vpop.f32.mrf.mxu0
    %v440 = vadd.f32 %v163, %v439
    %v441 = vpop.f32.mrf.mxu0
    %v442 = vadd.f32 %v167, %v441
    %v443 = vpop.f32.mrf.mxu0
    %v444 = vadd.f32 %v163, %v443
    %v445 = vpop.f32.mrf.mxu0
    %v446 = vadd.f32 %v167, %v445
    %447 = vmatprep.mubr.bf16.mxu0 %v101
    %448 = vmatmul.mubr.bf16.gmra.mxu0 %v100
    %v449 = vpop.f32.mrf.mxu0
    %v450 = vadd.f32 %v163, %v449
    %v451 = vpop.f32.mrf.mxu0
    %v452 = vadd.f32 %v167, %v451
    %v453 = vpop.f32.mrf.mxu0
    %v454 = vadd.f32 %v163, %v453
    %v455 = vpop.f32.mrf.mxu0
    %v456 = vadd.f32 %v167, %v455
    %457 = vmatprep.mubr.bf16.mxu0 %v104
    %458 = vmatmul.mubr.bf16.gmra.mxu0 %v103
    %v459 = vpop.f32.mrf.mxu0
    %v460 = vadd.f32 %v163, %v459
    %v461 = vpop.f32.mrf.mxu0
    %v462 = vadd.f32 %v167, %v461
    %v463 = vpop.f32.mrf.mxu0
    %v464 = vadd.f32 %v163, %v463
    %v465 = vpop.f32.mrf.mxu0
    %v466 = vadd.f32 %v167, %v465
    %467 = vmatprep.mubr.bf16.mxu0 %v107
    %468 = vmatmul.mubr.bf16.gmra.mxu0 %v106
    %v469 = vpop.f32.mrf.mxu0
    %v470 = vadd.f32 %v163, %v469
    %v471 = vpop.f32.mrf.mxu0
    %v472 = vadd.f32 %v167, %v471
    %v473 = vpop.f32.mrf.mxu0
    %v474 = vadd.f32 %v163, %v473
    %v475 = vpop.f32.mrf.mxu0
    %v476 = vadd.f32 %v167, %v475
    %477 = vmatprep.mubr.bf16.mxu0 %v110
    %478 = vmatmul.mubr.bf16.gmra.mxu0 %v109
    %v479 = vpop.f32.mrf.mxu0
    %v480 = vadd.f32 %v163, %v479
    %v481 = vpop.f32.mrf.mxu0
    %v482 = vadd.f32 %v167, %v481
    %v483 = vpop.f32.mrf.mxu0
    %v484 = vadd.f32 %v163, %v483
    %v485 = vpop.f32.mrf.mxu0
    %v486 = vadd.f32 %v167, %v485
    %487 = vmatprep.mubr.bf16.mxu0 %v113
    %488 = vmatmul.mubr.bf16.gmra.mxu0 %v112
    %v489 = vpop.f32.mrf.mxu0
    %v490 = vadd.f32 %v163, %v489
    %v491 = vpop.f32.mrf.mxu0
    %v492 = vadd.f32 %v167, %v491
    %v493 = vpop.f32.mrf.mxu0
    %v494 = vadd.f32 %v163, %v493
    %v495 = vpop.f32.mrf.mxu0
    %v496 = vadd.f32 %v167, %v495
    %497 = vmatprep.mubr.bf16.mxu0 %v116
    %498 = vmatmul.mubr.bf16.gmra.mxu0 %v115
    %v499 = vpop.f32.mrf.mxu0
    %v500 = vadd.f32 %v163, %v499
    %v501 = vpop.f32.mrf.mxu0
    %v502 = vadd.f32 %v167, %v501
    %v503 = vpop.f32.mrf.mxu0
    %v504 = vadd.f32 %v163, %v503
    %v505 = vpop.f32.mrf.mxu0
    %v506 = vadd.f32 %v167, %v505
    %507 = vdwg.mxu0
    %508 = vmatprep.subr.bf16.mxu0 0
    %509 = vmatpush1.bf16.msra.mxu0 0
    %510 = vmatprep.subr.bf16.mxu0 0
    %511 = vmatpush1.bf16.msra.mxu0 0
    %512 = vmatprep.subr.bf16.mxu0 0
    %513 = vmatpush1.bf16.msra.mxu0 0
    %514 = vmatprep.subr.bf16.mxu0 0
    %515 = vmatpush1.bf16.msra.mxu0 0
    %516 = vmatprep.subr.bf16.mxu0 %v329
    %517 = vmatpush1.bf16.msra.mxu0 %v328
    %518 = vmatprep.subr.bf16.mxu0 %v327
    %519 = vmatpush1.bf16.msra.mxu0 %v326
    %520 = vmatprep.subr.bf16.mxu0 %v325
    %521 = vmatpush1.bf16.msra.mxu0 %v324
    %522 = vmatprep.subr.bf16.mxu0 %v323
    %523 = vmatpush1.bf16.msra.mxu0 %v322
    %524 = vmatprep.subr.bf16.mxu0 0
    %525 = vmatpush2.bf16.msra.mxu0 0
    %526 = vmatprep.subr.bf16.mxu0 0
    %527 = vmatpush2.bf16.msra.mxu0 0
    %528 = vmatprep.subr.bf16.mxu0 0
    %529 = vmatpush2.bf16.msra.mxu0 0
    %530 = vmatprep.subr.bf16.mxu0 0
    %531 = vmatpush2.bf16.msra.mxu0 0
    %532 = vmatprep.subr.bf16.mxu0 0
    %533 = vmatpush2.bf16.msra.mxu0 0
    %534 = vmatprep.subr.bf16.mxu0 0
    %535 = vmatpush2.bf16.msra.mxu0 0
    %536 = vmatprep.subr.bf16.mxu0 0
    %537 = vmatpush2.bf16.msra.mxu0 0
    %538 = vmatprep.subr.bf16.mxu0 0
    %539 = vmatpush2.bf16.msra.mxu0 0
    %540 = vmatprep.mubr.bf16.mxu0 0
    %541 = vmatmul.mubr.bf16.gmra.mxu0 %v372
    %v542 = vpop.f32.mrf.mxu0
    %v543 = vadd.f32 %v430, %v542
    %v544 = vpop.f32.mrf.mxu0
    %v545 = vadd.f32 %v432, %v544
    %v546 = vpop.f32.mrf.mxu0
    %v547 = vadd.f32 %v434, %v546
    %v548 = vpop.f32.mrf.mxu0
    %v549 = vadd.f32 %v436, %v548
    %550 = vmatprep.mubr.bf16.mxu0 0
    %551 = vmatmul.mubr.bf16.gmra.mxu0 %v375
    %v552 = vpop.f32.mrf.mxu0
    %v553 = vadd.f32 %v440, %v552
    %v554 = vpop.f32.mrf.mxu0
    %v555 = vadd.f32 %v442, %v554
    %v556 = vpop.f32.mrf.mxu0
    %v557 = vadd.f32 %v444, %v556
    %v558 = vpop.f32.mrf.mxu0
    %v559 = vadd.f32 %v446, %v558
    %560 = vmatprep.mubr.bf16.mxu0 0
    %561 = vmatmul.mubr.bf16.gmra.mxu0 %v378
    %v562 = vpop.f32.mrf.mxu0
    %v563 = vadd.f32 %v450, %v562
    %v564 = vpop.f32.mrf.mxu0
    %v565 = vadd.f32 %v452, %v564
    %v566 = vpop.f32.mrf.mxu0
    %v567 = vadd.f32 %v454, %v566
    %v568 = vpop.f32.mrf.mxu0
    %v569 = vadd.f32 %v456, %v568
    %570 = vmatprep.mubr.bf16.mxu0 0
    %571 = vmatmul.mubr.bf16.gmra.mxu0 %v381
    %v572 = vpop.f32.mrf.mxu0
    %v573 = vadd.f32 %v460, %v572
    %v574 = vpop.f32.mrf.mxu0
    %v575 = vadd.f32 %v462, %v574
    %v576 = vpop.f32.mrf.mxu0
    %v577 = vadd.f32 %v464, %v576
    %v578 = vpop.f32.mrf.mxu0
    %v579 = vadd.f32 %v466, %v578
    %580 = vmatprep.mubr.bf16.mxu0 0
    %581 = vmatmul.mubr.bf16.gmra.mxu0 %v384
    %v582 = vpop.f32.mrf.mxu0
    %v583 = vadd.f32 %v470, %v582
    %v584 = vpop.f32.mrf.mxu0
    %v585 = vadd.f32 %v472, %v584
    %v586 = vpop.f32.mrf.mxu0
    %v587 = vadd.f32 %v474, %v586
    %v588 = vpop.f32.mrf.mxu0
    %v589 = vadd.f32 %v476, %v588
    %590 = vmatprep.mubr.bf16.mxu0 0
    %591 = vmatmul.mubr.bf16.gmra.mxu0 %v387
    %v592 = vpop.f32.mrf.mxu0
    %v593 = vadd.f32 %v480, %v592
    %v594 = vpop.f32.mrf.mxu0
    %v595 = vadd.f32 %v482, %v594
    %v596 = vpop.f32.mrf.mxu0
    %v597 = vadd.f32 %v484, %v596
    %v598 = vpop.f32.mrf.mxu0
    %v599 = vadd.f32 %v486, %v598
    %600 = vmatprep.mubr.bf16.mxu0 0
    %601 = vmatmul.mubr.bf16.gmra.mxu0 %v390
    %v602 = vpop.f32.mrf.mxu0
    %v603 = vadd.f32 %v490, %v602
    %v604 = vpop.f32.mrf.mxu0
    %v605 = vadd.f32 %v492, %v604
    %v606 = vpop.f32.mrf.mxu0
    %v607 = vadd.f32 %v494, %v606
    %v608 = vpop.f32.mrf.mxu0
    %v609 = vadd.f32 %v496, %v608
    %610 = vmatprep.mubr.bf16.mxu0 0
    %611 = vmatmul.mubr.bf16.gmra.mxu0 %v393
    %v612 = vpop.f32.mrf.mxu0
    %v613 = vadd.f32 %v500, %v612
    %v614 = vpop.f32.mrf.mxu0
    %v615 = vadd.f32 %v502, %v614
    %v616 = vpop.f32.mrf.mxu0
    %v617 = vadd.f32 %v504, %v616
    %v618 = vpop.f32.mrf.mxu0
    %v619 = vadd.f32 %v506, %v618
    %620 = vdwg.mxu0
    %v621 = vmax.f32 %v543, 0.0
    %v622 = vmax.f32 %v545, 0.0
    %v623 = vmax.f32 %v547, 0.0
    %v624 = vmax.f32 %v549, 0.0
    %v625 = vmax.f32 %v553, 0.0
    %v626 = vmax.f32 %v555, 0.0
    %v627 = vmax.f32 %v557, 0.0
    %v628 = vmax.f32 %v559, 0.0
    %v629 = vmax.f32 %v563, 0.0
    %v630 = vmax.f32 %v565, 0.0
    %v631 = vmax.f32 %v567, 0.0
    %v632 = vmax.f32 %v569, 0.0
    %v633 = vmax.f32 %v573, 0.0
    %v634 = vmax.f32 %v575, 0.0
    %v635 = vmax.f32 %v577, 0.0
    %v636 = vmax.f32 %v579, 0.0
    %v637 = vmax.f32 %v583, 0.0
    %v638 = vmax.f32 %v585, 0.0
    %v639 = vmax.f32 %v587, 0.0
    %v640 = vmax.f32 %v589, 0.0
    %v641 = vmax.f32 %v593, 0.0
    %v642 = vmax.f32 %v595, 0.0
    %v643 = vmax.f32 %v597, 0.0
    %v644 = vmax.f32 %v599, 0.0
    %v645 = vmax.f32 %v603, 0.0
    %v646 = vmax.f32 %v605, 0.0
    %v647 = vmax.f32 %v607, 0.0
    %v648 = vmax.f32 %v609, 0.0
    %v649 = vmax.f32 %v613, 0.0
    %v650 = vmax.f32 %v615, 0.0
    %v651 = vmax.f32 %v617, 0.0
    %v652 = vmax.f32 %v619, 0.0
    %v653 = vpack.c.bf16 %v623, %v621
    %v654 = vpack.c.bf16 %v624, %v622
    %v655 = vpack.c.bf16 %v627, %v625
    %v656 = vpack.c.bf16 %v628, %v626
    %v657 = vpack.c.bf16 %v631, %v629
    %v658 = vpack.c.bf16 %v632, %v630
    %v659 = vpack.c.bf16 %v635, %v633
    %v660 = vpack.c.bf16 %v636, %v634
    %v661 = vpack.c.bf16 %v639, %v637
    %v662 = vpack.c.bf16 %v640, %v638
    %v663 = vpack.c.bf16 %v643, %v641
    %v664 = vpack.c.bf16 %v644, %v642
    %v665 = vpack.c.bf16 %v647, %v645
    %v666 = vpack.c.bf16 %v648, %v646
    %v667 = vpack.c.bf16 %v651, %v649
    %v668 = vpack.c.bf16 %v652, %v650
    %v677 = vunpack.c.l.b16 %v654
    %v678 = vunpack.c.h.b16 %v654
    %v679 = vunpack.c.l.b16 %v656
    %v680 = vunpack.c.h.b16 %v656
    %v681 = vunpack.c.l.b16 %v658
    %v682 = vunpack.c.h.b16 %v658
    %v683 = vunpack.c.l.b16 %v660
    %v684 = vunpack.c.h.b16 %v660
    %v685 = vunpack.c.l.b16 %v662
    %v686 = vunpack.c.h.b16 %v662
    %v687 = vunpack.c.l.b16 %v664
    %v688 = vunpack.c.h.b16 %v664
    %v689 = vunpack.c.l.b16 %v666
    %v690 = vunpack.c.h.b16 %v666
    %v691 = vunpack.c.l.b16 %v668
    %v692 = vunpack.c.h.b16 %v668
    %v693 = vpack.c.b16 %v677, %v677
    %v694 = vpack.c.b16 %v678, %v678
    %v695 = vpack.c.b16 %v679, %v679
    %v696 = vpack.c.b16 %v680, %v680
    %v697 = vpack.c.b16 %v681, %v681
    %v698 = vpack.c.b16 %v682, %v682
    %v699 = vpack.c.b16 %v683, %v683
    %v700 = vpack.c.b16 %v684, %v684
    %v701 = vpack.c.b16 %v685, %v685
    %v702 = vpack.c.b16 %v686, %v686
    %v703 = vpack.c.b16 %v687, %v687
    %v704 = vpack.c.b16 %v688, %v688
    %v705 = vpack.c.b16 %v689, %v689
    %v706 = vpack.c.b16 %v690, %v690
    %v707 = vpack.c.b16 %v691, %v691
    %v708 = vpack.c.b16 %v692, %v692
    %vm725 = vcmask 257024
    %726 = vst.msk [vmem:[#allocation3] sm:$0xf] %vm725, %v693
    %727 = vst.msk [vmem:[#allocation3 + $0x4] sm:$0xf] %vm725, %v694
    %728 = vst.msk [vmem:[#allocation3 + $0x8] sm:$0xf] %vm725, %v695
    %729 = vst.msk [vmem:[#allocation3 + $0xc] sm:$0xf] %vm725, %v696
    %730 = vst.msk [vmem:[#allocation3 + $0x10] sm:$0xf] %vm725, %v697
    %731 = vst.msk [vmem:[#allocation3 + $0x14] sm:$0xf] %vm725, %v698
    %732 = vst.msk [vmem:[#allocation3 + $0x18] sm:$0xf] %vm725, %v699
    %733 = vst.msk [vmem:[#allocation3 + $0x1c] sm:$0xf] %vm725, %v700
    %734 = vst.msk [vmem:[#allocation3 + $0x20] sm:$0xf] %vm725, %v701
    %735 = vst.msk [vmem:[#allocation3 + $0x24] sm:$0xf] %vm725, %v702
    %736 = vst.msk [vmem:[#allocation3 + $0x28] sm:$0xf] %vm725, %v703
    %737 = vst.msk [vmem:[#allocation3 + $0x2c] sm:$0xf] %vm725, %v704
    %738 = vst.msk [vmem:[#allocation3 + $0x30] sm:$0xf] %vm725, %v705
    %739 = vst.msk [vmem:[#allocation3 + $0x34] sm:$0xf] %vm725, %v706
    %740 = vst.msk [vmem:[#allocation3 + $0x38] sm:$0xf] %vm725, %v707
    %741 = vst.msk [vmem:[#allocation3 + $0x3c] sm:$0xf] %vm725, %v708
    %v742 = vld [vmem:[%s1] sm:$0xf]
    %v743 = vld [vmem:[%s1 + $0x4] sm:$0xf]
    %v744 = vld [vmem:[%s1 + $0x8] sm:$0xf]
    %v745 = vld [vmem:[%s1 + $0xc] sm:$0xf]
    %v746 = vld [vmem:[%s1 + $0x10] sm:$0xf]
    %v747 = vld [vmem:[%s1 + $0x14] sm:$0xf]
    %v748 = vld [vmem:[%s1 + $0x18] sm:$0xf]
    %v749 = vld [vmem:[%s1 + $0x1c] sm:$0xf]
    %751 = vset.pattern.permute.xlu0 0
    %752 = vperm.xlu0 %751, %v742
    %v753 = vpop.permute.xlu0 %752
    %v756 = vunpack.c.l.s4 839922192
    %v757 = vunpack.c.0.s8 %v756
    %v758 = vlaneseq
    %v759 = vshrl.u32 %v758, 7
    %v760 = vsub.s32 %v757, %v759
    %v761 = vrot.slane %v753, %v760
    %763 = vset.pattern.permute.xlu0 0
    %764 = vperm.xlu0 %763, %v743
    %v765 = vpop.permute.xlu0 %764
    %v768 = vunpack.c.l.s4 839922192
    %v769 = vunpack.c.0.s8 %v768
    %v770 = vlaneseq
    %v771 = vshrl.u32 %v770, 7
    %v772 = vsub.s32 %v769, %v771
    %v773 = vrot.slane %v765, %v772
    %775 = vset.pattern.permute.xlu0 0
    %776 = vperm.xlu0 %775, %v744
    %v777 = vpop.permute.xlu0 %776
    %v780 = vunpack.c.l.s4 839922192
    %v781 = vunpack.c.0.s8 %v780
    %v782 = vlaneseq
    %v783 = vshrl.u32 %v782, 7
    %v784 = vsub.s32 %v781, %v783
    %v785 = vrot.slane %v777, %v784
    %787 = vset.pattern.permute.xlu0 0
    %788 = vperm.xlu0 %787, %v745
    %v789 = vpop.permute.xlu0 %788
    %v792 = vunpack.c.l.s4 839922192
    %v793 = vunpack.c.0.s8 %v792
    %v794 = vlaneseq
    %v795 = vshrl.u32 %v794, 7
    %v796 = vsub.s32 %v793, %v795
    %v797 = vrot.slane %v789, %v796
    %799 = vset.pattern.permute.xlu0 0
    %800 = vperm.xlu0 %799, %v746
    %v801 = vpop.permute.xlu0 %800
    %v804 = vunpack.c.l.s4 839922192
    %v805 = vunpack.c.0.s8 %v804
    %v806 = vlaneseq
    %v807 = vshrl.u32 %v806, 7
    %v808 = vsub.s32 %v805, %v807
    %v809 = vrot.slane %v801, %v808
    %811 = vset.pattern.permute.xlu0 0
    %812 = vperm.xlu0 %811, %v747
    %v813 = vpop.permute.xlu0 %812
    %v816 = vunpack.c.l.s4 839922192
    %v817 = vunpack.c.0.s8 %v816
    %v818 = vlaneseq
    %v819 = vshrl.u32 %v818, 7
    %v820 = vsub.s32 %v817, %v819
    %v821 = vrot.slane %v813, %v820
    %823 = vset.pattern.permute.xlu0 0
    %824 = vperm.xlu0 %823, %v748
    %v825 = vpop.permute.xlu0 %824
    %v828 = vunpack.c.l.s4 839922192
    %v829 = vunpack.c.0.s8 %v828
    %v830 = vlaneseq
    %v831 = vshrl.u32 %v830, 7
    %v832 = vsub.s32 %v829, %v831
    %v833 = vrot.slane %v825, %v832
    %835 = vset.pattern.permute.xlu0 0
    %836 = vperm.xlu0 %835, %v749
    %v837 = vpop.permute.xlu0 %836
    %v840 = vunpack.c.l.s4 839922192
    %v841 = vunpack.c.0.s8 %v840
    %v842 = vlaneseq
    %v843 = vshrl.u32 %v842, 7
    %v844 = vsub.s32 %v841, %v843
    %v845 = vrot.slane %v837, %v844
    %v846 = vld [vmem:[%s2] sm:$0xf]
    %v847 = vld [vmem:[%s2 + $0x4] sm:$0xf]
    %v848 = vld [vmem:[%s2 + $0x8] sm:$0xf]
    %v849 = vld [vmem:[%s2 + $0xc] sm:$0xf]
    %v850 = vld [vmem:[%s2 + $0x10] sm:$0xf]
    %v851 = vld [vmem:[%s2 + $0x14] sm:$0xf]
    %v852 = vld [vmem:[%s2 + $0x18] sm:$0xf]
    %v853 = vld [vmem:[%s2 + $0x1c] sm:$0xf]
    %855 = vset.pattern.permute.xlu0 0
    %856 = vperm.xlu0 %855, %v846
    %v857 = vpop.permute.xlu0 %856
    %v860 = vunpack.c.l.s4 839922192
    %v861 = vunpack.c.0.s8 %v860
    %v862 = vlaneseq
    %v863 = vshrl.u32 %v862, 7
    %v864 = vsub.s32 %v861, %v863
    %v865 = vrot.slane %v857, %v864
    %867 = vset.pattern.permute.xlu0 0
    %868 = vperm.xlu0 %867, %v847
    %v869 = vpop.permute.xlu0 %868
    %v872 = vunpack.c.l.s4 839922192
    %v873 = vunpack.c.0.s8 %v872
    %v874 = vlaneseq
    %v875 = vshrl.u32 %v874, 7
    %v876 = vsub.s32 %v873, %v875
    %v877 = vrot.slane %v869, %v876
    %879 = vset.pattern.permute.xlu0 0
    %880 = vperm.xlu0 %879, %v848
    %v881 = vpop.permute.xlu0 %880
    %v884 = vunpack.c.l.s4 839922192
    %v885 = vunpack.c.0.s8 %v884
    %v886 = vlaneseq
    %v887 = vshrl.u32 %v886, 7
    %v888 = vsub.s32 %v885, %v887
    %v889 = vrot.slane %v881, %v888
    %891 = vset.pattern.permute.xlu0 0
    %892 = vperm.xlu0 %891, %v849
    %v893 = vpop.permute.xlu0 %892
    %v896 = vunpack.c.l.s4 839922192
    %v897 = vunpack.c.0.s8 %v896
    %v898 = vlaneseq
    %v899 = vshrl.u32 %v898, 7
    %v900 = vsub.s32 %v897, %v899
    %v901 = vrot.slane %v893, %v900
    %903 = vset.pattern.permute.xlu0 0
    %904 = vperm.xlu0 %903, %v850
    %v905 = vpop.permute.xlu0 %904
    %v908 = vunpack.c.l.s4 839922192
    %v909 = vunpack.c.0.s8 %v908
    %v910 = vlaneseq
    %v911 = vshrl.u32 %v910, 7
    %v912 = vsub.s32 %v909, %v911
    %v913 = vrot.slane %v905, %v912
    %915 = vset.pattern.permute.xlu0 0
    %916 = vperm.xlu0 %915, %v851
    %v917 = vpop.permute.xlu0 %916
    %v920 = vunpack.c.l.s4 839922192
    %v921 = vunpack.c.0.s8 %v920
    %v922 = vlaneseq
    %v923 = vshrl.u32 %v922, 7
    %v924 = vsub.s32 %v921, %v923
    %v925 = vrot.slane %v917, %v924
    %927 = vset.pattern.permute.xlu0 0
    %928 = vperm.xlu0 %927, %v852
    %v929 = vpop.permute.xlu0 %928
    %v932 = vunpack.c.l.s4 839922192
    %v933 = vunpack.c.0.s8 %v932
    %v934 = vlaneseq
    %v935 = vshrl.u32 %v934, 7
    %v936 = vsub.s32 %v933, %v935
    %v937 = vrot.slane %v929, %v936
    %939 = vset.pattern.permute.xlu0 0
    %940 = vperm.xlu0 %939, %v853
    %v941 = vpop.permute.xlu0 %940
    %v944 = vunpack.c.l.s4 839922192
    %v945 = vunpack.c.0.s8 %v944
    %v946 = vlaneseq
    %v947 = vshrl.u32 %v946, 7
    %v948 = vsub.s32 %v945, %v947
    %v949 = vrot.slane %v941, %v948
    %vm950 = vcmask 1043459
    %vm951 = vsmask.f32 7950
    %vm952 = vmand %vm950, %vm951
    %vm953 = vcmask 523271
    %vm954 = vsmask.f32 7966
    %vm955 = vmand %vm953, %vm954
    %vm956 = vmor %vm955, %vm952
    %v957 = vld [vmem:[#allocation2 + $0x8] sm:$0x88]
    %v958 = vsel %vm956, 0, %v957
    %959 = vst [vmem:[#allocation2 + $0x8] sm:$0x88] %v958
    %vm960 = vcmask 1043456
    %vm961 = vcmask 523268
    %vm962 = vmor %vm961, %vm960
    %963 = vst.msk [vmem:[#allocation2 + $0x10] sm:$0xff] %vm962, 0
    %964 = vst.msk [vmem:[#allocation2 + $0x48] sm:$0xff] %vm962, 0
    %vm965 = vcmask 1040384
    %vm966 = vsmask.f32 256
    %vm967 = vmand %vm965, %vm966
    %vm968 = vcmask 520196
    %vm969 = vsmask.f32 4352
    %vm970 = vmand %vm968, %vm969
    %vm971 = vmor %vm970, %vm967
    %v972 = vld [vmem:[#allocation2 + $0x50] sm:$0x11]
    %v973 = vsel %vm971, 0, %v972
    %974 = vst [vmem:[#allocation2 + $0x50] sm:$0x11] %v973
    %v979 = vunpack.c.l.b16 %v653
    %v980 = vunpack.c.h.b16 %v653
    %v981 = vunpack.c.l.b16 %v655
    %v982 = vunpack.c.h.b16 %v655
    %v983 = vunpack.c.l.b16 %v657
    %v984 = vunpack.c.h.b16 %v657
    %v985 = vunpack.c.l.b16 %v659
    %v986 = vunpack.c.h.b16 %v659
    %v987 = vpack.c.b16 %v979, %v979
    %v988 = vpack.c.b16 %v980, %v980
    %v989 = vpack.c.b16 %v981, %v981
    %v990 = vpack.c.b16 %v982, %v982
    %v991 = vpack.c.b16 %v983, %v983
    %v992 = vpack.c.b16 %v984, %v984
    %v993 = vpack.c.b16 %v985, %v985
    %v994 = vpack.c.b16 %v986, %v986
    %vm1003 = vcmask 519168
    %1004 = vst.msk [vmem:[#allocation2 + $0x18] sm:$0xf] %vm1003, %v987
    %1005 = vst.msk [vmem:[#allocation2 + $0x20] sm:$0xf] %vm1003, %v988
    %1006 = vst.msk [vmem:[#allocation2 + $0x28] sm:$0xf] %vm1003, %v989
    %1007 = vst.msk [vmem:[#allocation2 + $0x30] sm:$0xf] %vm1003, %v990
    %1008 = vst.msk [vmem:[#allocation2 + $0x38] sm:$0xf] %vm1003, %v991
    %1009 = vst.msk [vmem:[#allocation2 + $0x40] sm:$0xf] %vm1003, %v992
    %1010 = vst.msk [vmem:[#allocation2 + $0x48] sm:$0xf] %vm1003, %v993
    %1011 = vst.msk [vmem:[#allocation2 + $0x50] sm:$0xf] %vm1003, %v994
    %1012 = vrot.lane.b32.xlu0 %v987, 64
    %v1013 = vpop.permute.xlu0 %1012
    %1014 = vrot.lane.b32.xlu0 %v988, 64
    %v1015 = vpop.permute.xlu0 %1014
    %1016 = vrot.lane.b32.xlu0 %v989, 64
    %v1017 = vpop.permute.xlu0 %1016
    %1018 = vrot.lane.b32.xlu0 %v990, 64
    %v1019 = vpop.permute.xlu0 %1018
    %1020 = vrot.lane.b32.xlu0 %v991, 64
    %v1021 = vpop.permute.xlu0 %1020
    %1022 = vrot.lane.b32.xlu0 %v992, 64
    %v1023 = vpop.permute.xlu0 %1022
    %1024 = vrot.lane.b32.xlu0 %v993, 64
    %v1025 = vpop.permute.xlu0 %1024
    %1026 = vrot.lane.b32.xlu0 %v994, 64
    %v1027 = vpop.permute.xlu0 %1026
    %vm1036 = vcmask 1043968
    %1037 = vst.msk [vmem:[#allocation2 + $0x10] sm:$0xf] %vm1036, %v1013
    %1038 = vst.msk [vmem:[#allocation2 + $0x18] sm:$0xf] %vm1036, %v1015
    %1039 = vst.msk [vmem:[#allocation2 + $0x20] sm:$0xf] %vm1036, %v1017
    %1040 = vst.msk [vmem:[#allocation2 + $0x28] sm:$0xf] %vm1036, %v1019
    %1041 = vst.msk [vmem:[#allocation2 + $0x30] sm:$0xf] %vm1036, %v1021
    %1042 = vst.msk [vmem:[#allocation2 + $0x38] sm:$0xf] %vm1036, %v1023
    %1043 = vst.msk [vmem:[#allocation2 + $0x40] sm:$0xf] %vm1036, %v1025
    %1044 = vst.msk [vmem:[#allocation2 + $0x48] sm:$0xf] %vm1036, %v1027
    %1045 = vst.msk [vmem:[#allocation2 + $0xc] sm:$0xf] %vm1003, %v987
    %1046 = vst.msk [vmem:[#allocation2 + $0x14] sm:$0xf] %vm1003, %v988
    %1047 = vst.msk [vmem:[#allocation2 + $0x1c] sm:$0xf] %vm1003, %v989
    %1048 = vst.msk [vmem:[#allocation2 + $0x24] sm:$0xf] %vm1003, %v990
    %1049 = vst.msk [vmem:[#allocation2 + $0x2c] sm:$0xf] %vm1003, %v991
    %1050 = vst.msk [vmem:[#allocation2 + $0x34] sm:$0xf] %vm1003, %v992
    %1051 = vst.msk [vmem:[#allocation2 + $0x3c] sm:$0xf] %vm1003, %v993
    %1052 = vst.msk [vmem:[#allocation2 + $0x44] sm:$0xf] %vm1003, %v994
    %v1053 = vld [vmem:[#allocation2 + $0x8] sm:$0x88]
    %v1054 = vld [vmem:[#allocation2 + $0x10] sm:$0xff]
    %v1055 = vld [vmem:[#allocation2 + $0x18] sm:$0xff]
    %v1056 = vld [vmem:[#allocation2 + $0x20] sm:$0xff]
    %v1057 = vld [vmem:[#allocation2 + $0x28] sm:$0xff]
    %v1058 = vld [vmem:[#allocation2 + $0x30] sm:$0xff]
    %v1059 = vld [vmem:[#allocation2 + $0x38] sm:$0xff]
    %v1060 = vld [vmem:[#allocation2 + $0x40] sm:$0xff]
    %v1061 = vld [vmem:[#allocation2 + $0x48] sm:$0xff]
    %vm1062 = vsmask.f32 3328
    %vm1063 = vsmask.f32 7440
    %vm1064 = vmor %vm1062, %vm1063
    %v1066 = vshll.u32 %v761, 16
    %v1068 = vrot.slane %v1066, 5
    %v1069 = vshrl.u32 %v761, 16
    %v1071 = vrot.slane %v1069, 4
    %v1072 = vor.u32 %v1071, %v1068
    %v1073 = vrot.slane %v1072, 4
    %v1075 = vshll.u32 %v773, 16
    %v1077 = vrot.slane %v1075, 5
    %v1078 = vsel %vm1064, %v1073, %v1077
    %v1079 = vshrl.u32 %v773, 16
    %v1081 = vrot.slane %v1079, 4
    %v1082 = vor.u32 %v1081, %v1077
    %v1083 = vrot.slane %v1082, 4
    %v1085 = vshll.u32 %v785, 16
    %v1087 = vrot.slane %v1085, 5
    %v1088 = vsel %vm1064, %v1083, %v1087
    %v1089 = vshrl.u32 %v785, 16
    %v1091 = vrot.slane %v1089, 4
    %v1092 = vor.u32 %v1091, %v1087
    %v1093 = vrot.slane %v1092, 4
    %v1095 = vshll.u32 %v797, 16
    %v1097 = vrot.slane %v1095, 5
    %v1098 = vsel %vm1064, %v1093, %v1097
    %v1099 = vshrl.u32 %v797, 16
    %v1101 = vrot.slane %v1099, 4
    %v1102 = vor.u32 %v1101, %v1097
    %v1103 = vrot.slane %v1102, 4
    %v1105 = vshll.u32 %v809, 16
    %v1107 = vrot.slane %v1105, 5
    %v1108 = vsel %vm1064, %v1103, %v1107
    %v1109 = vshrl.u32 %v809, 16
    %v1111 = vrot.slane %v1109, 4
    %v1112 = vor.u32 %v1111, %v1107
    %v1113 = vrot.slane %v1112, 4
    %v1115 = vshll.u32 %v821, 16
    %v1117 = vrot.slane %v1115, 5
    %v1118 = vsel %vm1064, %v1113, %v1117
    %v1119 = vshrl.u32 %v821, 16
    %v1121 = vrot.slane %v1119, 4
    %v1122 = vor.u32 %v1121, %v1117
    %v1123 = vrot.slane %v1122, 4
    %v1125 = vshll.u32 %v833, 16
    %v1127 = vrot.slane %v1125, 5
    %v1128 = vsel %vm1064, %v1123, %v1127
    %v1129 = vshrl.u32 %v833, 16
    %v1131 = vrot.slane %v1129, 4
    %v1132 = vor.u32 %v1131, %v1127
    %v1133 = vrot.slane %v1132, 4
    %v1135 = vshll.u32 %v845, 16
    %v1137 = vrot.slane %v1135, 5
    %v1138 = vsel %vm1064, %v1133, %v1137
    %v1139 = vshrl.u32 %v845, 16
    %v1141 = vrot.slane %v1139, 4
    %v1142 = vor.u32 %v1141, %v1137
    %v1143 = vrot.slane %v1142, 4
    %v1153 = vmul.bf16 %v1053, %v1068
    %v1154 = vmul.bf16 %v1054, %v1078
    %v1155 = vmul.bf16 %v1055, %v1088
    %v1156 = vmul.bf16 %v1056, %v1098
    %v1157 = vmul.bf16 %v1057, %v1108
    %v1158 = vmul.bf16 %v1058, %v1118
    %v1159 = vmul.bf16 %v1059, %v1128
    %v1160 = vmul.bf16 %v1060, %v1138
    %v1161 = vmul.bf16 %v1061, %v1143
    %v1162 = vld [vmem:[%s5] sm:$0xf]
    %v1163 = vld [vmem:[%s5 + $0x4] sm:$0xf]
    %v1164 = vld [vmem:[%s5 + $0x8] sm:$0xf]
    %v1165 = vld [vmem:[%s5 + $0xc] sm:$0xf]
    %v1166 = vld [vmem:[%s5 + $0x10] sm:$0xf]
    %v1167 = vld [vmem:[%s5 + $0x14] sm:$0xf]
    %v1168 = vld [vmem:[%s5 + $0x18] sm:$0xf]
    %v1169 = vld [vmem:[%s5 + $0x1c] sm:$0xf]
    %v1170 = vld [vmem:[%s5 + $0x20] sm:$0xf]
    %v1171 = vld [vmem:[%s5 + $0x24] sm:$0xf]
    %v1172 = vld [vmem:[%s5 + $0x28] sm:$0xf]
    %v1173 = vld [vmem:[%s5 + $0x2c] sm:$0xf]
    %v1174 = vld [vmem:[%s5 + $0x30] sm:$0xf]
    %v1175 = vld [vmem:[%s5 + $0x34] sm:$0xf]
    %v1176 = vld [vmem:[%s5 + $0x38] sm:$0xf]
    %v1177 = vld [vmem:[%s5 + $0x3c] sm:$0xf]
    %v1178 = vld [vmem:[%s5 + $0x40] sm:$0xf]
    %v1179 = vld [vmem:[%s5 + $0x44] sm:$0xf]
    %v1180 = vld [vmem:[%s5 + $0x48] sm:$0xf]
    %v1181 = vld [vmem:[%s5 + $0x4c] sm:$0xf]
    %v1182 = vld [vmem:[%s5 + $0x50] sm:$0xf]
    %v1183 = vld [vmem:[%s5 + $0x54] sm:$0xf]
    %v1184 = vld [vmem:[%s5 + $0x58] sm:$0xf]
    %v1185 = vld [vmem:[%s5 + $0x5c] sm:$0xf]
    %s1186 = scalar_lea.vmem %s5, 96
    %v1187 = vld [vmem:[%s1186] sm:$0xf]
    %v1188 = vld [vmem:[%s1186 + $0x4] sm:$0xf]
    %v1189 = vld [vmem:[%s1186 + $0x8] sm:$0xf]
    %v1190 = vld [vmem:[%s1186 + $0xc] sm:$0xf]
    %v1191 = vld [vmem:[%s1186 + $0x10] sm:$0xf]
    %v1192 = vld [vmem:[%s1186 + $0x14] sm:$0xf]
    %v1193 = vld [vmem:[%s1186 + $0x18] sm:$0xf]
    %v1194 = vld [vmem:[%s1186 + $0x1c] sm:$0xf]
    %v1195 = vld [vmem:[%s1186 + $0x20] sm:$0xf]
    %v1196 = vld [vmem:[%s1186 + $0x24] sm:$0xf]
    %v1197 = vld [vmem:[%s1186 + $0x28] sm:$0xf]
    %v1198 = vld [vmem:[%s1186 + $0x2c] sm:$0xf]
    %v1199 = vld [vmem:[%s1186 + $0x30] sm:$0xf]
    %v1200 = vld [vmem:[%s1186 + $0x34] sm:$0xf]
    %v1201 = vld [vmem:[%s1186 + $0x38] sm:$0xf]
    %v1202 = vld [vmem:[%s1186 + $0x3c] sm:$0xf]
    %v1203 = vld [vmem:[%s1186 + $0x40] sm:$0xf]
    %v1204 = vld [vmem:[%s1186 + $0x44] sm:$0xf]
    %v1205 = vld [vmem:[%s1186 + $0x48] sm:$0xf]
    %v1206 = vld [vmem:[%s1186 + $0x4c] sm:$0xf]
    %v1207 = vld [vmem:[%s1186 + $0x50] sm:$0xf]
    %v1208 = vld [vmem:[%s1186 + $0x54] sm:$0xf]
    %v1209 = vld [vmem:[%s1186 + $0x58] sm:$0xf]
    %v1210 = vld [vmem:[%s1186 + $0x5c] sm:$0xf]
    %v1219 = vunpack.c.l.b16 %v1054
    %v1220 = vunpack.c.h.b16 %v1054
    %v1221 = vunpack.c.l.b16 %v1055
    %v1222 = vunpack.c.h.b16 %v1055
    %v1223 = vunpack.c.l.b16 %v1056
    %v1224 = vunpack.c.h.b16 %v1056
    %v1225 = vunpack.c.l.b16 %v1057
    %v1226 = vunpack.c.h.b16 %v1057
    %v1227 = vunpack.c.l.b16 %v1058
    %v1228 = vunpack.c.h.b16 %v1058
    %v1229 = vunpack.c.l.b16 %v1059
    %v1230 = vunpack.c.h.b16 %v1059
    %v1231 = vunpack.c.l.b16 %v1060
    %v1232 = vunpack.c.h.b16 %v1060
    %v1233 = vunpack.c.l.b16 %v1061
    %v1234 = vunpack.c.h.b16 %v1061
    %v1235 = vpack.c.b16 %v1221, %v1219
    %v1236 = vpack.c.b16 %v1222, %v1220
    %v1237 = vpack.c.b16 %v1225, %v1223
    %v1238 = vpack.c.b16 %v1226, %v1224
    %v1239 = vpack.c.b16 %v1229, %v1227
    %v1240 = vpack.c.b16 %v1230, %v1228
    %v1241 = vpack.c.b16 %v1233, %v1231
    %v1242 = vpack.c.b16 %v1234, %v1232
    %v1271 = vunpack.c.l.b16 %v1187
    %v1272 = vunpack.c.l.b16 %v1188
    %v1273 = vunpack.c.l.b16 %v1189
    %v1274 = vunpack.c.l.b16 %v1190
    %v1275 = vunpack.c.l.b16 %v1191
    %v1276 = vunpack.c.l.b16 %v1192
    %v1277 = vunpack.c.l.b16 %v1193
    %v1278 = vunpack.c.l.b16 %v1194
    %v1279 = vunpack.c.l.b16 %v1195
    %v1280 = vunpack.c.l.b16 %v1196
    %v1281 = vunpack.c.l.b16 %v1197
    %v1282 = vunpack.c.l.b16 %v1198
    %v1283 = vunpack.c.l.b16 %v1199
    %v1284 = vunpack.c.l.b16 %v1200
    %v1285 = vunpack.c.l.b16 %v1201
    %v1286 = vunpack.c.l.b16 %v1202
    %v1287 = vunpack.c.l.b16 %v1203
    %v1288 = vunpack.c.l.b16 %v1204
    %v1289 = vunpack.c.l.b16 %v1205
    %v1290 = vunpack.c.l.b16 %v1206
    %v1291 = vunpack.c.l.b16 %v1207
    %v1292 = vunpack.c.l.b16 %v1208
    %v1293 = vunpack.c.l.b16 %v1209
    %v1294 = vunpack.c.l.b16 %v1210
    %v1295 = vpack.c.b16 %v1272, %v1271
    %v1296 = vpack.c.b16 %v1274, %v1273
    %v1297 = vpack.c.b16 %v1276, %v1275
    %v1298 = vpack.c.b16 %v1278, %v1277
    %v1299 = vpack.c.b16 %v1280, %v1279
    %v1300 = vpack.c.b16 %v1282, %v1281
    %v1301 = vpack.c.b16 %v1284, %v1283
    %v1302 = vpack.c.b16 %v1286, %v1285
    %v1303 = vpack.c.b16 %v1288, %v1287
    %v1304 = vpack.c.b16 %v1290, %v1289
    %v1305 = vpack.c.b16 %v1292, %v1291
    %v1306 = vpack.c.b16 %v1294, %v1293
    %v1320 = vsel %vm370, %v1236, 0
    %v1323 = vsel %vm370, %v1238, 0
    %v1326 = vsel %vm370, %v1240, 0
    %v1329 = vsel %vm370, %v1242, 0
    %1331 = vmatprep.subr.bf16.mxu0 0
    %1332 = vmatpush1.bf16.msra.mxu0 %v1302
    %1333 = vmatprep.subr.bf16.mxu0 0
    %1334 = vmatpush1.bf16.msra.mxu0 %v1301
    %1335 = vmatprep.subr.bf16.mxu0 0
    %1336 = vmatpush1.bf16.msra.mxu0 %v1300
    %1337 = vmatprep.subr.bf16.mxu0 0
    %1338 = vmatpush1.bf16.msra.mxu0 %v1299
    %1339 = vmatprep.subr.bf16.mxu0 0
    %1340 = vmatpush1.bf16.msra.mxu0 %v1298
    %1341 = vmatprep.subr.bf16.mxu0 0
    %1342 = vmatpush1.bf16.msra.mxu0 %v1297
    %1343 = vmatprep.subr.bf16.mxu0 0
    %1344 = vmatpush1.bf16.msra.mxu0 %v1296
    %1345 = vmatprep.subr.bf16.mxu0 0
    %1346 = vmatpush1.bf16.msra.mxu0 %v1295
    %1347 = vmatprep.subr.bf16.mxu0 0
    %1348 = vmatpush2.bf16.msra.mxu0 0
    %1349 = vmatprep.subr.bf16.mxu0 0
    %1350 = vmatpush2.bf16.msra.mxu0 0
    %1351 = vmatprep.subr.bf16.mxu0 0
    %1352 = vmatpush2.bf16.msra.mxu0 0
    %1353 = vmatprep.subr.bf16.mxu0 0
    %1354 = vmatpush2.bf16.msra.mxu0 0
    %1355 = vmatprep.subr.bf16.mxu0 0
    %1356 = vmatpush2.bf16.msra.mxu0 %v1306
    %1357 = vmatprep.subr.bf16.mxu0 0
    %1358 = vmatpush2.bf16.msra.mxu0 %v1305
    %1359 = vmatprep.subr.bf16.mxu0 0
    %1360 = vmatpush2.bf16.msra.mxu0 %v1304
    %1361 = vmatprep.subr.bf16.mxu0 0
    %1362 = vmatpush2.bf16.msra.mxu0 %v1303
    %1363 = vmatprep.mubr.bf16.mxu0 %v1320
    %1364 = vmatmul.mubr.bf16.gmra.mxu0 %v1235
    %v1365 = vpop.f32.mrf.mxu0
    %v1366 = vadd.f32 0.0, %v1365
    %v1367 = vpop.f32.mrf.mxu0
    %v1368 = vpop.f32.mrf.mxu0
    %v1369 = vadd.f32 0.0, %v1368
    %v1370 = vpop.f32.mrf.mxu0
    %1371 = vmatprep.mubr.bf16.mxu0 %v1323
    %1372 = vmatmul.mubr.bf16.gmra.mxu0 %v1237
    %v1373 = vpop.f32.mrf.mxu0
    %v1374 = vadd.f32 0.0, %v1373
    %v1375 = vpop.f32.mrf.mxu0
    %v1376 = vpop.f32.mrf.mxu0
    %v1377 = vadd.f32 0.0, %v1376
    %v1378 = vpop.f32.mrf.mxu0
    %1379 = vmatprep.mubr.bf16.mxu0 %v1326
    %1380 = vmatmul.mubr.bf16.gmra.mxu0 %v1239
    %v1381 = vpop.f32.mrf.mxu0
    %v1382 = vadd.f32 0.0, %v1381
    %v1383 = vpop.f32.mrf.mxu0
    %v1384 = vpop.f32.mrf.mxu0
    %v1385 = vadd.f32 0.0, %v1384
    %v1386 = vpop.f32.mrf.mxu0
    %1387 = vmatprep.mubr.bf16.mxu0 %v1329
    %1388 = vmatmul.mubr.bf16.gmra.mxu0 %v1241
    %v1389 = vpop.f32.mrf.mxu0
    %v1390 = vadd.f32 0.0, %v1389
    %v1391 = vpop.f32.mrf.mxu0
    %v1392 = vpop.f32.mrf.mxu0
    %v1393 = vadd.f32 0.0, %v1392
    %v1394 = vpop.f32.mrf.mxu0
    %1395 = vdwg.mxu0
    %v1405 = vunpack.c.l.b16 %v1153
    %v1406 = vunpack.c.h.b16 %v1153
    %v1407 = vunpack.c.l.b16 %v1154
    %v1408 = vunpack.c.h.b16 %v1154
    %v1409 = vunpack.c.l.b16 %v1155
    %v1410 = vunpack.c.h.b16 %v1155
    %v1411 = vunpack.c.l.b16 %v1156
    %v1412 = vunpack.c.h.b16 %v1156
    %v1413 = vunpack.c.l.b16 %v1157
    %v1414 = vunpack.c.h.b16 %v1157
    %v1415 = vunpack.c.l.b16 %v1158
    %v1416 = vunpack.c.h.b16 %v1158
    %v1417 = vunpack.c.l.b16 %v1159
    %v1418 = vunpack.c.h.b16 %v1159
    %v1419 = vunpack.c.l.b16 %v1160
    %v1420 = vunpack.c.h.b16 %v1160
    %v1421 = vunpack.c.l.b16 %v1161
    %v1422 = vunpack.c.h.b16 %v1161
    %v1423 = vpack.c.b16 %v1407, %v1405
    %v1424 = vpack.c.b16 %v1408, %v1406
    %v1425 = vpack.c.b16 %v1411, %v1409
    %v1426 = vpack.c.b16 %v1412, %v1410
    %v1427 = vpack.c.b16 %v1415, %v1413
    %v1428 = vpack.c.b16 %v1416, %v1414
    %v1429 = vpack.c.b16 %v1419, %v1417
    %v1430 = vpack.c.b16 %v1420, %v1418
    %v1431 = vpack.c.b16 %v1421, %v1421
    %v1432 = vpack.c.b16 %v1422, %v1422
    %v1434 = vshrl.u32 %v1423, 16
    %v1436 = vrot.slane %v1434, 3
    %v1437 = vshll.u32 %v1423, 16
    %v1439 = vrot.slane %v1437, 4
    %v1440 = vor.u32 %v1436, %v1439
    %v1442 = vshrl.u32 %v1425, 16
    %v1444 = vrot.slane %v1442, 3
    %v1445 = vshll.u32 %v1425, 16
    %v1447 = vrot.slane %v1445, 4
    %v1448 = vor.u32 %v1444, %v1447
    %v1449 = vsel %vm969, %v1440, %v1448
    %v1451 = vshrl.u32 %v1424, 16
    %v1453 = vrot.slane %v1451, 3
    %v1454 = vshll.u32 %v1424, 16
    %v1456 = vrot.slane %v1454, 4
    %v1457 = vor.u32 %v1453, %v1456
    %v1459 = vshrl.u32 %v1426, 16
    %v1461 = vrot.slane %v1459, 3
    %v1462 = vshll.u32 %v1426, 16
    %v1464 = vrot.slane %v1462, 4
    %v1465 = vor.u32 %v1461, %v1464
    %v1466 = vsel %vm969, %v1457, %v1465
    %v1468 = vshrl.u32 %v1427, 16
    %v1470 = vrot.slane %v1468, 3
    %v1471 = vshll.u32 %v1427, 16
    %v1473 = vrot.slane %v1471, 4
    %v1474 = vor.u32 %v1470, %v1473
    %v1475 = vsel %vm969, %v1448, %v1474
    %v1477 = vshrl.u32 %v1428, 16
    %v1479 = vrot.slane %v1477, 3
    %v1480 = vshll.u32 %v1428, 16
    %v1482 = vrot.slane %v1480, 4
    %v1483 = vor.u32 %v1479, %v1482
    %v1484 = vsel %vm969, %v1465, %v1483
    %v1486 = vshrl.u32 %v1429, 16
    %v1488 = vrot.slane %v1486, 3
    %v1489 = vshll.u32 %v1429, 16
    %v1491 = vrot.slane %v1489, 4
    %v1492 = vor.u32 %v1488, %v1491
    %v1493 = vsel %vm969, %v1474, %v1492
    %v1495 = vshrl.u32 %v1430, 16
    %v1497 = vrot.slane %v1495, 3
    %v1498 = vshll.u32 %v1430, 16
    %v1500 = vrot.slane %v1498, 4
    %v1501 = vor.u32 %v1497, %v1500
    %v1502 = vsel %vm969, %v1483, %v1501
    %v1504 = vshrl.u32 %v1431, 16
    %v1506 = vrot.slane %v1504, 3
    %v1507 = vshll.u32 %v1431, 16
    %v1509 = vrot.slane %v1507, 4
    %v1510 = vor.u32 %v1506, %v1509
    %v1511 = vsel %vm969, %v1492, %v1510
    %v1513 = vshrl.u32 %v1432, 16
    %v1515 = vrot.slane %v1513, 3
    %v1516 = vshll.u32 %v1432, 16
    %v1518 = vrot.slane %v1516, 4
    %v1519 = vor.u32 %v1515, %v1518
    %v1520 = vsel %vm969, %v1501, %v1519
    %v1549 = vunpack.c.l.b16 %v1162
    %v1550 = vunpack.c.l.b16 %v1163
    %v1551 = vunpack.c.l.b16 %v1164
    %v1552 = vunpack.c.l.b16 %v1165
    %v1553 = vunpack.c.l.b16 %v1166
    %v1554 = vunpack.c.l.b16 %v1167
    %v1555 = vunpack.c.l.b16 %v1168
    %v1556 = vunpack.c.l.b16 %v1169
    %v1557 = vunpack.c.l.b16 %v1170
    %v1558 = vunpack.c.l.b16 %v1171
    %v1559 = vunpack.c.l.b16 %v1172
    %v1560 = vunpack.c.l.b16 %v1173
    %v1561 = vunpack.c.l.b16 %v1174
    %v1562 = vunpack.c.l.b16 %v1175
    %v1563 = vunpack.c.l.b16 %v1176
    %v1564 = vunpack.c.l.b16 %v1177
    %v1565 = vunpack.c.l.b16 %v1178
    %v1566 = vunpack.c.l.b16 %v1179
    %v1567 = vunpack.c.l.b16 %v1180
    %v1568 = vunpack.c.l.b16 %v1181
    %v1569 = vunpack.c.l.b16 %v1182
    %v1570 = vunpack.c.l.b16 %v1183
    %v1571 = vunpack.c.l.b16 %v1184
    %v1572 = vunpack.c.l.b16 %v1185
    %v1573 = vpack.c.b16 %v1550, %v1549
    %v1574 = vpack.c.b16 %v1552, %v1551
    %v1575 = vpack.c.b16 %v1554, %v1553
    %v1576 = vpack.c.b16 %v1556, %v1555
    %v1577 = vpack.c.b16 %v1558, %v1557
    %v1578 = vpack.c.b16 %v1560, %v1559
    %v1579 = vpack.c.b16 %v1562, %v1561
    %v1580 = vpack.c.b16 %v1564, %v1563
    %v1581 = vpack.c.b16 %v1566, %v1565
    %v1582 = vpack.c.b16 %v1568, %v1567
    %v1583 = vpack.c.b16 %v1570, %v1569
    %v1584 = vpack.c.b16 %v1572, %v1571
    %v1598 = vsel %vm370, %v1466, 0
    %v1601 = vsel %vm370, %v1484, 0
    %v1604 = vsel %vm370, %v1502, 0
    %v1607 = vsel %vm370, %v1520, 0
    %1609 = vmatprep.subr.bf16.mxu0 0
    %1610 = vmatpush1.bf16.msra.mxu0 %v1580
    %1611 = vmatprep.subr.bf16.mxu0 0
    %1612 = vmatpush1.bf16.msra.mxu0 %v1579
    %1613 = vmatprep.subr.bf16.mxu0 0
    %1614 = vmatpush1.bf16.msra.mxu0 %v1578
    %1615 = vmatprep.subr.bf16.mxu0 0
    %1616 = vmatpush1.bf16.msra.mxu0 %v1577
    %1617 = vmatprep.subr.bf16.mxu0 0
    %1618 = vmatpush1.bf16.msra.mxu0 %v1576
    %1619 = vmatprep.subr.bf16.mxu0 0
    %1620 = vmatpush1.bf16.msra.mxu0 %v1575
    %1621 = vmatprep.subr.bf16.mxu0 0
    %1622 = vmatpush1.bf16.msra.mxu0 %v1574
    %1623 = vmatprep.subr.bf16.mxu0 0
    %1624 = vmatpush1.bf16.msra.mxu0 %v1573
    %1625 = vmatprep.subr.bf16.mxu0 0
    %1626 = vmatpush2.bf16.msra.mxu0 0
    %1627 = vmatprep.subr.bf16.mxu0 0
    %1628 = vmatpush2.bf16.msra.mxu0 0
    %1629 = vmatprep.subr.bf16.mxu0 0
    %1630 = vmatpush2.bf16.msra.mxu0 0
    %1631 = vmatprep.subr.bf16.mxu0 0
    %1632 = vmatpush2.bf16.msra.mxu0 0
    %1633 = vmatprep.subr.bf16.mxu0 0
    %1634 = vmatpush2.bf16.msra.mxu0 %v1584
    %1635 = vmatprep.subr.bf16.mxu0 0
    %1636 = vmatpush2.bf16.msra.mxu0 %v1583
    %1637 = vmatprep.subr.bf16.mxu0 0
    %1638 = vmatpush2.bf16.msra.mxu0 %v1582
    %1639 = vmatprep.subr.bf16.mxu0 0
    %1640 = vmatpush2.bf16.msra.mxu0 %v1581
    %1641 = vmatprep.mubr.bf16.mxu0 %v1598
    %1642 = vmatmul.mubr.bf16.gmra.mxu0 %v1449
    %v1643 = vpop.f32.mrf.mxu0
    %v1644 = vadd.f32 %v1366, %v1643
    %v1645 = vpop.f32.mrf.mxu0
    %v1646 = vpop.f32.mrf.mxu0
    %v1647 = vadd.f32 %v1369, %v1646
    %v1648 = vpop.f32.mrf.mxu0
    %1649 = vmatprep.mubr.bf16.mxu0 %v1601
    %1650 = vmatmul.mubr.bf16.gmra.mxu0 %v1475
    %v1651 = vpop.f32.mrf.mxu0
    %v1652 = vadd.f32 %v1374, %v1651
    %v1653 = vpop.f32.mrf.mxu0
    %v1654 = vpop.f32.mrf.mxu0
    %v1655 = vadd.f32 %v1377, %v1654
    %v1656 = vpop.f32.mrf.mxu0
    %1657 = vmatprep.mubr.bf16.mxu0 %v1604
    %1658 = vmatmul.mubr.bf16.gmra.mxu0 %v1493
    %v1659 = vpop.f32.mrf.mxu0
    %v1660 = vadd.f32 %v1382, %v1659
    %v1661 = vpop.f32.mrf.mxu0
    %v1662 = vpop.f32.mrf.mxu0
    %v1663 = vadd.f32 %v1385, %v1662
    %v1664 = vpop.f32.mrf.mxu0
    %1665 = vmatprep.mubr.bf16.mxu0 %v1607
    %1666 = vmatmul.mubr.bf16.gmra.mxu0 %v1511
    %v1667 = vpop.f32.mrf.mxu0
    %v1668 = vadd.f32 %v1390, %v1667
    %v1669 = vpop.f32.mrf.mxu0
    %v1670 = vpop.f32.mrf.mxu0
    %v1671 = vadd.f32 %v1393, %v1670
    %v1672 = vpop.f32.mrf.mxu0
    %1673 = vdwg.mxu0
    %v1674 = vld [vmem:[#allocation2 + $0x10] sm:$0xff]
    %v1675 = vld [vmem:[#allocation2 + $0x18] sm:$0xff]
    %v1676 = vld [vmem:[#allocation2 + $0x20] sm:$0xff]
    %v1677 = vld [vmem:[#allocation2 + $0x28] sm:$0xff]
    %v1678 = vld [vmem:[#allocation2 + $0x30] sm:$0xff]
    %v1679 = vld [vmem:[#allocation2 + $0x38] sm:$0xff]
    %v1680 = vld [vmem:[#allocation2 + $0x40] sm:$0xff]
    %v1681 = vld [vmem:[#allocation2 + $0x48] sm:$0xff]
    %v1682 = vld [vmem:[#allocation2 + $0x50] sm:$0x11]
    %vm1683 = vsmask.f32 4368
    %vm1684 = vmor %vm966, %vm1683
    %v1686 = vshrl.u32 %v865, 16
    %v1688 = vrot.slane %v1686, 7
    %v1689 = vshll.u32 %v865, 16
    %v1691 = vor.u32 %v1688, %v1689
    %v1692 = vrot.slane %v1688, 4
    %v1694 = vshrl.u32 %v877, 16
    %v1696 = vrot.slane %v1694, 7
    %v1697 = vshll.u32 %v877, 16
    %v1699 = vor.u32 %v1696, %v1697
    %v1700 = vsel %vm1684, %v1692, %v1699
    %v1701 = vrot.slane %v1696, 4
    %v1703 = vshrl.u32 %v889, 16
    %v1705 = vrot.slane %v1703, 7
    %v1706 = vshll.u32 %v889, 16
    %v1708 = vor.u32 %v1705, %v1706
    %v1709 = vsel %vm1684, %v1701, %v1708
    %v1710 = vrot.slane %v1705, 4
    %v1712 = vshrl.u32 %v901, 16
    %v1714 = vrot.slane %v1712, 7
    %v1715 = vshll.u32 %v901, 16
    %v1717 = vor.u32 %v1714, %v1715
    %v1718 = vsel %vm1684, %v1710, %v1717
    %v1719 = vrot.slane %v1714, 4
    %v1721 = vshrl.u32 %v913, 16
    %v1723 = vrot.slane %v1721, 7
    %v1724 = vshll.u32 %v913, 16
    %v1726 = vor.u32 %v1723, %v1724
    %v1727 = vsel %vm1684, %v1719, %v1726
    %v1728 = vrot.slane %v1723, 4
    %v1730 = vshrl.u32 %v925, 16
    %v1732 = vrot.slane %v1730, 7
    %v1733 = vshll.u32 %v925, 16
    %v1735 = vor.u32 %v1732, %v1733
    %v1736 = vsel %vm1684, %v1728, %v1735
    %v1737 = vrot.slane %v1732, 4
    %v1739 = vshrl.u32 %v937, 16
    %v1741 = vrot.slane %v1739, 7
    %v1742 = vshll.u32 %v937, 16
    %v1744 = vor.u32 %v1741, %v1742
    %v1745 = vsel %vm1684, %v1737, %v1744
    %v1746 = vrot.slane %v1741, 4
    %v1748 = vshrl.u32 %v949, 16
    %v1750 = vrot.slane %v1748, 7
    %v1751 = vshll.u32 %v949, 16
    %v1753 = vor.u32 %v1750, %v1751
    %v1754 = vsel %vm1684, %v1746, %v1753
    %v1755 = vrot.slane %v1750, 4
    %v1765 = vmul.bf16 %v1674, %v1691
    %v1766 = vmul.bf16 %v1675, %v1700
    %v1767 = vmul.bf16 %v1676, %v1709
    %v1768 = vmul.bf16 %v1677, %v1718
    %v1769 = vmul.bf16 %v1678, %v1727
    %v1770 = vmul.bf16 %v1679, %v1736
    %v1771 = vmul.bf16 %v1680, %v1745
    %v1772 = vmul.bf16 %v1681, %v1754
    %v1773 = vmul.bf16 %v1682, %v1755
    %s1774 = scalar_lea.vmem %s5, 192
    %v1775 = vld [vmem:[%s1774] sm:$0xf]
    %v1776 = vld [vmem:[%s1774 + $0x4] sm:$0xf]
    %v1777 = vld [vmem:[%s1774 + $0x8] sm:$0xf]
    %v1778 = vld [vmem:[%s1774 + $0xc] sm:$0xf]
    %v1779 = vld [vmem:[%s1774 + $0x10] sm:$0xf]
    %v1780 = vld [vmem:[%s1774 + $0x14] sm:$0xf]
    %v1781 = vld [vmem:[%s1774 + $0x18] sm:$0xf]
    %v1782 = vld [vmem:[%s1774 + $0x1c] sm:$0xf]
    %v1783 = vld [vmem:[%s1774 + $0x20] sm:$0xf]
    %v1784 = vld [vmem:[%s1774 + $0x24] sm:$0xf]
    %v1785 = vld [vmem:[%s1774 + $0x28] sm:$0xf]
    %v1786 = vld [vmem:[%s1774 + $0x2c] sm:$0xf]
    %v1787 = vld [vmem:[%s1774 + $0x30] sm:$0xf]
    %v1788 = vld [vmem:[%s1774 + $0x34] sm:$0xf]
    %v1789 = vld [vmem:[%s1774 + $0x38] sm:$0xf]
    %v1790 = vld [vmem:[%s1774 + $0x3c] sm:$0xf]
    %v1791 = vld [vmem:[%s1774 + $0x40] sm:$0xf]
    %v1792 = vld [vmem:[%s1774 + $0x44] sm:$0xf]
    %v1793 = vld [vmem:[%s1774 + $0x48] sm:$0xf]
    %v1794 = vld [vmem:[%s1774 + $0x4c] sm:$0xf]
    %v1795 = vld [vmem:[%s1774 + $0x50] sm:$0xf]
    %v1796 = vld [vmem:[%s1774 + $0x54] sm:$0xf]
    %v1797 = vld [vmem:[%s1774 + $0x58] sm:$0xf]
    %v1798 = vld [vmem:[%s1774 + $0x5c] sm:$0xf]
    %v1808 = vunpack.c.l.b16 %v1765
    %v1809 = vunpack.c.h.b16 %v1765
    %v1810 = vunpack.c.l.b16 %v1766
    %v1811 = vunpack.c.h.b16 %v1766
    %v1812 = vunpack.c.l.b16 %v1767
    %v1813 = vunpack.c.h.b16 %v1767
    %v1814 = vunpack.c.l.b16 %v1768
    %v1815 = vunpack.c.h.b16 %v1768
    %v1816 = vunpack.c.l.b16 %v1769
    %v1817 = vunpack.c.h.b16 %v1769
    %v1818 = vunpack.c.l.b16 %v1770
    %v1819 = vunpack.c.h.b16 %v1770
    %v1820 = vunpack.c.l.b16 %v1771
    %v1821 = vunpack.c.h.b16 %v1771
    %v1822 = vunpack.c.l.b16 %v1772
    %v1823 = vunpack.c.h.b16 %v1772
    %v1824 = vunpack.c.l.b16 %v1773
    %v1825 = vunpack.c.h.b16 %v1773
    %v1826 = vpack.c.b16 %v1810, %v1808
    %v1827 = vpack.c.b16 %v1811, %v1809
    %v1828 = vpack.c.b16 %v1814, %v1812
    %v1829 = vpack.c.b16 %v1815, %v1813
    %v1830 = vpack.c.b16 %v1818, %v1816
    %v1831 = vpack.c.b16 %v1819, %v1817
    %v1832 = vpack.c.b16 %v1822, %v1820
    %v1833 = vpack.c.b16 %v1823, %v1821
    %v1834 = vpack.c.b16 %v1824, %v1824
    %v1835 = vpack.c.b16 %v1825, %v1825
    %vm1836 = vsmask.f32 7424
    %v1838 = vshrl.u32 %v1826, 16
    %v1840 = vshll.u32 %v1826, 16
    %v1842 = vrot.slane %v1840, 1
    %v1843 = vor.u32 %v1838, %v1842
    %v1845 = vshll.u32 %v1828, 16
    %v1847 = vrot.slane %v1845, 1
    %v1848 = vsel %vm1836, %v1843, %v1847
    %v1850 = vshrl.u32 %v1827, 16
    %v1852 = vshll.u32 %v1827, 16
    %v1854 = vrot.slane %v1852, 1
    %v1855 = vor.u32 %v1850, %v1854
    %v1857 = vshll.u32 %v1829, 16
    %v1859 = vrot.slane %v1857, 1
    %v1860 = vsel %vm1836, %v1855, %v1859
    %v1861 = vshrl.u32 %v1828, 16
    %v1863 = vor.u32 %v1861, %v1847
    %v1865 = vshll.u32 %v1830, 16
    %v1867 = vrot.slane %v1865, 1
    %v1868 = vsel %vm1836, %v1863, %v1867
    %v1869 = vshrl.u32 %v1829, 16
    %v1871 = vor.u32 %v1869, %v1859
    %v1873 = vshll.u32 %v1831, 16
    %v1875 = vrot.slane %v1873, 1
    %v1876 = vsel %vm1836, %v1871, %v1875
    %v1877 = vshrl.u32 %v1830, 16
    %v1879 = vor.u32 %v1877, %v1867
    %v1881 = vshll.u32 %v1832, 16
    %v1883 = vrot.slane %v1881, 1
    %v1884 = vsel %vm1836, %v1879, %v1883
    %v1885 = vshrl.u32 %v1831, 16
    %v1887 = vor.u32 %v1885, %v1875
    %v1889 = vshll.u32 %v1833, 16
    %v1891 = vrot.slane %v1889, 1
    %v1892 = vsel %vm1836, %v1887, %v1891
    %v1893 = vshrl.u32 %v1832, 16
    %v1895 = vor.u32 %v1893, %v1883
    %v1897 = vshll.u32 %v1834, 16
    %v1899 = vrot.slane %v1897, 1
    %v1900 = vsel %vm1836, %v1895, %v1899
    %v1901 = vshrl.u32 %v1833, 16
    %v1903 = vor.u32 %v1901, %v1891
    %v1905 = vshll.u32 %v1835, 16
    %v1907 = vrot.slane %v1905, 1
    %v1908 = vsel %vm1836, %v1903, %v1907
    %v1937 = vunpack.c.l.b16 %v1775
    %v1938 = vunpack.c.l.b16 %v1776
    %v1939 = vunpack.c.l.b16 %v1777
    %v1940 = vunpack.c.l.b16 %v1778
    %v1941 = vunpack.c.l.b16 %v1779
    %v1942 = vunpack.c.l.b16 %v1780
    %v1943 = vunpack.c.l.b16 %v1781
    %v1944 = vunpack.c.l.b16 %v1782
    %v1945 = vunpack.c.l.b16 %v1783
    %v1946 = vunpack.c.l.b16 %v1784
    %v1947 = vunpack.c.l.b16 %v1785
    %v1948 = vunpack.c.l.b16 %v1786
    %v1949 = vunpack.c.l.b16 %v1787
    %v1950 = vunpack.c.l.b16 %v1788
    %v1951 = vunpack.c.l.b16 %v1789
    %v1952 = vunpack.c.l.b16 %v1790
    %v1953 = vunpack.c.l.b16 %v1791
    %v1954 = vunpack.c.l.b16 %v1792
    %v1955 = vunpack.c.l.b16 %v1793
    %v1956 = vunpack.c.l.b16 %v1794
    %v1957 = vunpack.c.l.b16 %v1795
    %v1958 = vunpack.c.l.b16 %v1796
    %v1959 = vunpack.c.l.b16 %v1797
    %v1960 = vunpack.c.l.b16 %v1798
    %v1961 = vpack.c.b16 %v1938, %v1937
    %v1962 = vpack.c.b16 %v1940, %v1939
    %v1963 = vpack.c.b16 %v1942, %v1941
    %v1964 = vpack.c.b16 %v1944, %v1943
    %v1965 = vpack.c.b16 %v1946, %v1945
    %v1966 = vpack.c.b16 %v1948, %v1947
    %v1967 = vpack.c.b16 %v1950, %v1949
    %v1968 = vpack.c.b16 %v1952, %v1951
    %v1969 = vpack.c.b16 %v1954, %v1953
    %v1970 = vpack.c.b16 %v1956, %v1955
    %v1971 = vpack.c.b16 %v1958, %v1957
    %v1972 = vpack.c.b16 %v1960, %v1959
    %v1986 = vsel %vm370, %v1860, 0
    %v1989 = vsel %vm370, %v1876, 0
    %v1992 = vsel %vm370, %v1892, 0
    %v1995 = vsel %vm370, %v1908, 0
    %1997 = vmatprep.subr.bf16.mxu0 0
    %1998 = vmatpush1.bf16.msra.mxu0 %v1968
    %1999 = vmatprep.subr.bf16.mxu0 0
    %2000 = vmatpush1.bf16.msra.mxu0 %v1967
    %2001 = vmatprep.subr.bf16.mxu0 0
    %2002 = vmatpush1.bf16.msra.mxu0 %v1966
    %2003 = vmatprep.subr.bf16.mxu0 0
    %2004 = vmatpush1.bf16.msra.mxu0 %v1965
    %2005 = vmatprep.subr.bf16.mxu0 0
    %2006 = vmatpush1.bf16.msra.mxu0 %v1964
    %2007 = vmatprep.subr.bf16.mxu0 0
    %2008 = vmatpush1.bf16.msra.mxu0 %v1963
    %2009 = vmatprep.subr.bf16.mxu0 0
    %2010 = vmatpush1.bf16.msra.mxu0 %v1962
    %2011 = vmatprep.subr.bf16.mxu0 0
    %2012 = vmatpush1.bf16.msra.mxu0 %v1961
    %2013 = vmatprep.subr.bf16.mxu0 0
    %2014 = vmatpush2.bf16.msra.mxu0 0
    %2015 = vmatprep.subr.bf16.mxu0 0
    %2016 = vmatpush2.bf16.msra.mxu0 0
    %2017 = vmatprep.subr.bf16.mxu0 0
    %2018 = vmatpush2.bf16.msra.mxu0 0
    %2019 = vmatprep.subr.bf16.mxu0 0
    %2020 = vmatpush2.bf16.msra.mxu0 0
    %2021 = vmatprep.subr.bf16.mxu0 0
    %2022 = vmatpush2.bf16.msra.mxu0 %v1972
    %2023 = vmatprep.subr.bf16.mxu0 0
    %2024 = vmatpush2.bf16.msra.mxu0 %v1971
    %2025 = vmatprep.subr.bf16.mxu0 0
    %2026 = vmatpush2.bf16.msra.mxu0 %v1970
    %2027 = vmatprep.subr.bf16.mxu0 0
    %2028 = vmatpush2.bf16.msra.mxu0 %v1969
    %2029 = vmatprep.mubr.bf16.mxu0 %v1986
    %2030 = vmatmul.mubr.bf16.gmra.mxu0 %v1848
    %v2031 = vpop.f32.mrf.mxu0
    %v2032 = vadd.f32 0.0, %v2031
    %v2033 = vpop.f32.mrf.mxu0
    %v2034 = vpop.f32.mrf.mxu0
    %v2035 = vadd.f32 0.0, %v2034
    %v2036 = vpop.f32.mrf.mxu0
    %2037 = vmatprep.mubr.bf16.mxu0 %v1989
    %2038 = vmatmul.mubr.bf16.gmra.mxu0 %v1868
    %v2039 = vpop.f32.mrf.mxu0
    %v2040 = vadd.f32 0.0, %v2039
    %v2041 = vpop.f32.mrf.mxu0
    %v2042 = vpop.f32.mrf.mxu0
    %v2043 = vadd.f32 0.0, %v2042
    %v2044 = vpop.f32.mrf.mxu0
    %2045 = vmatprep.mubr.bf16.mxu0 %v1992
    %2046 = vmatmul.mubr.bf16.gmra.mxu0 %v1884
    %v2047 = vpop.f32.mrf.mxu0
    %v2048 = vadd.f32 0.0, %v2047
    %v2049 = vpop.f32.mrf.mxu0
    %v2050 = vpop.f32.mrf.mxu0
    %v2051 = vadd.f32 0.0, %v2050
    %v2052 = vpop.f32.mrf.mxu0
    %2053 = vmatprep.mubr.bf16.mxu0 %v1995
    %2054 = vmatmul.mubr.bf16.gmra.mxu0 %v1900
    %v2055 = vpop.f32.mrf.mxu0
    %v2056 = vadd.f32 0.0, %v2055
    %v2057 = vpop.f32.mrf.mxu0
    %v2058 = vpop.f32.mrf.mxu0
    %v2059 = vadd.f32 0.0, %v2058
    %v2060 = vpop.f32.mrf.mxu0
    %2061 = vdwg.mxu0
    %v2062 = vadd.f32 %v1644, %v2032
    %v2063 = vadd.f32 %v1647, %v2035
    %v2064 = vadd.f32 %v1652, %v2040
    %v2065 = vadd.f32 %v1655, %v2043
    %v2066 = vadd.f32 %v1660, %v2048
    %v2067 = vadd.f32 %v1663, %v2051
    %v2068 = vadd.f32 %v1668, %v2056
    %v2069 = vadd.f32 %v1671, %v2059
    %v2070 = vld [vmem:[%s6] sm:$0x1]
    %v2072 = vlaneseq
    %v2073 = vshrl.u32 %v2072, 7
    %v2074 = vsub.s32 0, %v2073
    %v2075 = vrot.slane %v2070, %v2074
    %v2077 = vadd.f32 %v2062, %v2075
    %v2078 = vadd.f32 %v2063, %v2075
    %v2079 = vadd.f32 %v2064, %v2075
    %v2080 = vadd.f32 %v2065, %v2075
    %v2081 = vadd.f32 %v2066, %v2075
    %v2082 = vadd.f32 %v2067, %v2075
    %v2083 = vadd.f32 %v2068, %v2075
    %v2084 = vadd.f32 %v2069, %v2075
    %v2085 = vmax.f32 %v2077, 0.0
    %v2086 = vmax.f32 %v2078, 0.0
    %v2087 = vmax.f32 %v2079, 0.0
    %v2088 = vmax.f32 %v2080, 0.0
    %v2089 = vmax.f32 %v2081, 0.0
    %v2090 = vmax.f32 %v2082, 0.0
    %v2091 = vmax.f32 %v2083, 0.0
    %v2092 = vmax.f32 %v2084, 0.0
    %v2093 = vpack.c.bf16 %v2086, %v2085
    %v2094 = vpack.c.bf16 %v2088, %v2087
    %v2095 = vpack.c.bf16 %v2090, %v2089
    %v2096 = vpack.c.bf16 %v2092, %v2091
    %v2101 = vunpack.c.l.b16 %v2093
    %v2102 = vunpack.c.h.b16 %v2093
    %v2103 = vunpack.c.l.b16 %v2094
    %v2104 = vunpack.c.h.b16 %v2094
    %v2105 = vunpack.c.l.b16 %v2095
    %v2106 = vunpack.c.h.b16 %v2095
    %v2107 = vunpack.c.l.b16 %v2096
    %v2108 = vunpack.c.h.b16 %v2096
    %v2109 = vpack.c.b16 %v2101, %v2101
    %v2110 = vpack.c.b16 %v2102, %v2102
    %v2111 = vpack.c.b16 %v2103, %v2103
    %v2112 = vpack.c.b16 %v2104, %v2104
    %v2113 = vpack.c.b16 %v2105, %v2105
    %v2114 = vpack.c.b16 %v2106, %v2106
    %v2115 = vpack.c.b16 %v2107, %v2107
    %v2116 = vpack.c.b16 %v2108, %v2108
    %2117 = vrot.lane.b32.xlu0 %v2109, 32
    %v2118 = vpop.permute.xlu0 %2117
    %2119 = vrot.lane.b32.xlu0 %v2110, 32
    %v2120 = vpop.permute.xlu0 %2119
    %2121 = vrot.lane.b32.xlu0 %v2111, 32
    %v2122 = vpop.permute.xlu0 %2121
    %2123 = vrot.lane.b32.xlu0 %v2112, 32
    %v2124 = vpop.permute.xlu0 %2123
    %2125 = vrot.lane.b32.xlu0 %v2113, 32
    %v2126 = vpop.permute.xlu0 %2125
    %2127 = vrot.lane.b32.xlu0 %v2114, 32
    %v2128 = vpop.permute.xlu0 %2127
    %2129 = vrot.lane.b32.xlu0 %v2115, 32
    %v2130 = vpop.permute.xlu0 %2129
    %2131 = vrot.lane.b32.xlu0 %v2116, 32
    %v2132 = vpop.permute.xlu0 %2131
    %vm2141 = vcmask 519424
    %2142 = vst.msk [vmem:[#allocation3] sm:$0xf] %vm2141, %v2118
    %2143 = vst.msk [vmem:[#allocation3 + $0x4] sm:$0xf] %vm2141, %v2120
    %2144 = vst.msk [vmem:[#allocation3 + $0x8] sm:$0xf] %vm2141, %v2122
    %2145 = vst.msk [vmem:[#allocation3 + $0xc] sm:$0xf] %vm2141, %v2124
    %2146 = vst.msk [vmem:[#allocation3 + $0x10] sm:$0xf] %vm2141, %v2126
    %2147 = vst.msk [vmem:[#allocation3 + $0x14] sm:$0xf] %vm2141, %v2128
    %2148 = vst.msk [vmem:[#allocation3 + $0x18] sm:$0xf] %vm2141, %v2130
    %2149 = vst.msk [vmem:[#allocation3 + $0x1c] sm:$0xf] %vm2141, %v2132
    %v2150 = vld [vmem:[#allocation2 + $0x8] sm:$0x88]
    %v2151 = vsel %vm956, 0, %v2150
    %2152 = vst [vmem:[#allocation2 + $0x8] sm:$0x88] %v2151
    %2153 = vst.msk [vmem:[#allocation2 + $0x10] sm:$0xff] %vm962, 0
    %2154 = vst.msk [vmem:[#allocation2 + $0x48] sm:$0xff] %vm962, 0
    %v2155 = vld [vmem:[#allocation2 + $0x50] sm:$0x11]
    %v2156 = vsel %vm971, 0, %v2155
    %2157 = vst [vmem:[#allocation2 + $0x50] sm:$0x11] %v2156
    %2158 = vst.msk [vmem:[#allocation2 + $0x18] sm:$0xf] %vm1003, %v1013
    %2159 = vst.msk [vmem:[#allocation2 + $0x20] sm:$0xf] %vm1003, %v1015
    %2160 = vst.msk [vmem:[#allocation2 + $0x28] sm:$0xf] %vm1003, %v1017
    %2161 = vst.msk [vmem:[#allocation2 + $0x30] sm:$0xf] %vm1003, %v1019
    %2162 = vst.msk [vmem:[#allocation2 + $0x38] sm:$0xf] %vm1003, %v1021
    %2163 = vst.msk [vmem:[#allocation2 + $0x40] sm:$0xf] %vm1003, %v1023
    %2164 = vst.msk [vmem:[#allocation2 + $0x48] sm:$0xf] %vm1003, %v1025
    %2165 = vst.msk [vmem:[#allocation2 + $0x50] sm:$0xf] %vm1003, %v1027
    %2166 = vst.msk [vmem:[#allocation2 + $0x10] sm:$0xf] %vm1036, %v987
    %2167 = vst.msk [vmem:[#allocation2 + $0x18] sm:$0xf] %vm1036, %v988
    %2168 = vst.msk [vmem:[#allocation2 + $0x20] sm:$0xf] %vm1036, %v989
    %2169 = vst.msk [vmem:[#allocation2 + $0x28] sm:$0xf] %vm1036, %v990
    %2170 = vst.msk [vmem:[#allocation2 + $0x30] sm:$0xf] %vm1036, %v991
    %2171 = vst.msk [vmem:[#allocation2 + $0x38] sm:$0xf] %vm1036, %v992
    %2172 = vst.msk [vmem:[#allocation2 + $0x40] sm:$0xf] %vm1036, %v993
    %2173 = vst.msk [vmem:[#allocation2 + $0x48] sm:$0xf] %vm1036, %v994
    %2174 = vst.msk [vmem:[#allocation2 + $0xc] sm:$0xf] %vm1003, %v1013
    %2175 = vst.msk [vmem:[#allocation2 + $0x14] sm:$0xf] %vm1003, %v1015
    %2176 = vst.msk [vmem:[#allocation2 + $0x1c] sm:$0xf] %vm1003, %v1017
    %2177 = vst.msk [vmem:[#allocation2 + $0x24] sm:$0xf] %vm1003, %v1019
    %2178 = vst.msk [vmem:[#allocation2 + $0x2c] sm:$0xf] %vm1003, %v1021
    %2179 = vst.msk [vmem:[#allocation2 + $0x34] sm:$0xf] %vm1003, %v1023
    %2180 = vst.msk [vmem:[#allocation2 + $0x3c] sm:$0xf] %vm1003, %v1025
    %2181 = vst.msk [vmem:[#allocation2 + $0x44] sm:$0xf] %vm1003, %v1027
    %v2182 = vld [vmem:[#allocation2 + $0x8] sm:$0x88]
    %v2183 = vld [vmem:[#allocation2 + $0x10] sm:$0xff]
    %v2184 = vld [vmem:[#allocation2 + $0x18] sm:$0xff]
    %v2185 = vld [vmem:[#allocation2 + $0x20] sm:$0xff]
    %v2186 = vld [vmem:[#allocation2 + $0x28] sm:$0xff]
    %v2187 = vld [vmem:[#allocation2 + $0x30] sm:$0xff]
    %v2188 = vld [vmem:[#allocation2 + $0x38] sm:$0xff]
    %v2189 = vld [vmem:[#allocation2 + $0x40] sm:$0xff]
    %v2190 = vld [vmem:[#allocation2 + $0x48] sm:$0xff]
    %v2191 = vmul.bf16 %v2182, %v1068
    %v2192 = vmul.bf16 %v2183, %v1078
    %v2193 = vmul.bf16 %v2184, %v1088
    %v2194 = vmul.bf16 %v2185, %v1098
    %v2195 = vmul.bf16 %v2186, %v1108
    %v2196 = vmul.bf16 %v2187, %v1118
    %v2197 = vmul.bf16 %v2188, %v1128
    %v2198 = vmul.bf16 %v2189, %v1138
    %v2199 = vmul.bf16 %v2190, %v1143
    %v2200 = vld [vmem:[%s7] sm:$0xf]
    %v2201 = vld [vmem:[%s7 + $0x4] sm:$0xf]
    %v2202 = vld [vmem:[%s7 + $0x8] sm:$0xf]
    %v2203 = vld [vmem:[%s7 + $0xc] sm:$0xf]
    %v2204 = vld [vmem:[%s7 + $0x10] sm:$0xf]
    %v2205 = vld [vmem:[%s7 + $0x14] sm:$0xf]
    %v2206 = vld [vmem:[%s7 + $0x18] sm:$0xf]
    %v2207 = vld [vmem:[%s7 + $0x1c] sm:$0xf]
    %v2208 = vld [vmem:[%s7 + $0x20] sm:$0xf]
    %v2209 = vld [vmem:[%s7 + $0x24] sm:$0xf]
    %v2210 = vld [vmem:[%s7 + $0x28] sm:$0xf]
    %v2211 = vld [vmem:[%s7 + $0x2c] sm:$0xf]
    %v2212 = vld [vmem:[%s7 + $0x30] sm:$0xf]
    %v2213 = vld [vmem:[%s7 + $0x34] sm:$0xf]
    %v2214 = vld [vmem:[%s7 + $0x38] sm:$0xf]
    %v2215 = vld [vmem:[%s7 + $0x3c] sm:$0xf]
    %v2216 = vld [vmem:[%s7 + $0x40] sm:$0xf]
    %v2217 = vld [vmem:[%s7 + $0x44] sm:$0xf]
    %v2218 = vld [vmem:[%s7 + $0x48] sm:$0xf]
    %v2219 = vld [vmem:[%s7 + $0x4c] sm:$0xf]
    %v2220 = vld [vmem:[%s7 + $0x50] sm:$0xf]
    %v2221 = vld [vmem:[%s7 + $0x54] sm:$0xf]
    %v2222 = vld [vmem:[%s7 + $0x58] sm:$0xf]
    %v2223 = vld [vmem:[%s7 + $0x5c] sm:$0xf]
    %s2224 = scalar_lea.vmem %s7, 96
    %v2225 = vld [vmem:[%s2224] sm:$0xf]
    %v2226 = vld [vmem:[%s2224 + $0x4] sm:$0xf]
    %v2227 = vld [vmem:[%s2224 + $0x8] sm:$0xf]
    %v2228 = vld [vmem:[%s2224 + $0xc] sm:$0xf]
    %v2229 = vld [vmem:[%s2224 + $0x10] sm:$0xf]
    %v2230 = vld [vmem:[%s2224 + $0x14] sm:$0xf]
    %v2231 = vld [vmem:[%s2224 + $0x18] sm:$0xf]
    %v2232 = vld [vmem:[%s2224 + $0x1c] sm:$0xf]
    %v2233 = vld [vmem:[%s2224 + $0x20] sm:$0xf]
    %v2234 = vld [vmem:[%s2224 + $0x24] sm:$0xf]
    %v2235 = vld [vmem:[%s2224 + $0x28] sm:$0xf]
    %v2236 = vld [vmem:[%s2224 + $0x2c] sm:$0xf]
    %v2237 = vld [vmem:[%s2224 + $0x30] sm:$0xf]
    %v2238 = vld [vmem:[%s2224 + $0x34] sm:$0xf]
    %v2239 = vld [vmem:[%s2224 + $0x38] sm:$0xf]
    %v2240 = vld [vmem:[%s2224 + $0x3c] sm:$0xf]
    %v2241 = vld [vmem:[%s2224 + $0x40] sm:$0xf]
    %v2242 = vld [vmem:[%s2224 + $0x44] sm:$0xf]
    %v2243 = vld [vmem:[%s2224 + $0x48] sm:$0xf]
    %v2244 = vld [vmem:[%s2224 + $0x4c] sm:$0xf]
    %v2245 = vld [vmem:[%s2224 + $0x50] sm:$0xf]
    %v2246 = vld [vmem:[%s2224 + $0x54] sm:$0xf]
    %v2247 = vld [vmem:[%s2224 + $0x58] sm:$0xf]
    %v2248 = vld [vmem:[%s2224 + $0x5c] sm:$0xf]
    %v2257 = vunpack.c.l.b16 %v2183
    %v2258 = vunpack.c.h.b16 %v2183
    %v2259 = vunpack.c.l.b16 %v2184
    %v2260 = vunpack.c.h.b16 %v2184
    %v2261 = vunpack.c.l.b16 %v2185
    %v2262 = vunpack.c.h.b16 %v2185
    %v2263 = vunpack.c.l.b16 %v2186
    %v2264 = vunpack.c.h.b16 %v2186
    %v2265 = vunpack.c.l.b16 %v2187
    %v2266 = vunpack.c.h.b16 %v2187
    %v2267 = vunpack.c.l.b16 %v2188
    %v2268 = vunpack.c.h.b16 %v2188
    %v2269 = vunpack.c.l.b16 %v2189
    %v2270 = vunpack.c.h.b16 %v2189
    %v2271 = vunpack.c.l.b16 %v2190
    %v2272 = vunpack.c.h.b16 %v2190
    %v2273 = vpack.c.b16 %v2259, %v2257
    %v2274 = vpack.c.b16 %v2260, %v2258
    %v2275 = vpack.c.b16 %v2263, %v2261
    %v2276 = vpack.c.b16 %v2264, %v2262
    %v2277 = vpack.c.b16 %v2267, %v2265
    %v2278 = vpack.c.b16 %v2268, %v2266
    %v2279 = vpack.c.b16 %v2271, %v2269
    %v2280 = vpack.c.b16 %v2272, %v2270
    %v2309 = vunpack.c.l.b16 %v2225
    %v2310 = vunpack.c.l.b16 %v2226
    %v2311 = vunpack.c.l.b16 %v2227
    %v2312 = vunpack.c.l.b16 %v2228
    %v2313 = vunpack.c.l.b16 %v2229
    %v2314 = vunpack.c.l.b16 %v2230
    %v2315 = vunpack.c.l.b16 %v2231
    %v2316 = vunpack.c.l.b16 %v2232
    %v2317 = vunpack.c.l.b16 %v2233
    %v2318 = vunpack.c.l.b16 %v2234
    %v2319 = vunpack.c.l.b16 %v2235
    %v2320 = vunpack.c.l.b16 %v2236
    %v2321 = vunpack.c.l.b16 %v2237
    %v2322 = vunpack.c.l.b16 %v2238
    %v2323 = vunpack.c.l.b16 %v2239
    %v2324 = vunpack.c.l.b16 %v2240
    %v2325 = vunpack.c.l.b16 %v2241
    %v2326 = vunpack.c.l.b16 %v2242
    %v2327 = vunpack.c.l.b16 %v2243
    %v2328 = vunpack.c.l.b16 %v2244
    %v2329 = vunpack.c.l.b16 %v2245
    %v2330 = vunpack.c.l.b16 %v2246
    %v2331 = vunpack.c.l.b16 %v2247
    %v2332 = vunpack.c.l.b16 %v2248
    %v2333 = vpack.c.b16 %v2310, %v2309
    %v2334 = vpack.c.b16 %v2312, %v2311
    %v2335 = vpack.c.b16 %v2314, %v2313
    %v2336 = vpack.c.b16 %v2316, %v2315
    %v2337 = vpack.c.b16 %v2318, %v2317
    %v2338 = vpack.c.b16 %v2320, %v2319
    %v2339 = vpack.c.b16 %v2322, %v2321
    %v2340 = vpack.c.b16 %v2324, %v2323
    %v2341 = vpack.c.b16 %v2326, %v2325
    %v2342 = vpack.c.b16 %v2328, %v2327
    %v2343 = vpack.c.b16 %v2330, %v2329
    %v2344 = vpack.c.b16 %v2332, %v2331
    %v2358 = vsel %vm370, %v2274, 0
    %v2361 = vsel %vm370, %v2276, 0
    %v2364 = vsel %vm370, %v2278, 0
    %v2367 = vsel %vm370, %v2280, 0
    %2369 = vmatprep.subr.bf16.mxu0 0
    %2370 = vmatpush1.bf16.msra.mxu0 %v2340
    %2371 = vmatprep.subr.bf16.mxu0 0
    %2372 = vmatpush1.bf16.msra.mxu0 %v2339
    %2373 = vmatprep.subr.bf16.mxu0 0
    %2374 = vmatpush1.bf16.msra.mxu0 %v2338
    %2375 = vmatprep.subr.bf16.mxu0 0
    %2376 = vmatpush1.bf16.msra.mxu0 %v2337
    %2377 = vmatprep.subr.bf16.mxu0 0
    %2378 = vmatpush1.bf16.msra.mxu0 %v2336
    %2379 = vmatprep.subr.bf16.mxu0 0
    %2380 = vmatpush1.bf16.msra.mxu0 %v2335
    %2381 = vmatprep.subr.bf16.mxu0 0
    %2382 = vmatpush1.bf16.msra.mxu0 %v2334
    %2383 = vmatprep.subr.bf16.mxu0 0
    %2384 = vmatpush1.bf16.msra.mxu0 %v2333
    %2385 = vmatprep.subr.bf16.mxu0 0
    %2386 = vmatpush2.bf16.msra.mxu0 0
    %2387 = vmatprep.subr.bf16.mxu0 0
    %2388 = vmatpush2.bf16.msra.mxu0 0
    %2389 = vmatprep.subr.bf16.mxu0 0
    %2390 = vmatpush2.bf16.msra.mxu0 0
    %2391 = vmatprep.subr.bf16.mxu0 0
    %2392 = vmatpush2.bf16.msra.mxu0 0
    %2393 = vmatprep.subr.bf16.mxu0 0
    %2394 = vmatpush2.bf16.msra.mxu0 %v2344
    %2395 = vmatprep.subr.bf16.mxu0 0
    %2396 = vmatpush2.bf16.msra.mxu0 %v2343
    %2397 = vmatprep.subr.bf16.mxu0 0
    %2398 = vmatpush2.bf16.msra.mxu0 %v2342
    %2399 = vmatprep.subr.bf16.mxu0 0
    %2400 = vmatpush2.bf16.msra.mxu0 %v2341
    %2401 = vmatprep.mubr.bf16.mxu0 %v2358
    %2402 = vmatmul.mubr.bf16.gmra.mxu0 %v2273
    %v2403 = vpop.f32.mrf.mxu0
    %v2404 = vadd.f32 0.0, %v2403
    %v2405 = vpop.f32.mrf.mxu0
    %v2406 = vpop.f32.mrf.mxu0
    %v2407 = vadd.f32 0.0, %v2406
    %v2408 = vpop.f32.mrf.mxu0
    %2409 = vmatprep.mubr.bf16.mxu0 %v2361
    %2410 = vmatmul.mubr.bf16.gmra.mxu0 %v2275
    %v2411 = vpop.f32.mrf.mxu0
    %v2412 = vadd.f32 0.0, %v2411
    %v2413 = vpop.f32.mrf.mxu0
    %v2414 = vpop.f32.mrf.mxu0
    %v2415 = vadd.f32 0.0, %v2414
    %v2416 = vpop.f32.mrf.mxu0
    %2417 = vmatprep.mubr.bf16.mxu0 %v2364
    %2418 = vmatmul.mubr.bf16.gmra.mxu0 %v2277
    %v2419 = vpop.f32.mrf.mxu0
    %v2420 = vadd.f32 0.0, %v2419
    %v2421 = vpop.f32.mrf.mxu0
    %v2422 = vpop.f32.mrf.mxu0
    %v2423 = vadd.f32 0.0, %v2422
    %v2424 = vpop.f32.mrf.mxu0
    %2425 = vmatprep.mubr.bf16.mxu0 %v2367
    %2426 = vmatmul.mubr.bf16.gmra.mxu0 %v2279
    %v2427 = vpop.f32.mrf.mxu0
    %v2428 = vadd.f32 0.0, %v2427
    %v2429 = vpop.f32.mrf.mxu0
    %v2430 = vpop.f32.mrf.mxu0
    %v2431 = vadd.f32 0.0, %v2430
    %v2432 = vpop.f32.mrf.mxu0
    %2433 = vdwg.mxu0
    %v2443 = vunpack.c.l.b16 %v2191
    %v2444 = vunpack.c.h.b16 %v2191
    %v2445 = vunpack.c.l.b16 %v2192
    %v2446 = vunpack.c.h.b16 %v2192
    %v2447 = vunpack.c.l.b16 %v2193
    %v2448 = vunpack.c.h.b16 %v2193
    %v2449 = vunpack.c.l.b16 %v2194
    %v2450 = vunpack.c.h.b16 %v2194
    %v2451 = vunpack.c.l.b16 %v2195
    %v2452 = vunpack.c.h.b16 %v2195
    %v2453 = vunpack.c.l.b16 %v2196
    %v2454 = vunpack.c.h.b16 %v2196
    %v2455 = vunpack.c.l.b16 %v2197
    %v2456 = vunpack.c.h.b16 %v2197
    %v2457 = vunpack.c.l.b16 %v2198
    %v2458 = vunpack.c.h.b16 %v2198
    %v2459 = vunpack.c.l.b16 %v2199
    %v2460 = vunpack.c.h.b16 %v2199
    %v2461 = vpack.c.b16 %v2445, %v2443
    %v2462 = vpack.c.b16 %v2446, %v2444
    %v2463 = vpack.c.b16 %v2449, %v2447
    %v2464 = vpack.c.b16 %v2450, %v2448
    %v2465 = vpack.c.b16 %v2453, %v2451
    %v2466 = vpack.c.b16 %v2454, %v2452
    %v2467 = vpack.c.b16 %v2457, %v2455
    %v2468 = vpack.c.b16 %v2458, %v2456
    %v2469 = vpack.c.b16 %v2459, %v2459
    %v2470 = vpack.c.b16 %v2460, %v2460
    %v2472 = vshrl.u32 %v2461, 16
    %v2474 = vrot.slane %v2472, 3
    %v2475 = vshll.u32 %v2461, 16
    %v2477 = vrot.slane %v2475, 4
    %v2478 = vor.u32 %v2474, %v2477
    %v2480 = vshrl.u32 %v2463, 16
    %v2482 = vrot.slane %v2480, 3
    %v2483 = vshll.u32 %v2463, 16
    %v2485 = vrot.slane %v2483, 4
    %v2486 = vor.u32 %v2482, %v2485
    %v2487 = vsel %vm969, %v2478, %v2486
    %v2489 = vshrl.u32 %v2462, 16
    %v2491 = vrot.slane %v2489, 3
    %v2492 = vshll.u32 %v2462, 16
    %v2494 = vrot.slane %v2492, 4
    %v2495 = vor.u32 %v2491, %v2494
    %v2497 = vshrl.u32 %v2464, 16
    %v2499 = vrot.slane %v2497, 3
    %v2500 = vshll.u32 %v2464, 16
    %v2502 = vrot.slane %v2500, 4
    %v2503 = vor.u32 %v2499, %v2502
    %v2504 = vsel %vm969, %v2495, %v2503
    %v2506 = vshrl.u32 %v2465, 16
    %v2508 = vrot.slane %v2506, 3
    %v2509 = vshll.u32 %v2465, 16
    %v2511 = vrot.slane %v2509, 4
    %v2512 = vor.u32 %v2508, %v2511
    %v2513 = vsel %vm969, %v2486, %v2512
    %v2515 = vshrl.u32 %v2466, 16
    %v2517 = vrot.slane %v2515, 3
    %v2518 = vshll.u32 %v2466, 16
    %v2520 = vrot.slane %v2518, 4
    %v2521 = vor.u32 %v2517, %v2520
    %v2522 = vsel %vm969, %v2503, %v2521
    %v2524 = vshrl.u32 %v2467, 16
    %v2526 = vrot.slane %v2524, 3
    %v2527 = vshll.u32 %v2467, 16
    %v2529 = vrot.slane %v2527, 4
    %v2530 = vor.u32 %v2526, %v2529
    %v2531 = vsel %vm969, %v2512, %v2530
    %v2533 = vshrl.u32 %v2468, 16
    %v2535 = vrot.slane %v2533, 3
    %v2536 = vshll.u32 %v2468, 16
    %v2538 = vrot.slane %v2536, 4
    %v2539 = vor.u32 %v2535, %v2538
    %v2540 = vsel %vm969, %v2521, %v2539
    %v2542 = vshrl.u32 %v2469, 16
    %v2544 = vrot.slane %v2542, 3
    %v2545 = vshll.u32 %v2469, 16
    %v2547 = vrot.slane %v2545, 4
    %v2548 = vor.u32 %v2544, %v2547
    %v2549 = vsel %vm969, %v2530, %v2548
    %v2551 = vshrl.u32 %v2470, 16
    %v2553 = vrot.slane %v2551, 3
    %v2554 = vshll.u32 %v2470, 16
    %v2556 = vrot.slane %v2554, 4
    %v2557 = vor.u32 %v2553, %v2556
    %v2558 = vsel %vm969, %v2539, %v2557
    %v2587 = vunpack.c.l.b16 %v2200
    %v2588 = vunpack.c.l.b16 %v2201
    %v2589 = vunpack.c.l.b16 %v2202
    %v2590 = vunpack.c.l.b16 %v2203
    %v2591 = vunpack.c.l.b16 %v2204
    %v2592 = vunpack.c.l.b16 %v2205
    %v2593 = vunpack.c.l.b16 %v2206
    %v2594 = vunpack.c.l.b16 %v2207
    %v2595 = vunpack.c.l.b16 %v2208
    %v2596 = vunpack.c.l.b16 %v2209
    %v2597 = vunpack.c.l.b16 %v2210
    %v2598 = vunpack.c.l.b16 %v2211
    %v2599 = vunpack.c.l.b16 %v2212
    %v2600 = vunpack.c.l.b16 %v2213
    %v2601 = vunpack.c.l.b16 %v2214
    %v2602 = vunpack.c.l.b16 %v2215
    %v2603 = vunpack.c.l.b16 %v2216
    %v2604 = vunpack.c.l.b16 %v2217
    %v2605 = vunpack.c.l.b16 %v2218
    %v2606 = vunpack.c.l.b16 %v2219
    %v2607 = vunpack.c.l.b16 %v2220
    %v2608 = vunpack.c.l.b16 %v2221
    %v2609 = vunpack.c.l.b16 %v2222
    %v2610 = vunpack.c.l.b16 %v2223
    %v2611 = vpack.c.b16 %v2588, %v2587
    %v2612 = vpack.c.b16 %v2590, %v2589
    %v2613 = vpack.c.b16 %v2592, %v2591
    %v2614 = vpack.c.b16 %v2594, %v2593
    %v2615 = vpack.c.b16 %v2596, %v2595
    %v2616 = vpack.c.b16 %v2598, %v2597
    %v2617 = vpack.c.b16 %v2600, %v2599
    %v2618 = vpack.c.b16 %v2602, %v2601
    %v2619 = vpack.c.b16 %v2604, %v2603
    %v2620 = vpack.c.b16 %v2606, %v2605
    %v2621 = vpack.c.b16 %v2608, %v2607
    %v2622 = vpack.c.b16 %v2610, %v2609
    %v2636 = vsel %vm370, %v2504, 0
    %v2639 = vsel %vm370, %v2522, 0
    %v2642 = vsel %vm370, %v2540, 0
    %v2645 = vsel %vm370, %v2558, 0
    %2647 = vmatprep.subr.bf16.mxu0 0
    %2648 = vmatpush1.bf16.msra.mxu0 %v2618
    %2649 = vmatprep.subr.bf16.mxu0 0
    %2650 = vmatpush1.bf16.msra.mxu0 %v2617
    %2651 = vmatprep.subr.bf16.mxu0 0
    %2652 = vmatpush1.bf16.msra.mxu0 %v2616
    %2653 = vmatprep.subr.bf16.mxu0 0
    %2654 = vmatpush1.bf16.msra.mxu0 %v2615
    %2655 = vmatprep.subr.bf16.mxu0 0
    %2656 = vmatpush1.bf16.msra.mxu0 %v2614
    %2657 = vmatprep.subr.bf16.mxu0 0
    %2658 = vmatpush1.bf16.msra.mxu0 %v2613
    %2659 = vmatprep.subr.bf16.mxu0 0
    %2660 = vmatpush1.bf16.msra.mxu0 %v2612
    %2661 = vmatprep.subr.bf16.mxu0 0
    %2662 = vmatpush1.bf16.msra.mxu0 %v2611
    %2663 = vmatprep.subr.bf16.mxu0 0
    %2664 = vmatpush2.bf16.msra.mxu0 0
    %2665 = vmatprep.subr.bf16.mxu0 0
    %2666 = vmatpush2.bf16.msra.mxu0 0
    %2667 = vmatprep.subr.bf16.mxu0 0
    %2668 = vmatpush2.bf16.msra.mxu0 0
    %2669 = vmatprep.subr.bf16.mxu0 0
    %2670 = vmatpush2.bf16.msra.mxu0 0
    %2671 = vmatprep.subr.bf16.mxu0 0
    %2672 = vmatpush2.bf16.msra.mxu0 %v2622
    %2673 = vmatprep.subr.bf16.mxu0 0
    %2674 = vmatpush2.bf16.msra.mxu0 %v2621
    %2675 = vmatprep.subr.bf16.mxu0 0
    %2676 = vmatpush2.bf16.msra.mxu0 %v2620
    %2677 = vmatprep.subr.bf16.mxu0 0
    %2678 = vmatpush2.bf16.msra.mxu0 %v2619
    %2679 = vmatprep.mubr.bf16.mxu0 %v2636
    %2680 = vmatmul.mubr.bf16.gmra.mxu0 %v2487
    %v2681 = vpop.f32.mrf.mxu0
    %v2682 = vadd.f32 %v2404, %v2681
    %v2683 = vpop.f32.mrf.mxu0
    %v2684 = vpop.f32.mrf.mxu0
    %v2685 = vadd.f32 %v2407, %v2684
    %v2686 = vpop.f32.mrf.mxu0
    %2687 = vmatprep.mubr.bf16.mxu0 %v2639
    %2688 = vmatmul.mubr.bf16.gmra.mxu0 %v2513
    %v2689 = vpop.f32.mrf.mxu0
    %v2690 = vadd.f32 %v2412, %v2689
    %v2691 = vpop.f32.mrf.mxu0
    %v2692 = vpop.f32.mrf.mxu0
    %v2693 = vadd.f32 %v2415, %v2692
    %v2694 = vpop.f32.mrf.mxu0
    %2695 = vmatprep.mubr.bf16.mxu0 %v2642
    %2696 = vmatmul.mubr.bf16.gmra.mxu0 %v2531
    %v2697 = vpop.f32.mrf.mxu0
    %v2698 = vadd.f32 %v2420, %v2697
    %v2699 = vpop.f32.mrf.mxu0
    %v2700 = vpop.f32.mrf.mxu0
    %v2701 = vadd.f32 %v2423, %v2700
    %v2702 = vpop.f32.mrf.mxu0
    %2703 = vmatprep.mubr.bf16.mxu0 %v2645
    %2704 = vmatmul.mubr.bf16.gmra.mxu0 %v2549
    %v2705 = vpop.f32.mrf.mxu0
    %v2706 = vadd.f32 %v2428, %v2705
    %v2707 = vpop.f32.mrf.mxu0
    %v2708 = vpop.f32.mrf.mxu0
    %v2709 = vadd.f32 %v2431, %v2708
    %v2710 = vpop.f32.mrf.mxu0
    %2711 = vdwg.mxu0
    %v2712 = vld [vmem:[#allocation2 + $0x10] sm:$0xff]
    %v2713 = vld [vmem:[#allocation2 + $0x18] sm:$0xff]
    %v2714 = vld [vmem:[#allocation2 + $0x20] sm:$0xff]
    %v2715 = vld [vmem:[#allocation2 + $0x28] sm:$0xff]
    %v2716 = vld [vmem:[#allocation2 + $0x30] sm:$0xff]
    %v2717 = vld [vmem:[#allocation2 + $0x38] sm:$0xff]
    %v2718 = vld [vmem:[#allocation2 + $0x40] sm:$0xff]
    %v2719 = vld [vmem:[#allocation2 + $0x48] sm:$0xff]
    %v2720 = vld [vmem:[#allocation2 + $0x50] sm:$0x11]
    %v2721 = vmul.bf16 %v2712, %v1691
    %v2722 = vmul.bf16 %v2713, %v1700
    %v2723 = vmul.bf16 %v2714, %v1709
    %v2724 = vmul.bf16 %v2715, %v1718
    %v2725 = vmul.bf16 %v2716, %v1727
    %v2726 = vmul.bf16 %v2717, %v1736
    %v2727 = vmul.bf16 %v2718, %v1745
    %v2728 = vmul.bf16 %v2719, %v1754
    %v2729 = vmul.bf16 %v2720, %v1755
    %s2730 = scalar_lea.vmem %s7, 192
    %v2731 = vld [vmem:[%s2730] sm:$0xf]
    %v2732 = vld [vmem:[%s2730 + $0x4] sm:$0xf]
    %v2733 = vld [vmem:[%s2730 + $0x8] sm:$0xf]
    %v2734 = vld [vmem:[%s2730 + $0xc] sm:$0xf]
    %v2735 = vld [vmem:[%s2730 + $0x10] sm:$0xf]
    %v2736 = vld [vmem:[%s2730 + $0x14] sm:$0xf]
    %v2737 = vld [vmem:[%s2730 + $0x18] sm:$0xf]
    %v2738 = vld [vmem:[%s2730 + $0x1c] sm:$0xf]
    %v2739 = vld [vmem:[%s2730 + $0x20] sm:$0xf]
    %v2740 = vld [vmem:[%s2730 + $0x24] sm:$0xf]
    %v2741 = vld [vmem:[%s2730 + $0x28] sm:$0xf]
    %v2742 = vld [vmem:[%s2730 + $0x2c] sm:$0xf]
    %v2743 = vld [vmem:[%s2730 + $0x30] sm:$0xf]
    %v2744 = vld [vmem:[%s2730 + $0x34] sm:$0xf]
    %v2745 = vld [vmem:[%s2730 + $0x38] sm:$0xf]
    %v2746 = vld [vmem:[%s2730 + $0x3c] sm:$0xf]
    %v2747 = vld [vmem:[%s2730 + $0x40] sm:$0xf]
    %v2748 = vld [vmem:[%s2730 + $0x44] sm:$0xf]
    %v2749 = vld [vmem:[%s2730 + $0x48] sm:$0xf]
    %v2750 = vld [vmem:[%s2730 + $0x4c] sm:$0xf]
    %v2751 = vld [vmem:[%s2730 + $0x50] sm:$0xf]
    %v2752 = vld [vmem:[%s2730 + $0x54] sm:$0xf]
    %v2753 = vld [vmem:[%s2730 + $0x58] sm:$0xf]
    %v2754 = vld [vmem:[%s2730 + $0x5c] sm:$0xf]
    %v2764 = vunpack.c.l.b16 %v2721
    %v2765 = vunpack.c.h.b16 %v2721
    %v2766 = vunpack.c.l.b16 %v2722
    %v2767 = vunpack.c.h.b16 %v2722
    %v2768 = vunpack.c.l.b16 %v2723
    %v2769 = vunpack.c.h.b16 %v2723
    %v2770 = vunpack.c.l.b16 %v2724
    %v2771 = vunpack.c.h.b16 %v2724
    %v2772 = vunpack.c.l.b16 %v2725
    %v2773 = vunpack.c.h.b16 %v2725
    %v2774 = vunpack.c.l.b16 %v2726
    %v2775 = vunpack.c.h.b16 %v2726
    %v2776 = vunpack.c.l.b16 %v2727
    %v2777 = vunpack.c.h.b16 %v2727
    %v2778 = vunpack.c.l.b16 %v2728
    %v2779 = vunpack.c.h.b16 %v2728
    %v2780 = vunpack.c.l.b16 %v2729
    %v2781 = vunpack.c.h.b16 %v2729
    %v2782 = vpack.c.b16 %v2766, %v2764
    %v2783 = vpack.c.b16 %v2767, %v2765
    %v2784 = vpack.c.b16 %v2770, %v2768
    %v2785 = vpack.c.b16 %v2771, %v2769
    %v2786 = vpack.c.b16 %v2774, %v2772
    %v2787 = vpack.c.b16 %v2775, %v2773
    %v2788 = vpack.c.b16 %v2778, %v2776
    %v2789 = vpack.c.b16 %v2779, %v2777
    %v2790 = vpack.c.b16 %v2780, %v2780
    %v2791 = vpack.c.b16 %v2781, %v2781
    %v2793 = vshrl.u32 %v2782, 16
    %v2795 = vshll.u32 %v2782, 16
    %v2797 = vrot.slane %v2795, 1
    %v2798 = vor.u32 %v2793, %v2797
    %v2800 = vshll.u32 %v2784, 16
    %v2802 = vrot.slane %v2800, 1
    %v2803 = vsel %vm1836, %v2798, %v2802
    %v2805 = vshrl.u32 %v2783, 16
    %v2807 = vshll.u32 %v2783, 16
    %v2809 = vrot.slane %v2807, 1
    %v2810 = vor.u32 %v2805, %v2809
    %v2812 = vshll.u32 %v2785, 16
    %v2814 = vrot.slane %v2812, 1
    %v2815 = vsel %vm1836, %v2810, %v2814
    %v2816 = vshrl.u32 %v2784, 16
    %v2818 = vor.u32 %v2816, %v2802
    %v2820 = vshll.u32 %v2786, 16
    %v2822 = vrot.slane %v2820, 1
    %v2823 = vsel %vm1836, %v2818, %v2822
    %v2824 = vshrl.u32 %v2785, 16
    %v2826 = vor.u32 %v2824, %v2814
    %v2828 = vshll.u32 %v2787, 16
    %v2830 = vrot.slane %v2828, 1
    %v2831 = vsel %vm1836, %v2826, %v2830
    %v2832 = vshrl.u32 %v2786, 16
    %v2834 = vor.u32 %v2832, %v2822
    %v2836 = vshll.u32 %v2788, 16
    %v2838 = vrot.slane %v2836, 1
    %v2839 = vsel %vm1836, %v2834, %v2838
    %v2840 = vshrl.u32 %v2787, 16
    %v2842 = vor.u32 %v2840, %v2830
    %v2844 = vshll.u32 %v2789, 16
    %v2846 = vrot.slane %v2844, 1
    %v2847 = vsel %vm1836, %v2842, %v2846
    %v2848 = vshrl.u32 %v2788, 16
    %v2850 = vor.u32 %v2848, %v2838
    %v2852 = vshll.u32 %v2790, 16
    %v2854 = vrot.slane %v2852, 1
    %v2855 = vsel %vm1836, %v2850, %v2854
    %v2856 = vshrl.u32 %v2789, 16
    %v2858 = vor.u32 %v2856, %v2846
    %v2860 = vshll.u32 %v2791, 16
    %v2862 = vrot.slane %v2860, 1
    %v2863 = vsel %vm1836, %v2858, %v2862
    %v2892 = vunpack.c.l.b16 %v2731
    %v2893 = vunpack.c.l.b16 %v2732
    %v2894 = vunpack.c.l.b16 %v2733
    %v2895 = vunpack.c.l.b16 %v2734
    %v2896 = vunpack.c.l.b16 %v2735
    %v2897 = vunpack.c.l.b16 %v2736
    %v2898 = vunpack.c.l.b16 %v2737
    %v2899 = vunpack.c.l.b16 %v2738
    %v2900 = vunpack.c.l.b16 %v2739
    %v2901 = vunpack.c.l.b16 %v2740
    %v2902 = vunpack.c.l.b16 %v2741
    %v2903 = vunpack.c.l.b16 %v2742
    %v2904 = vunpack.c.l.b16 %v2743
    %v2905 = vunpack.c.l.b16 %v2744
    %v2906 = vunpack.c.l.b16 %v2745
    %v2907 = vunpack.c.l.b16 %v2746
    %v2908 = vunpack.c.l.b16 %v2747
    %v2909 = vunpack.c.l.b16 %v2748
    %v2910 = vunpack.c.l.b16 %v2749
    %v2911 = vunpack.c.l.b16 %v2750
    %v2912 = vunpack.c.l.b16 %v2751
    %v2913 = vunpack.c.l.b16 %v2752
    %v2914 = vunpack.c.l.b16 %v2753
    %v2915 = vunpack.c.l.b16 %v2754
    %v2916 = vpack.c.b16 %v2893, %v2892
    %v2917 = vpack.c.b16 %v2895, %v2894
    %v2918 = vpack.c.b16 %v2897, %v2896
    %v2919 = vpack.c.b16 %v2899, %v2898
    %v2920 = vpack.c.b16 %v2901, %v2900
    %v2921 = vpack.c.b16 %v2903, %v2902
    %v2922 = vpack.c.b16 %v2905, %v2904
    %v2923 = vpack.c.b16 %v2907, %v2906
    %v2924 = vpack.c.b16 %v2909, %v2908
    %v2925 = vpack.c.b16 %v2911, %v2910
    %v2926 = vpack.c.b16 %v2913, %v2912
    %v2927 = vpack.c.b16 %v2915, %v2914
    %v2941 = vsel %vm370, %v2815, 0
    %v2944 = vsel %vm370, %v2831, 0
    %v2947 = vsel %vm370, %v2847, 0
    %v2950 = vsel %vm370, %v2863, 0
    %2952 = vmatprep.subr.bf16.mxu0 0
    %2953 = vmatpush1.bf16.msra.mxu0 %v2923
    %2954 = vmatprep.subr.bf16.mxu0 0
    %2955 = vmatpush1.bf16.msra.mxu0 %v2922
    %2956 = vmatprep.subr.bf16.mxu0 0
    %2957 = vmatpush1.bf16.msra.mxu0 %v2921
    %2958 = vmatprep.subr.bf16.mxu0 0
    %2959 = vmatpush1.bf16.msra.mxu0 %v2920
    %2960 = vmatprep.subr.bf16.mxu0 0
    %2961 = vmatpush1.bf16.msra.mxu0 %v2919
    %2962 = vmatprep.subr.bf16.mxu0 0
    %2963 = vmatpush1.bf16.msra.mxu0 %v2918
    %2964 = vmatprep.subr.bf16.mxu0 0
    %2965 = vmatpush1.bf16.msra.mxu0 %v2917
    %2966 = vmatprep.subr.bf16.mxu0 0
    %2967 = vmatpush1.bf16.msra.mxu0 %v2916
    %2968 = vmatprep.subr.bf16.mxu0 0
    %2969 = vmatpush2.bf16.msra.mxu0 0
    %2970 = vmatprep.subr.bf16.mxu0 0
    %2971 = vmatpush2.bf16.msra.mxu0 0
    %2972 = vmatprep.subr.bf16.mxu0 0
    %2973 = vmatpush2.bf16.msra.mxu0 0
    %2974 = vmatprep.subr.bf16.mxu0 0
    %2975 = vmatpush2.bf16.msra.mxu0 0
    %2976 = vmatprep.subr.bf16.mxu0 0
    %2977 = vmatpush2.bf16.msra.mxu0 %v2927
    %2978 = vmatprep.subr.bf16.mxu0 0
    %2979 = vmatpush2.bf16.msra.mxu0 %v2926
    %2980 = vmatprep.subr.bf16.mxu0 0
    %2981 = vmatpush2.bf16.msra.mxu0 %v2925
    %2982 = vmatprep.subr.bf16.mxu0 0
    %2983 = vmatpush2.bf16.msra.mxu0 %v2924
    %2984 = vmatprep.mubr.bf16.mxu0 %v2941
    %2985 = vmatmul.mubr.bf16.gmra.mxu0 %v2803
    %v2986 = vpop.f32.mrf.mxu0
    %v2987 = vadd.f32 0.0, %v2986
    %v2988 = vpop.f32.mrf.mxu0
    %v2989 = vpop.f32.mrf.mxu0
    %v2990 = vadd.f32 0.0, %v2989
    %v2991 = vpop.f32.mrf.mxu0
    %2992 = vmatprep.mubr.bf16.mxu0 %v2944
    %2993 = vmatmul.mubr.bf16.gmra.mxu0 %v2823
    %v2994 = vpop.f32.mrf.mxu0
    %v2995 = vadd.f32 0.0, %v2994
    %v2996 = vpop.f32.mrf.mxu0
    %v2997 = vpop.f32.mrf.mxu0
    %v2998 = vadd.f32 0.0, %v2997
    %v2999 = vpop.f32.mrf.mxu0
    %3000 = vmatprep.mubr.bf16.mxu0 %v2947
    %3001 = vmatmul.mubr.bf16.gmra.mxu0 %v2839
    %v3002 = vpop.f32.mrf.mxu0
    %v3003 = vadd.f32 0.0, %v3002
    %v3004 = vpop.f32.mrf.mxu0
    %v3005 = vpop.f32.mrf.mxu0
    %v3006 = vadd.f32 0.0, %v3005
    %v3007 = vpop.f32.mrf.mxu0
    %3008 = vmatprep.mubr.bf16.mxu0 %v2950
    %3009 = vmatmul.mubr.bf16.gmra.mxu0 %v2855
    %v3010 = vpop.f32.mrf.mxu0
    %v3011 = vadd.f32 0.0, %v3010
    %v3012 = vpop.f32.mrf.mxu0
    %v3013 = vpop.f32.mrf.mxu0
    %v3014 = vadd.f32 0.0, %v3013
    %v3015 = vpop.f32.mrf.mxu0
    %3016 = vdwg.mxu0
    %v3017 = vadd.f32 %v2682, %v2987
    %v3018 = vadd.f32 %v2685, %v2990
    %v3019 = vadd.f32 %v2690, %v2995
    %v3020 = vadd.f32 %v2693, %v2998
    %v3021 = vadd.f32 %v2698, %v3003
    %v3022 = vadd.f32 %v2701, %v3006
    %v3023 = vadd.f32 %v2706, %v3011
    %v3024 = vadd.f32 %v2709, %v3014
    %v3025 = vld [vmem:[%s8] sm:$0x1]
    %v3027 = vlaneseq
    %v3028 = vshrl.u32 %v3027, 7
    %v3029 = vsub.s32 0, %v3028
    %v3030 = vrot.slane %v3025, %v3029
    %v3032 = vadd.f32 %v3017, %v3030
    %v3033 = vadd.f32 %v3018, %v3030
    %v3034 = vadd.f32 %v3019, %v3030
    %v3035 = vadd.f32 %v3020, %v3030
    %v3036 = vadd.f32 %v3021, %v3030
    %v3037 = vadd.f32 %v3022, %v3030
    %v3038 = vadd.f32 %v3023, %v3030
    %v3039 = vadd.f32 %v3024, %v3030
    %v3040 = vmax.f32 %v3032, 0.0
    %v3041 = vmax.f32 %v3033, 0.0
    %v3042 = vmax.f32 %v3034, 0.0
    %v3043 = vmax.f32 %v3035, 0.0
    %v3044 = vmax.f32 %v3036, 0.0
    %v3045 = vmax.f32 %v3037, 0.0
    %v3046 = vmax.f32 %v3038, 0.0
    %v3047 = vmax.f32 %v3039, 0.0
    %v3048 = vpack.c.bf16 %v3041, %v3040
    %v3049 = vpack.c.bf16 %v3043, %v3042
    %v3050 = vpack.c.bf16 %v3045, %v3044
    %v3051 = vpack.c.bf16 %v3047, %v3046
    %v3052 = vld [vmem:[#allocation2 + $0x8] sm:$0x88]
    %v3053 = vsel %vm956, 0, %v3052
    %3054 = vst [vmem:[#allocation2 + $0x8] sm:$0x88] %v3053
    %3055 = vst.msk [vmem:[#allocation2 + $0x10] sm:$0xff] %vm962, 0
    %3056 = vst.msk [vmem:[#allocation2 + $0x48] sm:$0xff] %vm962, 0
    %v3057 = vld [vmem:[#allocation2 + $0x50] sm:$0x11]
    %v3058 = vsel %vm971, 0, %v3057
    %3059 = vst [vmem:[#allocation2 + $0x50] sm:$0x11] %v3058
    %v3064 = vunpack.c.l.b16 %v3048
    %v3065 = vunpack.c.h.b16 %v3048
    %v3066 = vunpack.c.l.b16 %v3049
    %v3067 = vunpack.c.h.b16 %v3049
    %v3068 = vunpack.c.l.b16 %v3050
    %v3069 = vunpack.c.h.b16 %v3050
    %v3070 = vunpack.c.l.b16 %v3051
    %v3071 = vunpack.c.h.b16 %v3051
    %v3072 = vpack.c.b16 %v3064, %v3064
    %v3073 = vpack.c.b16 %v3065, %v3065
    %v3074 = vpack.c.b16 %v3066, %v3066
    %v3075 = vpack.c.b16 %v3067, %v3067
    %v3076 = vpack.c.b16 %v3068, %v3068
    %v3077 = vpack.c.b16 %v3069, %v3069
    %v3078 = vpack.c.b16 %v3070, %v3070
    %v3079 = vpack.c.b16 %v3071, %v3071
    %3088 = vst.msk [vmem:[#allocation2 + $0x18] sm:$0xf] %vm1003, %v3072
    %3089 = vst.msk [vmem:[#allocation2 + $0x20] sm:$0xf] %vm1003, %v3073
    %3090 = vst.msk [vmem:[#allocation2 + $0x28] sm:$0xf] %vm1003, %v3074
    %3091 = vst.msk [vmem:[#allocation2 + $0x30] sm:$0xf] %vm1003, %v3075
    %3092 = vst.msk [vmem:[#allocation2 + $0x38] sm:$0xf] %vm1003, %v3076
    %3093 = vst.msk [vmem:[#allocation2 + $0x40] sm:$0xf] %vm1003, %v3077
    %3094 = vst.msk [vmem:[#allocation2 + $0x48] sm:$0xf] %vm1003, %v3078
    %3095 = vst.msk [vmem:[#allocation2 + $0x50] sm:$0xf] %vm1003, %v3079
    %3096 = vrot.lane.b32.xlu0 %v3072, 64
    %v3097 = vpop.permute.xlu0 %3096
    %3098 = vrot.lane.b32.xlu0 %v3073, 64
    %v3099 = vpop.permute.xlu0 %3098
    %3100 = vrot.lane.b32.xlu0 %v3074, 64
    %v3101 = vpop.permute.xlu0 %3100
    %3102 = vrot.lane.b32.xlu0 %v3075, 64
    %v3103 = vpop.permute.xlu0 %3102
    %3104 = vrot.lane.b32.xlu0 %v3076, 64
    %v3105 = vpop.permute.xlu0 %3104
    %3106 = vrot.lane.b32.xlu0 %v3077, 64
    %v3107 = vpop.permute.xlu0 %3106
    %3108 = vrot.lane.b32.xlu0 %v3078, 64
    %v3109 = vpop.permute.xlu0 %3108
    %3110 = vrot.lane.b32.xlu0 %v3079, 64
    %v3111 = vpop.permute.xlu0 %3110
    %3120 = vst.msk [vmem:[#allocation2 + $0x10] sm:$0xf] %vm1036, %v3097
    %3121 = vst.msk [vmem:[#allocation2 + $0x18] sm:$0xf] %vm1036, %v3099
    %3122 = vst.msk [vmem:[#allocation2 + $0x20] sm:$0xf] %vm1036, %v3101
    %3123 = vst.msk [vmem:[#allocation2 + $0x28] sm:$0xf] %vm1036, %v3103
    %3124 = vst.msk [vmem:[#allocation2 + $0x30] sm:$0xf] %vm1036, %v3105
    %3125 = vst.msk [vmem:[#allocation2 + $0x38] sm:$0xf] %vm1036, %v3107
    %3126 = vst.msk [vmem:[#allocation2 + $0x40] sm:$0xf] %vm1036, %v3109
    %3127 = vst.msk [vmem:[#allocation2 + $0x48] sm:$0xf] %vm1036, %v3111
    %3128 = vst.msk [vmem:[#allocation2 + $0xc] sm:$0xf] %vm1003, %v3072
    %3129 = vst.msk [vmem:[#allocation2 + $0x14] sm:$0xf] %vm1003, %v3073
    %3130 = vst.msk [vmem:[#allocation2 + $0x1c] sm:$0xf] %vm1003, %v3074
    %3131 = vst.msk [vmem:[#allocation2 + $0x24] sm:$0xf] %vm1003, %v3075
    %3132 = vst.msk [vmem:[#allocation2 + $0x2c] sm:$0xf] %vm1003, %v3076
    %3133 = vst.msk [vmem:[#allocation2 + $0x34] sm:$0xf] %vm1003, %v3077
    %3134 = vst.msk [vmem:[#allocation2 + $0x3c] sm:$0xf] %vm1003, %v3078
    %3135 = vst.msk [vmem:[#allocation2 + $0x44] sm:$0xf] %vm1003, %v3079
    %v3136 = vld [vmem:[#allocation2 + $0x8] sm:$0x88]
    %v3137 = vld [vmem:[#allocation2 + $0x10] sm:$0xff]
    %v3138 = vld [vmem:[#allocation2 + $0x18] sm:$0xff]
    %v3139 = vld [vmem:[#allocation2 + $0x20] sm:$0xff]
    %v3140 = vld [vmem:[#allocation2 + $0x28] sm:$0xff]
    %v3141 = vld [vmem:[#allocation2 + $0x30] sm:$0xff]
    %v3142 = vld [vmem:[#allocation2 + $0x38] sm:$0xff]
    %v3143 = vld [vmem:[#allocation2 + $0x40] sm:$0xff]
    %v3144 = vld [vmem:[#allocation2 + $0x48] sm:$0xff]
    %v3145 = vmul.bf16 %v3136, %v1068
    %v3146 = vmul.bf16 %v3137, %v1078
    %v3147 = vmul.bf16 %v3138, %v1088
    %v3148 = vmul.bf16 %v3139, %v1098
    %v3149 = vmul.bf16 %v3140, %v1108
    %v3150 = vmul.bf16 %v3141, %v1118
    %v3151 = vmul.bf16 %v3142, %v1128
    %v3152 = vmul.bf16 %v3143, %v1138
    %v3153 = vmul.bf16 %v3144, %v1143
    %v3154 = vld [vmem:[%s9] sm:$0xf]
    %v3155 = vld [vmem:[%s9 + $0x4] sm:$0xf]
    %v3156 = vld [vmem:[%s9 + $0x8] sm:$0xf]
    %v3157 = vld [vmem:[%s9 + $0xc] sm:$0xf]
    %v3158 = vld [vmem:[%s9 + $0x10] sm:$0xf]
    %v3159 = vld [vmem:[%s9 + $0x14] sm:$0xf]
    %v3160 = vld [vmem:[%s9 + $0x18] sm:$0xf]
    %v3161 = vld [vmem:[%s9 + $0x1c] sm:$0xf]
    %v3162 = vld [vmem:[%s9 + $0x20] sm:$0xf]
    %v3163 = vld [vmem:[%s9 + $0x24] sm:$0xf]
    %v3164 = vld [vmem:[%s9 + $0x28] sm:$0xf]
    %v3165 = vld [vmem:[%s9 + $0x2c] sm:$0xf]
    %v3166 = vld [vmem:[%s9 + $0x30] sm:$0xf]
    %v3167 = vld [vmem:[%s9 + $0x34] sm:$0xf]
    %v3168 = vld [vmem:[%s9 + $0x38] sm:$0xf]
    %v3169 = vld [vmem:[%s9 + $0x3c] sm:$0xf]
    %v3170 = vld [vmem:[%s9 + $0x40] sm:$0xf]
    %v3171 = vld [vmem:[%s9 + $0x44] sm:$0xf]
    %v3172 = vld [vmem:[%s9 + $0x48] sm:$0xf]
    %v3173 = vld [vmem:[%s9 + $0x4c] sm:$0xf]
    %v3174 = vld [vmem:[%s9 + $0x50] sm:$0xf]
    %v3175 = vld [vmem:[%s9 + $0x54] sm:$0xf]
    %v3176 = vld [vmem:[%s9 + $0x58] sm:$0xf]
    %v3177 = vld [vmem:[%s9 + $0x5c] sm:$0xf]
    %s3178 = scalar_lea.vmem %s9, 96
    %v3179 = vld [vmem:[%s3178] sm:$0xf]
    %v3180 = vld [vmem:[%s3178 + $0x4] sm:$0xf]
    %v3181 = vld [vmem:[%s3178 + $0x8] sm:$0xf]
    %v3182 = vld [vmem:[%s3178 + $0xc] sm:$0xf]
    %v3183 = vld [vmem:[%s3178 + $0x10] sm:$0xf]
    %v3184 = vld [vmem:[%s3178 + $0x14] sm:$0xf]
    %v3185 = vld [vmem:[%s3178 + $0x18] sm:$0xf]
    %v3186 = vld [vmem:[%s3178 + $0x1c] sm:$0xf]
    %v3187 = vld [vmem:[%s3178 + $0x20] sm:$0xf]
    %v3188 = vld [vmem:[%s3178 + $0x24] sm:$0xf]
    %v3189 = vld [vmem:[%s3178 + $0x28] sm:$0xf]
    %v3190 = vld [vmem:[%s3178 + $0x2c] sm:$0xf]
    %v3191 = vld [vmem:[%s3178 + $0x30] sm:$0xf]
    %v3192 = vld [vmem:[%s3178 + $0x34] sm:$0xf]
    %v3193 = vld [vmem:[%s3178 + $0x38] sm:$0xf]
    %v3194 = vld [vmem:[%s3178 + $0x3c] sm:$0xf]
    %v3195 = vld [vmem:[%s3178 + $0x40] sm:$0xf]
    %v3196 = vld [vmem:[%s3178 + $0x44] sm:$0xf]
    %v3197 = vld [vmem:[%s3178 + $0x48] sm:$0xf]
    %v3198 = vld [vmem:[%s3178 + $0x4c] sm:$0xf]
    %v3199 = vld [vmem:[%s3178 + $0x50] sm:$0xf]
    %v3200 = vld [vmem:[%s3178 + $0x54] sm:$0xf]
    %v3201 = vld [vmem:[%s3178 + $0x58] sm:$0xf]
    %v3202 = vld [vmem:[%s3178 + $0x5c] sm:$0xf]
    %v3211 = vunpack.c.l.b16 %v3137
    %v3212 = vunpack.c.h.b16 %v3137
    %v3213 = vunpack.c.l.b16 %v3138
    %v3214 = vunpack.c.h.b16 %v3138
    %v3215 = vunpack.c.l.b16 %v3139
    %v3216 = vunpack.c.h.b16 %v3139
    %v3217 = vunpack.c.l.b16 %v3140
    %v3218 = vunpack.c.h.b16 %v3140
    %v3219 = vunpack.c.l.b16 %v3141
    %v3220 = vunpack.c.h.b16 %v3141
    %v3221 = vunpack.c.l.b16 %v3142
    %v3222 = vunpack.c.h.b16 %v3142
    %v3223 = vunpack.c.l.b16 %v3143
    %v3224 = vunpack.c.h.b16 %v3143
    %v3225 = vunpack.c.l.b16 %v3144
    %v3226 = vunpack.c.h.b16 %v3144
    %v3227 = vpack.c.b16 %v3213, %v3211
    %v3228 = vpack.c.b16 %v3214, %v3212
    %v3229 = vpack.c.b16 %v3217, %v3215
    %v3230 = vpack.c.b16 %v3218, %v3216
    %v3231 = vpack.c.b16 %v3221, %v3219
    %v3232 = vpack.c.b16 %v3222, %v3220
    %v3233 = vpack.c.b16 %v3225, %v3223
    %v3234 = vpack.c.b16 %v3226, %v3224
    %v3263 = vunpack.c.l.b16 %v3179
    %v3264 = vunpack.c.l.b16 %v3180
    %v3265 = vunpack.c.l.b16 %v3181
    %v3266 = vunpack.c.l.b16 %v3182
    %v3267 = vunpack.c.l.b16 %v3183
    %v3268 = vunpack.c.l.b16 %v3184
    %v3269 = vunpack.c.l.b16 %v3185
    %v3270 = vunpack.c.l.b16 %v3186
    %v3271 = vunpack.c.l.b16 %v3187
    %v3272 = vunpack.c.l.b16 %v3188
    %v3273 = vunpack.c.l.b16 %v3189
    %v3274 = vunpack.c.l.b16 %v3190
    %v3275 = vunpack.c.l.b16 %v3191
    %v3276 = vunpack.c.l.b16 %v3192
    %v3277 = vunpack.c.l.b16 %v3193
    %v3278 = vunpack.c.l.b16 %v3194
    %v3279 = vunpack.c.l.b16 %v3195
    %v3280 = vunpack.c.l.b16 %v3196
    %v3281 = vunpack.c.l.b16 %v3197
    %v3282 = vunpack.c.l.b16 %v3198
    %v3283 = vunpack.c.l.b16 %v3199
    %v3284 = vunpack.c.l.b16 %v3200
    %v3285 = vunpack.c.l.b16 %v3201
    %v3286 = vunpack.c.l.b16 %v3202
    %v3287 = vpack.c.b16 %v3264, %v3263
    %v3288 = vpack.c.b16 %v3266, %v3265
    %v3289 = vpack.c.b16 %v3268, %v3267
    %v3290 = vpack.c.b16 %v3270, %v3269
    %v3291 = vpack.c.b16 %v3272, %v3271
    %v3292 = vpack.c.b16 %v3274, %v3273
    %v3293 = vpack.c.b16 %v3276, %v3275
    %v3294 = vpack.c.b16 %v3278, %v3277
    %v3295 = vpack.c.b16 %v3280, %v3279
    %v3296 = vpack.c.b16 %v3282, %v3281
    %v3297 = vpack.c.b16 %v3284, %v3283
    %v3298 = vpack.c.b16 %v3286, %v3285
    %v3312 = vsel %vm370, %v3228, 0
    %v3315 = vsel %vm370, %v3230, 0
    %v3318 = vsel %vm370, %v3232, 0
    %v3321 = vsel %vm370, %v3234, 0
    %3323 = vmatprep.subr.bf16.mxu0 0
    %3324 = vmatpush1.bf16.msra.mxu0 %v3294
    %3325 = vmatprep.subr.bf16.mxu0 0
    %3326 = vmatpush1.bf16.msra.mxu0 %v3293
    %3327 = vmatprep.subr.bf16.mxu0 0
    %3328 = vmatpush1.bf16.msra.mxu0 %v3292
    %3329 = vmatprep.subr.bf16.mxu0 0
    %3330 = vmatpush1.bf16.msra.mxu0 %v3291
    %3331 = vmatprep.subr.bf16.mxu0 0
    %3332 = vmatpush1.bf16.msra.mxu0 %v3290
    %3333 = vmatprep.subr.bf16.mxu0 0
    %3334 = vmatpush1.bf16.msra.mxu0 %v3289
    %3335 = vmatprep.subr.bf16.mxu0 0
    %3336 = vmatpush1.bf16.msra.mxu0 %v3288
    %3337 = vmatprep.subr.bf16.mxu0 0
    %3338 = vmatpush1.bf16.msra.mxu0 %v3287
    %3339 = vmatprep.subr.bf16.mxu0 0
    %3340 = vmatpush2.bf16.msra.mxu0 0
    %3341 = vmatprep.subr.bf16.mxu0 0
    %3342 = vmatpush2.bf16.msra.mxu0 0
    %3343 = vmatprep.subr.bf16.mxu0 0
    %3344 = vmatpush2.bf16.msra.mxu0 0
    %3345 = vmatprep.subr.bf16.mxu0 0
    %3346 = vmatpush2.bf16.msra.mxu0 0
    %3347 = vmatprep.subr.bf16.mxu0 0
    %3348 = vmatpush2.bf16.msra.mxu0 %v3298
    %3349 = vmatprep.subr.bf16.mxu0 0
    %3350 = vmatpush2.bf16.msra.mxu0 %v3297
    %3351 = vmatprep.subr.bf16.mxu0 0
    %3352 = vmatpush2.bf16.msra.mxu0 %v3296
    %3353 = vmatprep.subr.bf16.mxu0 0
    %3354 = vmatpush2.bf16.msra.mxu0 %v3295
    %3355 = vmatprep.mubr.bf16.mxu0 %v3312
    %3356 = vmatmul.mubr.bf16.gmra.mxu0 %v3227
    %v3357 = vpop.f32.mrf.mxu0
    %v3358 = vadd.f32 0.0, %v3357
    %v3359 = vpop.f32.mrf.mxu0
    %v3360 = vpop.f32.mrf.mxu0
    %v3361 = vadd.f32 0.0, %v3360
    %v3362 = vpop.f32.mrf.mxu0
    %3363 = vmatprep.mubr.bf16.mxu0 %v3315
    %3364 = vmatmul.mubr.bf16.gmra.mxu0 %v3229
    %v3365 = vpop.f32.mrf.mxu0
    %v3366 = vadd.f32 0.0, %v3365
    %v3367 = vpop.f32.mrf.mxu0
    %v3368 = vpop.f32.mrf.mxu0
    %v3369 = vadd.f32 0.0, %v3368
    %v3370 = vpop.f32.mrf.mxu0
    %3371 = vmatprep.mubr.bf16.mxu0 %v3318
    %3372 = vmatmul.mubr.bf16.gmra.mxu0 %v3231
    %v3373 = vpop.f32.mrf.mxu0
    %v3374 = vadd.f32 0.0, %v3373
    %v3375 = vpop.f32.mrf.mxu0
    %v3376 = vpop.f32.mrf.mxu0
    %v3377 = vadd.f32 0.0, %v3376
    %v3378 = vpop.f32.mrf.mxu0
    %3379 = vmatprep.mubr.bf16.mxu0 %v3321
    %3380 = vmatmul.mubr.bf16.gmra.mxu0 %v3233
    %v3381 = vpop.f32.mrf.mxu0
    %v3382 = vadd.f32 0.0, %v3381
    %v3383 = vpop.f32.mrf.mxu0
    %v3384 = vpop.f32.mrf.mxu0
    %v3385 = vadd.f32 0.0, %v3384
    %v3386 = vpop.f32.mrf.mxu0
    %3387 = vdwg.mxu0
    %v3397 = vunpack.c.l.b16 %v3145
    %v3398 = vunpack.c.h.b16 %v3145
    %v3399 = vunpack.c.l.b16 %v3146
    %v3400 = vunpack.c.h.b16 %v3146
    %v3401 = vunpack.c.l.b16 %v3147
    %v3402 = vunpack.c.h.b16 %v3147
    %v3403 = vunpack.c.l.b16 %v3148
    %v3404 = vunpack.c.h.b16 %v3148
    %v3405 = vunpack.c.l.b16 %v3149
    %v3406 = vunpack.c.h.b16 %v3149
    %v3407 = vunpack.c.l.b16 %v3150
    %v3408 = vunpack.c.h.b16 %v3150
    %v3409 = vunpack.c.l.b16 %v3151
    %v3410 = vunpack.c.h.b16 %v3151
    %v3411 = vunpack.c.l.b16 %v3152
    %v3412 = vunpack.c.h.b16 %v3152
    %v3413 = vunpack.c.l.b16 %v3153
    %v3414 = vunpack.c.h.b16 %v3153
    %v3415 = vpack.c.b16 %v3399, %v3397
    %v3416 = vpack.c.b16 %v3400, %v3398
    %v3417 = vpack.c.b16 %v3403, %v3401
    %v3418 = vpack.c.b16 %v3404, %v3402
    %v3419 = vpack.c.b16 %v3407, %v3405
    %v3420 = vpack.c.b16 %v3408, %v3406
    %v3421 = vpack.c.b16 %v3411, %v3409
    %v3422 = vpack.c.b16 %v3412, %v3410
    %v3423 = vpack.c.b16 %v3413, %v3413
    %v3424 = vpack.c.b16 %v3414, %v3414
    %v3426 = vshrl.u32 %v3415, 16
    %v3428 = vrot.slane %v3426, 3
    %v3429 = vshll.u32 %v3415, 16
    %v3431 = vrot.slane %v3429, 4
    %v3432 = vor.u32 %v3428, %v3431
    %v3434 = vshrl.u32 %v3417, 16
    %v3436 = vrot.slane %v3434, 3
    %v3437 = vshll.u32 %v3417, 16
    %v3439 = vrot.slane %v3437, 4
    %v3440 = vor.u32 %v3436, %v3439
    %v3441 = vsel %vm969, %v3432, %v3440
    %v3443 = vshrl.u32 %v3416, 16
    %v3445 = vrot.slane %v3443, 3
    %v3446 = vshll.u32 %v3416, 16
    %v3448 = vrot.slane %v3446, 4
    %v3449 = vor.u32 %v3445, %v3448
    %v3451 = vshrl.u32 %v3418, 16
    %v3453 = vrot.slane %v3451, 3
    %v3454 = vshll.u32 %v3418, 16
    %v3456 = vrot.slane %v3454, 4
    %v3457 = vor.u32 %v3453, %v3456
    %v3458 = vsel %vm969, %v3449, %v3457
    %v3460 = vshrl.u32 %v3419, 16
    %v3462 = vrot.slane %v3460, 3
    %v3463 = vshll.u32 %v3419, 16
    %v3465 = vrot.slane %v3463, 4
    %v3466 = vor.u32 %v3462, %v3465
    %v3467 = vsel %vm969, %v3440, %v3466
    %v3469 = vshrl.u32 %v3420, 16
    %v3471 = vrot.slane %v3469, 3
    %v3472 = vshll.u32 %v3420, 16
    %v3474 = vrot.slane %v3472, 4
    %v3475 = vor.u32 %v3471, %v3474
    %v3476 = vsel %vm969, %v3457, %v3475
    %v3478 = vshrl.u32 %v3421, 16
    %v3480 = vrot.slane %v3478, 3
    %v3481 = vshll.u32 %v3421, 16
    %v3483 = vrot.slane %v3481, 4
    %v3484 = vor.u32 %v3480, %v3483
    %v3485 = vsel %vm969, %v3466, %v3484
    %v3487 = vshrl.u32 %v3422, 16
    %v3489 = vrot.slane %v3487, 3
    %v3490 = vshll.u32 %v3422, 16
    %v3492 = vrot.slane %v3490, 4
    %v3493 = vor.u32 %v3489, %v3492
    %v3494 = vsel %vm969, %v3475, %v3493
    %v3496 = vshrl.u32 %v3423, 16
    %v3498 = vrot.slane %v3496, 3
    %v3499 = vshll.u32 %v3423, 16
    %v3501 = vrot.slane %v3499, 4
    %v3502 = vor.u32 %v3498, %v3501
    %v3503 = vsel %vm969, %v3484, %v3502
    %v3505 = vshrl.u32 %v3424, 16
    %v3507 = vrot.slane %v3505, 3
    %v3508 = vshll.u32 %v3424, 16
    %v3510 = vrot.slane %v3508, 4
    %v3511 = vor.u32 %v3507, %v3510
    %v3512 = vsel %vm969, %v3493, %v3511
    %v3541 = vunpack.c.l.b16 %v3154
    %v3542 = vunpack.c.l.b16 %v3155
    %v3543 = vunpack.c.l.b16 %v3156
    %v3544 = vunpack.c.l.b16 %v3157
    %v3545 = vunpack.c.l.b16 %v3158
    %v3546 = vunpack.c.l.b16 %v3159
    %v3547 = vunpack.c.l.b16 %v3160
    %v3548 = vunpack.c.l.b16 %v3161
    %v3549 = vunpack.c.l.b16 %v3162
    %v3550 = vunpack.c.l.b16 %v3163
    %v3551 = vunpack.c.l.b16 %v3164
    %v3552 = vunpack.c.l.b16 %v3165
    %v3553 = vunpack.c.l.b16 %v3166
    %v3554 = vunpack.c.l.b16 %v3167
    %v3555 = vunpack.c.l.b16 %v3168
    %v3556 = vunpack.c.l.b16 %v3169
    %v3557 = vunpack.c.l.b16 %v3170
    %v3558 = vunpack.c.l.b16 %v3171
    %v3559 = vunpack.c.l.b16 %v3172
    %v3560 = vunpack.c.l.b16 %v3173
    %v3561 = vunpack.c.l.b16 %v3174
    %v3562 = vunpack.c.l.b16 %v3175
    %v3563 = vunpack.c.l.b16 %v3176
    %v3564 = vunpack.c.l.b16 %v3177
    %v3565 = vpack.c.b16 %v3542, %v3541
    %v3566 = vpack.c.b16 %v3544, %v3543
    %v3567 = vpack.c.b16 %v3546, %v3545
    %v3568 = vpack.c.b16 %v3548, %v3547
    %v3569 = vpack.c.b16 %v3550, %v3549
    %v3570 = vpack.c.b16 %v3552, %v3551
    %v3571 = vpack.c.b16 %v3554, %v3553
    %v3572 = vpack.c.b16 %v3556, %v3555
    %v3573 = vpack.c.b16 %v3558, %v3557
    %v3574 = vpack.c.b16 %v3560, %v3559
    %v3575 = vpack.c.b16 %v3562, %v3561
    %v3576 = vpack.c.b16 %v3564, %v3563
    %v3590 = vsel %vm370, %v3458, 0
    %v3593 = vsel %vm370, %v3476, 0
    %v3596 = vsel %vm370, %v3494, 0
    %v3599 = vsel %vm370, %v3512, 0
    %3601 = vmatprep.subr.bf16.mxu0 0
    %3602 = vmatpush1.bf16.msra.mxu0 %v3572
    %3603 = vmatprep.subr.bf16.mxu0 0
    %3604 = vmatpush1.bf16.msra.mxu0 %v3571
    %3605 = vmatprep.subr.bf16.mxu0 0
    %3606 = vmatpush1.bf16.msra.mxu0 %v3570
    %3607 = vmatprep.subr.bf16.mxu0 0
    %3608 = vmatpush1.bf16.msra.mxu0 %v3569
    %3609 = vmatprep.subr.bf16.mxu0 0
    %3610 = vmatpush1.bf16.msra.mxu0 %v3568
    %3611 = vmatprep.subr.bf16.mxu0 0
    %3612 = vmatpush1.bf16.msra.mxu0 %v3567
    %3613 = vmatprep.subr.bf16.mxu0 0
    %3614 = vmatpush1.bf16.msra.mxu0 %v3566
    %3615 = vmatprep.subr.bf16.mxu0 0
    %3616 = vmatpush1.bf16.msra.mxu0 %v3565
    %3617 = vmatprep.subr.bf16.mxu0 0
    %3618 = vmatpush2.bf16.msra.mxu0 0
    %3619 = vmatprep.subr.bf16.mxu0 0
    %3620 = vmatpush2.bf16.msra.mxu0 0
    %3621 = vmatprep.subr.bf16.mxu0 0
    %3622 = vmatpush2.bf16.msra.mxu0 0
    %3623 = vmatprep.subr.bf16.mxu0 0
    %3624 = vmatpush2.bf16.msra.mxu0 0
    %3625 = vmatprep.subr.bf16.mxu0 0
    %3626 = vmatpush2.bf16.msra.mxu0 %v3576
    %3627 = vmatprep.subr.bf16.mxu0 0
    %3628 = vmatpush2.bf16.msra.mxu0 %v3575
    %3629 = vmatprep.subr.bf16.mxu0 0
    %3630 = vmatpush2.bf16.msra.mxu0 %v3574
    %3631 = vmatprep.subr.bf16.mxu0 0
    %3632 = vmatpush2.bf16.msra.mxu0 %v3573
    %3633 = vmatprep.mubr.bf16.mxu0 %v3590
    %3634 = vmatmul.mubr.bf16.gmra.mxu0 %v3441
    %v3635 = vpop.f32.mrf.mxu0
    %v3636 = vadd.f32 %v3358, %v3635
    %v3637 = vpop.f32.mrf.mxu0
    %v3638 = vpop.f32.mrf.mxu0
    %v3639 = vadd.f32 %v3361, %v3638
    %v3640 = vpop.f32.mrf.mxu0
    %3641 = vmatprep.mubr.bf16.mxu0 %v3593
    %3642 = vmatmul.mubr.bf16.gmra.mxu0 %v3467
    %v3643 = vpop.f32.mrf.mxu0
    %v3644 = vadd.f32 %v3366, %v3643
    %v3645 = vpop.f32.mrf.mxu0
    %v3646 = vpop.f32.mrf.mxu0
    %v3647 = vadd.f32 %v3369, %v3646
    %v3648 = vpop.f32.mrf.mxu0
    %3649 = vmatprep.mubr.bf16.mxu0 %v3596
    %3650 = vmatmul.mubr.bf16.gmra.mxu0 %v3485
    %v3651 = vpop.f32.mrf.mxu0
    %v3652 = vadd.f32 %v3374, %v3651
    %v3653 = vpop.f32.mrf.mxu0
    %v3654 = vpop.f32.mrf.mxu0
    %v3655 = vadd.f32 %v3377, %v3654
    %v3656 = vpop.f32.mrf.mxu0
    %3657 = vmatprep.mubr.bf16.mxu0 %v3599
    %3658 = vmatmul.mubr.bf16.gmra.mxu0 %v3503
    %v3659 = vpop.f32.mrf.mxu0
    %v3660 = vadd.f32 %v3382, %v3659
    %v3661 = vpop.f32.mrf.mxu0
    %v3662 = vpop.f32.mrf.mxu0
    %v3663 = vadd.f32 %v3385, %v3662
    %v3664 = vpop.f32.mrf.mxu0
    %3665 = vdwg.mxu0
    %v3666 = vld [vmem:[#allocation2 + $0x10] sm:$0xff]
    %v3667 = vld [vmem:[#allocation2 + $0x18] sm:$0xff]
    %v3668 = vld [vmem:[#allocation2 + $0x20] sm:$0xff]
    %v3669 = vld [vmem:[#allocation2 + $0x28] sm:$0xff]
    %v3670 = vld [vmem:[#allocation2 + $0x30] sm:$0xff]
    %v3671 = vld [vmem:[#allocation2 + $0x38] sm:$0xff]
    %v3672 = vld [vmem:[#allocation2 + $0x40] sm:$0xff]
    %v3673 = vld [vmem:[#allocation2 + $0x48] sm:$0xff]
    %v3674 = vld [vmem:[#allocation2 + $0x50] sm:$0x11]
    %v3675 = vmul.bf16 %v3666, %v1691
    %v3676 = vmul.bf16 %v3667, %v1700
    %v3677 = vmul.bf16 %v3668, %v1709
    %v3678 = vmul.bf16 %v3669, %v1718
    %v3679 = vmul.bf16 %v3670, %v1727
    %v3680 = vmul.bf16 %v3671, %v1736
    %v3681 = vmul.bf16 %v3672, %v1745
    %v3682 = vmul.bf16 %v3673, %v1754
    %v3683 = vmul.bf16 %v3674, %v1755
    %s3684 = scalar_lea.vmem %s9, 192
    %v3685 = vld [vmem:[%s3684] sm:$0xf]
    %v3686 = vld [vmem:[%s3684 + $0x4] sm:$0xf]
    %v3687 = vld [vmem:[%s3684 + $0x8] sm:$0xf]
    %v3688 = vld [vmem:[%s3684 + $0xc] sm:$0xf]
    %v3689 = vld [vmem:[%s3684 + $0x10] sm:$0xf]
    %v3690 = vld [vmem:[%s3684 + $0x14] sm:$0xf]
    %v3691 = vld [vmem:[%s3684 + $0x18] sm:$0xf]
    %v3692 = vld [vmem:[%s3684 + $0x1c] sm:$0xf]
    %v3693 = vld [vmem:[%s3684 + $0x20] sm:$0xf]
    %v3694 = vld [vmem:[%s3684 + $0x24] sm:$0xf]
    %v3695 = vld [vmem:[%s3684 + $0x28] sm:$0xf]
    %v3696 = vld [vmem:[%s3684 + $0x2c] sm:$0xf]
    %v3697 = vld [vmem:[%s3684 + $0x30] sm:$0xf]
    %v3698 = vld [vmem:[%s3684 + $0x34] sm:$0xf]
    %v3699 = vld [vmem:[%s3684 + $0x38] sm:$0xf]
    %v3700 = vld [vmem:[%s3684 + $0x3c] sm:$0xf]
    %v3701 = vld [vmem:[%s3684 + $0x40] sm:$0xf]
    %v3702 = vld [vmem:[%s3684 + $0x44] sm:$0xf]
    %v3703 = vld [vmem:[%s3684 + $0x48] sm:$0xf]
    %v3704 = vld [vmem:[%s3684 + $0x4c] sm:$0xf]
    %v3705 = vld [vmem:[%s3684 + $0x50] sm:$0xf]
    %v3706 = vld [vmem:[%s3684 + $0x54] sm:$0xf]
    %v3707 = vld [vmem:[%s3684 + $0x58] sm:$0xf]
    %v3708 = vld [vmem:[%s3684 + $0x5c] sm:$0xf]
    %v3718 = vunpack.c.l.b16 %v3675
    %v3719 = vunpack.c.h.b16 %v3675
    %v3720 = vunpack.c.l.b16 %v3676
    %v3721 = vunpack.c.h.b16 %v3676
    %v3722 = vunpack.c.l.b16 %v3677
    %v3723 = vunpack.c.h.b16 %v3677
    %v3724 = vunpack.c.l.b16 %v3678
    %v3725 = vunpack.c.h.b16 %v3678
    %v3726 = vunpack.c.l.b16 %v3679
    %v3727 = vunpack.c.h.b16 %v3679
    %v3728 = vunpack.c.l.b16 %v3680
    %v3729 = vunpack.c.h.b16 %v3680
    %v3730 = vunpack.c.l.b16 %v3681
    %v3731 = vunpack.c.h.b16 %v3681
    %v3732 = vunpack.c.l.b16 %v3682
    %v3733 = vunpack.c.h.b16 %v3682
    %v3734 = vunpack.c.l.b16 %v3683
    %v3735 = vunpack.c.h.b16 %v3683
    %v3736 = vpack.c.b16 %v3720, %v3718
    %v3737 = vpack.c.b16 %v3721, %v3719
    %v3738 = vpack.c.b16 %v3724, %v3722
    %v3739 = vpack.c.b16 %v3725, %v3723
    %v3740 = vpack.c.b16 %v3728, %v3726
    %v3741 = vpack.c.b16 %v3729, %v3727
    %v3742 = vpack.c.b16 %v3732, %v3730
    %v3743 = vpack.c.b16 %v3733, %v3731
    %v3744 = vpack.c.b16 %v3734, %v3734
    %v3745 = vpack.c.b16 %v3735, %v3735
    %v3747 = vshrl.u32 %v3736, 16
    %v3749 = vshll.u32 %v3736, 16
    %v3751 = vrot.slane %v3749, 1
    %v3752 = vor.u32 %v3747, %v3751
    %v3754 = vshll.u32 %v3738, 16
    %v3756 = vrot.slane %v3754, 1
    %v3757 = vsel %vm1836, %v3752, %v3756
    %v3759 = vshrl.u32 %v3737, 16
    %v3761 = vshll.u32 %v3737, 16
    %v3763 = vrot.slane %v3761, 1
    %v3764 = vor.u32 %v3759, %v3763
    %v3766 = vshll.u32 %v3739, 16
    %v3768 = vrot.slane %v3766, 1
    %v3769 = vsel %vm1836, %v3764, %v3768
    %v3770 = vshrl.u32 %v3738, 16
    %v3772 = vor.u32 %v3770, %v3756
    %v3774 = vshll.u32 %v3740, 16
    %v3776 = vrot.slane %v3774, 1
    %v3777 = vsel %vm1836, %v3772, %v3776
    %v3778 = vshrl.u32 %v3739, 16
    %v3780 = vor.u32 %v3778, %v3768
    %v3782 = vshll.u32 %v3741, 16
    %v3784 = vrot.slane %v3782, 1
    %v3785 = vsel %vm1836, %v3780, %v3784
    %v3786 = vshrl.u32 %v3740, 16
    %v3788 = vor.u32 %v3786, %v3776
    %v3790 = vshll.u32 %v3742, 16
    %v3792 = vrot.slane %v3790, 1
    %v3793 = vsel %vm1836, %v3788, %v3792
    %v3794 = vshrl.u32 %v3741, 16
    %v3796 = vor.u32 %v3794, %v3784
    %v3798 = vshll.u32 %v3743, 16
    %v3800 = vrot.slane %v3798, 1
    %v3801 = vsel %vm1836, %v3796, %v3800
    %v3802 = vshrl.u32 %v3742, 16
    %v3804 = vor.u32 %v3802, %v3792
    %v3806 = vshll.u32 %v3744, 16
    %v3808 = vrot.slane %v3806, 1
    %v3809 = vsel %vm1836, %v3804, %v3808
    %v3810 = vshrl.u32 %v3743, 16
    %v3812 = vor.u32 %v3810, %v3800
    %v3814 = vshll.u32 %v3745, 16
    %v3816 = vrot.slane %v3814, 1
    %v3817 = vsel %vm1836, %v3812, %v3816
    %v3846 = vunpack.c.l.b16 %v3685
    %v3847 = vunpack.c.l.b16 %v3686
    %v3848 = vunpack.c.l.b16 %v3687
    %v3849 = vunpack.c.l.b16 %v3688
    %v3850 = vunpack.c.l.b16 %v3689
    %v3851 = vunpack.c.l.b16 %v3690
    %v3852 = vunpack.c.l.b16 %v3691
    %v3853 = vunpack.c.l.b16 %v3692
    %v3854 = vunpack.c.l.b16 %v3693
    %v3855 = vunpack.c.l.b16 %v3694
    %v3856 = vunpack.c.l.b16 %v3695
    %v3857 = vunpack.c.l.b16 %v3696
    %v3858 = vunpack.c.l.b16 %v3697
    %v3859 = vunpack.c.l.b16 %v3698
    %v3860 = vunpack.c.l.b16 %v3699
    %v3861 = vunpack.c.l.b16 %v3700
    %v3862 = vunpack.c.l.b16 %v3701
    %v3863 = vunpack.c.l.b16 %v3702
    %v3864 = vunpack.c.l.b16 %v3703
    %v3865 = vunpack.c.l.b16 %v3704
    %v3866 = vunpack.c.l.b16 %v3705
    %v3867 = vunpack.c.l.b16 %v3706
    %v3868 = vunpack.c.l.b16 %v3707
    %v3869 = vunpack.c.l.b16 %v3708
    %v3870 = vpack.c.b16 %v3847, %v3846
    %v3871 = vpack.c.b16 %v3849, %v3848
    %v3872 = vpack.c.b16 %v3851, %v3850
    %v3873 = vpack.c.b16 %v3853, %v3852
    %v3874 = vpack.c.b16 %v3855, %v3854
    %v3875 = vpack.c.b16 %v3857, %v3856
    %v3876 = vpack.c.b16 %v3859, %v3858
    %v3877 = vpack.c.b16 %v3861, %v3860
    %v3878 = vpack.c.b16 %v3863, %v3862
    %v3879 = vpack.c.b16 %v3865, %v3864
    %v3880 = vpack.c.b16 %v3867, %v3866
    %v3881 = vpack.c.b16 %v3869, %v3868
    %v3895 = vsel %vm370, %v3769, 0
    %v3898 = vsel %vm370, %v3785, 0
    %v3901 = vsel %vm370, %v3801, 0
    %v3904 = vsel %vm370, %v3817, 0
    %3906 = vmatprep.subr.bf16.mxu0 0
    %3907 = vmatpush1.bf16.msra.mxu0 %v3877
    %3908 = vmatprep.subr.bf16.mxu0 0
    %3909 = vmatpush1.bf16.msra.mxu0 %v3876
    %3910 = vmatprep.subr.bf16.mxu0 0
    %3911 = vmatpush1.bf16.msra.mxu0 %v3875
    %3912 = vmatprep.subr.bf16.mxu0 0
    %3913 = vmatpush1.bf16.msra.mxu0 %v3874
    %3914 = vmatprep.subr.bf16.mxu0 0
    %3915 = vmatpush1.bf16.msra.mxu0 %v3873
    %3916 = vmatprep.subr.bf16.mxu0 0
    %3917 = vmatpush1.bf16.msra.mxu0 %v3872
    %3918 = vmatprep.subr.bf16.mxu0 0
    %3919 = vmatpush1.bf16.msra.mxu0 %v3871
    %3920 = vmatprep.subr.bf16.mxu0 0
    %3921 = vmatpush1.bf16.msra.mxu0 %v3870
    %3922 = vmatprep.subr.bf16.mxu0 0
    %3923 = vmatpush2.bf16.msra.mxu0 0
    %3924 = vmatprep.subr.bf16.mxu0 0
    %3925 = vmatpush2.bf16.msra.mxu0 0
    %3926 = vmatprep.subr.bf16.mxu0 0
    %3927 = vmatpush2.bf16.msra.mxu0 0
    %3928 = vmatprep.subr.bf16.mxu0 0
    %3929 = vmatpush2.bf16.msra.mxu0 0
    %3930 = vmatprep.subr.bf16.mxu0 0
    %3931 = vmatpush2.bf16.msra.mxu0 %v3881
    %3932 = vmatprep.subr.bf16.mxu0 0
    %3933 = vmatpush2.bf16.msra.mxu0 %v3880
    %3934 = vmatprep.subr.bf16.mxu0 0
    %3935 = vmatpush2.bf16.msra.mxu0 %v3879
    %3936 = vmatprep.subr.bf16.mxu0 0
    %3937 = vmatpush2.bf16.msra.mxu0 %v3878
    %3938 = vmatprep.mubr.bf16.mxu0 %v3895
    %3939 = vmatmul.mubr.bf16.gmra.mxu0 %v3757
    %v3940 = vpop.f32.mrf.mxu0
    %v3941 = vadd.f32 0.0, %v3940
    %v3942 = vpop.f32.mrf.mxu0
    %v3943 = vpop.f32.mrf.mxu0
    %v3944 = vadd.f32 0.0, %v3943
    %v3945 = vpop.f32.mrf.mxu0
    %3946 = vmatprep.mubr.bf16.mxu0 %v3898
    %3947 = vmatmul.mubr.bf16.gmra.mxu0 %v3777
    %v3948 = vpop.f32.mrf.mxu0
    %v3949 = vadd.f32 0.0, %v3948
    %v3950 = vpop.f32.mrf.mxu0
    %v3951 = vpop.f32.mrf.mxu0
    %v3952 = vadd.f32 0.0, %v3951
    %v3953 = vpop.f32.mrf.mxu0
    %3954 = vmatprep.mubr.bf16.mxu0 %v3901
    %3955 = vmatmul.mubr.bf16.gmra.mxu0 %v3793
    %v3956 = vpop.f32.mrf.mxu0
    %v3957 = vadd.f32 0.0, %v3956
    %v3958 = vpop.f32.mrf.mxu0
    %v3959 = vpop.f32.mrf.mxu0
    %v3960 = vadd.f32 0.0, %v3959
    %v3961 = vpop.f32.mrf.mxu0
    %3962 = vmatprep.mubr.bf16.mxu0 %v3904
    %3963 = vmatmul.mubr.bf16.gmra.mxu0 %v3809
    %v3964 = vpop.f32.mrf.mxu0
    %v3965 = vadd.f32 0.0, %v3964
    %v3966 = vpop.f32.mrf.mxu0
    %v3967 = vpop.f32.mrf.mxu0
    %v3968 = vadd.f32 0.0, %v3967
    %v3969 = vpop.f32.mrf.mxu0
    %3970 = vdwg.mxu0
    %v3971 = vadd.f32 %v3636, %v3941
    %v3972 = vadd.f32 %v3639, %v3944
    %v3973 = vadd.f32 %v3644, %v3949
    %v3974 = vadd.f32 %v3647, %v3952
    %v3975 = vadd.f32 %v3652, %v3957
    %v3976 = vadd.f32 %v3655, %v3960
    %v3977 = vadd.f32 %v3660, %v3965
    %v3978 = vadd.f32 %v3663, %v3968
    %v3979 = vld [vmem:[%s10] sm:$0x1]
    %v3981 = vlaneseq
    %v3982 = vshrl.u32 %v3981, 7
    %v3983 = vsub.s32 0, %v3982
    %v3984 = vrot.slane %v3979, %v3983
    %v3986 = vadd.f32 %v3971, %v3984
    %v3987 = vadd.f32 %v3972, %v3984
    %v3988 = vadd.f32 %v3973, %v3984
    %v3989 = vadd.f32 %v3974, %v3984
    %v3990 = vadd.f32 %v3975, %v3984
    %v3991 = vadd.f32 %v3976, %v3984
    %v3992 = vadd.f32 %v3977, %v3984
    %v3993 = vadd.f32 %v3978, %v3984
    %v3994 = vmax.f32 %v3986, 0.0
    %v3995 = vmax.f32 %v3987, 0.0
    %v3996 = vmax.f32 %v3988, 0.0
    %v3997 = vmax.f32 %v3989, 0.0
    %v3998 = vmax.f32 %v3990, 0.0
    %v3999 = vmax.f32 %v3991, 0.0
    %v4000 = vmax.f32 %v3992, 0.0
    %v4001 = vmax.f32 %v3993, 0.0
    %v4002 = vpack.c.bf16 %v3995, %v3994
    %v4003 = vpack.c.bf16 %v3997, %v3996
    %v4004 = vpack.c.bf16 %v3999, %v3998
    %v4005 = vpack.c.bf16 %v4001, %v4000
    %v4010 = vunpack.c.l.b16 %v4002
    %v4011 = vunpack.c.h.b16 %v4002
    %v4012 = vunpack.c.l.b16 %v4003
    %v4013 = vunpack.c.h.b16 %v4003
    %v4014 = vunpack.c.l.b16 %v4004
    %v4015 = vunpack.c.h.b16 %v4004
    %v4016 = vunpack.c.l.b16 %v4005
    %v4017 = vunpack.c.h.b16 %v4005
    %v4018 = vpack.c.b16 %v4010, %v4010
    %v4019 = vpack.c.b16 %v4011, %v4011
    %v4020 = vpack.c.b16 %v4012, %v4012
    %v4021 = vpack.c.b16 %v4013, %v4013
    %v4022 = vpack.c.b16 %v4014, %v4014
    %v4023 = vpack.c.b16 %v4015, %v4015
    %v4024 = vpack.c.b16 %v4016, %v4016
    %v4025 = vpack.c.b16 %v4017, %v4017
    %4026 = vrot.lane.b32.xlu0 %v4018, 64
    %v4027 = vpop.permute.xlu0 %4026
    %4028 = vrot.lane.b32.xlu0 %v4019, 64
    %v4029 = vpop.permute.xlu0 %4028
    %4030 = vrot.lane.b32.xlu0 %v4020, 64
    %v4031 = vpop.permute.xlu0 %4030
    %4032 = vrot.lane.b32.xlu0 %v4021, 64
    %v4033 = vpop.permute.xlu0 %4032
    %4034 = vrot.lane.b32.xlu0 %v4022, 64
    %v4035 = vpop.permute.xlu0 %4034
    %4036 = vrot.lane.b32.xlu0 %v4023, 64
    %v4037 = vpop.permute.xlu0 %4036
    %4038 = vrot.lane.b32.xlu0 %v4024, 64
    %v4039 = vpop.permute.xlu0 %4038
    %4040 = vrot.lane.b32.xlu0 %v4025, 64
    %v4041 = vpop.permute.xlu0 %4040
    %4050 = vst.msk [vmem:[#allocation3] sm:$0xf] %vm1036, %v4027
    %4051 = vst.msk [vmem:[#allocation3 + $0x4] sm:$0xf] %vm1036, %v4029
    %4052 = vst.msk [vmem:[#allocation3 + $0x8] sm:$0xf] %vm1036, %v4031
    %4053 = vst.msk [vmem:[#allocation3 + $0xc] sm:$0xf] %vm1036, %v4033
    %4054 = vst.msk [vmem:[#allocation3 + $0x10] sm:$0xf] %vm1036, %v4035
    %4055 = vst.msk [vmem:[#allocation3 + $0x14] sm:$0xf] %vm1036, %v4037
    %4056 = vst.msk [vmem:[#allocation3 + $0x18] sm:$0xf] %vm1036, %v4039
    %4057 = vst.msk [vmem:[#allocation3 + $0x1c] sm:$0xf] %vm1036, %v4041
    %v4058 = vld [vmem:[#allocation2 + $0x8] sm:$0x88]
    %v4059 = vsel %vm956, 0, %v4058
    %4060 = vst [vmem:[#allocation2 + $0x8] sm:$0x88] %v4059
    %4061 = vst.msk [vmem:[#allocation2 + $0x10] sm:$0xff] %vm962, 0
    %4062 = vst.msk [vmem:[#allocation2 + $0x48] sm:$0xff] %vm962, 0
    %v4063 = vld [vmem:[#allocation2 + $0x50] sm:$0x11]
    %v4064 = vsel %vm971, 0, %v4063
    %4065 = vst [vmem:[#allocation2 + $0x50] sm:$0x11] %v4064
    %v4070 = vunpack.c.l.b16 %v661
    %v4071 = vunpack.c.h.b16 %v661
    %v4072 = vunpack.c.l.b16 %v663
    %v4073 = vunpack.c.h.b16 %v663
    %v4074 = vunpack.c.l.b16 %v665
    %v4075 = vunpack.c.h.b16 %v665
    %v4076 = vunpack.c.l.b16 %v667
    %v4077 = vunpack.c.h.b16 %v667
    %v4078 = vpack.c.b16 %v4070, %v4070
    %v4079 = vpack.c.b16 %v4071, %v4071
    %v4080 = vpack.c.b16 %v4072, %v4072
    %v4081 = vpack.c.b16 %v4073, %v4073
    %v4082 = vpack.c.b16 %v4074, %v4074
    %v4083 = vpack.c.b16 %v4075, %v4075
    %v4084 = vpack.c.b16 %v4076, %v4076
    %v4085 = vpack.c.b16 %v4077, %v4077
    %4094 = vst.msk [vmem:[#allocation2 + $0x18] sm:$0xf] %vm1003, %v4078
    %4095 = vst.msk [vmem:[#allocation2 + $0x20] sm:$0xf] %vm1003, %v4079
    %4096 = vst.msk [vmem:[#allocation2 + $0x28] sm:$0xf] %vm1003, %v4080
    %4097 = vst.msk [vmem:[#allocation2 + $0x30] sm:$0xf] %vm1003, %v4081
    %4098 = vst.msk [vmem:[#allocation2 + $0x38] sm:$0xf] %vm1003, %v4082
    %4099 = vst.msk [vmem:[#allocation2 + $0x40] sm:$0xf] %vm1003, %v4083
    %4100 = vst.msk [vmem:[#allocation2 + $0x48] sm:$0xf] %vm1003, %v4084
    %4101 = vst.msk [vmem:[#allocation2 + $0x50] sm:$0xf] %vm1003, %v4085
    %4102 = vrot.lane.b32.xlu0 %v4078, 64
    %v4103 = vpop.permute.xlu0 %4102
    %4104 = vrot.lane.b32.xlu0 %v4079, 64
    %v4105 = vpop.permute.xlu0 %4104
    %4106 = vrot.lane.b32.xlu0 %v4080, 64
    %v4107 = vpop.permute.xlu0 %4106
    %4108 = vrot.lane.b32.xlu0 %v4081, 64
    %v4109 = vpop.permute.xlu0 %4108
    %4110 = vrot.lane.b32.xlu0 %v4082, 64
    %v4111 = vpop.permute.xlu0 %4110
    %4112 = vrot.lane.b32.xlu0 %v4083, 64
    %v4113 = vpop.permute.xlu0 %4112
    %4114 = vrot.lane.b32.xlu0 %v4084, 64
    %v4115 = vpop.permute.xlu0 %4114
    %4116 = vrot.lane.b32.xlu0 %v4085, 64
    %v4117 = vpop.permute.xlu0 %4116
    %4126 = vst.msk [vmem:[#allocation2 + $0x10] sm:$0xf] %vm1036, %v4103
    %4127 = vst.msk [vmem:[#allocation2 + $0x18] sm:$0xf] %vm1036, %v4105
    %4128 = vst.msk [vmem:[#allocation2 + $0x20] sm:$0xf] %vm1036, %v4107
    %4129 = vst.msk [vmem:[#allocation2 + $0x28] sm:$0xf] %vm1036, %v4109
    %4130 = vst.msk [vmem:[#allocation2 + $0x30] sm:$0xf] %vm1036, %v4111
    %4131 = vst.msk [vmem:[#allocation2 + $0x38] sm:$0xf] %vm1036, %v4113
    %4132 = vst.msk [vmem:[#allocation2 + $0x40] sm:$0xf] %vm1036, %v4115
    %4133 = vst.msk [vmem:[#allocation2 + $0x48] sm:$0xf] %vm1036, %v4117
    %4134 = vst.msk [vmem:[#allocation2 + $0xc] sm:$0xf] %vm1003, %v4078
    %4135 = vst.msk [vmem:[#allocation2 + $0x14] sm:$0xf] %vm1003, %v4079
    %4136 = vst.msk [vmem:[#allocation2 + $0x1c] sm:$0xf] %vm1003, %v4080
    %4137 = vst.msk [vmem:[#allocation2 + $0x24] sm:$0xf] %vm1003, %v4081
    %4138 = vst.msk [vmem:[#allocation2 + $0x2c] sm:$0xf] %vm1003, %v4082
    %4139 = vst.msk [vmem:[#allocation2 + $0x34] sm:$0xf] %vm1003, %v4083
    %4140 = vst.msk [vmem:[#allocation2 + $0x3c] sm:$0xf] %vm1003, %v4084
    %4141 = vst.msk [vmem:[#allocation2 + $0x44] sm:$0xf] %vm1003, %v4085
    %v4142 = vld [vmem:[#allocation2 + $0x8] sm:$0x88]
    %v4143 = vld [vmem:[#allocation2 + $0x10] sm:$0xff]
    %v4144 = vld [vmem:[#allocation2 + $0x18] sm:$0xff]
    %v4145 = vld [vmem:[#allocation2 + $0x20] sm:$0xff]
    %v4146 = vld [vmem:[#allocation2 + $0x28] sm:$0xff]
    %v4147 = vld [vmem:[#allocation2 + $0x30] sm:$0xff]
    %v4148 = vld [vmem:[#allocation2 + $0x38] sm:$0xff]
    %v4149 = vld [vmem:[#allocation2 + $0x40] sm:$0xff]
    %v4150 = vld [vmem:[#allocation2 + $0x48] sm:$0xff]
    %v4151 = vmul.bf16 %v4142, %v1068
    %v4152 = vmul.bf16 %v4143, %v1078
    %v4153 = vmul.bf16 %v4144, %v1088
    %v4154 = vmul.bf16 %v4145, %v1098
    %v4155 = vmul.bf16 %v4146, %v1108
    %v4156 = vmul.bf16 %v4147, %v1118
    %v4157 = vmul.bf16 %v4148, %v1128
    %v4158 = vmul.bf16 %v4149, %v1138
    %v4159 = vmul.bf16 %v4150, %v1143
    %v4160 = vld [vmem:[%s5] sm:$0xf]
    %v4161 = vld [vmem:[%s5 + $0x4] sm:$0xf]
    %v4162 = vld [vmem:[%s5 + $0x8] sm:$0xf]
    %v4163 = vld [vmem:[%s5 + $0xc] sm:$0xf]
    %v4164 = vld [vmem:[%s5 + $0x10] sm:$0xf]
    %v4165 = vld [vmem:[%s5 + $0x14] sm:$0xf]
    %v4166 = vld [vmem:[%s5 + $0x18] sm:$0xf]
    %v4167 = vld [vmem:[%s5 + $0x1c] sm:$0xf]
    %v4168 = vld [vmem:[%s5 + $0x20] sm:$0xf]
    %v4169 = vld [vmem:[%s5 + $0x24] sm:$0xf]
    %v4170 = vld [vmem:[%s5 + $0x28] sm:$0xf]
    %v4171 = vld [vmem:[%s5 + $0x2c] sm:$0xf]
    %v4172 = vld [vmem:[%s5 + $0x30] sm:$0xf]
    %v4173 = vld [vmem:[%s5 + $0x34] sm:$0xf]
    %v4174 = vld [vmem:[%s5 + $0x38] sm:$0xf]
    %v4175 = vld [vmem:[%s5 + $0x3c] sm:$0xf]
    %v4176 = vld [vmem:[%s5 + $0x40] sm:$0xf]
    %v4177 = vld [vmem:[%s5 + $0x44] sm:$0xf]
    %v4178 = vld [vmem:[%s5 + $0x48] sm:$0xf]
    %v4179 = vld [vmem:[%s5 + $0x4c] sm:$0xf]
    %v4180 = vld [vmem:[%s5 + $0x50] sm:$0xf]
    %v4181 = vld [vmem:[%s5 + $0x54] sm:$0xf]
    %v4182 = vld [vmem:[%s5 + $0x58] sm:$0xf]
    %v4183 = vld [vmem:[%s5 + $0x5c] sm:$0xf]
    %v4184 = vld [vmem:[%s1186] sm:$0xf]
    %v4185 = vld [vmem:[%s1186 + $0x4] sm:$0xf]
    %v4186 = vld [vmem:[%s1186 + $0x8] sm:$0xf]
    %v4187 = vld [vmem:[%s1186 + $0xc] sm:$0xf]
    %v4188 = vld [vmem:[%s1186 + $0x10] sm:$0xf]
    %v4189 = vld [vmem:[%s1186 + $0x14] sm:$0xf]
    %v4190 = vld [vmem:[%s1186 + $0x18] sm:$0xf]
    %v4191 = vld [vmem:[%s1186 + $0x1c] sm:$0xf]
    %v4192 = vld [vmem:[%s1186 + $0x20] sm:$0xf]
    %v4193 = vld [vmem:[%s1186 + $0x24] sm:$0xf]
    %v4194 = vld [vmem:[%s1186 + $0x28] sm:$0xf]
    %v4195 = vld [vmem:[%s1186 + $0x2c] sm:$0xf]
    %v4196 = vld [vmem:[%s1186 + $0x30] sm:$0xf]
    %v4197 = vld [vmem:[%s1186 + $0x34] sm:$0xf]
    %v4198 = vld [vmem:[%s1186 + $0x38] sm:$0xf]
    %v4199 = vld [vmem:[%s1186 + $0x3c] sm:$0xf]
    %v4200 = vld [vmem:[%s1186 + $0x40] sm:$0xf]
    %v4201 = vld [vmem:[%s1186 + $0x44] sm:$0xf]
    %v4202 = vld [vmem:[%s1186 + $0x48] sm:$0xf]
    %v4203 = vld [vmem:[%s1186 + $0x4c] sm:$0xf]
    %v4204 = vld [vmem:[%s1186 + $0x50] sm:$0xf]
    %v4205 = vld [vmem:[%s1186 + $0x54] sm:$0xf]
    %v4206 = vld [vmem:[%s1186 + $0x58] sm:$0xf]
    %v4207 = vld [vmem:[%s1186 + $0x5c] sm:$0xf]
    %v4216 = vunpack.c.l.b16 %v4143
    %v4217 = vunpack.c.h.b16 %v4143
    %v4218 = vunpack.c.l.b16 %v4144
    %v4219 = vunpack.c.h.b16 %v4144
    %v4220 = vunpack.c.l.b16 %v4145
    %v4221 = vunpack.c.h.b16 %v4145
    %v4222 = vunpack.c.l.b16 %v4146
    %v4223 = vunpack.c.h.b16 %v4146
    %v4224 = vunpack.c.l.b16 %v4147
    %v4225 = vunpack.c.h.b16 %v4147
    %v4226 = vunpack.c.l.b16 %v4148
    %v4227 = vunpack.c.h.b16 %v4148
    %v4228 = vunpack.c.l.b16 %v4149
    %v4229 = vunpack.c.h.b16 %v4149
    %v4230 = vunpack.c.l.b16 %v4150
    %v4231 = vunpack.c.h.b16 %v4150
    %v4232 = vpack.c.b16 %v4218, %v4216
    %v4233 = vpack.c.b16 %v4219, %v4217
    %v4234 = vpack.c.b16 %v4222, %v4220
    %v4235 = vpack.c.b16 %v4223, %v4221
    %v4236 = vpack.c.b16 %v4226, %v4224
    %v4237 = vpack.c.b16 %v4227, %v4225
    %v4238 = vpack.c.b16 %v4230, %v4228
    %v4239 = vpack.c.b16 %v4231, %v4229
    %v4268 = vunpack.c.l.b16 %v4184
    %v4269 = vunpack.c.l.b16 %v4185
    %v4270 = vunpack.c.l.b16 %v4186
    %v4271 = vunpack.c.l.b16 %v4187
    %v4272 = vunpack.c.l.b16 %v4188
    %v4273 = vunpack.c.l.b16 %v4189
    %v4274 = vunpack.c.l.b16 %v4190
    %v4275 = vunpack.c.l.b16 %v4191
    %v4276 = vunpack.c.l.b16 %v4192
    %v4277 = vunpack.c.l.b16 %v4193
    %v4278 = vunpack.c.l.b16 %v4194
    %v4279 = vunpack.c.l.b16 %v4195
    %v4280 = vunpack.c.l.b16 %v4196
    %v4281 = vunpack.c.l.b16 %v4197
    %v4282 = vunpack.c.l.b16 %v4198
    %v4283 = vunpack.c.l.b16 %v4199
    %v4284 = vunpack.c.l.b16 %v4200
    %v4285 = vunpack.c.l.b16 %v4201
    %v4286 = vunpack.c.l.b16 %v4202
    %v4287 = vunpack.c.l.b16 %v4203
    %v4288 = vunpack.c.l.b16 %v4204
    %v4289 = vunpack.c.l.b16 %v4205
    %v4290 = vunpack.c.l.b16 %v4206
    %v4291 = vunpack.c.l.b16 %v4207
    %v4292 = vpack.c.b16 %v4269, %v4268
    %v4293 = vpack.c.b16 %v4271, %v4270
    %v4294 = vpack.c.b16 %v4273, %v4272
    %v4295 = vpack.c.b16 %v4275, %v4274
    %v4296 = vpack.c.b16 %v4277, %v4276
    %v4297 = vpack.c.b16 %v4279, %v4278
    %v4298 = vpack.c.b16 %v4281, %v4280
    %v4299 = vpack.c.b16 %v4283, %v4282
    %v4300 = vpack.c.b16 %v4285, %v4284
    %v4301 = vpack.c.b16 %v4287, %v4286
    %v4302 = vpack.c.b16 %v4289, %v4288
    %v4303 = vpack.c.b16 %v4291, %v4290
    %v4317 = vsel %vm370, %v4233, 0
    %v4320 = vsel %vm370, %v4235, 0
    %v4323 = vsel %vm370, %v4237, 0
    %v4326 = vsel %vm370, %v4239, 0
    %4328 = vmatprep.subr.bf16.mxu0 0
    %4329 = vmatpush1.bf16.msra.mxu0 %v4299
    %4330 = vmatprep.subr.bf16.mxu0 0
    %4331 = vmatpush1.bf16.msra.mxu0 %v4298
    %4332 = vmatprep.subr.bf16.mxu0 0
    %4333 = vmatpush1.bf16.msra.mxu0 %v4297
    %4334 = vmatprep.subr.bf16.mxu0 0
    %4335 = vmatpush1.bf16.msra.mxu0 %v4296
    %4336 = vmatprep.subr.bf16.mxu0 0
    %4337 = vmatpush1.bf16.msra.mxu0 %v4295
    %4338 = vmatprep.subr.bf16.mxu0 0
    %4339 = vmatpush1.bf16.msra.mxu0 %v4294
    %4340 = vmatprep.subr.bf16.mxu0 0
    %4341 = vmatpush1.bf16.msra.mxu0 %v4293
    %4342 = vmatprep.subr.bf16.mxu0 0
    %4343 = vmatpush1.bf16.msra.mxu0 %v4292
    %4344 = vmatprep.subr.bf16.mxu0 0
    %4345 = vmatpush2.bf16.msra.mxu0 0
    %4346 = vmatprep.subr.bf16.mxu0 0
    %4347 = vmatpush2.bf16.msra.mxu0 0
    %4348 = vmatprep.subr.bf16.mxu0 0
    %4349 = vmatpush2.bf16.msra.mxu0 0
    %4350 = vmatprep.subr.bf16.mxu0 0
    %4351 = vmatpush2.bf16.msra.mxu0 0
    %4352 = vmatprep.subr.bf16.mxu0 0
    %4353 = vmatpush2.bf16.msra.mxu0 %v4303
    %4354 = vmatprep.subr.bf16.mxu0 0
    %4355 = vmatpush2.bf16.msra.mxu0 %v4302
    %4356 = vmatprep.subr.bf16.mxu0 0
    %4357 = vmatpush2.bf16.msra.mxu0 %v4301
    %4358 = vmatprep.subr.bf16.mxu0 0
    %4359 = vmatpush2.bf16.msra.mxu0 %v4300
    %4360 = vmatprep.mubr.bf16.mxu0 %v4317
    %4361 = vmatmul.mubr.bf16.gmra.mxu0 %v4232
    %v4362 = vpop.f32.mrf.mxu0
    %v4363 = vadd.f32 0.0, %v4362
    %v4364 = vpop.f32.mrf.mxu0
    %v4365 = vpop.f32.mrf.mxu0
    %v4366 = vadd.f32 0.0, %v4365
    %v4367 = vpop.f32.mrf.mxu0
    %4368 = vmatprep.mubr.bf16.mxu0 %v4320
    %4369 = vmatmul.mubr.bf16.gmra.mxu0 %v4234
    %v4370 = vpop.f32.mrf.mxu0
    %v4371 = vadd.f32 0.0, %v4370
    %v4372 = vpop.f32.mrf.mxu0
    %v4373 = vpop.f32.mrf.mxu0
    %v4374 = vadd.f32 0.0, %v4373
    %v4375 = vpop.f32.mrf.mxu0
    %4376 = vmatprep.mubr.bf16.mxu0 %v4323
    %4377 = vmatmul.mubr.bf16.gmra.mxu0 %v4236
    %v4378 = vpop.f32.mrf.mxu0
    %v4379 = vadd.f32 0.0, %v4378
    %v4380 = vpop.f32.mrf.mxu0
    %v4381 = vpop.f32.mrf.mxu0
    %v4382 = vadd.f32 0.0, %v4381
    %v4383 = vpop.f32.mrf.mxu0
    %4384 = vmatprep.mubr.bf16.mxu0 %v4326
    %4385 = vmatmul.mubr.bf16.gmra.mxu0 %v4238
    %v4386 = vpop.f32.mrf.mxu0
    %v4387 = vadd.f32 0.0, %v4386
    %v4388 = vpop.f32.mrf.mxu0
    %v4389 = vpop.f32.mrf.mxu0
    %v4390 = vadd.f32 0.0, %v4389
    %v4391 = vpop.f32.mrf.mxu0
    %4392 = vdwg.mxu0
    %v4402 = vunpack.c.l.b16 %v4151
    %v4403 = vunpack.c.h.b16 %v4151
    %v4404 = vunpack.c.l.b16 %v4152
    %v4405 = vunpack.c.h.b16 %v4152
    %v4406 = vunpack.c.l.b16 %v4153
    %v4407 = vunpack.c.h.b16 %v4153
    %v4408 = vunpack.c.l.b16 %v4154
    %v4409 = vunpack.c.h.b16 %v4154
    %v4410 = vunpack.c.l.b16 %v4155
    %v4411 = vunpack.c.h.b16 %v4155
    %v4412 = vunpack.c.l.b16 %v4156
    %v4413 = vunpack.c.h.b16 %v4156
    %v4414 = vunpack.c.l.b16 %v4157
    %v4415 = vunpack.c.h.b16 %v4157
    %v4416 = vunpack.c.l.b16 %v4158
    %v4417 = vunpack.c.h.b16 %v4158
    %v4418 = vunpack.c.l.b16 %v4159
    %v4419 = vunpack.c.h.b16 %v4159
    %v4420 = vpack.c.b16 %v4404, %v4402
    %v4421 = vpack.c.b16 %v4405, %v4403
    %v4422 = vpack.c.b16 %v4408, %v4406
    %v4423 = vpack.c.b16 %v4409, %v4407
    %v4424 = vpack.c.b16 %v4412, %v4410
    %v4425 = vpack.c.b16 %v4413, %v4411
    %v4426 = vpack.c.b16 %v4416, %v4414
    %v4427 = vpack.c.b16 %v4417, %v4415
    %v4428 = vpack.c.b16 %v4418, %v4418
    %v4429 = vpack.c.b16 %v4419, %v4419
    %v4431 = vshrl.u32 %v4420, 16
    %v4433 = vrot.slane %v4431, 3
    %v4434 = vshll.u32 %v4420, 16
    %v4436 = vrot.slane %v4434, 4
    %v4437 = vor.u32 %v4433, %v4436
    %v4439 = vshrl.u32 %v4422, 16
    %v4441 = vrot.slane %v4439, 3
    %v4442 = vshll.u32 %v4422, 16
    %v4444 = vrot.slane %v4442, 4
    %v4445 = vor.u32 %v4441, %v4444
    %v4446 = vsel %vm969, %v4437, %v4445
    %v4448 = vshrl.u32 %v4421, 16
    %v4450 = vrot.slane %v4448, 3
    %v4451 = vshll.u32 %v4421, 16
    %v4453 = vrot.slane %v4451, 4
    %v4454 = vor.u32 %v4450, %v4453
    %v4456 = vshrl.u32 %v4423, 16
    %v4458 = vrot.slane %v4456, 3
    %v4459 = vshll.u32 %v4423, 16
    %v4461 = vrot.slane %v4459, 4
    %v4462 = vor.u32 %v4458, %v4461
    %v4463 = vsel %vm969, %v4454, %v4462
    %v4465 = vshrl.u32 %v4424, 16
    %v4467 = vrot.slane %v4465, 3
    %v4468 = vshll.u32 %v4424, 16
    %v4470 = vrot.slane %v4468, 4
    %v4471 = vor.u32 %v4467, %v4470
    %v4472 = vsel %vm969, %v4445, %v4471
    %v4474 = vshrl.u32 %v4425, 16
    %v4476 = vrot.slane %v4474, 3
    %v4477 = vshll.u32 %v4425, 16
    %v4479 = vrot.slane %v4477, 4
    %v4480 = vor.u32 %v4476, %v4479
    %v4481 = vsel %vm969, %v4462, %v4480
    %v4483 = vshrl.u32 %v4426, 16
    %v4485 = vrot.slane %v4483, 3
    %v4486 = vshll.u32 %v4426, 16
    %v4488 = vrot.slane %v4486, 4
    %v4489 = vor.u32 %v4485, %v4488
    %v4490 = vsel %vm969, %v4471, %v4489
    %v4492 = vshrl.u32 %v4427, 16
    %v4494 = vrot.slane %v4492, 3
    %v4495 = vshll.u32 %v4427, 16
    %v4497 = vrot.slane %v4495, 4
    %v4498 = vor.u32 %v4494, %v4497
    %v4499 = vsel %vm969, %v4480, %v4498
    %v4501 = vshrl.u32 %v4428, 16
    %v4503 = vrot.slane %v4501, 3
    %v4504 = vshll.u32 %v4428, 16
    %v4506 = vrot.slane %v4504, 4
    %v4507 = vor.u32 %v4503, %v4506
    %v4508 = vsel %vm969, %v4489, %v4507
    %v4510 = vshrl.u32 %v4429, 16
    %v4512 = vrot.slane %v4510, 3
    %v4513 = vshll.u32 %v4429, 16
    %v4515 = vrot.slane %v4513, 4
    %v4516 = vor.u32 %v4512, %v4515
    %v4517 = vsel %vm969, %v4498, %v4516
    %v4546 = vunpack.c.l.b16 %v4160
    %v4547 = vunpack.c.l.b16 %v4161
    %v4548 = vunpack.c.l.b16 %v4162
    %v4549 = vunpack.c.l.b16 %v4163
    %v4550 = vunpack.c.l.b16 %v4164
    %v4551 = vunpack.c.l.b16 %v4165
    %v4552 = vunpack.c.l.b16 %v4166
    %v4553 = vunpack.c.l.b16 %v4167
    %v4554 = vunpack.c.l.b16 %v4168
    %v4555 = vunpack.c.l.b16 %v4169
    %v4556 = vunpack.c.l.b16 %v4170
    %v4557 = vunpack.c.l.b16 %v4171
    %v4558 = vunpack.c.l.b16 %v4172
    %v4559 = vunpack.c.l.b16 %v4173
    %v4560 = vunpack.c.l.b16 %v4174
    %v4561 = vunpack.c.l.b16 %v4175
    %v4562 = vunpack.c.l.b16 %v4176
    %v4563 = vunpack.c.l.b16 %v4177
    %v4564 = vunpack.c.l.b16 %v4178
    %v4565 = vunpack.c.l.b16 %v4179
    %v4566 = vunpack.c.l.b16 %v4180
    %v4567 = vunpack.c.l.b16 %v4181
    %v4568 = vunpack.c.l.b16 %v4182
    %v4569 = vunpack.c.l.b16 %v4183
    %v4570 = vpack.c.b16 %v4547, %v4546
    %v4571 = vpack.c.b16 %v4549, %v4548
    %v4572 = vpack.c.b16 %v4551, %v4550
    %v4573 = vpack.c.b16 %v4553, %v4552
    %v4574 = vpack.c.b16 %v4555, %v4554
    %v4575 = vpack.c.b16 %v4557, %v4556
    %v4576 = vpack.c.b16 %v4559, %v4558
    %v4577 = vpack.c.b16 %v4561, %v4560
    %v4578 = vpack.c.b16 %v4563, %v4562
    %v4579 = vpack.c.b16 %v4565, %v4564
    %v4580 = vpack.c.b16 %v4567, %v4566
    %v4581 = vpack.c.b16 %v4569, %v4568
    %v4595 = vsel %vm370, %v4463, 0
    %v4598 = vsel %vm370, %v4481, 0
    %v4601 = vsel %vm370, %v4499, 0
    %v4604 = vsel %vm370, %v4517, 0
    %4606 = vmatprep.subr.bf16.mxu0 0
    %4607 = vmatpush1.bf16.msra.mxu0 %v4577
    %4608 = vmatprep.subr.bf16.mxu0 0
    %4609 = vmatpush1.bf16.msra.mxu0 %v4576
    %4610 = vmatprep.subr.bf16.mxu0 0
    %4611 = vmatpush1.bf16.msra.mxu0 %v4575
    %4612 = vmatprep.subr.bf16.mxu0 0
    %4613 = vmatpush1.bf16.msra.mxu0 %v4574
    %4614 = vmatprep.subr.bf16.mxu0 0
    %4615 = vmatpush1.bf16.msra.mxu0 %v4573
    %4616 = vmatprep.subr.bf16.mxu0 0
    %4617 = vmatpush1.bf16.msra.mxu0 %v4572
    %4618 = vmatprep.subr.bf16.mxu0 0
    %4619 = vmatpush1.bf16.msra.mxu0 %v4571
    %4620 = vmatprep.subr.bf16.mxu0 0
    %4621 = vmatpush1.bf16.msra.mxu0 %v4570
    %4622 = vmatprep.subr.bf16.mxu0 0
    %4623 = vmatpush2.bf16.msra.mxu0 0
    %4624 = vmatprep.subr.bf16.mxu0 0
    %4625 = vmatpush2.bf16.msra.mxu0 0
    %4626 = vmatprep.subr.bf16.mxu0 0
    %4627 = vmatpush2.bf16.msra.mxu0 0
    %4628 = vmatprep.subr.bf16.mxu0 0
    %4629 = vmatpush2.bf16.msra.mxu0 0
    %4630 = vmatprep.subr.bf16.mxu0 0
    %4631 = vmatpush2.bf16.msra.mxu0 %v4581
    %4632 = vmatprep.subr.bf16.mxu0 0
    %4633 = vmatpush2.bf16.msra.mxu0 %v4580
    %4634 = vmatprep.subr.bf16.mxu0 0
    %4635 = vmatpush2.bf16.msra.mxu0 %v4579
    %4636 = vmatprep.subr.bf16.mxu0 0
    %4637 = vmatpush2.bf16.msra.mxu0 %v4578
    %4638 = vmatprep.mubr.bf16.mxu0 %v4595
    %4639 = vmatmul.mubr.bf16.gmra.mxu0 %v4446
    %v4640 = vpop.f32.mrf.mxu0
    %v4641 = vadd.f32 %v4363, %v4640
    %v4642 = vpop.f32.mrf.mxu0
    %v4643 = vpop.f32.mrf.mxu0
    %v4644 = vadd.f32 %v4366, %v4643
    %v4645 = vpop.f32.mrf.mxu0
    %4646 = vmatprep.mubr.bf16.mxu0 %v4598
    %4647 = vmatmul.mubr.bf16.gmra.mxu0 %v4472
    %v4648 = vpop.f32.mrf.mxu0
    %v4649 = vadd.f32 %v4371, %v4648
    %v4650 = vpop.f32.mrf.mxu0
    %v4651 = vpop.f32.mrf.mxu0
    %v4652 = vadd.f32 %v4374, %v4651
    %v4653 = vpop.f32.mrf.mxu0
    %4654 = vmatprep.mubr.bf16.mxu0 %v4601
    %4655 = vmatmul.mubr.bf16.gmra.mxu0 %v4490
    %v4656 = vpop.f32.mrf.mxu0
    %v4657 = vadd.f32 %v4379, %v4656
    %v4658 = vpop.f32.mrf.mxu0
    %v4659 = vpop.f32.mrf.mxu0
    %v4660 = vadd.f32 %v4382, %v4659
    %v4661 = vpop.f32.mrf.mxu0
    %4662 = vmatprep.mubr.bf16.mxu0 %v4604
    %4663 = vmatmul.mubr.bf16.gmra.mxu0 %v4508
    %v4664 = vpop.f32.mrf.mxu0
    %v4665 = vadd.f32 %v4387, %v4664
    %v4666 = vpop.f32.mrf.mxu0
    %v4667 = vpop.f32.mrf.mxu0
    %v4668 = vadd.f32 %v4390, %v4667
    %v4669 = vpop.f32.mrf.mxu0
    %4670 = vdwg.mxu0
    %v4671 = vld [vmem:[#allocation2 + $0x10] sm:$0xff]
    %v4672 = vld [vmem:[#allocation2 + $0x18] sm:$0xff]
    %v4673 = vld [vmem:[#allocation2 + $0x20] sm:$0xff]
    %v4674 = vld [vmem:[#allocation2 + $0x28] sm:$0xff]
    %v4675 = vld [vmem:[#allocation2 + $0x30] sm:$0xff]
    %v4676 = vld [vmem:[#allocation2 + $0x38] sm:$0xff]
    %v4677 = vld [vmem:[#allocation2 + $0x40] sm:$0xff]
    %v4678 = vld [vmem:[#allocation2 + $0x48] sm:$0xff]
    %v4679 = vld [vmem:[#allocation2 + $0x50] sm:$0x11]
    %v4680 = vmul.bf16 %v4671, %v1691
    %v4681 = vmul.bf16 %v4672, %v1700
    %v4682 = vmul.bf16 %v4673, %v1709
    %v4683 = vmul.bf16 %v4674, %v1718
    %v4684 = vmul.bf16 %v4675, %v1727
    %v4685 = vmul.bf16 %v4676, %v1736
    %v4686 = vmul.bf16 %v4677, %v1745
    %v4687 = vmul.bf16 %v4678, %v1754
    %v4688 = vmul.bf16 %v4679, %v1755
    %v4689 = vld [vmem:[%s1774] sm:$0xf]
    %v4690 = vld [vmem:[%s1774 + $0x4] sm:$0xf]
    %v4691 = vld [vmem:[%s1774 + $0x8] sm:$0xf]
    %v4692 = vld [vmem:[%s1774 + $0xc] sm:$0xf]
    %v4693 = vld [vmem:[%s1774 + $0x10] sm:$0xf]
    %v4694 = vld [vmem:[%s1774 + $0x14] sm:$0xf]
    %v4695 = vld [vmem:[%s1774 + $0x18] sm:$0xf]
    %v4696 = vld [vmem:[%s1774 + $0x1c] sm:$0xf]
    %v4697 = vld [vmem:[%s1774 + $0x20] sm:$0xf]
    %v4698 = vld [vmem:[%s1774 + $0x24] sm:$0xf]
    %v4699 = vld [vmem:[%s1774 + $0x28] sm:$0xf]
    %v4700 = vld [vmem:[%s1774 + $0x2c] sm:$0xf]
    %v4701 = vld [vmem:[%s1774 + $0x30] sm:$0xf]
    %v4702 = vld [vmem:[%s1774 + $0x34] sm:$0xf]
    %v4703 = vld [vmem:[%s1774 + $0x38] sm:$0xf]
    %v4704 = vld [vmem:[%s1774 + $0x3c] sm:$0xf]
    %v4705 = vld [vmem:[%s1774 + $0x40] sm:$0xf]
    %v4706 = vld [vmem:[%s1774 + $0x44] sm:$0xf]
    %v4707 = vld [vmem:[%s1774 + $0x48] sm:$0xf]
    %v4708 = vld [vmem:[%s1774 + $0x4c] sm:$0xf]
    %v4709 = vld [vmem:[%s1774 + $0x50] sm:$0xf]
    %v4710 = vld [vmem:[%s1774 + $0x54] sm:$0xf]
    %v4711 = vld [vmem:[%s1774 + $0x58] sm:$0xf]
    %v4712 = vld [vmem:[%s1774 + $0x5c] sm:$0xf]
    %v4722 = vunpack.c.l.b16 %v4680
    %v4723 = vunpack.c.h.b16 %v4680
    %v4724 = vunpack.c.l.b16 %v4681
    %v4725 = vunpack.c.h.b16 %v4681
    %v4726 = vunpack.c.l.b16 %v4682
    %v4727 = vunpack.c.h.b16 %v4682
    %v4728 = vunpack.c.l.b16 %v4683
    %v4729 = vunpack.c.h.b16 %v4683
    %v4730 = vunpack.c.l.b16 %v4684
    %v4731 = vunpack.c.h.b16 %v4684
    %v4732 = vunpack.c.l.b16 %v4685
    %v4733 = vunpack.c.h.b16 %v4685
    %v4734 = vunpack.c.l.b16 %v4686
    %v4735 = vunpack.c.h.b16 %v4686
    %v4736 = vunpack.c.l.b16 %v4687
    %v4737 = vunpack.c.h.b16 %v4687
    %v4738 = vunpack.c.l.b16 %v4688
    %v4739 = vunpack.c.h.b16 %v4688
    %v4740 = vpack.c.b16 %v4724, %v4722
    %v4741 = vpack.c.b16 %v4725, %v4723
    %v4742 = vpack.c.b16 %v4728, %v4726
    %v4743 = vpack.c.b16 %v4729, %v4727
    %v4744 = vpack.c.b16 %v4732, %v4730
    %v4745 = vpack.c.b16 %v4733, %v4731
    %v4746 = vpack.c.b16 %v4736, %v4734
    %v4747 = vpack.c.b16 %v4737, %v4735
    %v4748 = vpack.c.b16 %v4738, %v4738
    %v4749 = vpack.c.b16 %v4739, %v4739
    %v4751 = vshrl.u32 %v4740, 16
    %v4753 = vshll.u32 %v4740, 16
    %v4755 = vrot.slane %v4753, 1
    %v4756 = vor.u32 %v4751, %v4755
    %v4758 = vshll.u32 %v4742, 16
    %v4760 = vrot.slane %v4758, 1
    %v4761 = vsel %vm1836, %v4756, %v4760
    %v4763 = vshrl.u32 %v4741, 16
    %v4765 = vshll.u32 %v4741, 16
    %v4767 = vrot.slane %v4765, 1
    %v4768 = vor.u32 %v4763, %v4767
    %v4770 = vshll.u32 %v4743, 16
    %v4772 = vrot.slane %v4770, 1
    %v4773 = vsel %vm1836, %v4768, %v4772
    %v4774 = vshrl.u32 %v4742, 16
    %v4776 = vor.u32 %v4774, %v4760
    %v4778 = vshll.u32 %v4744, 16
    %v4780 = vrot.slane %v4778, 1
    %v4781 = vsel %vm1836, %v4776, %v4780
    %v4782 = vshrl.u32 %v4743, 16
    %v4784 = vor.u32 %v4782, %v4772
    %v4786 = vshll.u32 %v4745, 16
    %v4788 = vrot.slane %v4786, 1
    %v4789 = vsel %vm1836, %v4784, %v4788
    %v4790 = vshrl.u32 %v4744, 16
    %v4792 = vor.u32 %v4790, %v4780
    %v4794 = vshll.u32 %v4746, 16
    %v4796 = vrot.slane %v4794, 1
    %v4797 = vsel %vm1836, %v4792, %v4796
    %v4798 = vshrl.u32 %v4745, 16
    %v4800 = vor.u32 %v4798, %v4788
    %v4802 = vshll.u32 %v4747, 16
    %v4804 = vrot.slane %v4802, 1
    %v4805 = vsel %vm1836, %v4800, %v4804
    %v4806 = vshrl.u32 %v4746, 16
    %v4808 = vor.u32 %v4806, %v4796
    %v4810 = vshll.u32 %v4748, 16
    %v4812 = vrot.slane %v4810, 1
    %v4813 = vsel %vm1836, %v4808, %v4812
    %v4814 = vshrl.u32 %v4747, 16
    %v4816 = vor.u32 %v4814, %v4804
    %v4818 = vshll.u32 %v4749, 16
    %v4820 = vrot.slane %v4818, 1
    %v4821 = vsel %vm1836, %v4816, %v4820
    %v4850 = vunpack.c.l.b16 %v4689
    %v4851 = vunpack.c.l.b16 %v4690
    %v4852 = vunpack.c.l.b16 %v4691
    %v4853 = vunpack.c.l.b16 %v4692
    %v4854 = vunpack.c.l.b16 %v4693
    %v4855 = vunpack.c.l.b16 %v4694
    %v4856 = vunpack.c.l.b16 %v4695
    %v4857 = vunpack.c.l.b16 %v4696
    %v4858 = vunpack.c.l.b16 %v4697
    %v4859 = vunpack.c.l.b16 %v4698
    %v4860 = vunpack.c.l.b16 %v4699
    %v4861 = vunpack.c.l.b16 %v4700
    %v4862 = vunpack.c.l.b16 %v4701
    %v4863 = vunpack.c.l.b16 %v4702
    %v4864 = vunpack.c.l.b16 %v4703
    %v4865 = vunpack.c.l.b16 %v4704
    %v4866 = vunpack.c.l.b16 %v4705
    %v4867 = vunpack.c.l.b16 %v4706
    %v4868 = vunpack.c.l.b16 %v4707
    %v4869 = vunpack.c.l.b16 %v4708
    %v4870 = vunpack.c.l.b16 %v4709
    %v4871 = vunpack.c.l.b16 %v4710
    %v4872 = vunpack.c.l.b16 %v4711
    %v4873 = vunpack.c.l.b16 %v4712
    %v4874 = vpack.c.b16 %v4851, %v4850
    %v4875 = vpack.c.b16 %v4853, %v4852
    %v4876 = vpack.c.b16 %v4855, %v4854
    %v4877 = vpack.c.b16 %v4857, %v4856
    %v4878 = vpack.c.b16 %v4859, %v4858
    %v4879 = vpack.c.b16 %v4861, %v4860
    %v4880 = vpack.c.b16 %v4863, %v4862
    %v4881 = vpack.c.b16 %v4865, %v4864
    %v4882 = vpack.c.b16 %v4867, %v4866
    %v4883 = vpack.c.b16 %v4869, %v4868
    %v4884 = vpack.c.b16 %v4871, %v4870
    %v4885 = vpack.c.b16 %v4873, %v4872
    %v4899 = vsel %vm370, %v4773, 0
    %v4902 = vsel %vm370, %v4789, 0
    %v4905 = vsel %vm370, %v4805, 0
    %v4908 = vsel %vm370, %v4821, 0
    %4910 = vmatprep.subr.bf16.mxu0 0
    %4911 = vmatpush1.bf16.msra.mxu0 %v4881
    %4912 = vmatprep.subr.bf16.mxu0 0
    %4913 = vmatpush1.bf16.msra.mxu0 %v4880
    %4914 = vmatprep.subr.bf16.mxu0 0
    %4915 = vmatpush1.bf16.msra.mxu0 %v4879
    %4916 = vmatprep.subr.bf16.mxu0 0
    %4917 = vmatpush1.bf16.msra.mxu0 %v4878
    %4918 = vmatprep.subr.bf16.mxu0 0
    %4919 = vmatpush1.bf16.msra.mxu0 %v4877
    %4920 = vmatprep.subr.bf16.mxu0 0
    %4921 = vmatpush1.bf16.msra.mxu0 %v4876
    %4922 = vmatprep.subr.bf16.mxu0 0
    %4923 = vmatpush1.bf16.msra.mxu0 %v4875
    %4924 = vmatprep.subr.bf16.mxu0 0
    %4925 = vmatpush1.bf16.msra.mxu0 %v4874
    %4926 = vmatprep.subr.bf16.mxu0 0
    %4927 = vmatpush2.bf16.msra.mxu0 0
    %4928 = vmatprep.subr.bf16.mxu0 0
    %4929 = vmatpush2.bf16.msra.mxu0 0
    %4930 = vmatprep.subr.bf16.mxu0 0
    %4931 = vmatpush2.bf16.msra.mxu0 0
    %4932 = vmatprep.subr.bf16.mxu0 0
    %4933 = vmatpush2.bf16.msra.mxu0 0
    %4934 = vmatprep.subr.bf16.mxu0 0
    %4935 = vmatpush2.bf16.msra.mxu0 %v4885
    %4936 = vmatprep.subr.bf16.mxu0 0
    %4937 = vmatpush2.bf16.msra.mxu0 %v4884
    %4938 = vmatprep.subr.bf16.mxu0 0
    %4939 = vmatpush2.bf16.msra.mxu0 %v4883
    %4940 = vmatprep.subr.bf16.mxu0 0
    %4941 = vmatpush2.bf16.msra.mxu0 %v4882
    %4942 = vmatprep.mubr.bf16.mxu0 %v4899
    %4943 = vmatmul.mubr.bf16.gmra.mxu0 %v4761
    %v4944 = vpop.f32.mrf.mxu0
    %v4945 = vadd.f32 0.0, %v4944
    %v4946 = vpop.f32.mrf.mxu0
    %v4947 = vpop.f32.mrf.mxu0
    %v4948 = vadd.f32 0.0, %v4947
    %v4949 = vpop.f32.mrf.mxu0
    %4950 = vmatprep.mubr.bf16.mxu0 %v4902
    %4951 = vmatmul.mubr.bf16.gmra.mxu0 %v4781
    %v4952 = vpop.f32.mrf.mxu0
    %v4953 = vadd.f32 0.0, %v4952
    %v4954 = vpop.f32.mrf.mxu0
    %v4955 = vpop.f32.mrf.mxu0
    %v4956 = vadd.f32 0.0, %v4955
    %v4957 = vpop.f32.mrf.mxu0
    %4958 = vmatprep.mubr.bf16.mxu0 %v4905
    %4959 = vmatmul.mubr.bf16.gmra.mxu0 %v4797
    %v4960 = vpop.f32.mrf.mxu0
    %v4961 = vadd.f32 0.0, %v4960
    %v4962 = vpop.f32.mrf.mxu0
    %v4963 = vpop.f32.mrf.mxu0
    %v4964 = vadd.f32 0.0, %v4963
    %v4965 = vpop.f32.mrf.mxu0
    %4966 = vmatprep.mubr.bf16.mxu0 %v4908
    %4967 = vmatmul.mubr.bf16.gmra.mxu0 %v4813
    %v4968 = vpop.f32.mrf.mxu0
    %v4969 = vadd.f32 0.0, %v4968
    %v4970 = vpop.f32.mrf.mxu0
    %v4971 = vpop.f32.mrf.mxu0
    %v4972 = vadd.f32 0.0, %v4971
    %v4973 = vpop.f32.mrf.mxu0
    %4974 = vdwg.mxu0
    %v4975 = vadd.f32 %v4641, %v4945
    %v4976 = vadd.f32 %v4644, %v4948
    %v4977 = vadd.f32 %v4649, %v4953
    %v4978 = vadd.f32 %v4652, %v4956
    %v4979 = vadd.f32 %v4657, %v4961
    %v4980 = vadd.f32 %v4660, %v4964
    %v4981 = vadd.f32 %v4665, %v4969
    %v4982 = vadd.f32 %v4668, %v4972
    %v4983 = vld [vmem:[%s6] sm:$0x1]
    %v4985 = vlaneseq
    %v4986 = vshrl.u32 %v4985, 7
    %v4987 = vsub.s32 0, %v4986
    %v4988 = vrot.slane %v4983, %v4987
    %v4990 = vadd.f32 %v4975, %v4988
    %v4991 = vadd.f32 %v4976, %v4988
    %v4992 = vadd.f32 %v4977, %v4988
    %v4993 = vadd.f32 %v4978, %v4988
    %v4994 = vadd.f32 %v4979, %v4988
    %v4995 = vadd.f32 %v4980, %v4988
    %v4996 = vadd.f32 %v4981, %v4988
    %v4997 = vadd.f32 %v4982, %v4988
    %v4998 = vmax.f32 %v4990, 0.0
    %v4999 = vmax.f32 %v4991, 0.0
    %v5000 = vmax.f32 %v4992, 0.0
    %v5001 = vmax.f32 %v4993, 0.0
    %v5002 = vmax.f32 %v4994, 0.0
    %v5003 = vmax.f32 %v4995, 0.0
    %v5004 = vmax.f32 %v4996, 0.0
    %v5005 = vmax.f32 %v4997, 0.0
    %v5006 = vpack.c.bf16 %v4999, %v4998
    %v5007 = vpack.c.bf16 %v5001, %v5000
    %v5008 = vpack.c.bf16 %v5003, %v5002
    %v5009 = vpack.c.bf16 %v5005, %v5004
    %v5014 = vunpack.c.l.b16 %v5006
    %v5015 = vunpack.c.h.b16 %v5006
    %v5016 = vunpack.c.l.b16 %v5007
    %v5017 = vunpack.c.h.b16 %v5007
    %v5018 = vunpack.c.l.b16 %v5008
    %v5019 = vunpack.c.h.b16 %v5008
    %v5020 = vunpack.c.l.b16 %v5009
    %v5021 = vunpack.c.h.b16 %v5009
    %v5022 = vpack.c.b16 %v5014, %v5014
    %v5023 = vpack.c.b16 %v5015, %v5015
    %v5024 = vpack.c.b16 %v5016, %v5016
    %v5025 = vpack.c.b16 %v5017, %v5017
    %v5026 = vpack.c.b16 %v5018, %v5018
    %v5027 = vpack.c.b16 %v5019, %v5019
    %v5028 = vpack.c.b16 %v5020, %v5020
    %v5029 = vpack.c.b16 %v5021, %v5021
    %5030 = vrot.lane.b32.xlu0 %v5022, 32
    %v5031 = vpop.permute.xlu0 %5030
    %5032 = vrot.lane.b32.xlu0 %v5023, 32
    %v5033 = vpop.permute.xlu0 %5032
    %5034 = vrot.lane.b32.xlu0 %v5024, 32
    %v5035 = vpop.permute.xlu0 %5034
    %5036 = vrot.lane.b32.xlu0 %v5025, 32
    %v5037 = vpop.permute.xlu0 %5036
    %5038 = vrot.lane.b32.xlu0 %v5026, 32
    %v5039 = vpop.permute.xlu0 %5038
    %5040 = vrot.lane.b32.xlu0 %v5027, 32
    %v5041 = vpop.permute.xlu0 %5040
    %5042 = vrot.lane.b32.xlu0 %v5028, 32
    %v5043 = vpop.permute.xlu0 %5042
    %5044 = vrot.lane.b32.xlu0 %v5029, 32
    %v5045 = vpop.permute.xlu0 %5044
    %5054 = vst.msk [vmem:[#allocation3 + $0x20] sm:$0xf] %vm2141, %v5031
    %5055 = vst.msk [vmem:[#allocation3 + $0x24] sm:$0xf] %vm2141, %v5033
    %5056 = vst.msk [vmem:[#allocation3 + $0x28] sm:$0xf] %vm2141, %v5035
    %5057 = vst.msk [vmem:[#allocation3 + $0x2c] sm:$0xf] %vm2141, %v5037
    %5058 = vst.msk [vmem:[#allocation3 + $0x30] sm:$0xf] %vm2141, %v5039
    %5059 = vst.msk [vmem:[#allocation3 + $0x34] sm:$0xf] %vm2141, %v5041
    %5060 = vst.msk [vmem:[#allocation3 + $0x38] sm:$0xf] %vm2141, %v5043
    %5061 = vst.msk [vmem:[#allocation3 + $0x3c] sm:$0xf] %vm2141, %v5045
    %v5062 = vld [vmem:[#allocation2 + $0x8] sm:$0x88]
    %v5063 = vsel %vm956, 0, %v5062
    %5064 = vst [vmem:[#allocation2 + $0x8] sm:$0x88] %v5063
    %5065 = vst.msk [vmem:[#allocation2 + $0x10] sm:$0xff] %vm962, 0
    %5066 = vst.msk [vmem:[#allocation2 + $0x48] sm:$0xff] %vm962, 0
    %v5067 = vld [vmem:[#allocation2 + $0x50] sm:$0x11]
    %v5068 = vsel %vm971, 0, %v5067
    %5069 = vst [vmem:[#allocation2 + $0x50] sm:$0x11] %v5068
    %5070 = vst.msk [vmem:[#allocation2 + $0x18] sm:$0xf] %vm1003, %v4103
    %5071 = vst.msk [vmem:[#allocation2 + $0x20] sm:$0xf] %vm1003, %v4105
    %5072 = vst.msk [vmem:[#allocation2 + $0x28] sm:$0xf] %vm1003, %v4107
    %5073 = vst.msk [vmem:[#allocation2 + $0x30] sm:$0xf] %vm1003, %v4109
    %5074 = vst.msk [vmem:[#allocation2 + $0x38] sm:$0xf] %vm1003, %v4111
    %5075 = vst.msk [vmem:[#allocation2 + $0x40] sm:$0xf] %vm1003, %v4113
    %5076 = vst.msk [vmem:[#allocation2 + $0x48] sm:$0xf] %vm1003, %v4115
    %5077 = vst.msk [vmem:[#allocation2 + $0x50] sm:$0xf] %vm1003, %v4117
    %5078 = vst.msk [vmem:[#allocation2 + $0x10] sm:$0xf] %vm1036, %v4078
    %5079 = vst.msk [vmem:[#allocation2 + $0x18] sm:$0xf] %vm1036, %v4079
    %5080 = vst.msk [vmem:[#allocation2 + $0x20] sm:$0xf] %vm1036, %v4080
    %5081 = vst.msk [vmem:[#allocation2 + $0x28] sm:$0xf] %vm1036, %v4081
    %5082 = vst.msk [vmem:[#allocation2 + $0x30] sm:$0xf] %vm1036, %v4082
    %5083 = vst.msk [vmem:[#allocation2 + $0x38] sm:$0xf] %vm1036, %v4083
    %5084 = vst.msk [vmem:[#allocation2 + $0x40] sm:$0xf] %vm1036, %v4084
    %5085 = vst.msk [vmem:[#allocation2 + $0x48] sm:$0xf] %vm1036, %v4085
    %5086 = vst.msk [vmem:[#allocation2 + $0xc] sm:$0xf] %vm1003, %v4103
    %5087 = vst.msk [vmem:[#allocation2 + $0x14] sm:$0xf] %vm1003, %v4105
    %5088 = vst.msk [vmem:[#allocation2 + $0x1c] sm:$0xf] %vm1003, %v4107
    %5089 = vst.msk [vmem:[#allocation2 + $0x24] sm:$0xf] %vm1003, %v4109
    %5090 = vst.msk [vmem:[#allocation2 + $0x2c] sm:$0xf] %vm1003, %v4111
    %5091 = vst.msk [vmem:[#allocation2 + $0x34] sm:$0xf] %vm1003, %v4113
    %5092 = vst.msk [vmem:[#allocation2 + $0x3c] sm:$0xf] %vm1003, %v4115
    %5093 = vst.msk [vmem:[#allocation2 + $0x44] sm:$0xf] %vm1003, %v4117
    %v5094 = vld [vmem:[#allocation2 + $0x8] sm:$0x88]
    %v5095 = vld [vmem:[#allocation2 + $0x10] sm:$0xff]
    %v5096 = vld [vmem:[#allocation2 + $0x18] sm:$0xff]
    %v5097 = vld [vmem:[#allocation2 + $0x20] sm:$0xff]
    %v5098 = vld [vmem:[#allocation2 + $0x28] sm:$0xff]
    %v5099 = vld [vmem:[#allocation2 + $0x30] sm:$0xff]
    %v5100 = vld [vmem:[#allocation2 + $0x38] sm:$0xff]
    %v5101 = vld [vmem:[#allocation2 + $0x40] sm:$0xff]
    %v5102 = vld [vmem:[#allocation2 + $0x48] sm:$0xff]
    %v5103 = vmul.bf16 %v5094, %v1068
    %v5104 = vmul.bf16 %v5095, %v1078
    %v5105 = vmul.bf16 %v5096, %v1088
    %v5106 = vmul.bf16 %v5097, %v1098
    %v5107 = vmul.bf16 %v5098, %v1108
    %v5108 = vmul.bf16 %v5099, %v1118
    %v5109 = vmul.bf16 %v5100, %v1128
    %v5110 = vmul.bf16 %v5101, %v1138
    %v5111 = vmul.bf16 %v5102, %v1143
    %v5112 = vld [vmem:[%s7] sm:$0xf]
    %v5113 = vld [vmem:[%s7 + $0x4] sm:$0xf]
    %v5114 = vld [vmem:[%s7 + $0x8] sm:$0xf]
    %v5115 = vld [vmem:[%s7 + $0xc] sm:$0xf]
    %v5116 = vld [vmem:[%s7 + $0x10] sm:$0xf]
    %v5117 = vld [vmem:[%s7 + $0x14] sm:$0xf]
    %v5118 = vld [vmem:[%s7 + $0x18] sm:$0xf]
    %v5119 = vld [vmem:[%s7 + $0x1c] sm:$0xf]
    %v5120 = vld [vmem:[%s7 + $0x20] sm:$0xf]
    %v5121 = vld [vmem:[%s7 + $0x24] sm:$0xf]
    %v5122 = vld [vmem:[%s7 + $0x28] sm:$0xf]
    %v5123 = vld [vmem:[%s7 + $0x2c] sm:$0xf]
    %v5124 = vld [vmem:[%s7 + $0x30] sm:$0xf]
    %v5125 = vld [vmem:[%s7 + $0x34] sm:$0xf]
    %v5126 = vld [vmem:[%s7 + $0x38] sm:$0xf]
    %v5127 = vld [vmem:[%s7 + $0x3c] sm:$0xf]
    %v5128 = vld [vmem:[%s7 + $0x40] sm:$0xf]
    %v5129 = vld [vmem:[%s7 + $0x44] sm:$0xf]
    %v5130 = vld [vmem:[%s7 + $0x48] sm:$0xf]
    %v5131 = vld [vmem:[%s7 + $0x4c] sm:$0xf]
    %v5132 = vld [vmem:[%s7 + $0x50] sm:$0xf]
    %v5133 = vld [vmem:[%s7 + $0x54] sm:$0xf]
    %v5134 = vld [vmem:[%s7 + $0x58] sm:$0xf]
    %v5135 = vld [vmem:[%s7 + $0x5c] sm:$0xf]
    %v5136 = vld [vmem:[%s2224] sm:$0xf]
    %v5137 = vld [vmem:[%s2224 + $0x4] sm:$0xf]
    %v5138 = vld [vmem:[%s2224 + $0x8] sm:$0xf]
    %v5139 = vld [vmem:[%s2224 + $0xc] sm:$0xf]
    %v5140 = vld [vmem:[%s2224 + $0x10] sm:$0xf]
    %v5141 = vld [vmem:[%s2224 + $0x14] sm:$0xf]
    %v5142 = vld [vmem:[%s2224 + $0x18] sm:$0xf]
    %v5143 = vld [vmem:[%s2224 + $0x1c] sm:$0xf]
    %v5144 = vld [vmem:[%s2224 + $0x20] sm:$0xf]
    %v5145 = vld [vmem:[%s2224 + $0x24] sm:$0xf]
    %v5146 = vld [vmem:[%s2224 + $0x28] sm:$0xf]
    %v5147 = vld [vmem:[%s2224 + $0x2c] sm:$0xf]
    %v5148 = vld [vmem:[%s2224 + $0x30] sm:$0xf]
    %v5149 = vld [vmem:[%s2224 + $0x34] sm:$0xf]
    %v5150 = vld [vmem:[%s2224 + $0x38] sm:$0xf]
    %v5151 = vld [vmem:[%s2224 + $0x3c] sm:$0xf]
    %v5152 = vld [vmem:[%s2224 + $0x40] sm:$0xf]
    %v5153 = vld [vmem:[%s2224 + $0x44] sm:$0xf]
    %v5154 = vld [vmem:[%s2224 + $0x48] sm:$0xf]
    %v5155 = vld [vmem:[%s2224 + $0x4c] sm:$0xf]
    %v5156 = vld [vmem:[%s2224 + $0x50] sm:$0xf]
    %v5157 = vld [vmem:[%s2224 + $0x54] sm:$0xf]
    %v5158 = vld [vmem:[%s2224 + $0x58] sm:$0xf]
    %v5159 = vld [vmem:[%s2224 + $0x5c] sm:$0xf]
    %v5168 = vunpack.c.l.b16 %v5095
    %v5169 = vunpack.c.h.b16 %v5095
    %v5170 = vunpack.c.l.b16 %v5096
    %v5171 = vunpack.c.h.b16 %v5096
    %v5172 = vunpack.c.l.b16 %v5097
    %v5173 = vunpack.c.h.b16 %v5097
    %v5174 = vunpack.c.l.b16 %v5098
    %v5175 = vunpack.c.h.b16 %v5098
    %v5176 = vunpack.c.l.b16 %v5099
    %v5177 = vunpack.c.h.b16 %v5099
    %v5178 = vunpack.c.l.b16 %v5100
    %v5179 = vunpack.c.h.b16 %v5100
    %v5180 = vunpack.c.l.b16 %v5101
    %v5181 = vunpack.c.h.b16 %v5101
    %v5182 = vunpack.c.l.b16 %v5102
    %v5183 = vunpack.c.h.b16 %v5102
    %v5184 = vpack.c.b16 %v5170, %v5168
    %v5185 = vpack.c.b16 %v5171, %v5169
    %v5186 = vpack.c.b16 %v5174, %v5172
    %v5187 = vpack.c.b16 %v5175, %v5173
    %v5188 = vpack.c.b16 %v5178, %v5176
    %v5189 = vpack.c.b16 %v5179, %v5177
    %v5190 = vpack.c.b16 %v5182, %v5180
    %v5191 = vpack.c.b16 %v5183, %v5181
    %v5220 = vunpack.c.l.b16 %v5136
    %v5221 = vunpack.c.l.b16 %v5137
    %v5222 = vunpack.c.l.b16 %v5138
    %v5223 = vunpack.c.l.b16 %v5139
    %v5224 = vunpack.c.l.b16 %v5140
    %v5225 = vunpack.c.l.b16 %v5141
    %v5226 = vunpack.c.l.b16 %v5142
    %v5227 = vunpack.c.l.b16 %v5143
    %v5228 = vunpack.c.l.b16 %v5144
    %v5229 = vunpack.c.l.b16 %v5145
    %v5230 = vunpack.c.l.b16 %v5146
    %v5231 = vunpack.c.l.b16 %v5147
    %v5232 = vunpack.c.l.b16 %v5148
    %v5233 = vunpack.c.l.b16 %v5149
    %v5234 = vunpack.c.l.b16 %v5150
    %v5235 = vunpack.c.l.b16 %v5151
    %v5236 = vunpack.c.l.b16 %v5152
    %v5237 = vunpack.c.l.b16 %v5153
    %v5238 = vunpack.c.l.b16 %v5154
    %v5239 = vunpack.c.l.b16 %v5155
    %v5240 = vunpack.c.l.b16 %v5156
    %v5241 = vunpack.c.l.b16 %v5157
    %v5242 = vunpack.c.l.b16 %v5158
    %v5243 = vunpack.c.l.b16 %v5159
    %v5244 = vpack.c.b16 %v5221, %v5220
    %v5245 = vpack.c.b16 %v5223, %v5222
    %v5246 = vpack.c.b16 %v5225, %v5224
    %v5247 = vpack.c.b16 %v5227, %v5226
    %v5248 = vpack.c.b16 %v5229, %v5228
    %v5249 = vpack.c.b16 %v5231, %v5230
    %v5250 = vpack.c.b16 %v5233, %v5232
    %v5251 = vpack.c.b16 %v5235, %v5234
    %v5252 = vpack.c.b16 %v5237, %v5236
    %v5253 = vpack.c.b16 %v5239, %v5238
    %v5254 = vpack.c.b16 %v5241, %v5240
    %v5255 = vpack.c.b16 %v5243, %v5242
    %v5269 = vsel %vm370, %v5185, 0
    %v5272 = vsel %vm370, %v5187, 0
    %v5275 = vsel %vm370, %v5189, 0
    %v5278 = vsel %vm370, %v5191, 0
    %5280 = vmatprep.subr.bf16.mxu0 0
    %5281 = vmatpush1.bf16.msra.mxu0 %v5251
    %5282 = vmatprep.subr.bf16.mxu0 0
    %5283 = vmatpush1.bf16.msra.mxu0 %v5250
    %5284 = vmatprep.subr.bf16.mxu0 0
    %5285 = vmatpush1.bf16.msra.mxu0 %v5249
    %5286 = vmatprep.subr.bf16.mxu0 0
    %5287 = vmatpush1.bf16.msra.mxu0 %v5248
    %5288 = vmatprep.subr.bf16.mxu0 0
    %5289 = vmatpush1.bf16.msra.mxu0 %v5247
    %5290 = vmatprep.subr.bf16.mxu0 0
    %5291 = vmatpush1.bf16.msra.mxu0 %v5246
    %5292 = vmatprep.subr.bf16.mxu0 0
    %5293 = vmatpush1.bf16.msra.mxu0 %v5245
    %5294 = vmatprep.subr.bf16.mxu0 0
    %5295 = vmatpush1.bf16.msra.mxu0 %v5244
    %5296 = vmatprep.subr.bf16.mxu0 0
    %5297 = vmatpush2.bf16.msra.mxu0 0
    %5298 = vmatprep.subr.bf16.mxu0 0
    %5299 = vmatpush2.bf16.msra.mxu0 0
    %5300 = vmatprep.subr.bf16.mxu0 0
    %5301 = vmatpush2.bf16.msra.mxu0 0
    %5302 = vmatprep.subr.bf16.mxu0 0
    %5303 = vmatpush2.bf16.msra.mxu0 0
    %5304 = vmatprep.subr.bf16.mxu0 0
    %5305 = vmatpush2.bf16.msra.mxu0 %v5255
    %5306 = vmatprep.subr.bf16.mxu0 0
    %5307 = vmatpush2.bf16.msra.mxu0 %v5254
    %5308 = vmatprep.subr.bf16.mxu0 0
    %5309 = vmatpush2.bf16.msra.mxu0 %v5253
    %5310 = vmatprep.subr.bf16.mxu0 0
    %5311 = vmatpush2.bf16.msra.mxu0 %v5252
    %5312 = vmatprep.mubr.bf16.mxu0 %v5269
    %5313 = vmatmul.mubr.bf16.gmra.mxu0 %v5184
    %v5314 = vpop.f32.mrf.mxu0
    %v5315 = vadd.f32 0.0, %v5314
    %v5316 = vpop.f32.mrf.mxu0
    %v5317 = vpop.f32.mrf.mxu0
    %v5318 = vadd.f32 0.0, %v5317
    %v5319 = vpop.f32.mrf.mxu0
    %5320 = vmatprep.mubr.bf16.mxu0 %v5272
    %5321 = vmatmul.mubr.bf16.gmra.mxu0 %v5186
    %v5322 = vpop.f32.mrf.mxu0
    %v5323 = vadd.f32 0.0, %v5322
    %v5324 = vpop.f32.mrf.mxu0
    %v5325 = vpop.f32.mrf.mxu0
    %v5326 = vadd.f32 0.0, %v5325
    %v5327 = vpop.f32.mrf.mxu0
    %5328 = vmatprep.mubr.bf16.mxu0 %v5275
    %5329 = vmatmul.mubr.bf16.gmra.mxu0 %v5188
    %v5330 = vpop.f32.mrf.mxu0
    %v5331 = vadd.f32 0.0, %v5330
    %v5332 = vpop.f32.mrf.mxu0
    %v5333 = vpop.f32.mrf.mxu0
    %v5334 = vadd.f32 0.0, %v5333
    %v5335 = vpop.f32.mrf.mxu0
    %5336 = vmatprep.mubr.bf16.mxu0 %v5278
    %5337 = vmatmul.mubr.bf16.gmra.mxu0 %v5190
    %v5338 = vpop.f32.mrf.mxu0
    %v5339 = vadd.f32 0.0, %v5338
    %v5340 = vpop.f32.mrf.mxu0
    %v5341 = vpop.f32.mrf.mxu0
    %v5342 = vadd.f32 0.0, %v5341
    %v5343 = vpop.f32.mrf.mxu0
    %5344 = vdwg.mxu0
    %v5354 = vunpack.c.l.b16 %v5103
    %v5355 = vunpack.c.h.b16 %v5103
    %v5356 = vunpack.c.l.b16 %v5104
    %v5357 = vunpack.c.h.b16 %v5104
    %v5358 = vunpack.c.l.b16 %v5105
    %v5359 = vunpack.c.h.b16 %v5105
    %v5360 = vunpack.c.l.b16 %v5106
    %v5361 = vunpack.c.h.b16 %v5106
    %v5362 = vunpack.c.l.b16 %v5107
    %v5363 = vunpack.c.h.b16 %v5107
    %v5364 = vunpack.c.l.b16 %v5108
    %v5365 = vunpack.c.h.b16 %v5108
    %v5366 = vunpack.c.l.b16 %v5109
    %v5367 = vunpack.c.h.b16 %v5109
    %v5368 = vunpack.c.l.b16 %v5110
    %v5369 = vunpack.c.h.b16 %v5110
    %v5370 = vunpack.c.l.b16 %v5111
    %v5371 = vunpack.c.h.b16 %v5111
    %v5372 = vpack.c.b16 %v5356, %v5354
    %v5373 = vpack.c.b16 %v5357, %v5355
    %v5374 = vpack.c.b16 %v5360, %v5358
    %v5375 = vpack.c.b16 %v5361, %v5359
    %v5376 = vpack.c.b16 %v5364, %v5362
    %v5377 = vpack.c.b16 %v5365, %v5363
    %v5378 = vpack.c.b16 %v5368, %v5366
    %v5379 = vpack.c.b16 %v5369, %v5367
    %v5380 = vpack.c.b16 %v5370, %v5370
    %v5381 = vpack.c.b16 %v5371, %v5371
    %v5383 = vshrl.u32 %v5372, 16
    %v5385 = vrot.slane %v5383, 3
    %v5386 = vshll.u32 %v5372, 16
    %v5388 = vrot.slane %v5386, 4
    %v5389 = vor.u32 %v5385, %v5388
    %v5391 = vshrl.u32 %v5374, 16
    %v5393 = vrot.slane %v5391, 3
    %v5394 = vshll.u32 %v5374, 16
    %v5396 = vrot.slane %v5394, 4
    %v5397 = vor.u32 %v5393, %v5396
    %v5398 = vsel %vm969, %v5389, %v5397
    %v5400 = vshrl.u32 %v5373, 16
    %v5402 = vrot.slane %v5400, 3
    %v5403 = vshll.u32 %v5373, 16
    %v5405 = vrot.slane %v5403, 4
    %v5406 = vor.u32 %v5402, %v5405
    %v5408 = vshrl.u32 %v5375, 16
    %v5410 = vrot.slane %v5408, 3
    %v5411 = vshll.u32 %v5375, 16
    %v5413 = vrot.slane %v5411, 4
    %v5414 = vor.u32 %v5410, %v5413
    %v5415 = vsel %vm969, %v5406, %v5414
    %v5417 = vshrl.u32 %v5376, 16
    %v5419 = vrot.slane %v5417, 3
    %v5420 = vshll.u32 %v5376, 16
    %v5422 = vrot.slane %v5420, 4
    %v5423 = vor.u32 %v5419, %v5422
    %v5424 = vsel %vm969, %v5397, %v5423
    %v5426 = vshrl.u32 %v5377, 16
    %v5428 = vrot.slane %v5426, 3
    %v5429 = vshll.u32 %v5377, 16
    %v5431 = vrot.slane %v5429, 4
    %v5432 = vor.u32 %v5428, %v5431
    %v5433 = vsel %vm969, %v5414, %v5432
    %v5435 = vshrl.u32 %v5378, 16
    %v5437 = vrot.slane %v5435, 3
    %v5438 = vshll.u32 %v5378, 16
    %v5440 = vrot.slane %v5438, 4
    %v5441 = vor.u32 %v5437, %v5440
    %v5442 = vsel %vm969, %v5423, %v5441
    %v5444 = vshrl.u32 %v5379, 16
    %v5446 = vrot.slane %v5444, 3
    %v5447 = vshll.u32 %v5379, 16
    %v5449 = vrot.slane %v5447, 4
    %v5450 = vor.u32 %v5446, %v5449
    %v5451 = vsel %vm969, %v5432, %v5450
    %v5453 = vshrl.u32 %v5380, 16
    %v5455 = vrot.slane %v5453, 3
    %v5456 = vshll.u32 %v5380, 16
    %v5458 = vrot.slane %v5456, 4
    %v5459 = vor.u32 %v5455, %v5458
    %v5460 = vsel %vm969, %v5441, %v5459
    %v5462 = vshrl.u32 %v5381, 16
    %v5464 = vrot.slane %v5462, 3
    %v5465 = vshll.u32 %v5381, 16
    %v5467 = vrot.slane %v5465, 4
    %v5468 = vor.u32 %v5464, %v5467
    %v5469 = vsel %vm969, %v5450, %v5468
    %v5498 = vunpack.c.l.b16 %v5112
    %v5499 = vunpack.c.l.b16 %v5113
    %v5500 = vunpack.c.l.b16 %v5114
    %v5501 = vunpack.c.l.b16 %v5115
    %v5502 = vunpack.c.l.b16 %v5116
    %v5503 = vunpack.c.l.b16 %v5117
    %v5504 = vunpack.c.l.b16 %v5118
    %v5505 = vunpack.c.l.b16 %v5119
    %v5506 = vunpack.c.l.b16 %v5120
    %v5507 = vunpack.c.l.b16 %v5121
    %v5508 = vunpack.c.l.b16 %v5122
    %v5509 = vunpack.c.l.b16 %v5123
    %v5510 = vunpack.c.l.b16 %v5124
    %v5511 = vunpack.c.l.b16 %v5125
    %v5512 = vunpack.c.l.b16 %v5126
    %v5513 = vunpack.c.l.b16 %v5127
    %v5514 = vunpack.c.l.b16 %v5128
    %v5515 = vunpack.c.l.b16 %v5129
    %v5516 = vunpack.c.l.b16 %v5130
    %v5517 = vunpack.c.l.b16 %v5131
    %v5518 = vunpack.c.l.b16 %v5132
    %v5519 = vunpack.c.l.b16 %v5133
    %v5520 = vunpack.c.l.b16 %v5134
    %v5521 = vunpack.c.l.b16 %v5135
    %v5522 = vpack.c.b16 %v5499, %v5498
    %v5523 = vpack.c.b16 %v5501, %v5500
    %v5524 = vpack.c.b16 %v5503, %v5502
    %v5525 = vpack.c.b16 %v5505, %v5504
    %v5526 = vpack.c.b16 %v5507, %v5506
    %v5527 = vpack.c.b16 %v5509, %v5508
    %v5528 = vpack.c.b16 %v5511, %v5510
    %v5529 = vpack.c.b16 %v5513, %v5512
    %v5530 = vpack.c.b16 %v5515, %v5514
    %v5531 = vpack.c.b16 %v5517, %v5516
    %v5532 = vpack.c.b16 %v5519, %v5518
    %v5533 = vpack.c.b16 %v5521, %v5520
    %v5547 = vsel %vm370, %v5415, 0
    %v5550 = vsel %vm370, %v5433, 0
    %v5553 = vsel %vm370, %v5451, 0
    %v5556 = vsel %vm370, %v5469, 0
    %5558 = vmatprep.subr.bf16.mxu0 0
    %5559 = vmatpush1.bf16.msra.mxu0 %v5529
    %5560 = vmatprep.subr.bf16.mxu0 0
    %5561 = vmatpush1.bf16.msra.mxu0 %v5528
    %5562 = vmatprep.subr.bf16.mxu0 0
    %5563 = vmatpush1.bf16.msra.mxu0 %v5527
    %5564 = vmatprep.subr.bf16.mxu0 0
    %5565 = vmatpush1.bf16.msra.mxu0 %v5526
    %5566 = vmatprep.subr.bf16.mxu0 0
    %5567 = vmatpush1.bf16.msra.mxu0 %v5525
    %5568 = vmatprep.subr.bf16.mxu0 0
    %5569 = vmatpush1.bf16.msra.mxu0 %v5524
    %5570 = vmatprep.subr.bf16.mxu0 0
    %5571 = vmatpush1.bf16.msra.mxu0 %v5523
    %5572 = vmatprep.subr.bf16.mxu0 0
    %5573 = vmatpush1.bf16.msra.mxu0 %v5522
    %5574 = vmatprep.subr.bf16.mxu0 0
    %5575 = vmatpush2.bf16.msra.mxu0 0
    %5576 = vmatprep.subr.bf16.mxu0 0
    %5577 = vmatpush2.bf16.msra.mxu0 0
    %5578 = vmatprep.subr.bf16.mxu0 0
    %5579 = vmatpush2.bf16.msra.mxu0 0
    %5580 = vmatprep.subr.bf16.mxu0 0
    %5581 = vmatpush2.bf16.msra.mxu0 0
    %5582 = vmatprep.subr.bf16.mxu0 0
    %5583 = vmatpush2.bf16.msra.mxu0 %v5533
    %5584 = vmatprep.subr.bf16.mxu0 0
    %5585 = vmatpush2.bf16.msra.mxu0 %v5532
    %5586 = vmatprep.subr.bf16.mxu0 0
    %5587 = vmatpush2.bf16.msra.mxu0 %v5531
    %5588 = vmatprep.subr.bf16.mxu0 0
    %5589 = vmatpush2.bf16.msra.mxu0 %v5530
    %5590 = vmatprep.mubr.bf16.mxu0 %v5547
    %5591 = vmatmul.mubr.bf16.gmra.mxu0 %v5398
    %v5592 = vpop.f32.mrf.mxu0
    %v5593 = vadd.f32 %v5315, %v5592
    %v5594 = vpop.f32.mrf.mxu0
    %v5595 = vpop.f32.mrf.mxu0
    %v5596 = vadd.f32 %v5318, %v5595
    %v5597 = vpop.f32.mrf.mxu0
    %5598 = vmatprep.mubr.bf16.mxu0 %v5550
    %5599 = vmatmul.mubr.bf16.gmra.mxu0 %v5424
    %v5600 = vpop.f32.mrf.mxu0
    %v5601 = vadd.f32 %v5323, %v5600
    %v5602 = vpop.f32.mrf.mxu0
    %v5603 = vpop.f32.mrf.mxu0
    %v5604 = vadd.f32 %v5326, %v5603
    %v5605 = vpop.f32.mrf.mxu0
    %5606 = vmatprep.mubr.bf16.mxu0 %v5553
    %5607 = vmatmul.mubr.bf16.gmra.mxu0 %v5442
    %v5608 = vpop.f32.mrf.mxu0
    %v5609 = vadd.f32 %v5331, %v5608
    %v5610 = vpop.f32.mrf.mxu0
    %v5611 = vpop.f32.mrf.mxu0
    %v5612 = vadd.f32 %v5334, %v5611
    %v5613 = vpop.f32.mrf.mxu0
    %5614 = vmatprep.mubr.bf16.mxu0 %v5556
    %5615 = vmatmul.mubr.bf16.gmra.mxu0 %v5460
    %v5616 = vpop.f32.mrf.mxu0
    %v5617 = vadd.f32 %v5339, %v5616
    %v5618 = vpop.f32.mrf.mxu0
    %v5619 = vpop.f32.mrf.mxu0
    %v5620 = vadd.f32 %v5342, %v5619
    %v5621 = vpop.f32.mrf.mxu0
    %5622 = vdwg.mxu0
    %v5623 = vld [vmem:[#allocation2 + $0x10] sm:$0xff]
    %v5624 = vld [vmem:[#allocation2 + $0x18] sm:$0xff]
    %v5625 = vld [vmem:[#allocation2 + $0x20] sm:$0xff]
    %v5626 = vld [vmem:[#allocation2 + $0x28] sm:$0xff]
    %v5627 = vld [vmem:[#allocation2 + $0x30] sm:$0xff]
    %v5628 = vld [vmem:[#allocation2 + $0x38] sm:$0xff]
    %v5629 = vld [vmem:[#allocation2 + $0x40] sm:$0xff]
    %v5630 = vld [vmem:[#allocation2 + $0x48] sm:$0xff]
    %v5631 = vld [vmem:[#allocation2 + $0x50] sm:$0x11]
    %v5632 = vmul.bf16 %v5623, %v1691
    %v5633 = vmul.bf16 %v5624, %v1700
    %v5634 = vmul.bf16 %v5625, %v1709
    %v5635 = vmul.bf16 %v5626, %v1718
    %v5636 = vmul.bf16 %v5627, %v1727
    %v5637 = vmul.bf16 %v5628, %v1736
    %v5638 = vmul.bf16 %v5629, %v1745
    %v5639 = vmul.bf16 %v5630, %v1754
    %v5640 = vmul.bf16 %v5631, %v1755
    %v5641 = vld [vmem:[%s2730] sm:$0xf]
    %v5642 = vld [vmem:[%s2730 + $0x4] sm:$0xf]
    %v5643 = vld [vmem:[%s2730 + $0x8] sm:$0xf]
    %v5644 = vld [vmem:[%s2730 + $0xc] sm:$0xf]
    %v5645 = vld [vmem:[%s2730 + $0x10] sm:$0xf]
    %v5646 = vld [vmem:[%s2730 + $0x14] sm:$0xf]
    %v5647 = vld [vmem:[%s2730 + $0x18] sm:$0xf]
    %v5648 = vld [vmem:[%s2730 + $0x1c] sm:$0xf]
    %v5649 = vld [vmem:[%s2730 + $0x20] sm:$0xf]
    %v5650 = vld [vmem:[%s2730 + $0x24] sm:$0xf]
    %v5651 = vld [vmem:[%s2730 + $0x28] sm:$0xf]
    %v5652 = vld [vmem:[%s2730 + $0x2c] sm:$0xf]
    %v5653 = vld [vmem:[%s2730 + $0x30] sm:$0xf]
    %v5654 = vld [vmem:[%s2730 + $0x34] sm:$0xf]
    %v5655 = vld [vmem:[%s2730 + $0x38] sm:$0xf]
    %v5656 = vld [vmem:[%s2730 + $0x3c] sm:$0xf]
    %v5657 = vld [vmem:[%s2730 + $0x40] sm:$0xf]
    %v5658 = vld [vmem:[%s2730 + $0x44] sm:$0xf]
    %v5659 = vld [vmem:[%s2730 + $0x48] sm:$0xf]
    %v5660 = vld [vmem:[%s2730 + $0x4c] sm:$0xf]
    %v5661 = vld [vmem:[%s2730 + $0x50] sm:$0xf]
    %v5662 = vld [vmem:[%s2730 + $0x54] sm:$0xf]
    %v5663 = vld [vmem:[%s2730 + $0x58] sm:$0xf]
    %v5664 = vld [vmem:[%s2730 + $0x5c] sm:$0xf]
    %v5674 = vunpack.c.l.b16 %v5632
    %v5675 = vunpack.c.h.b16 %v5632
    %v5676 = vunpack.c.l.b16 %v5633
    %v5677 = vunpack.c.h.b16 %v5633
    %v5678 = vunpack.c.l.b16 %v5634
    %v5679 = vunpack.c.h.b16 %v5634
    %v5680 = vunpack.c.l.b16 %v5635
    %v5681 = vunpack.c.h.b16 %v5635
    %v5682 = vunpack.c.l.b16 %v5636
    %v5683 = vunpack.c.h.b16 %v5636
    %v5684 = vunpack.c.l.b16 %v5637
    %v5685 = vunpack.c.h.b16 %v5637
    %v5686 = vunpack.c.l.b16 %v5638
    %v5687 = vunpack.c.h.b16 %v5638
    %v5688 = vunpack.c.l.b16 %v5639
    %v5689 = vunpack.c.h.b16 %v5639
    %v5690 = vunpack.c.l.b16 %v5640
    %v5691 = vunpack.c.h.b16 %v5640
    %v5692 = vpack.c.b16 %v5676, %v5674
    %v5693 = vpack.c.b16 %v5677, %v5675
    %v5694 = vpack.c.b16 %v5680, %v5678
    %v5695 = vpack.c.b16 %v5681, %v5679
    %v5696 = vpack.c.b16 %v5684, %v5682
    %v5697 = vpack.c.b16 %v5685, %v5683
    %v5698 = vpack.c.b16 %v5688, %v5686
    %v5699 = vpack.c.b16 %v5689, %v5687
    %v5700 = vpack.c.b16 %v5690, %v5690
    %v5701 = vpack.c.b16 %v5691, %v5691
    %v5703 = vshrl.u32 %v5692, 16
    %v5705 = vshll.u32 %v5692, 16
    %v5707 = vrot.slane %v5705, 1
    %v5708 = vor.u32 %v5703, %v5707
    %v5710 = vshll.u32 %v5694, 16
    %v5712 = vrot.slane %v5710, 1
    %v5713 = vsel %vm1836, %v5708, %v5712
    %v5715 = vshrl.u32 %v5693, 16
    %v5717 = vshll.u32 %v5693, 16
    %v5719 = vrot.slane %v5717, 1
    %v5720 = vor.u32 %v5715, %v5719
    %v5722 = vshll.u32 %v5695, 16
    %v5724 = vrot.slane %v5722, 1
    %v5725 = vsel %vm1836, %v5720, %v5724
    %v5726 = vshrl.u32 %v5694, 16
    %v5728 = vor.u32 %v5726, %v5712
    %v5730 = vshll.u32 %v5696, 16
    %v5732 = vrot.slane %v5730, 1
    %v5733 = vsel %vm1836, %v5728, %v5732
    %v5734 = vshrl.u32 %v5695, 16
    %v5736 = vor.u32 %v5734, %v5724
    %v5738 = vshll.u32 %v5697, 16
    %v5740 = vrot.slane %v5738, 1
    %v5741 = vsel %vm1836, %v5736, %v5740
    %v5742 = vshrl.u32 %v5696, 16
    %v5744 = vor.u32 %v5742, %v5732
    %v5746 = vshll.u32 %v5698, 16
    %v5748 = vrot.slane %v5746, 1
    %v5749 = vsel %vm1836, %v5744, %v5748
    %v5750 = vshrl.u32 %v5697, 16
    %v5752 = vor.u32 %v5750, %v5740
    %v5754 = vshll.u32 %v5699, 16
    %v5756 = vrot.slane %v5754, 1
    %v5757 = vsel %vm1836, %v5752, %v5756
    %v5758 = vshrl.u32 %v5698, 16
    %v5760 = vor.u32 %v5758, %v5748
    %v5762 = vshll.u32 %v5700, 16
    %v5764 = vrot.slane %v5762, 1
    %v5765 = vsel %vm1836, %v5760, %v5764
    %v5766 = vshrl.u32 %v5699, 16
    %v5768 = vor.u32 %v5766, %v5756
    %v5770 = vshll.u32 %v5701, 16
    %v5772 = vrot.slane %v5770, 1
    %v5773 = vsel %vm1836, %v5768, %v5772
    %v5802 = vunpack.c.l.b16 %v5641
    %v5803 = vunpack.c.l.b16 %v5642
    %v5804 = vunpack.c.l.b16 %v5643
    %v5805 = vunpack.c.l.b16 %v5644
    %v5806 = vunpack.c.l.b16 %v5645
    %v5807 = vunpack.c.l.b16 %v5646
    %v5808 = vunpack.c.l.b16 %v5647
    %v5809 = vunpack.c.l.b16 %v5648
    %v5810 = vunpack.c.l.b16 %v5649
    %v5811 = vunpack.c.l.b16 %v5650
    %v5812 = vunpack.c.l.b16 %v5651
    %v5813 = vunpack.c.l.b16 %v5652
    %v5814 = vunpack.c.l.b16 %v5653
    %v5815 = vunpack.c.l.b16 %v5654
    %v5816 = vunpack.c.l.b16 %v5655
    %v5817 = vunpack.c.l.b16 %v5656
    %v5818 = vunpack.c.l.b16 %v5657
    %v5819 = vunpack.c.l.b16 %v5658
    %v5820 = vunpack.c.l.b16 %v5659
    %v5821 = vunpack.c.l.b16 %v5660
    %v5822 = vunpack.c.l.b16 %v5661
    %v5823 = vunpack.c.l.b16 %v5662
    %v5824 = vunpack.c.l.b16 %v5663
    %v5825 = vunpack.c.l.b16 %v5664
    %v5826 = vpack.c.b16 %v5803, %v5802
    %v5827 = vpack.c.b16 %v5805, %v5804
    %v5828 = vpack.c.b16 %v5807, %v5806
    %v5829 = vpack.c.b16 %v5809, %v5808
    %v5830 = vpack.c.b16 %v5811, %v5810
    %v5831 = vpack.c.b16 %v5813, %v5812
    %v5832 = vpack.c.b16 %v5815, %v5814
    %v5833 = vpack.c.b16 %v5817, %v5816
    %v5834 = vpack.c.b16 %v5819, %v5818
    %v5835 = vpack.c.b16 %v5821, %v5820
    %v5836 = vpack.c.b16 %v5823, %v5822
    %v5837 = vpack.c.b16 %v5825, %v5824
    %v5851 = vsel %vm370, %v5725, 0
    %v5854 = vsel %vm370, %v5741, 0
    %v5857 = vsel %vm370, %v5757, 0
    %v5860 = vsel %vm370, %v5773, 0
    %5862 = vmatprep.subr.bf16.mxu0 0
    %5863 = vmatpush1.bf16.msra.mxu0 %v5833
    %5864 = vmatprep.subr.bf16.mxu0 0
    %5865 = vmatpush1.bf16.msra.mxu0 %v5832
    %5866 = vmatprep.subr.bf16.mxu0 0
    %5867 = vmatpush1.bf16.msra.mxu0 %v5831
    %5868 = vmatprep.subr.bf16.mxu0 0
    %5869 = vmatpush1.bf16.msra.mxu0 %v5830
    %5870 = vmatprep.subr.bf16.mxu0 0
    %5871 = vmatpush1.bf16.msra.mxu0 %v5829
    %5872 = vmatprep.subr.bf16.mxu0 0
    %5873 = vmatpush1.bf16.msra.mxu0 %v5828
    %5874 = vmatprep.subr.bf16.mxu0 0
    %5875 = vmatpush1.bf16.msra.mxu0 %v5827
    %5876 = vmatprep.subr.bf16.mxu0 0
    %5877 = vmatpush1.bf16.msra.mxu0 %v5826
    %5878 = vmatprep.subr.bf16.mxu0 0
    %5879 = vmatpush2.bf16.msra.mxu0 0
    %5880 = vmatprep.subr.bf16.mxu0 0
    %5881 = vmatpush2.bf16.msra.mxu0 0
    %5882 = vmatprep.subr.bf16.mxu0 0
    %5883 = vmatpush2.bf16.msra.mxu0 0
    %5884 = vmatprep.subr.bf16.mxu0 0
    %5885 = vmatpush2.bf16.msra.mxu0 0
    %5886 = vmatprep.subr.bf16.mxu0 0
    %5887 = vmatpush2.bf16.msra.mxu0 %v5837
    %5888 = vmatprep.subr.bf16.mxu0 0
    %5889 = vmatpush2.bf16.msra.mxu0 %v5836
    %5890 = vmatprep.subr.bf16.mxu0 0
    %5891 = vmatpush2.bf16.msra.mxu0 %v5835
    %5892 = vmatprep.subr.bf16.mxu0 0
    %5893 = vmatpush2.bf16.msra.mxu0 %v5834
    %5894 = vmatprep.mubr.bf16.mxu0 %v5851
    %5895 = vmatmul.mubr.bf16.gmra.mxu0 %v5713
    %v5896 = vpop.f32.mrf.mxu0
    %v5897 = vadd.f32 0.0, %v5896
    %v5898 = vpop.f32.mrf.mxu0
    %v5899 = vpop.f32.mrf.mxu0
    %v5900 = vadd.f32 0.0, %v5899
    %v5901 = vpop.f32.mrf.mxu0
    %5902 = vmatprep.mubr.bf16.mxu0 %v5854
    %5903 = vmatmul.mubr.bf16.gmra.mxu0 %v5733
    %v5904 = vpop.f32.mrf.mxu0
    %v5905 = vadd.f32 0.0, %v5904
    %v5906 = vpop.f32.mrf.mxu0
    %v5907 = vpop.f32.mrf.mxu0
    %v5908 = vadd.f32 0.0, %v5907
    %v5909 = vpop.f32.mrf.mxu0
    %5910 = vmatprep.mubr.bf16.mxu0 %v5857
    %5911 = vmatmul.mubr.bf16.gmra.mxu0 %v5749
    %v5912 = vpop.f32.mrf.mxu0
    %v5913 = vadd.f32 0.0, %v5912
    %v5914 = vpop.f32.mrf.mxu0
    %v5915 = vpop.f32.mrf.mxu0
    %v5916 = vadd.f32 0.0, %v5915
    %v5917 = vpop.f32.mrf.mxu0
    %5918 = vmatprep.mubr.bf16.mxu0 %v5860
    %5919 = vmatmul.mubr.bf16.gmra.mxu0 %v5765
    %v5920 = vpop.f32.mrf.mxu0
    %v5921 = vadd.f32 0.0, %v5920
    %v5922 = vpop.f32.mrf.mxu0
    %v5923 = vpop.f32.mrf.mxu0
    %v5924 = vadd.f32 0.0, %v5923
    %v5925 = vpop.f32.mrf.mxu0
    %5926 = vdwg.mxu0
    %v5927 = vadd.f32 %v5593, %v5897
    %v5928 = vadd.f32 %v5596, %v5900
    %v5929 = vadd.f32 %v5601, %v5905
    %v5930 = vadd.f32 %v5604, %v5908
    %v5931 = vadd.f32 %v5609, %v5913
    %v5932 = vadd.f32 %v5612, %v5916
    %v5933 = vadd.f32 %v5617, %v5921
    %v5934 = vadd.f32 %v5620, %v5924
    %v5935 = vld [vmem:[%s8] sm:$0x1]
    %v5937 = vlaneseq
    %v5938 = vshrl.u32 %v5937, 7
    %v5939 = vsub.s32 0, %v5938
    %v5940 = vrot.slane %v5935, %v5939
    %v5942 = vadd.f32 %v5927, %v5940
    %v5943 = vadd.f32 %v5928, %v5940
    %v5944 = vadd.f32 %v5929, %v5940
    %v5945 = vadd.f32 %v5930, %v5940
    %v5946 = vadd.f32 %v5931, %v5940
    %v5947 = vadd.f32 %v5932, %v5940
    %v5948 = vadd.f32 %v5933, %v5940
    %v5949 = vadd.f32 %v5934, %v5940
    %v5950 = vmax.f32 %v5942, 0.0
    %v5951 = vmax.f32 %v5943, 0.0
    %v5952 = vmax.f32 %v5944, 0.0
    %v5953 = vmax.f32 %v5945, 0.0
    %v5954 = vmax.f32 %v5946, 0.0
    %v5955 = vmax.f32 %v5947, 0.0
    %v5956 = vmax.f32 %v5948, 0.0
    %v5957 = vmax.f32 %v5949, 0.0
    %v5958 = vpack.c.bf16 %v5951, %v5950
    %v5959 = vpack.c.bf16 %v5953, %v5952
    %v5960 = vpack.c.bf16 %v5955, %v5954
    %v5961 = vpack.c.bf16 %v5957, %v5956
    %v5962 = vld [vmem:[#allocation2 + $0x8] sm:$0x88]
    %v5963 = vsel %vm956, 0, %v5962
    %5964 = vst [vmem:[#allocation2 + $0x8] sm:$0x88] %v5963
    %5965 = vst.msk [vmem:[#allocation2 + $0x10] sm:$0xff] %vm962, 0
    %5966 = vst.msk [vmem:[#allocation2 + $0x48] sm:$0xff] %vm962, 0
    %v5967 = vld [vmem:[#allocation2 + $0x50] sm:$0x11]
    %v5968 = vsel %vm971, 0, %v5967
    %5969 = vst [vmem:[#allocation2 + $0x50] sm:$0x11] %v5968
    %v5974 = vunpack.c.l.b16 %v5958
    %v5975 = vunpack.c.h.b16 %v5958
    %v5976 = vunpack.c.l.b16 %v5959
    %v5977 = vunpack.c.h.b16 %v5959
    %v5978 = vunpack.c.l.b16 %v5960
    %v5979 = vunpack.c.h.b16 %v5960
    %v5980 = vunpack.c.l.b16 %v5961
    %v5981 = vunpack.c.h.b16 %v5961
    %v5982 = vpack.c.b16 %v5974, %v5974
    %v5983 = vpack.c.b16 %v5975, %v5975
    %v5984 = vpack.c.b16 %v5976, %v5976
    %v5985 = vpack.c.b16 %v5977, %v5977
    %v5986 = vpack.c.b16 %v5978, %v5978
    %v5987 = vpack.c.b16 %v5979, %v5979
    %v5988 = vpack.c.b16 %v5980, %v5980
    %v5989 = vpack.c.b16 %v5981, %v5981
    %5998 = vst.msk [vmem:[#allocation2 + $0x18] sm:$0xf] %vm1003, %v5982
    %5999 = vst.msk [vmem:[#allocation2 + $0x20] sm:$0xf] %vm1003, %v5983
    %6000 = vst.msk [vmem:[#allocation2 + $0x28] sm:$0xf] %vm1003, %v5984
    %6001 = vst.msk [vmem:[#allocation2 + $0x30] sm:$0xf] %vm1003, %v5985
    %6002 = vst.msk [vmem:[#allocation2 + $0x38] sm:$0xf] %vm1003, %v5986
    %6003 = vst.msk [vmem:[#allocation2 + $0x40] sm:$0xf] %vm1003, %v5987
    %6004 = vst.msk [vmem:[#allocation2 + $0x48] sm:$0xf] %vm1003, %v5988
    %6005 = vst.msk [vmem:[#allocation2 + $0x50] sm:$0xf] %vm1003, %v5989
    %6006 = vrot.lane.b32.xlu0 %v5982, 64
    %v6007 = vpop.permute.xlu0 %6006
    %6008 = vrot.lane.b32.xlu0 %v5983, 64
    %v6009 = vpop.permute.xlu0 %6008
    %6010 = vrot.lane.b32.xlu0 %v5984, 64
    %v6011 = vpop.permute.xlu0 %6010
    %6012 = vrot.lane.b32.xlu0 %v5985, 64
    %v6013 = vpop.permute.xlu0 %6012
    %6014 = vrot.lane.b32.xlu0 %v5986, 64
    %v6015 = vpop.permute.xlu0 %6014
    %6016 = vrot.lane.b32.xlu0 %v5987, 64
    %v6017 = vpop.permute.xlu0 %6016
    %6018 = vrot.lane.b32.xlu0 %v5988, 64
    %v6019 = vpop.permute.xlu0 %6018
    %6020 = vrot.lane.b32.xlu0 %v5989, 64
    %v6021 = vpop.permute.xlu0 %6020
    %6030 = vst.msk [vmem:[#allocation2 + $0x10] sm:$0xf] %vm1036, %v6007
    %6031 = vst.msk [vmem:[#allocation2 + $0x18] sm:$0xf] %vm1036, %v6009
    %6032 = vst.msk [vmem:[#allocation2 + $0x20] sm:$0xf] %vm1036, %v6011
    %6033 = vst.msk [vmem:[#allocation2 + $0x28] sm:$0xf] %vm1036, %v6013
    %6034 = vst.msk [vmem:[#allocation2 + $0x30] sm:$0xf] %vm1036, %v6015
    %6035 = vst.msk [vmem:[#allocation2 + $0x38] sm:$0xf] %vm1036, %v6017
    %6036 = vst.msk [vmem:[#allocation2 + $0x40] sm:$0xf] %vm1036, %v6019
    %6037 = vst.msk [vmem:[#allocation2 + $0x48] sm:$0xf] %vm1036, %v6021
    %6038 = vst.msk [vmem:[#allocation2 + $0xc] sm:$0xf] %vm1003, %v5982
    %6039 = vst.msk [vmem:[#allocation2 + $0x14] sm:$0xf] %vm1003, %v5983
    %6040 = vst.msk [vmem:[#allocation2 + $0x1c] sm:$0xf] %vm1003, %v5984
    %6041 = vst.msk [vmem:[#allocation2 + $0x24] sm:$0xf] %vm1003, %v5985
    %6042 = vst.msk [vmem:[#allocation2 + $0x2c] sm:$0xf] %vm1003, %v5986
    %6043 = vst.msk [vmem:[#allocation2 + $0x34] sm:$0xf] %vm1003, %v5987
    %6044 = vst.msk [vmem:[#allocation2 + $0x3c] sm:$0xf] %vm1003, %v5988
    %6045 = vst.msk [vmem:[#allocation2 + $0x44] sm:$0xf] %vm1003, %v5989
    %v6046 = vld [vmem:[#allocation2 + $0x8] sm:$0x88]
    %v6047 = vld [vmem:[#allocation2 + $0x10] sm:$0xff]
    %v6048 = vld [vmem:[#allocation2 + $0x18] sm:$0xff]
    %v6049 = vld [vmem:[#allocation2 + $0x20] sm:$0xff]
    %v6050 = vld [vmem:[#allocation2 + $0x28] sm:$0xff]
    %v6051 = vld [vmem:[#allocation2 + $0x30] sm:$0xff]
    %v6052 = vld [vmem:[#allocation2 + $0x38] sm:$0xff]
    %v6053 = vld [vmem:[#allocation2 + $0x40] sm:$0xff]
    %v6054 = vld [vmem:[#allocation2 + $0x48] sm:$0xff]
    %v6055 = vmul.bf16 %v6046, %v1068
    %v6056 = vmul.bf16 %v6047, %v1078
    %v6057 = vmul.bf16 %v6048, %v1088
    %v6058 = vmul.bf16 %v6049, %v1098
    %v6059 = vmul.bf16 %v6050, %v1108
    %v6060 = vmul.bf16 %v6051, %v1118
    %v6061 = vmul.bf16 %v6052, %v1128
    %v6062 = vmul.bf16 %v6053, %v1138
    %v6063 = vmul.bf16 %v6054, %v1143
    %v6064 = vld [vmem:[%s9] sm:$0xf]
    %v6065 = vld [vmem:[%s9 + $0x4] sm:$0xf]
    %v6066 = vld [vmem:[%s9 + $0x8] sm:$0xf]
    %v6067 = vld [vmem:[%s9 + $0xc] sm:$0xf]
    %v6068 = vld [vmem:[%s9 + $0x10] sm:$0xf]
    %v6069 = vld [vmem:[%s9 + $0x14] sm:$0xf]
    %v6070 = vld [vmem:[%s9 + $0x18] sm:$0xf]
    %v6071 = vld [vmem:[%s9 + $0x1c] sm:$0xf]
    %v6072 = vld [vmem:[%s9 + $0x20] sm:$0xf]
    %v6073 = vld [vmem:[%s9 + $0x24] sm:$0xf]
    %v6074 = vld [vmem:[%s9 + $0x28] sm:$0xf]
    %v6075 = vld [vmem:[%s9 + $0x2c] sm:$0xf]
    %v6076 = vld [vmem:[%s9 + $0x30] sm:$0xf]
    %v6077 = vld [vmem:[%s9 + $0x34] sm:$0xf]
    %v6078 = vld [vmem:[%s9 + $0x38] sm:$0xf]
    %v6079 = vld [vmem:[%s9 + $0x3c] sm:$0xf]
    %v6080 = vld [vmem:[%s9 + $0x40] sm:$0xf]
    %v6081 = vld [vmem:[%s9 + $0x44] sm:$0xf]
    %v6082 = vld [vmem:[%s9 + $0x48] sm:$0xf]
    %v6083 = vld [vmem:[%s9 + $0x4c] sm:$0xf]
    %v6084 = vld [vmem:[%s9 + $0x50] sm:$0xf]
    %v6085 = vld [vmem:[%s9 + $0x54] sm:$0xf]
    %v6086 = vld [vmem:[%s9 + $0x58] sm:$0xf]
    %v6087 = vld [vmem:[%s9 + $0x5c] sm:$0xf]
    %v6088 = vld [vmem:[%s3178] sm:$0xf]
    %v6089 = vld [vmem:[%s3178 + $0x4] sm:$0xf]
    %v6090 = vld [vmem:[%s3178 + $0x8] sm:$0xf]
    %v6091 = vld [vmem:[%s3178 + $0xc] sm:$0xf]
    %v6092 = vld [vmem:[%s3178 + $0x10] sm:$0xf]
    %v6093 = vld [vmem:[%s3178 + $0x14] sm:$0xf]
    %v6094 = vld [vmem:[%s3178 + $0x18] sm:$0xf]
    %v6095 = vld [vmem:[%s3178 + $0x1c] sm:$0xf]
    %v6096 = vld [vmem:[%s3178 + $0x20] sm:$0xf]
    %v6097 = vld [vmem:[%s3178 + $0x24] sm:$0xf]
    %v6098 = vld [vmem:[%s3178 + $0x28] sm:$0xf]
    %v6099 = vld [vmem:[%s3178 + $0x2c] sm:$0xf]
    %v6100 = vld [vmem:[%s3178 + $0x30] sm:$0xf]
    %v6101 = vld [vmem:[%s3178 + $0x34] sm:$0xf]
    %v6102 = vld [vmem:[%s3178 + $0x38] sm:$0xf]
    %v6103 = vld [vmem:[%s3178 + $0x3c] sm:$0xf]
    %v6104 = vld [vmem:[%s3178 + $0x40] sm:$0xf]
    %v6105 = vld [vmem:[%s3178 + $0x44] sm:$0xf]
    %v6106 = vld [vmem:[%s3178 + $0x48] sm:$0xf]
    %v6107 = vld [vmem:[%s3178 + $0x4c] sm:$0xf]
    %v6108 = vld [vmem:[%s3178 + $0x50] sm:$0xf]
    %v6109 = vld [vmem:[%s3178 + $0x54] sm:$0xf]
    %v6110 = vld [vmem:[%s3178 + $0x58] sm:$0xf]
    %v6111 = vld [vmem:[%s3178 + $0x5c] sm:$0xf]
    %v6120 = vunpack.c.l.b16 %v6047
    %v6121 = vunpack.c.h.b16 %v6047
    %v6122 = vunpack.c.l.b16 %v6048
    %v6123 = vunpack.c.h.b16 %v6048
    %v6124 = vunpack.c.l.b16 %v6049
    %v6125 = vunpack.c.h.b16 %v6049
    %v6126 = vunpack.c.l.b16 %v6050
    %v6127 = vunpack.c.h.b16 %v6050
    %v6128 = vunpack.c.l.b16 %v6051
    %v6129 = vunpack.c.h.b16 %v6051
    %v6130 = vunpack.c.l.b16 %v6052
    %v6131 = vunpack.c.h.b16 %v6052
    %v6132 = vunpack.c.l.b16 %v6053
    %v6133 = vunpack.c.h.b16 %v6053
    %v6134 = vunpack.c.l.b16 %v6054
    %v6135 = vunpack.c.h.b16 %v6054
    %v6136 = vpack.c.b16 %v6122, %v6120
    %v6137 = vpack.c.b16 %v6123, %v6121
    %v6138 = vpack.c.b16 %v6126, %v6124
    %v6139 = vpack.c.b16 %v6127, %v6125
    %v6140 = vpack.c.b16 %v6130, %v6128
    %v6141 = vpack.c.b16 %v6131, %v6129
    %v6142 = vpack.c.b16 %v6134, %v6132
    %v6143 = vpack.c.b16 %v6135, %v6133
    %v6172 = vunpack.c.l.b16 %v6088
    %v6173 = vunpack.c.l.b16 %v6089
    %v6174 = vunpack.c.l.b16 %v6090
    %v6175 = vunpack.c.l.b16 %v6091
    %v6176 = vunpack.c.l.b16 %v6092
    %v6177 = vunpack.c.l.b16 %v6093
    %v6178 = vunpack.c.l.b16 %v6094
    %v6179 = vunpack.c.l.b16 %v6095
    %v6180 = vunpack.c.l.b16 %v6096
    %v6181 = vunpack.c.l.b16 %v6097
    %v6182 = vunpack.c.l.b16 %v6098
    %v6183 = vunpack.c.l.b16 %v6099
    %v6184 = vunpack.c.l.b16 %v6100
    %v6185 = vunpack.c.l.b16 %v6101
    %v6186 = vunpack.c.l.b16 %v6102
    %v6187 = vunpack.c.l.b16 %v6103
    %v6188 = vunpack.c.l.b16 %v6104
    %v6189 = vunpack.c.l.b16 %v6105
    %v6190 = vunpack.c.l.b16 %v6106
    %v6191 = vunpack.c.l.b16 %v6107
    %v6192 = vunpack.c.l.b16 %v6108
    %v6193 = vunpack.c.l.b16 %v6109
    %v6194 = vunpack.c.l.b16 %v6110
    %v6195 = vunpack.c.l.b16 %v6111
    %v6196 = vpack.c.b16 %v6173, %v6172
    %v6197 = vpack.c.b16 %v6175, %v6174
    %v6198 = vpack.c.b16 %v6177, %v6176
    %v6199 = vpack.c.b16 %v6179, %v6178
    %v6200 = vpack.c.b16 %v6181, %v6180
    %v6201 = vpack.c.b16 %v6183, %v6182
    %v6202 = vpack.c.b16 %v6185, %v6184
    %v6203 = vpack.c.b16 %v6187, %v6186
    %v6204 = vpack.c.b16 %v6189, %v6188
    %v6205 = vpack.c.b16 %v6191, %v6190
    %v6206 = vpack.c.b16 %v6193, %v6192
    %v6207 = vpack.c.b16 %v6195, %v6194
    %v6221 = vsel %vm370, %v6137, 0
    %v6224 = vsel %vm370, %v6139, 0
    %v6227 = vsel %vm370, %v6141, 0
    %v6230 = vsel %vm370, %v6143, 0
    %6232 = vmatprep.subr.bf16.mxu0 0
    %6233 = vmatpush1.bf16.msra.mxu0 %v6203
    %6234 = vmatprep.subr.bf16.mxu0 0
    %6235 = vmatpush1.bf16.msra.mxu0 %v6202
    %6236 = vmatprep.subr.bf16.mxu0 0
    %6237 = vmatpush1.bf16.msra.mxu0 %v6201
    %6238 = vmatprep.subr.bf16.mxu0 0
    %6239 = vmatpush1.bf16.msra.mxu0 %v6200
    %6240 = vmatprep.subr.bf16.mxu0 0
    %6241 = vmatpush1.bf16.msra.mxu0 %v6199
    %6242 = vmatprep.subr.bf16.mxu0 0
    %6243 = vmatpush1.bf16.msra.mxu0 %v6198
    %6244 = vmatprep.subr.bf16.mxu0 0
    %6245 = vmatpush1.bf16.msra.mxu0 %v6197
    %6246 = vmatprep.subr.bf16.mxu0 0
    %6247 = vmatpush1.bf16.msra.mxu0 %v6196
    %6248 = vmatprep.subr.bf16.mxu0 0
    %6249 = vmatpush2.bf16.msra.mxu0 0
    %6250 = vmatprep.subr.bf16.mxu0 0
    %6251 = vmatpush2.bf16.msra.mxu0 0
    %6252 = vmatprep.subr.bf16.mxu0 0
    %6253 = vmatpush2.bf16.msra.mxu0 0
    %6254 = vmatprep.subr.bf16.mxu0 0
    %6255 = vmatpush2.bf16.msra.mxu0 0
    %6256 = vmatprep.subr.bf16.mxu0 0
    %6257 = vmatpush2.bf16.msra.mxu0 %v6207
    %6258 = vmatprep.subr.bf16.mxu0 0
    %6259 = vmatpush2.bf16.msra.mxu0 %v6206
    %6260 = vmatprep.subr.bf16.mxu0 0
    %6261 = vmatpush2.bf16.msra.mxu0 %v6205
    %6262 = vmatprep.subr.bf16.mxu0 0
    %6263 = vmatpush2.bf16.msra.mxu0 %v6204
    %6264 = vmatprep.mubr.bf16.mxu0 %v6221
    %6265 = vmatmul.mubr.bf16.gmra.mxu0 %v6136
    %v6266 = vpop.f32.mrf.mxu0
    %v6267 = vadd.f32 0.0, %v6266
    %v6268 = vpop.f32.mrf.mxu0
    %v6269 = vpop.f32.mrf.mxu0
    %v6270 = vadd.f32 0.0, %v6269
    %v6271 = vpop.f32.mrf.mxu0
    %6272 = vmatprep.mubr.bf16.mxu0 %v6224
    %6273 = vmatmul.mubr.bf16.gmra.mxu0 %v6138
    %v6274 = vpop.f32.mrf.mxu0
    %v6275 = vadd.f32 0.0, %v6274
    %v6276 = vpop.f32.mrf.mxu0
    %v6277 = vpop.f32.mrf.mxu0
    %v6278 = vadd.f32 0.0, %v6277
    %v6279 = vpop.f32.mrf.mxu0
    %6280 = vmatprep.mubr.bf16.mxu0 %v6227
    %6281 = vmatmul.mubr.bf16.gmra.mxu0 %v6140
    %v6282 = vpop.f32.mrf.mxu0
    %v6283 = vadd.f32 0.0, %v6282
    %v6284 = vpop.f32.mrf.mxu0
    %v6285 = vpop.f32.mrf.mxu0
    %v6286 = vadd.f32 0.0, %v6285
    %v6287 = vpop.f32.mrf.mxu0
    %6288 = vmatprep.mubr.bf16.mxu0 %v6230
    %6289 = vmatmul.mubr.bf16.gmra.mxu0 %v6142
    %v6290 = vpop.f32.mrf.mxu0
    %v6291 = vadd.f32 0.0, %v6290
    %v6292 = vpop.f32.mrf.mxu0
    %v6293 = vpop.f32.mrf.mxu0
    %v6294 = vadd.f32 0.0, %v6293
    %v6295 = vpop.f32.mrf.mxu0
    %6296 = vdwg.mxu0
    %v6306 = vunpack.c.l.b16 %v6055
    %v6307 = vunpack.c.h.b16 %v6055
    %v6308 = vunpack.c.l.b16 %v6056
    %v6309 = vunpack.c.h.b16 %v6056
    %v6310 = vunpack.c.l.b16 %v6057
    %v6311 = vunpack.c.h.b16 %v6057
    %v6312 = vunpack.c.l.b16 %v6058
    %v6313 = vunpack.c.h.b16 %v6058
    %v6314 = vunpack.c.l.b16 %v6059
    %v6315 = vunpack.c.h.b16 %v6059
    %v6316 = vunpack.c.l.b16 %v6060
    %v6317 = vunpack.c.h.b16 %v6060
    %v6318 = vunpack.c.l.b16 %v6061
    %v6319 = vunpack.c.h.b16 %v6061
    %v6320 = vunpack.c.l.b16 %v6062
    %v6321 = vunpack.c.h.b16 %v6062
    %v6322 = vunpack.c.l.b16 %v6063
    %v6323 = vunpack.c.h.b16 %v6063
    %v6324 = vpack.c.b16 %v6308, %v6306
    %v6325 = vpack.c.b16 %v6309, %v6307
    %v6326 = vpack.c.b16 %v6312, %v6310
    %v6327 = vpack.c.b16 %v6313, %v6311
    %v6328 = vpack.c.b16 %v6316, %v6314
    %v6329 = vpack.c.b16 %v6317, %v6315
    %v6330 = vpack.c.b16 %v6320, %v6318
    %v6331 = vpack.c.b16 %v6321, %v6319
    %v6332 = vpack.c.b16 %v6322, %v6322
    %v6333 = vpack.c.b16 %v6323, %v6323
    %v6335 = vshrl.u32 %v6324, 16
    %v6337 = vrot.slane %v6335, 3
    %v6338 = vshll.u32 %v6324, 16
    %v6340 = vrot.slane %v6338, 4
    %v6341 = vor.u32 %v6337, %v6340
    %v6343 = vshrl.u32 %v6326, 16
    %v6345 = vrot.slane %v6343, 3
    %v6346 = vshll.u32 %v6326, 16
    %v6348 = vrot.slane %v6346, 4
    %v6349 = vor.u32 %v6345, %v6348
    %v6350 = vsel %vm969, %v6341, %v6349
    %v6352 = vshrl.u32 %v6325, 16
    %v6354 = vrot.slane %v6352, 3
    %v6355 = vshll.u32 %v6325, 16
    %v6357 = vrot.slane %v6355, 4
    %v6358 = vor.u32 %v6354, %v6357
    %v6360 = vshrl.u32 %v6327, 16
    %v6362 = vrot.slane %v6360, 3
    %v6363 = vshll.u32 %v6327, 16
    %v6365 = vrot.slane %v6363, 4
    %v6366 = vor.u32 %v6362, %v6365
    %v6367 = vsel %vm969, %v6358, %v6366
    %v6369 = vshrl.u32 %v6328, 16
    %v6371 = vrot.slane %v6369, 3
    %v6372 = vshll.u32 %v6328, 16
    %v6374 = vrot.slane %v6372, 4
    %v6375 = vor.u32 %v6371, %v6374
    %v6376 = vsel %vm969, %v6349, %v6375
    %v6378 = vshrl.u32 %v6329, 16
    %v6380 = vrot.slane %v6378, 3
    %v6381 = vshll.u32 %v6329, 16
    %v6383 = vrot.slane %v6381, 4
    %v6384 = vor.u32 %v6380, %v6383
    %v6385 = vsel %vm969, %v6366, %v6384
    %v6387 = vshrl.u32 %v6330, 16
    %v6389 = vrot.slane %v6387, 3
    %v6390 = vshll.u32 %v6330, 16
    %v6392 = vrot.slane %v6390, 4
    %v6393 = vor.u32 %v6389, %v6392
    %v6394 = vsel %vm969, %v6375, %v6393
    %v6396 = vshrl.u32 %v6331, 16
    %v6398 = vrot.slane %v6396, 3
    %v6399 = vshll.u32 %v6331, 16
    %v6401 = vrot.slane %v6399, 4
    %v6402 = vor.u32 %v6398, %v6401
    %v6403 = vsel %vm969, %v6384, %v6402
    %v6405 = vshrl.u32 %v6332, 16
    %v6407 = vrot.slane %v6405, 3
    %v6408 = vshll.u32 %v6332, 16
    %v6410 = vrot.slane %v6408, 4
    %v6411 = vor.u32 %v6407, %v6410
    %v6412 = vsel %vm969, %v6393, %v6411
    %v6414 = vshrl.u32 %v6333, 16
    %v6416 = vrot.slane %v6414, 3
    %v6417 = vshll.u32 %v6333, 16
    %v6419 = vrot.slane %v6417, 4
    %v6420 = vor.u32 %v6416, %v6419
    %v6421 = vsel %vm969, %v6402, %v6420
    %v6450 = vunpack.c.l.b16 %v6064
    %v6451 = vunpack.c.l.b16 %v6065
    %v6452 = vunpack.c.l.b16 %v6066
    %v6453 = vunpack.c.l.b16 %v6067
    %v6454 = vunpack.c.l.b16 %v6068
    %v6455 = vunpack.c.l.b16 %v6069
    %v6456 = vunpack.c.l.b16 %v6070
    %v6457 = vunpack.c.l.b16 %v6071
    %v6458 = vunpack.c.l.b16 %v6072
    %v6459 = vunpack.c.l.b16 %v6073
    %v6460 = vunpack.c.l.b16 %v6074
    %v6461 = vunpack.c.l.b16 %v6075
    %v6462 = vunpack.c.l.b16 %v6076
    %v6463 = vunpack.c.l.b16 %v6077
    %v6464 = vunpack.c.l.b16 %v6078
    %v6465 = vunpack.c.l.b16 %v6079
    %v6466 = vunpack.c.l.b16 %v6080
    %v6467 = vunpack.c.l.b16 %v6081
    %v6468 = vunpack.c.l.b16 %v6082
    %v6469 = vunpack.c.l.b16 %v6083
    %v6470 = vunpack.c.l.b16 %v6084
    %v6471 = vunpack.c.l.b16 %v6085
    %v6472 = vunpack.c.l.b16 %v6086
    %v6473 = vunpack.c.l.b16 %v6087
    %v6474 = vpack.c.b16 %v6451, %v6450
    %v6475 = vpack.c.b16 %v6453, %v6452
    %v6476 = vpack.c.b16 %v6455, %v6454
    %v6477 = vpack.c.b16 %v6457, %v6456
    %v6478 = vpack.c.b16 %v6459, %v6458
    %v6479 = vpack.c.b16 %v6461, %v6460
    %v6480 = vpack.c.b16 %v6463, %v6462
    %v6481 = vpack.c.b16 %v6465, %v6464
    %v6482 = vpack.c.b16 %v6467, %v6466
    %v6483 = vpack.c.b16 %v6469, %v6468
    %v6484 = vpack.c.b16 %v6471, %v6470
    %v6485 = vpack.c.b16 %v6473, %v6472
    %v6499 = vsel %vm370, %v6367, 0
    %v6502 = vsel %vm370, %v6385, 0
    %v6505 = vsel %vm370, %v6403, 0
    %v6508 = vsel %vm370, %v6421, 0
    %6510 = vmatprep.subr.bf16.mxu0 0
    %6511 = vmatpush1.bf16.msra.mxu0 %v6481
    %6512 = vmatprep.subr.bf16.mxu0 0
    %6513 = vmatpush1.bf16.msra.mxu0 %v6480
    %6514 = vmatprep.subr.bf16.mxu0 0
    %6515 = vmatpush1.bf16.msra.mxu0 %v6479
    %6516 = vmatprep.subr.bf16.mxu0 0
    %6517 = vmatpush1.bf16.msra.mxu0 %v6478
    %6518 = vmatprep.subr.bf16.mxu0 0
    %6519 = vmatpush1.bf16.msra.mxu0 %v6477
    %6520 = vmatprep.subr.bf16.mxu0 0
    %6521 = vmatpush1.bf16.msra.mxu0 %v6476
    %6522 = vmatprep.subr.bf16.mxu0 0
    %6523 = vmatpush1.bf16.msra.mxu0 %v6475
    %6524 = vmatprep.subr.bf16.mxu0 0
    %6525 = vmatpush1.bf16.msra.mxu0 %v6474
    %6526 = vmatprep.subr.bf16.mxu0 0
    %6527 = vmatpush2.bf16.msra.mxu0 0
    %6528 = vmatprep.subr.bf16.mxu0 0
    %6529 = vmatpush2.bf16.msra.mxu0 0
    %6530 = vmatprep.subr.bf16.mxu0 0
    %6531 = vmatpush2.bf16.msra.mxu0 0
    %6532 = vmatprep.subr.bf16.mxu0 0
    %6533 = vmatpush2.bf16.msra.mxu0 0
    %6534 = vmatprep.subr.bf16.mxu0 0
    %6535 = vmatpush2.bf16.msra.mxu0 %v6485
    %6536 = vmatprep.subr.bf16.mxu0 0
    %6537 = vmatpush2.bf16.msra.mxu0 %v6484
    %6538 = vmatprep.subr.bf16.mxu0 0
    %6539 = vmatpush2.bf16.msra.mxu0 %v6483
    %6540 = vmatprep.subr.bf16.mxu0 0
    %6541 = vmatpush2.bf16.msra.mxu0 %v6482
    %6542 = vmatprep.mubr.bf16.mxu0 %v6499
    %6543 = vmatmul.mubr.bf16.gmra.mxu0 %v6350
    %v6544 = vpop.f32.mrf.mxu0
    %v6545 = vadd.f32 %v6267, %v6544
    %v6546 = vpop.f32.mrf.mxu0
    %v6547 = vpop.f32.mrf.mxu0
    %v6548 = vadd.f32 %v6270, %v6547
    %v6549 = vpop.f32.mrf.mxu0
    %6550 = vmatprep.mubr.bf16.mxu0 %v6502
    %6551 = vmatmul.mubr.bf16.gmra.mxu0 %v6376
    %v6552 = vpop.f32.mrf.mxu0
    %v6553 = vadd.f32 %v6275, %v6552
    %v6554 = vpop.f32.mrf.mxu0
    %v6555 = vpop.f32.mrf.mxu0
    %v6556 = vadd.f32 %v6278, %v6555
    %v6557 = vpop.f32.mrf.mxu0
    %6558 = vmatprep.mubr.bf16.mxu0 %v6505
    %6559 = vmatmul.mubr.bf16.gmra.mxu0 %v6394
    %v6560 = vpop.f32.mrf.mxu0
    %v6561 = vadd.f32 %v6283, %v6560
    %v6562 = vpop.f32.mrf.mxu0
    %v6563 = vpop.f32.mrf.mxu0
    %v6564 = vadd.f32 %v6286, %v6563
    %v6565 = vpop.f32.mrf.mxu0
    %6566 = vmatprep.mubr.bf16.mxu0 %v6508
    %6567 = vmatmul.mubr.bf16.gmra.mxu0 %v6412
    %v6568 = vpop.f32.mrf.mxu0
    %v6569 = vadd.f32 %v6291, %v6568
    %v6570 = vpop.f32.mrf.mxu0
    %v6571 = vpop.f32.mrf.mxu0
    %v6572 = vadd.f32 %v6294, %v6571
    %v6573 = vpop.f32.mrf.mxu0
    %6574 = vdwg.mxu0
    %v6575 = vld [vmem:[#allocation2 + $0x10] sm:$0xff]
    %v6576 = vld [vmem:[#allocation2 + $0x18] sm:$0xff]
    %v6577 = vld [vmem:[#allocation2 + $0x20] sm:$0xff]
    %v6578 = vld [vmem:[#allocation2 + $0x28] sm:$0xff]
    %v6579 = vld [vmem:[#allocation2 + $0x30] sm:$0xff]
    %v6580 = vld [vmem:[#allocation2 + $0x38] sm:$0xff]
    %v6581 = vld [vmem:[#allocation2 + $0x40] sm:$0xff]
    %v6582 = vld [vmem:[#allocation2 + $0x48] sm:$0xff]
    %v6583 = vld [vmem:[#allocation2 + $0x50] sm:$0x11]
    %v6584 = vmul.bf16 %v6575, %v1691
    %v6585 = vmul.bf16 %v6576, %v1700
    %v6586 = vmul.bf16 %v6577, %v1709
    %v6587 = vmul.bf16 %v6578, %v1718
    %v6588 = vmul.bf16 %v6579, %v1727
    %v6589 = vmul.bf16 %v6580, %v1736
    %v6590 = vmul.bf16 %v6581, %v1745
    %v6591 = vmul.bf16 %v6582, %v1754
    %v6592 = vmul.bf16 %v6583, %v1755
    %v6593 = vld [vmem:[%s3684] sm:$0xf]
    %v6594 = vld [vmem:[%s3684 + $0x4] sm:$0xf]
    %v6595 = vld [vmem:[%s3684 + $0x8] sm:$0xf]
    %v6596 = vld [vmem:[%s3684 + $0xc] sm:$0xf]
    %v6597 = vld [vmem:[%s3684 + $0x10] sm:$0xf]
    %v6598 = vld [vmem:[%s3684 + $0x14] sm:$0xf]
    %v6599 = vld [vmem:[%s3684 + $0x18] sm:$0xf]
    %v6600 = vld [vmem:[%s3684 + $0x1c] sm:$0xf]
    %v6601 = vld [vmem:[%s3684 + $0x20] sm:$0xf]
    %v6602 = vld [vmem:[%s3684 + $0x24] sm:$0xf]
    %v6603 = vld [vmem:[%s3684 + $0x28] sm:$0xf]
    %v6604 = vld [vmem:[%s3684 + $0x2c] sm:$0xf]
    %v6605 = vld [vmem:[%s3684 + $0x30] sm:$0xf]
    %v6606 = vld [vmem:[%s3684 + $0x34] sm:$0xf]
    %v6607 = vld [vmem:[%s3684 + $0x38] sm:$0xf]
    %v6608 = vld [vmem:[%s3684 + $0x3c] sm:$0xf]
    %v6609 = vld [vmem:[%s3684 + $0x40] sm:$0xf]
    %v6610 = vld [vmem:[%s3684 + $0x44] sm:$0xf]
    %v6611 = vld [vmem:[%s3684 + $0x48] sm:$0xf]
    %v6612 = vld [vmem:[%s3684 + $0x4c] sm:$0xf]
    %v6613 = vld [vmem:[%s3684 + $0x50] sm:$0xf]
    %v6614 = vld [vmem:[%s3684 + $0x54] sm:$0xf]
    %v6615 = vld [vmem:[%s3684 + $0x58] sm:$0xf]
    %v6616 = vld [vmem:[%s3684 + $0x5c] sm:$0xf]
    %v6626 = vunpack.c.l.b16 %v6584
    %v6627 = vunpack.c.h.b16 %v6584
    %v6628 = vunpack.c.l.b16 %v6585
    %v6629 = vunpack.c.h.b16 %v6585
    %v6630 = vunpack.c.l.b16 %v6586
    %v6631 = vunpack.c.h.b16 %v6586
    %v6632 = vunpack.c.l.b16 %v6587
    %v6633 = vunpack.c.h.b16 %v6587
    %v6634 = vunpack.c.l.b16 %v6588
    %v6635 = vunpack.c.h.b16 %v6588
    %v6636 = vunpack.c.l.b16 %v6589
    %v6637 = vunpack.c.h.b16 %v6589
    %v6638 = vunpack.c.l.b16 %v6590
    %v6639 = vunpack.c.h.b16 %v6590
    %v6640 = vunpack.c.l.b16 %v6591
    %v6641 = vunpack.c.h.b16 %v6591
    %v6642 = vunpack.c.l.b16 %v6592
    %v6643 = vunpack.c.h.b16 %v6592
    %v6644 = vpack.c.b16 %v6628, %v6626
    %v6645 = vpack.c.b16 %v6629, %v6627
    %v6646 = vpack.c.b16 %v6632, %v6630
    %v6647 = vpack.c.b16 %v6633, %v6631
    %v6648 = vpack.c.b16 %v6636, %v6634
    %v6649 = vpack.c.b16 %v6637, %v6635
    %v6650 = vpack.c.b16 %v6640, %v6638
    %v6651 = vpack.c.b16 %v6641, %v6639
    %v6652 = vpack.c.b16 %v6642, %v6642
    %v6653 = vpack.c.b16 %v6643, %v6643
    %v6655 = vshrl.u32 %v6644, 16
    %v6657 = vshll.u32 %v6644, 16
    %v6659 = vrot.slane %v6657, 1
    %v6660 = vor.u32 %v6655, %v6659
    %v6662 = vshll.u32 %v6646, 16
    %v6664 = vrot.slane %v6662, 1
    %v6665 = vsel %vm1836, %v6660, %v6664
    %v6667 = vshrl.u32 %v6645, 16
    %v6669 = vshll.u32 %v6645, 16
    %v6671 = vrot.slane %v6669, 1
    %v6672 = vor.u32 %v6667, %v6671
    %v6674 = vshll.u32 %v6647, 16
    %v6676 = vrot.slane %v6674, 1
    %v6677 = vsel %vm1836, %v6672, %v6676
    %v6678 = vshrl.u32 %v6646, 16
    %v6680 = vor.u32 %v6678, %v6664
    %v6682 = vshll.u32 %v6648, 16
    %v6684 = vrot.slane %v6682, 1
    %v6685 = vsel %vm1836, %v6680, %v6684
    %v6686 = vshrl.u32 %v6647, 16
    %v6688 = vor.u32 %v6686, %v6676
    %v6690 = vshll.u32 %v6649, 16
    %v6692 = vrot.slane %v6690, 1
    %v6693 = vsel %vm1836, %v6688, %v6692
    %v6694 = vshrl.u32 %v6648, 16
    %v6696 = vor.u32 %v6694, %v6684
    %v6698 = vshll.u32 %v6650, 16
    %v6700 = vrot.slane %v6698, 1
    %v6701 = vsel %vm1836, %v6696, %v6700
    %v6702 = vshrl.u32 %v6649, 16
    %v6704 = vor.u32 %v6702, %v6692
    %v6706 = vshll.u32 %v6651, 16
    %v6708 = vrot.slane %v6706, 1
    %v6709 = vsel %vm1836, %v6704, %v6708
    %v6710 = vshrl.u32 %v6650, 16
    %v6712 = vor.u32 %v6710, %v6700
    %v6714 = vshll.u32 %v6652, 16
    %v6716 = vrot.slane %v6714, 1
    %v6717 = vsel %vm1836, %v6712, %v6716
    %v6718 = vshrl.u32 %v6651, 16
    %v6720 = vor.u32 %v6718, %v6708
    %v6722 = vshll.u32 %v6653, 16
    %v6724 = vrot.slane %v6722, 1
    %v6725 = vsel %vm1836, %v6720, %v6724
    %v6754 = vunpack.c.l.b16 %v6593
    %v6755 = vunpack.c.l.b16 %v6594
    %v6756 = vunpack.c.l.b16 %v6595
    %v6757 = vunpack.c.l.b16 %v6596
    %v6758 = vunpack.c.l.b16 %v6597
    %v6759 = vunpack.c.l.b16 %v6598
    %v6760 = vunpack.c.l.b16 %v6599
    %v6761 = vunpack.c.l.b16 %v6600
    %v6762 = vunpack.c.l.b16 %v6601
    %v6763 = vunpack.c.l.b16 %v6602
    %v6764 = vunpack.c.l.b16 %v6603
    %v6765 = vunpack.c.l.b16 %v6604
    %v6766 = vunpack.c.l.b16 %v6605
    %v6767 = vunpack.c.l.b16 %v6606
    %v6768 = vunpack.c.l.b16 %v6607
    %v6769 = vunpack.c.l.b16 %v6608
    %v6770 = vunpack.c.l.b16 %v6609
    %v6771 = vunpack.c.l.b16 %v6610
    %v6772 = vunpack.c.l.b16 %v6611
    %v6773 = vunpack.c.l.b16 %v6612
    %v6774 = vunpack.c.l.b16 %v6613
    %v6775 = vunpack.c.l.b16 %v6614
    %v6776 = vunpack.c.l.b16 %v6615
    %v6777 = vunpack.c.l.b16 %v6616
    %v6778 = vpack.c.b16 %v6755, %v6754
    %v6779 = vpack.c.b16 %v6757, %v6756
    %v6780 = vpack.c.b16 %v6759, %v6758
    %v6781 = vpack.c.b16 %v6761, %v6760
    %v6782 = vpack.c.b16 %v6763, %v6762
    %v6783 = vpack.c.b16 %v6765, %v6764
    %v6784 = vpack.c.b16 %v6767, %v6766
    %v6785 = vpack.c.b16 %v6769, %v6768
    %v6786 = vpack.c.b16 %v6771, %v6770
    %v6787 = vpack.c.b16 %v6773, %v6772
    %v6788 = vpack.c.b16 %v6775, %v6774
    %v6789 = vpack.c.b16 %v6777, %v6776
    %v6803 = vsel %vm370, %v6677, 0
    %v6806 = vsel %vm370, %v6693, 0
    %v6809 = vsel %vm370, %v6709, 0
    %v6812 = vsel %vm370, %v6725, 0
    %6814 = vmatprep.subr.bf16.mxu0 0
    %6815 = vmatpush1.bf16.msra.mxu0 %v6785
    %6816 = vmatprep.subr.bf16.mxu0 0
    %6817 = vmatpush1.bf16.msra.mxu0 %v6784
    %6818 = vmatprep.subr.bf16.mxu0 0
    %6819 = vmatpush1.bf16.msra.mxu0 %v6783
    %6820 = vmatprep.subr.bf16.mxu0 0
    %6821 = vmatpush1.bf16.msra.mxu0 %v6782
    %6822 = vmatprep.subr.bf16.mxu0 0
    %6823 = vmatpush1.bf16.msra.mxu0 %v6781
    %6824 = vmatprep.subr.bf16.mxu0 0
    %6825 = vmatpush1.bf16.msra.mxu0 %v6780
    %6826 = vmatprep.subr.bf16.mxu0 0
    %6827 = vmatpush1.bf16.msra.mxu0 %v6779
    %6828 = vmatprep.subr.bf16.mxu0 0
    %6829 = vmatpush1.bf16.msra.mxu0 %v6778
    %6830 = vmatprep.subr.bf16.mxu0 0
    %6831 = vmatpush2.bf16.msra.mxu0 0
    %6832 = vmatprep.subr.bf16.mxu0 0
    %6833 = vmatpush2.bf16.msra.mxu0 0
    %6834 = vmatprep.subr.bf16.mxu0 0
    %6835 = vmatpush2.bf16.msra.mxu0 0
    %6836 = vmatprep.subr.bf16.mxu0 0
    %6837 = vmatpush2.bf16.msra.mxu0 0
    %6838 = vmatprep.subr.bf16.mxu0 0
    %6839 = vmatpush2.bf16.msra.mxu0 %v6789
    %6840 = vmatprep.subr.bf16.mxu0 0
    %6841 = vmatpush2.bf16.msra.mxu0 %v6788
    %6842 = vmatprep.subr.bf16.mxu0 0
    %6843 = vmatpush2.bf16.msra.mxu0 %v6787
    %6844 = vmatprep.subr.bf16.mxu0 0
    %6845 = vmatpush2.bf16.msra.mxu0 %v6786
    %6846 = vmatprep.mubr.bf16.mxu0 %v6803
    %6847 = vmatmul.mubr.bf16.gmra.mxu0 %v6665
    %v6848 = vpop.f32.mrf.mxu0
    %v6849 = vadd.f32 0.0, %v6848
    %v6850 = vpop.f32.mrf.mxu0
    %v6851 = vpop.f32.mrf.mxu0
    %v6852 = vadd.f32 0.0, %v6851
    %v6853 = vpop.f32.mrf.mxu0
    %6854 = vmatprep.mubr.bf16.mxu0 %v6806
    %6855 = vmatmul.mubr.bf16.gmra.mxu0 %v6685
    %v6856 = vpop.f32.mrf.mxu0
    %v6857 = vadd.f32 0.0, %v6856
    %v6858 = vpop.f32.mrf.mxu0
    %v6859 = vpop.f32.mrf.mxu0
    %v6860 = vadd.f32 0.0, %v6859
    %v6861 = vpop.f32.mrf.mxu0
    %6862 = vmatprep.mubr.bf16.mxu0 %v6809
    %6863 = vmatmul.mubr.bf16.gmra.mxu0 %v6701
    %v6864 = vpop.f32.mrf.mxu0
    %v6865 = vadd.f32 0.0, %v6864
    %v6866 = vpop.f32.mrf.mxu0
    %v6867 = vpop.f32.mrf.mxu0
    %v6868 = vadd.f32 0.0, %v6867
    %v6869 = vpop.f32.mrf.mxu0
    %6870 = vmatprep.mubr.bf16.mxu0 %v6812
    %6871 = vmatmul.mubr.bf16.gmra.mxu0 %v6717
    %v6872 = vpop.f32.mrf.mxu0
    %v6873 = vadd.f32 0.0, %v6872
    %v6874 = vpop.f32.mrf.mxu0
    %v6875 = vpop.f32.mrf.mxu0
    %v6876 = vadd.f32 0.0, %v6875
    %v6877 = vpop.f32.mrf.mxu0
    %6878 = vdwg.mxu0
    %v6879 = vadd.f32 %v6545, %v6849
    %v6880 = vadd.f32 %v6548, %v6852
    %v6881 = vadd.f32 %v6553, %v6857
    %v6882 = vadd.f32 %v6556, %v6860
    %v6883 = vadd.f32 %v6561, %v6865
    %v6884 = vadd.f32 %v6564, %v6868
    %v6885 = vadd.f32 %v6569, %v6873
    %v6886 = vadd.f32 %v6572, %v6876
    %v6887 = vld [vmem:[%s10] sm:$0x1]
    %v6889 = vlaneseq
    %v6890 = vshrl.u32 %v6889, 7
    %v6891 = vsub.s32 0, %v6890
    %v6892 = vrot.slane %v6887, %v6891
    %v6894 = vadd.f32 %v6879, %v6892
    %v6895 = vadd.f32 %v6880, %v6892
    %v6896 = vadd.f32 %v6881, %v6892
    %v6897 = vadd.f32 %v6882, %v6892
    %v6898 = vadd.f32 %v6883, %v6892
    %v6899 = vadd.f32 %v6884, %v6892
    %v6900 = vadd.f32 %v6885, %v6892
    %v6901 = vadd.f32 %v6886, %v6892
    %v6902 = vmax.f32 %v6894, 0.0
    %v6903 = vmax.f32 %v6895, 0.0
    %v6904 = vmax.f32 %v6896, 0.0
    %v6905 = vmax.f32 %v6897, 0.0
    %v6906 = vmax.f32 %v6898, 0.0
    %v6907 = vmax.f32 %v6899, 0.0
    %v6908 = vmax.f32 %v6900, 0.0
    %v6909 = vmax.f32 %v6901, 0.0
    %v6910 = vpack.c.bf16 %v6903, %v6902
    %v6911 = vpack.c.bf16 %v6905, %v6904
    %v6912 = vpack.c.bf16 %v6907, %v6906
    %v6913 = vpack.c.bf16 %v6909, %v6908
    %v6918 = vunpack.c.l.b16 %v6910
    %v6919 = vunpack.c.h.b16 %v6910
    %v6920 = vunpack.c.l.b16 %v6911
    %v6921 = vunpack.c.h.b16 %v6911
    %v6922 = vunpack.c.l.b16 %v6912
    %v6923 = vunpack.c.h.b16 %v6912
    %v6924 = vunpack.c.l.b16 %v6913
    %v6925 = vunpack.c.h.b16 %v6913
    %v6926 = vpack.c.b16 %v6918, %v6918
    %v6927 = vpack.c.b16 %v6919, %v6919
    %v6928 = vpack.c.b16 %v6920, %v6920
    %v6929 = vpack.c.b16 %v6921, %v6921
    %v6930 = vpack.c.b16 %v6922, %v6922
    %v6931 = vpack.c.b16 %v6923, %v6923
    %v6932 = vpack.c.b16 %v6924, %v6924
    %v6933 = vpack.c.b16 %v6925, %v6925
    %6934 = vrot.lane.b32.xlu0 %v6926, 64
    %v6935 = vpop.permute.xlu0 %6934
    %6936 = vrot.lane.b32.xlu0 %v6927, 64
    %v6937 = vpop.permute.xlu0 %6936
    %6938 = vrot.lane.b32.xlu0 %v6928, 64
    %v6939 = vpop.permute.xlu0 %6938
    %6940 = vrot.lane.b32.xlu0 %v6929, 64
    %v6941 = vpop.permute.xlu0 %6940
    %6942 = vrot.lane.b32.xlu0 %v6930, 64
    %v6943 = vpop.permute.xlu0 %6942
    %6944 = vrot.lane.b32.xlu0 %v6931, 64
    %v6945 = vpop.permute.xlu0 %6944
    %6946 = vrot.lane.b32.xlu0 %v6932, 64
    %v6947 = vpop.permute.xlu0 %6946
    %6948 = vrot.lane.b32.xlu0 %v6933, 64
    %v6949 = vpop.permute.xlu0 %6948
    %6958 = vst.msk [vmem:[#allocation3 + $0x20] sm:$0xf] %vm1036, %v6935
    %6959 = vst.msk [vmem:[#allocation3 + $0x24] sm:$0xf] %vm1036, %v6937
    %6960 = vst.msk [vmem:[#allocation3 + $0x28] sm:$0xf] %vm1036, %v6939
    %6961 = vst.msk [vmem:[#allocation3 + $0x2c] sm:$0xf] %vm1036, %v6941
    %6962 = vst.msk [vmem:[#allocation3 + $0x30] sm:$0xf] %vm1036, %v6943
    %6963 = vst.msk [vmem:[#allocation3 + $0x34] sm:$0xf] %vm1036, %v6945
    %6964 = vst.msk [vmem:[#allocation3 + $0x38] sm:$0xf] %vm1036, %v6947
    %6965 = vst.msk [vmem:[#allocation3 + $0x3c] sm:$0xf] %vm1036, %v6949
    %v6966 = vld [vmem:[#allocation3] sm:$0xf]
    %v6967 = vld [vmem:[#allocation3 + $0x4] sm:$0xf]
    %v6968 = vld [vmem:[#allocation3 + $0x8] sm:$0xf]
    %v6969 = vld [vmem:[#allocation3 + $0xc] sm:$0xf]
    %v6970 = vld [vmem:[#allocation3 + $0x10] sm:$0xf]
    %v6971 = vld [vmem:[#allocation3 + $0x14] sm:$0xf]
    %v6972 = vld [vmem:[#allocation3 + $0x18] sm:$0xf]
    %v6973 = vld [vmem:[#allocation3 + $0x1c] sm:$0xf]
    %v6974 = vld [vmem:[#allocation3 + $0x20] sm:$0xf]
    %v6975 = vld [vmem:[#allocation3 + $0x24] sm:$0xf]
    %v6976 = vld [vmem:[#allocation3 + $0x28] sm:$0xf]
    %v6977 = vld [vmem:[#allocation3 + $0x2c] sm:$0xf]
    %v6978 = vld [vmem:[#allocation3 + $0x30] sm:$0xf]
    %v6979 = vld [vmem:[#allocation3 + $0x34] sm:$0xf]
    %v6980 = vld [vmem:[#allocation3 + $0x38] sm:$0xf]
    %v6981 = vld [vmem:[#allocation3 + $0x3c] sm:$0xf]
    %v6982 = vld [vmem:[%s11] sm:$0xf]
    %v6983 = vld [vmem:[%s11 + $0xc] sm:$0xf]
    %v6984 = vld [vmem:[%s11 + $0x18] sm:$0xf]
    %v6985 = vld [vmem:[%s11 + $0x24] sm:$0xf]
    %v6986 = vld [vmem:[%s11 + $0x30] sm:$0xf]
    %v6987 = vld [vmem:[%s11 + $0x3c] sm:$0xf]
    %v6988 = vld [vmem:[%s11 + $0x48] sm:$0xf]
    %v6989 = vld [vmem:[%s11 + $0x54] sm:$0xf]
    %v6990 = vld [vmem:[%s11 + $0x60] sm:$0xf]
    %v6991 = vld [vmem:[%s11 + $0x6c] sm:$0xf]
    %v6992 = vld [vmem:[%s11 + $0x78] sm:$0xf]
    %v6993 = vld [vmem:[%s11 + $0x84] sm:$0xf]
    %v6994 = vld [vmem:[%s11 + $0x90] sm:$0xf]
    %v6995 = vld [vmem:[%s11 + $0x9c] sm:$0xf]
    %v6996 = vld [vmem:[%s11 + $0xa8] sm:$0xf]
    %v6997 = vld [vmem:[%s11 + $0xb4] sm:$0xf]
    %v6998 = vld [vmem:[%s12] sm:$0x1]
    %v7000 = vlaneseq
    %v7001 = vshrl.u32 %v7000, 7
    %v7002 = vsub.s32 0, %v7001
    %v7003 = vrot.slane %v6998, %v7002
    %v7021 = vunpack.c.l.b16 %v6966
    %v7022 = vunpack.c.l.b16 %v6967
    %v7023 = vunpack.c.l.b16 %v6968
    %v7024 = vunpack.c.l.b16 %v6969
    %v7025 = vunpack.c.l.b16 %v6970
    %v7026 = vunpack.c.l.b16 %v6971
    %v7027 = vunpack.c.l.b16 %v6972
    %v7028 = vunpack.c.l.b16 %v6973
    %v7029 = vunpack.c.l.b16 %v6974
    %v7030 = vunpack.c.l.b16 %v6975
    %v7031 = vunpack.c.l.b16 %v6976
    %v7032 = vunpack.c.l.b16 %v6977
    %v7033 = vunpack.c.l.b16 %v6978
    %v7034 = vunpack.c.l.b16 %v6979
    %v7035 = vunpack.c.l.b16 %v6980
    %v7036 = vunpack.c.l.b16 %v6981
    %v7037 = vpack.c.b16 %v7022, %v7021
    %v7038 = vpack.c.b16 %v7024, %v7023
    %v7039 = vpack.c.b16 %v7026, %v7025
    %v7040 = vpack.c.b16 %v7028, %v7027
    %v7041 = vpack.c.b16 %v7030, %v7029
    %v7042 = vpack.c.b16 %v7032, %v7031
    %v7043 = vpack.c.b16 %v7034, %v7033
    %v7044 = vpack.c.b16 %v7036, %v7035
    %v7069 = vunpack.c.l.b16 %v6982
    %v7070 = vunpack.c.l.b16 %v6983
    %v7071 = vunpack.c.l.b16 %v6984
    %v7072 = vunpack.c.l.b16 %v6985
    %v7073 = vunpack.c.l.b16 %v6986
    %v7074 = vunpack.c.l.b16 %v6987
    %v7075 = vunpack.c.l.b16 %v6988
    %v7076 = vunpack.c.l.b16 %v6989
    %v7077 = vunpack.c.l.b16 %v6990
    %v7078 = vunpack.c.l.b16 %v6991
    %v7079 = vunpack.c.l.b16 %v6992
    %v7080 = vunpack.c.l.b16 %v6993
    %v7081 = vunpack.c.l.b16 %v6994
    %v7082 = vunpack.c.l.b16 %v6995
    %v7083 = vunpack.c.l.b16 %v6996
    %v7084 = vunpack.c.l.b16 %v6997
    %v7085 = vpack.c.b16 %v7070, %v7069
    %v7086 = vpack.c.b16 %v7072, %v7071
    %v7087 = vpack.c.b16 %v7074, %v7073
    %v7088 = vpack.c.b16 %v7076, %v7075
    %v7089 = vpack.c.b16 %v7078, %v7077
    %v7090 = vpack.c.b16 %v7080, %v7079
    %v7091 = vpack.c.b16 %v7082, %v7081
    %v7092 = vpack.c.b16 %v7084, %v7083
    %7101 = vmatprep.subr.bf16.mxu0 0
    %7102 = vmatpush1.bf16.msra.mxu0 %v7092
    %7103 = vmatprep.subr.bf16.mxu0 0
    %7104 = vmatpush1.bf16.msra.mxu0 %v7091
    %7105 = vmatprep.subr.bf16.mxu0 0
    %7106 = vmatpush1.bf16.msra.mxu0 %v7090
    %7107 = vmatprep.subr.bf16.mxu0 0
    %7108 = vmatpush1.bf16.msra.mxu0 %v7089
    %7109 = vmatprep.subr.bf16.mxu0 0
    %7110 = vmatpush1.bf16.msra.mxu0 %v7088
    %7111 = vmatprep.subr.bf16.mxu0 0
    %7112 = vmatpush1.bf16.msra.mxu0 %v7087
    %7113 = vmatprep.subr.bf16.mxu0 0
    %7114 = vmatpush1.bf16.msra.mxu0 %v7086
    %7115 = vmatprep.subr.bf16.mxu0 0
    %7116 = vmatpush1.bf16.msra.mxu0 %v7085
    %7117 = vmatprep.subr.bf16.mxu0 0
    %7118 = vmatpush2.bf16.msra.mxu0 0
    %7119 = vmatprep.subr.bf16.mxu0 0
    %7120 = vmatpush2.bf16.msra.mxu0 0
    %7121 = vmatprep.subr.bf16.mxu0 0
    %7122 = vmatpush2.bf16.msra.mxu0 0
    %7123 = vmatprep.subr.bf16.mxu0 0
    %7124 = vmatpush2.bf16.msra.mxu0 0
    %7125 = vmatprep.subr.bf16.mxu0 0
    %7126 = vmatpush2.bf16.msra.mxu0 0
    %7127 = vmatprep.subr.bf16.mxu0 0
    %7128 = vmatpush2.bf16.msra.mxu0 0
    %7129 = vmatprep.subr.bf16.mxu0 0
    %7130 = vmatpush2.bf16.msra.mxu0 0
    %7131 = vmatprep.subr.bf16.mxu0 0
    %7132 = vmatpush2.bf16.msra.mxu0 0
    %7133 = vmatprep.mubr.bf16.mxu0 0
    %7134 = vmatmul.mubr.bf16.gmra.mxu0 %v7037
    %v7135 = vpop.f32.mrf.mxu0
    %v7136 = vadd.f32 %v7003, %v7135
    %v7137 = vpop.f32.mrf.mxu0
    %v7138 = vpop.f32.mrf.mxu0
    %v7139 = vadd.f32 %v7003, %v7138
    %v7140 = vpop.f32.mrf.mxu0
    %7141 = vmatprep.mubr.bf16.mxu0 0
    %7142 = vmatmul.mubr.bf16.gmra.mxu0 %v7038
    %v7143 = vpop.f32.mrf.mxu0
    %v7144 = vadd.f32 %v7003, %v7143
    %v7145 = vpop.f32.mrf.mxu0
    %v7146 = vpop.f32.mrf.mxu0
    %v7147 = vadd.f32 %v7003, %v7146
    %v7148 = vpop.f32.mrf.mxu0
    %7149 = vmatprep.mubr.bf16.mxu0 0
    %7150 = vmatmul.mubr.bf16.gmra.mxu0 %v7039
    %v7151 = vpop.f32.mrf.mxu0
    %v7152 = vadd.f32 %v7003, %v7151
    %v7153 = vpop.f32.mrf.mxu0
    %v7154 = vpop.f32.mrf.mxu0
    %v7155 = vadd.f32 %v7003, %v7154
    %v7156 = vpop.f32.mrf.mxu0
    %7157 = vmatprep.mubr.bf16.mxu0 0
    %7158 = vmatmul.mubr.bf16.gmra.mxu0 %v7040
    %v7159 = vpop.f32.mrf.mxu0
    %v7160 = vadd.f32 %v7003, %v7159
    %v7161 = vpop.f32.mrf.mxu0
    %v7162 = vpop.f32.mrf.mxu0
    %v7163 = vadd.f32 %v7003, %v7162
    %v7164 = vpop.f32.mrf.mxu0
    %7165 = vmatprep.mubr.bf16.mxu0 0
    %7166 = vmatmul.mubr.bf16.gmra.mxu0 %v7041
    %v7167 = vpop.f32.mrf.mxu0
    %v7168 = vadd.f32 %v7003, %v7167
    %v7169 = vpop.f32.mrf.mxu0
    %v7170 = vpop.f32.mrf.mxu0
    %v7171 = vadd.f32 %v7003, %v7170
    %v7172 = vpop.f32.mrf.mxu0
    %7173 = vmatprep.mubr.bf16.mxu0 0
    %7174 = vmatmul.mubr.bf16.gmra.mxu0 %v7042
    %v7175 = vpop.f32.mrf.mxu0
    %v7176 = vadd.f32 %v7003, %v7175
    %v7177 = vpop.f32.mrf.mxu0
    %v7178 = vpop.f32.mrf.mxu0
    %v7179 = vadd.f32 %v7003, %v7178
    %v7180 = vpop.f32.mrf.mxu0
    %7181 = vmatprep.mubr.bf16.mxu0 0
    %7182 = vmatmul.mubr.bf16.gmra.mxu0 %v7043
    %v7183 = vpop.f32.mrf.mxu0
    %v7184 = vadd.f32 %v7003, %v7183
    %v7185 = vpop.f32.mrf.mxu0
    %v7186 = vpop.f32.mrf.mxu0
    %v7187 = vadd.f32 %v7003, %v7186
    %v7188 = vpop.f32.mrf.mxu0
    %7189 = vmatprep.mubr.bf16.mxu0 0
    %7190 = vmatmul.mubr.bf16.gmra.mxu0 %v7044
    %v7191 = vpop.f32.mrf.mxu0
    %v7192 = vadd.f32 %v7003, %v7191
    %v7193 = vpop.f32.mrf.mxu0
    %v7194 = vpop.f32.mrf.mxu0
    %v7195 = vadd.f32 %v7003, %v7194
    %v7196 = vpop.f32.mrf.mxu0
    %7197 = vdwg.mxu0
    %v7198 = vld [vmem:[%s0] sm:$0xff]
    %v7199 = vld [vmem:[%s0 + $0x18] sm:$0xff]
    %v7200 = vld [vmem:[%s0 + $0x30] sm:$0xff]
    %v7201 = vld [vmem:[%s0 + $0x48] sm:$0xff]
    %v7202 = vld [vmem:[%s0 + $0x60] sm:$0xff]
    %v7203 = vld [vmem:[%s0 + $0x78] sm:$0xff]
    %v7204 = vld [vmem:[%s0 + $0x90] sm:$0xff]
    %v7205 = vld [vmem:[%s0 + $0xa8] sm:$0xff]
    %v7206 = vld [vmem:[%s0 + $0xc0] sm:$0xff]
    %v7207 = vld [vmem:[%s0 + $0xd8] sm:$0xff]
    %v7208 = vld [vmem:[%s0 + $0xf0] sm:$0xff]
    %v7209 = vld [vmem:[%s0 + $0x108] sm:$0xff]
    %v7210 = vld [vmem:[%s0 + $0x120] sm:$0xff]
    %v7211 = vld [vmem:[%s0 + $0x138] sm:$0xff]
    %v7212 = vld [vmem:[%s0 + $0x150] sm:$0xff]
    %v7213 = vld [vmem:[%s0 + $0x168] sm:$0xff]
    %v7214 = vadd.f32 %v7136, %v7198
    %v7215 = vadd.f32 %v7139, %v7199
    %v7216 = vadd.f32 %v7144, %v7200
    %v7217 = vadd.f32 %v7147, %v7201
    %v7218 = vadd.f32 %v7152, %v7202
    %v7219 = vadd.f32 %v7155, %v7203
    %v7220 = vadd.f32 %v7160, %v7204
    %v7221 = vadd.f32 %v7163, %v7205
    %v7222 = vadd.f32 %v7168, %v7206
    %v7223 = vadd.f32 %v7171, %v7207
    %v7224 = vadd.f32 %v7176, %v7208
    %v7225 = vadd.f32 %v7179, %v7209
    %v7226 = vadd.f32 %v7184, %v7210
    %v7227 = vadd.f32 %v7187, %v7211
    %v7228 = vadd.f32 %v7192, %v7212
    %v7229 = vadd.f32 %v7195, %v7213
    %v7230 = vmax.f32 %v7214, 0.0
    %v7231 = vmax.f32 %v7215, 0.0
    %v7232 = vmax.f32 %v7216, 0.0
    %v7233 = vmax.f32 %v7217, 0.0
    %v7234 = vmax.f32 %v7218, 0.0
    %v7235 = vmax.f32 %v7219, 0.0
    %v7236 = vmax.f32 %v7220, 0.0
    %v7237 = vmax.f32 %v7221, 0.0
    %v7238 = vmax.f32 %v7222, 0.0
    %v7239 = vmax.f32 %v7223, 0.0
    %v7240 = vmax.f32 %v7224, 0.0
    %v7241 = vmax.f32 %v7225, 0.0
    %v7242 = vmax.f32 %v7226, 0.0
    %v7243 = vmax.f32 %v7227, 0.0
    %v7244 = vmax.f32 %v7228, 0.0
    %v7245 = vmax.f32 %v7229, 0.0
    %7246 = vst [vmem:[#allocation4] sm:$0xff] %v7230
    %7247 = vst [vmem:[#allocation4 + $0x18] sm:$0xff] %v7231
    %7248 = vst [vmem:[#allocation4 + $0x30] sm:$0xff] %v7232
    %7249 = vst [vmem:[#allocation4 + $0x48] sm:$0xff] %v7233
    %7250 = vst [vmem:[#allocation4 + $0x60] sm:$0xff] %v7234
    %7251 = vst [vmem:[#allocation4 + $0x78] sm:$0xff] %v7235
    %7252 = vst [vmem:[#allocation4 + $0x90] sm:$0xff] %v7236
    %7253 = vst [vmem:[#allocation4 + $0xa8] sm:$0xff] %v7237
    %7254 = vst [vmem:[#allocation4 + $0xc0] sm:$0xff] %v7238
    %7255 = vst [vmem:[#allocation4 + $0xd8] sm:$0xff] %v7239
    %7256 = vst [vmem:[#allocation4 + $0xf0] sm:$0xff] %v7240
    %7257 = vst [vmem:[#allocation4 + $0x108] sm:$0xff] %v7241
    %7258 = vst [vmem:[#allocation4 + $0x120] sm:$0xff] %v7242
    %7259 = vst [vmem:[#allocation4 + $0x138] sm:$0xff] %v7243
    %7260 = vst [vmem:[#allocation4 + $0x150] sm:$0xff] %v7244
    %7261 = vst [vmem:[#allocation4 + $0x168] sm:$0xff] %v7245
    %v7262 = vld [vmem:[#allocation3] sm:$0xf]
    %v7263 = vld [vmem:[#allocation3 + $0x4] sm:$0xf]
    %v7264 = vld [vmem:[#allocation3 + $0x8] sm:$0xf]
    %v7265 = vld [vmem:[#allocation3 + $0xc] sm:$0xf]
    %v7266 = vld [vmem:[#allocation3 + $0x10] sm:$0xf]
    %v7267 = vld [vmem:[#allocation3 + $0x14] sm:$0xf]
    %v7268 = vld [vmem:[#allocation3 + $0x18] sm:$0xf]
    %v7269 = vld [vmem:[#allocation3 + $0x1c] sm:$0xf]
    %v7270 = vld [vmem:[#allocation3 + $0x20] sm:$0xf]
    %v7271 = vld [vmem:[#allocation3 + $0x24] sm:$0xf]
    %v7272 = vld [vmem:[#allocation3 + $0x28] sm:$0xf]
    %v7273 = vld [vmem:[#allocation3 + $0x2c] sm:$0xf]
    %v7274 = vld [vmem:[#allocation3 + $0x30] sm:$0xf]
    %v7275 = vld [vmem:[#allocation3 + $0x34] sm:$0xf]
    %v7276 = vld [vmem:[#allocation3 + $0x38] sm:$0xf]
    %v7277 = vld [vmem:[#allocation3 + $0x3c] sm:$0xf]
    %v7278 = vld [vmem:[%s11 + $0x4] sm:$0xf]
    %v7279 = vld [vmem:[%s11 + $0x10] sm:$0xf]
    %v7280 = vld [vmem:[%s11 + $0x1c] sm:$0xf]
    %v7281 = vld [vmem:[%s11 + $0x28] sm:$0xf]
    %v7282 = vld [vmem:[%s11 + $0x34] sm:$0xf]
    %v7283 = vld [vmem:[%s11 + $0x40] sm:$0xf]
    %v7284 = vld [vmem:[%s11 + $0x4c] sm:$0xf]
    %v7285 = vld [vmem:[%s11 + $0x58] sm:$0xf]
    %v7286 = vld [vmem:[%s11 + $0x64] sm:$0xf]
    %v7287 = vld [vmem:[%s11 + $0x70] sm:$0xf]
    %v7288 = vld [vmem:[%s11 + $0x7c] sm:$0xf]
    %v7289 = vld [vmem:[%s11 + $0x88] sm:$0xf]
    %v7290 = vld [vmem:[%s11 + $0x94] sm:$0xf]
    %v7291 = vld [vmem:[%s11 + $0xa0] sm:$0xf]
    %v7292 = vld [vmem:[%s11 + $0xac] sm:$0xf]
    %v7293 = vld [vmem:[%s11 + $0xb8] sm:$0xf]
    %v7294 = vld [vmem:[%s12 + $0x1] sm:$0x1]
    %v7296 = vlaneseq
    %v7297 = vshrl.u32 %v7296, 7
    %v7298 = vsub.s32 0, %v7297
    %v7299 = vrot.slane %v7294, %v7298
    %v7317 = vunpack.c.l.b16 %v7262
    %v7318 = vunpack.c.l.b16 %v7263
    %v7319 = vunpack.c.l.b16 %v7264
    %v7320 = vunpack.c.l.b16 %v7265
    %v7321 = vunpack.c.l.b16 %v7266
    %v7322 = vunpack.c.l.b16 %v7267
    %v7323 = vunpack.c.l.b16 %v7268
    %v7324 = vunpack.c.l.b16 %v7269
    %v7325 = vunpack.c.l.b16 %v7270
    %v7326 = vunpack.c.l.b16 %v7271
    %v7327 = vunpack.c.l.b16 %v7272
    %v7328 = vunpack.c.l.b16 %v7273
    %v7329 = vunpack.c.l.b16 %v7274
    %v7330 = vunpack.c.l.b16 %v7275
    %v7331 = vunpack.c.l.b16 %v7276
    %v7332 = vunpack.c.l.b16 %v7277
    %v7333 = vpack.c.b16 %v7318, %v7317
    %v7334 = vpack.c.b16 %v7320, %v7319
    %v7335 = vpack.c.b16 %v7322, %v7321
    %v7336 = vpack.c.b16 %v7324, %v7323
    %v7337 = vpack.c.b16 %v7326, %v7325
    %v7338 = vpack.c.b16 %v7328, %v7327
    %v7339 = vpack.c.b16 %v7330, %v7329
    %v7340 = vpack.c.b16 %v7332, %v7331
    %v7365 = vunpack.c.l.b16 %v7278
    %v7366 = vunpack.c.l.b16 %v7279
    %v7367 = vunpack.c.l.b16 %v7280
    %v7368 = vunpack.c.l.b16 %v7281
    %v7369 = vunpack.c.l.b16 %v7282
    %v7370 = vunpack.c.l.b16 %v7283
    %v7371 = vunpack.c.l.b16 %v7284
    %v7372 = vunpack.c.l.b16 %v7285
    %v7373 = vunpack.c.l.b16 %v7286
    %v7374 = vunpack.c.l.b16 %v7287
    %v7375 = vunpack.c.l.b16 %v7288
    %v7376 = vunpack.c.l.b16 %v7289
    %v7377 = vunpack.c.l.b16 %v7290
    %v7378 = vunpack.c.l.b16 %v7291
    %v7379 = vunpack.c.l.b16 %v7292
    %v7380 = vunpack.c.l.b16 %v7293
    %v7381 = vpack.c.b16 %v7366, %v7365
    %v7382 = vpack.c.b16 %v7368, %v7367
    %v7383 = vpack.c.b16 %v7370, %v7369
    %v7384 = vpack.c.b16 %v7372, %v7371
    %v7385 = vpack.c.b16 %v7374, %v7373
    %v7386 = vpack.c.b16 %v7376, %v7375
    %v7387 = vpack.c.b16 %v7378, %v7377
    %v7388 = vpack.c.b16 %v7380, %v7379
    %7397 = vmatprep.subr.bf16.mxu0 0
    %7398 = vmatpush1.bf16.msra.mxu0 %v7388
    %7399 = vmatprep.subr.bf16.mxu0 0
    %7400 = vmatpush1.bf16.msra.mxu0 %v7387
    %7401 = vmatprep.subr.bf16.mxu0 0
    %7402 = vmatpush1.bf16.msra.mxu0 %v7386
    %7403 = vmatprep.subr.bf16.mxu0 0
    %7404 = vmatpush1.bf16.msra.mxu0 %v7385
    %7405 = vmatprep.subr.bf16.mxu0 0
    %7406 = vmatpush1.bf16.msra.mxu0 %v7384
    %7407 = vmatprep.subr.bf16.mxu0 0
    %7408 = vmatpush1.bf16.msra.mxu0 %v7383
    %7409 = vmatprep.subr.bf16.mxu0 0
    %7410 = vmatpush1.bf16.msra.mxu0 %v7382
    %7411 = vmatprep.subr.bf16.mxu0 0
    %7412 = vmatpush1.bf16.msra.mxu0 %v7381
    %7413 = vmatprep.subr.bf16.mxu0 0
    %7414 = vmatpush2.bf16.msra.mxu0 0
    %7415 = vmatprep.subr.bf16.mxu0 0
    %7416 = vmatpush2.bf16.msra.mxu0 0
    %7417 = vmatprep.subr.bf16.mxu0 0
    %7418 = vmatpush2.bf16.msra.mxu0 0
    %7419 = vmatprep.subr.bf16.mxu0 0
    %7420 = vmatpush2.bf16.msra.mxu0 0
    %7421 = vmatprep.subr.bf16.mxu0 0
    %7422 = vmatpush2.bf16.msra.mxu0 0
    %7423 = vmatprep.subr.bf16.mxu0 0
    %7424 = vmatpush2.bf16.msra.mxu0 0
    %7425 = vmatprep.subr.bf16.mxu0 0
    %7426 = vmatpush2.bf16.msra.mxu0 0
    %7427 = vmatprep.subr.bf16.mxu0 0
    %7428 = vmatpush2.bf16.msra.mxu0 0
    %7429 = vmatprep.mubr.bf16.mxu0 0
    %7430 = vmatmul.mubr.bf16.gmra.mxu0 %v7333
    %v7431 = vpop.f32.mrf.mxu0
    %v7432 = vadd.f32 %v7299, %v7431
    %v7433 = vpop.f32.mrf.mxu0
    %v7434 = vpop.f32.mrf.mxu0
    %v7435 = vadd.f32 %v7299, %v7434
    %v7436 = vpop.f32.mrf.mxu0
    %7437 = vmatprep.mubr.bf16.mxu0 0
    %7438 = vmatmul.mubr.bf16.gmra.mxu0 %v7334
    %v7439 = vpop.f32.mrf.mxu0
    %v7440 = vadd.f32 %v7299, %v7439
    %v7441 = vpop.f32.mrf.mxu0
    %v7442 = vpop.f32.mrf.mxu0
    %v7443 = vadd.f32 %v7299, %v7442
    %v7444 = vpop.f32.mrf.mxu0
    %7445 = vmatprep.mubr.bf16.mxu0 0
    %7446 = vmatmul.mubr.bf16.gmra.mxu0 %v7335
    %v7447 = vpop.f32.mrf.mxu0
    %v7448 = vadd.f32 %v7299, %v7447
    %v7449 = vpop.f32.mrf.mxu0
    %v7450 = vpop.f32.mrf.mxu0
    %v7451 = vadd.f32 %v7299, %v7450
    %v7452 = vpop.f32.mrf.mxu0
    %7453 = vmatprep.mubr.bf16.mxu0 0
    %7454 = vmatmul.mubr.bf16.gmra.mxu0 %v7336
    %v7455 = vpop.f32.mrf.mxu0
    %v7456 = vadd.f32 %v7299, %v7455
    %v7457 = vpop.f32.mrf.mxu0
    %v7458 = vpop.f32.mrf.mxu0
    %v7459 = vadd.f32 %v7299, %v7458
    %v7460 = vpop.f32.mrf.mxu0
    %7461 = vmatprep.mubr.bf16.mxu0 0
    %7462 = vmatmul.mubr.bf16.gmra.mxu0 %v7337
    %v7463 = vpop.f32.mrf.mxu0
    %v7464 = vadd.f32 %v7299, %v7463
    %v7465 = vpop.f32.mrf.mxu0
    %v7466 = vpop.f32.mrf.mxu0
    %v7467 = vadd.f32 %v7299, %v7466
    %v7468 = vpop.f32.mrf.mxu0
    %7469 = vmatprep.mubr.bf16.mxu0 0
    %7470 = vmatmul.mubr.bf16.gmra.mxu0 %v7338
    %v7471 = vpop.f32.mrf.mxu0
    %v7472 = vadd.f32 %v7299, %v7471
    %v7473 = vpop.f32.mrf.mxu0
    %v7474 = vpop.f32.mrf.mxu0
    %v7475 = vadd.f32 %v7299, %v7474
    %v7476 = vpop.f32.mrf.mxu0
    %7477 = vmatprep.mubr.bf16.mxu0 0
    %7478 = vmatmul.mubr.bf16.gmra.mxu0 %v7339
    %v7479 = vpop.f32.mrf.mxu0
    %v7480 = vadd.f32 %v7299, %v7479
    %v7481 = vpop.f32.mrf.mxu0
    %v7482 = vpop.f32.mrf.mxu0
    %v7483 = vadd.f32 %v7299, %v7482
    %v7484 = vpop.f32.mrf.mxu0
    %7485 = vmatprep.mubr.bf16.mxu0 0
    %7486 = vmatmul.mubr.bf16.gmra.mxu0 %v7340
    %v7487 = vpop.f32.mrf.mxu0
    %v7488 = vadd.f32 %v7299, %v7487
    %v7489 = vpop.f32.mrf.mxu0
    %v7490 = vpop.f32.mrf.mxu0
    %v7491 = vadd.f32 %v7299, %v7490
    %v7492 = vpop.f32.mrf.mxu0
    %7493 = vdwg.mxu0
    %v7494 = vld [vmem:[%s0 + $0x8] sm:$0xff]
    %v7495 = vld [vmem:[%s0 + $0x20] sm:$0xff]
    %v7496 = vld [vmem:[%s0 + $0x38] sm:$0xff]
    %v7497 = vld [vmem:[%s0 + $0x50] sm:$0xff]
    %v7498 = vld [vmem:[%s0 + $0x68] sm:$0xff]
    %v7499 = vld [vmem:[%s0 + $0x80] sm:$0xff]
    %v7500 = vld [vmem:[%s0 + $0x98] sm:$0xff]
    %v7501 = vld [vmem:[%s0 + $0xb0] sm:$0xff]
    %v7502 = vld [vmem:[%s0 + $0xc8] sm:$0xff]
    %v7503 = vld [vmem:[%s0 + $0xe0] sm:$0xff]
    %v7504 = vld [vmem:[%s0 + $0xf8] sm:$0xff]
    %v7505 = vld [vmem:[%s0 + $0x110] sm:$0xff]
    %v7506 = vld [vmem:[%s0 + $0x128] sm:$0xff]
    %v7507 = vld [vmem:[%s0 + $0x140] sm:$0xff]
    %v7508 = vld [vmem:[%s0 + $0x158] sm:$0xff]
    %v7509 = vld [vmem:[%s0 + $0x170] sm:$0xff]
    %v7510 = vadd.f32 %v7432, %v7494
    %v7511 = vadd.f32 %v7435, %v7495
    %v7512 = vadd.f32 %v7440, %v7496
    %v7513 = vadd.f32 %v7443, %v7497
    %v7514 = vadd.f32 %v7448, %v7498
    %v7515 = vadd.f32 %v7451, %v7499
    %v7516 = vadd.f32 %v7456, %v7500
    %v7517 = vadd.f32 %v7459, %v7501
    %v7518 = vadd.f32 %v7464, %v7502
    %v7519 = vadd.f32 %v7467, %v7503
    %v7520 = vadd.f32 %v7472, %v7504
    %v7521 = vadd.f32 %v7475, %v7505
    %v7522 = vadd.f32 %v7480, %v7506
    %v7523 = vadd.f32 %v7483, %v7507
    %v7524 = vadd.f32 %v7488, %v7508
    %v7525 = vadd.f32 %v7491, %v7509
    %v7526 = vmax.f32 %v7510, 0.0
    %v7527 = vmax.f32 %v7511, 0.0
    %v7528 = vmax.f32 %v7512, 0.0
    %v7529 = vmax.f32 %v7513, 0.0
    %v7530 = vmax.f32 %v7514, 0.0
    %v7531 = vmax.f32 %v7515, 0.0
    %v7532 = vmax.f32 %v7516, 0.0
    %v7533 = vmax.f32 %v7517, 0.0
    %v7534 = vmax.f32 %v7518, 0.0
    %v7535 = vmax.f32 %v7519, 0.0
    %v7536 = vmax.f32 %v7520, 0.0
    %v7537 = vmax.f32 %v7521, 0.0
    %v7538 = vmax.f32 %v7522, 0.0
    %v7539 = vmax.f32 %v7523, 0.0
    %v7540 = vmax.f32 %v7524, 0.0
    %v7541 = vmax.f32 %v7525, 0.0
    %7542 = vst [vmem:[#allocation4 + $0x8] sm:$0xff] %v7526
    %7543 = vst [vmem:[#allocation4 + $0x20] sm:$0xff] %v7527
    %7544 = vst [vmem:[#allocation4 + $0x38] sm:$0xff] %v7528
    %7545 = vst [vmem:[#allocation4 + $0x50] sm:$0xff] %v7529
    %7546 = vst [vmem:[#allocation4 + $0x68] sm:$0xff] %v7530
    %7547 = vst [vmem:[#allocation4 + $0x80] sm:$0xff] %v7531
    %7548 = vst [vmem:[#allocation4 + $0x98] sm:$0xff] %v7532
    %7549 = vst [vmem:[#allocation4 + $0xb0] sm:$0xff] %v7533
    %7550 = vst [vmem:[#allocation4 + $0xc8] sm:$0xff] %v7534
    %7551 = vst [vmem:[#allocation4 + $0xe0] sm:$0xff] %v7535
    %7552 = vst [vmem:[#allocation4 + $0xf8] sm:$0xff] %v7536
    %7553 = vst [vmem:[#allocation4 + $0x110] sm:$0xff] %v7537
    %7554 = vst [vmem:[#allocation4 + $0x128] sm:$0xff] %v7538
    %7555 = vst [vmem:[#allocation4 + $0x140] sm:$0xff] %v7539
    %7556 = vst [vmem:[#allocation4 + $0x158] sm:$0xff] %v7540
    %7557 = vst [vmem:[#allocation4 + $0x170] sm:$0xff] %v7541
    %v7558 = vld [vmem:[#allocation3] sm:$0xf]
    %v7559 = vld [vmem:[#allocation3 + $0x4] sm:$0xf]
    %v7560 = vld [vmem:[#allocation3 + $0x8] sm:$0xf]
    %v7561 = vld [vmem:[#allocation3 + $0xc] sm:$0xf]
    %v7562 = vld [vmem:[#allocation3 + $0x10] sm:$0xf]
    %v7563 = vld [vmem:[#allocation3 + $0x14] sm:$0xf]
    %v7564 = vld [vmem:[#allocation3 + $0x18] sm:$0xf]
    %v7565 = vld [vmem:[#allocation3 + $0x1c] sm:$0xf]
    %v7566 = vld [vmem:[#allocation3 + $0x20] sm:$0xf]
    %v7567 = vld [vmem:[#allocation3 + $0x24] sm:$0xf]
    %v7568 = vld [vmem:[#allocation3 + $0x28] sm:$0xf]
    %v7569 = vld [vmem:[#allocation3 + $0x2c] sm:$0xf]
    %v7570 = vld [vmem:[#allocation3 + $0x30] sm:$0xf]
    %v7571 = vld [vmem:[#allocation3 + $0x34] sm:$0xf]
    %v7572 = vld [vmem:[#allocation3 + $0x38] sm:$0xf]
    %v7573 = vld [vmem:[#allocation3 + $0x3c] sm:$0xf]
    %v7574 = vld [vmem:[%s11 + $0x8] sm:$0xf]
    %v7575 = vld [vmem:[%s11 + $0x14] sm:$0xf]
    %v7576 = vld [vmem:[%s11 + $0x20] sm:$0xf]
    %v7577 = vld [vmem:[%s11 + $0x2c] sm:$0xf]
    %v7578 = vld [vmem:[%s11 + $0x38] sm:$0xf]
    %v7579 = vld [vmem:[%s11 + $0x44] sm:$0xf]
    %v7580 = vld [vmem:[%s11 + $0x50] sm:$0xf]
    %v7581 = vld [vmem:[%s11 + $0x5c] sm:$0xf]
    %v7582 = vld [vmem:[%s11 + $0x68] sm:$0xf]
    %v7583 = vld [vmem:[%s11 + $0x74] sm:$0xf]
    %v7584 = vld [vmem:[%s11 + $0x80] sm:$0xf]
    %v7585 = vld [vmem:[%s11 + $0x8c] sm:$0xf]
    %v7586 = vld [vmem:[%s11 + $0x98] sm:$0xf]
    %v7587 = vld [vmem:[%s11 + $0xa4] sm:$0xf]
    %v7588 = vld [vmem:[%s11 + $0xb0] sm:$0xf]
    %v7589 = vld [vmem:[%s11 + $0xbc] sm:$0xf]
    %v7590 = vld [vmem:[%s12 + $0x2] sm:$0x1]
    %v7592 = vlaneseq
    %v7593 = vshrl.u32 %v7592, 7
    %v7594 = vsub.s32 0, %v7593
    %v7595 = vrot.slane %v7590, %v7594
    %v7613 = vunpack.c.l.b16 %v7558
    %v7614 = vunpack.c.l.b16 %v7559
    %v7615 = vunpack.c.l.b16 %v7560
    %v7616 = vunpack.c.l.b16 %v7561
    %v7617 = vunpack.c.l.b16 %v7562
    %v7618 = vunpack.c.l.b16 %v7563
    %v7619 = vunpack.c.l.b16 %v7564
    %v7620 = vunpack.c.l.b16 %v7565
    %v7621 = vunpack.c.l.b16 %v7566
    %v7622 = vunpack.c.l.b16 %v7567
    %v7623 = vunpack.c.l.b16 %v7568
    %v7624 = vunpack.c.l.b16 %v7569
    %v7625 = vunpack.c.l.b16 %v7570
    %v7626 = vunpack.c.l.b16 %v7571
    %v7627 = vunpack.c.l.b16 %v7572
    %v7628 = vunpack.c.l.b16 %v7573
    %v7629 = vpack.c.b16 %v7614, %v7613
    %v7630 = vpack.c.b16 %v7616, %v7615
    %v7631 = vpack.c.b16 %v7618, %v7617
    %v7632 = vpack.c.b16 %v7620, %v7619
    %v7633 = vpack.c.b16 %v7622, %v7621
    %v7634 = vpack.c.b16 %v7624, %v7623
    %v7635 = vpack.c.b16 %v7626, %v7625
    %v7636 = vpack.c.b16 %v7628, %v7627
    %v7661 = vunpack.c.l.b16 %v7574
    %v7662 = vunpack.c.l.b16 %v7575
    %v7663 = vunpack.c.l.b16 %v7576
    %v7664 = vunpack.c.l.b16 %v7577
    %v7665 = vunpack.c.l.b16 %v7578
    %v7666 = vunpack.c.l.b16 %v7579
    %v7667 = vunpack.c.l.b16 %v7580
    %v7668 = vunpack.c.l.b16 %v7581
    %v7669 = vunpack.c.l.b16 %v7582
    %v7670 = vunpack.c.l.b16 %v7583
    %v7671 = vunpack.c.l.b16 %v7584
    %v7672 = vunpack.c.l.b16 %v7585
    %v7673 = vunpack.c.l.b16 %v7586
    %v7674 = vunpack.c.l.b16 %v7587
    %v7675 = vunpack.c.l.b16 %v7588
    %v7676 = vunpack.c.l.b16 %v7589
    %v7677 = vpack.c.b16 %v7662, %v7661
    %v7678 = vpack.c.b16 %v7664, %v7663
    %v7679 = vpack.c.b16 %v7666, %v7665
    %v7680 = vpack.c.b16 %v7668, %v7667
    %v7681 = vpack.c.b16 %v7670, %v7669
    %v7682 = vpack.c.b16 %v7672, %v7671
    %v7683 = vpack.c.b16 %v7674, %v7673
    %v7684 = vpack.c.b16 %v7676, %v7675
    %7693 = vmatprep.subr.bf16.mxu0 0
    %7694 = vmatpush1.bf16.msra.mxu0 %v7684
    %7695 = vmatprep.subr.bf16.mxu0 0
    %7696 = vmatpush1.bf16.msra.mxu0 %v7683
    %7697 = vmatprep.subr.bf16.mxu0 0
    %7698 = vmatpush1.bf16.msra.mxu0 %v7682
    %7699 = vmatprep.subr.bf16.mxu0 0
    %7700 = vmatpush1.bf16.msra.mxu0 %v7681
    %7701 = vmatprep.subr.bf16.mxu0 0
    %7702 = vmatpush1.bf16.msra.mxu0 %v7680
    %7703 = vmatprep.subr.bf16.mxu0 0
    %7704 = vmatpush1.bf16.msra.mxu0 %v7679
    %7705 = vmatprep.subr.bf16.mxu0 0
    %7706 = vmatpush1.bf16.msra.mxu0 %v7678
    %7707 = vmatprep.subr.bf16.mxu0 0
    %7708 = vmatpush1.bf16.msra.mxu0 %v7677
    %7709 = vmatprep.subr.bf16.mxu0 0
    %7710 = vmatpush2.bf16.msra.mxu0 0
    %7711 = vmatprep.subr.bf16.mxu0 0
    %7712 = vmatpush2.bf16.msra.mxu0 0
    %7713 = vmatprep.subr.bf16.mxu0 0
    %7714 = vmatpush2.bf16.msra.mxu0 0
    %7715 = vmatprep.subr.bf16.mxu0 0
    %7716 = vmatpush2.bf16.msra.mxu0 0
    %7717 = vmatprep.subr.bf16.mxu0 0
    %7718 = vmatpush2.bf16.msra.mxu0 0
    %7719 = vmatprep.subr.bf16.mxu0 0
    %7720 = vmatpush2.bf16.msra.mxu0 0
    %7721 = vmatprep.subr.bf16.mxu0 0
    %7722 = vmatpush2.bf16.msra.mxu0 0
    %7723 = vmatprep.subr.bf16.mxu0 0
    %7724 = vmatpush2.bf16.msra.mxu0 0
    %7725 = vmatprep.mubr.bf16.mxu0 0
    %7726 = vmatmul.mubr.bf16.gmra.mxu0 %v7629
    %v7727 = vpop.f32.mrf.mxu0
    %v7728 = vadd.f32 %v7595, %v7727
    %v7729 = vpop.f32.mrf.mxu0
    %v7730 = vpop.f32.mrf.mxu0
    %v7731 = vadd.f32 %v7595, %v7730
    %v7732 = vpop.f32.mrf.mxu0
    %7733 = vmatprep.mubr.bf16.mxu0 0
    %7734 = vmatmul.mubr.bf16.gmra.mxu0 %v7630
    %v7735 = vpop.f32.mrf.mxu0
    %v7736 = vadd.f32 %v7595, %v7735
    %v7737 = vpop.f32.mrf.mxu0
    %v7738 = vpop.f32.mrf.mxu0
    %v7739 = vadd.f32 %v7595, %v7738
    %v7740 = vpop.f32.mrf.mxu0
    %7741 = vmatprep.mubr.bf16.mxu0 0
    %7742 = vmatmul.mubr.bf16.gmra.mxu0 %v7631
    %v7743 = vpop.f32.mrf.mxu0
    %v7744 = vadd.f32 %v7595, %v7743
    %v7745 = vpop.f32.mrf.mxu0
    %v7746 = vpop.f32.mrf.mxu0
    %v7747 = vadd.f32 %v7595, %v7746
    %v7748 = vpop.f32.mrf.mxu0
    %7749 = vmatprep.mubr.bf16.mxu0 0
    %7750 = vmatmul.mubr.bf16.gmra.mxu0 %v7632
    %v7751 = vpop.f32.mrf.mxu0
    %v7752 = vadd.f32 %v7595, %v7751
    %v7753 = vpop.f32.mrf.mxu0
    %v7754 = vpop.f32.mrf.mxu0
    %v7755 = vadd.f32 %v7595, %v7754
    %v7756 = vpop.f32.mrf.mxu0
    %7757 = vmatprep.mubr.bf16.mxu0 0
    %7758 = vmatmul.mubr.bf16.gmra.mxu0 %v7633
    %v7759 = vpop.f32.mrf.mxu0
    %v7760 = vadd.f32 %v7595, %v7759
    %v7761 = vpop.f32.mrf.mxu0
    %v7762 = vpop.f32.mrf.mxu0
    %v7763 = vadd.f32 %v7595, %v7762
    %v7764 = vpop.f32.mrf.mxu0
    %7765 = vmatprep.mubr.bf16.mxu0 0
    %7766 = vmatmul.mubr.bf16.gmra.mxu0 %v7634
    %v7767 = vpop.f32.mrf.mxu0
    %v7768 = vadd.f32 %v7595, %v7767
    %v7769 = vpop.f32.mrf.mxu0
    %v7770 = vpop.f32.mrf.mxu0
    %v7771 = vadd.f32 %v7595, %v7770
    %v7772 = vpop.f32.mrf.mxu0
    %7773 = vmatprep.mubr.bf16.mxu0 0
    %7774 = vmatmul.mubr.bf16.gmra.mxu0 %v7635
    %v7775 = vpop.f32.mrf.mxu0
    %v7776 = vadd.f32 %v7595, %v7775
    %v7777 = vpop.f32.mrf.mxu0
    %v7778 = vpop.f32.mrf.mxu0
    %v7779 = vadd.f32 %v7595, %v7778
    %v7780 = vpop.f32.mrf.mxu0
    %7781 = vmatprep.mubr.bf16.mxu0 0
    %7782 = vmatmul.mubr.bf16.gmra.mxu0 %v7636
    %v7783 = vpop.f32.mrf.mxu0
    %v7784 = vadd.f32 %v7595, %v7783
    %v7785 = vpop.f32.mrf.mxu0
    %v7786 = vpop.f32.mrf.mxu0
    %v7787 = vadd.f32 %v7595, %v7786
    %v7788 = vpop.f32.mrf.mxu0
    %7789 = vdwg.mxu0
    %v7790 = vld [vmem:[%s0 + $0x10] sm:$0xff]
    %v7791 = vld [vmem:[%s0 + $0x28] sm:$0xff]
    %v7792 = vld [vmem:[%s0 + $0x40] sm:$0xff]
    %v7793 = vld [vmem:[%s0 + $0x58] sm:$0xff]
    %v7794 = vld [vmem:[%s0 + $0x70] sm:$0xff]
    %v7795 = vld [vmem:[%s0 + $0x88] sm:$0xff]
    %v7796 = vld [vmem:[%s0 + $0xa0] sm:$0xff]
    %v7797 = vld [vmem:[%s0 + $0xb8] sm:$0xff]
    %v7798 = vld [vmem:[%s0 + $0xd0] sm:$0xff]
    %v7799 = vld [vmem:[%s0 + $0xe8] sm:$0xff]
    %v7800 = vld [vmem:[%s0 + $0x100] sm:$0xff]
    %v7801 = vld [vmem:[%s0 + $0x118] sm:$0xff]
    %v7802 = vld [vmem:[%s0 + $0x130] sm:$0xff]
    %v7803 = vld [vmem:[%s0 + $0x148] sm:$0xff]
    %v7804 = vld [vmem:[%s0 + $0x160] sm:$0xff]
    %v7805 = vld [vmem:[%s0 + $0x178] sm:$0xff]
    %v7806 = vadd.f32 %v7728, %v7790
    %v7807 = vadd.f32 %v7731, %v7791
    %v7808 = vadd.f32 %v7736, %v7792
    %v7809 = vadd.f32 %v7739, %v7793
    %v7810 = vadd.f32 %v7744, %v7794
    %v7811 = vadd.f32 %v7747, %v7795
    %v7812 = vadd.f32 %v7752, %v7796
    %v7813 = vadd.f32 %v7755, %v7797
    %v7814 = vadd.f32 %v7760, %v7798
    %v7815 = vadd.f32 %v7763, %v7799
    %v7816 = vadd.f32 %v7768, %v7800
    %v7817 = vadd.f32 %v7771, %v7801
    %v7818 = vadd.f32 %v7776, %v7802
    %v7819 = vadd.f32 %v7779, %v7803
    %v7820 = vadd.f32 %v7784, %v7804
    %v7821 = vadd.f32 %v7787, %v7805
    %v7822 = vmax.f32 %v7806, 0.0
    %v7823 = vmax.f32 %v7807, 0.0
    %v7824 = vmax.f32 %v7808, 0.0
    %v7825 = vmax.f32 %v7809, 0.0
    %v7826 = vmax.f32 %v7810, 0.0
    %v7827 = vmax.f32 %v7811, 0.0
    %v7828 = vmax.f32 %v7812, 0.0
    %v7829 = vmax.f32 %v7813, 0.0
    %v7830 = vmax.f32 %v7814, 0.0
    %v7831 = vmax.f32 %v7815, 0.0
    %v7832 = vmax.f32 %v7816, 0.0
    %v7833 = vmax.f32 %v7817, 0.0
    %v7834 = vmax.f32 %v7818, 0.0
    %v7835 = vmax.f32 %v7819, 0.0
    %v7836 = vmax.f32 %v7820, 0.0
    %v7837 = vmax.f32 %v7821, 0.0
    %7838 = vst.msk [vmem:[#allocation4 + $0x10] sm:$0xff] %vm370, %v7822
    %7839 = vst.msk [vmem:[#allocation4 + $0x28] sm:$0xff] %vm370, %v7823
    %7840 = vst.msk [vmem:[#allocation4 + $0x40] sm:$0xff] %vm370, %v7824
    %7841 = vst.msk [vmem:[#allocation4 + $0x58] sm:$0xff] %vm370, %v7825
    %7842 = vst.msk [vmem:[#allocation4 + $0x70] sm:$0xff] %vm370, %v7826
    %7843 = vst.msk [vmem:[#allocation4 + $0x88] sm:$0xff] %vm370, %v7827
    %7844 = vst.msk [vmem:[#allocation4 + $0xa0] sm:$0xff] %vm370, %v7828
    %7845 = vst.msk [vmem:[#allocation4 + $0xb8] sm:$0xff] %vm370, %v7829
    %7846 = vst.msk [vmem:[#allocation4 + $0xd0] sm:$0xff] %vm370, %v7830
    %7847 = vst.msk [vmem:[#allocation4 + $0xe8] sm:$0xff] %vm370, %v7831
    %7848 = vst.msk [vmem:[#allocation4 + $0x100] sm:$0xff] %vm370, %v7832
    %7849 = vst.msk [vmem:[#allocation4 + $0x118] sm:$0xff] %vm370, %v7833
    %7850 = vst.msk [vmem:[#allocation4 + $0x130] sm:$0xff] %vm370, %v7834
    %7851 = vst.msk [vmem:[#allocation4 + $0x148] sm:$0xff] %vm370, %v7835
    %7852 = vst.msk [vmem:[#allocation4 + $0x160] sm:$0xff] %vm370, %v7836
    %7853 = vst.msk [vmem:[#allocation4 + $0x178] sm:$0xff] %vm370, %v7837
    // Predicated region
    $region54: #{block35_forward.1} parent=1 // pred_check
      _
    $region55: #{block35_forward.1} parent=1 // pred_check_branch
      %7855 = sbr.rel (0) target = $region57
    $region56: #{block35_forward.1} parent=1 // pred_region
      %s7857 = ssub.s32 6144, 6144
      %7858 = vsyncadd [#allocation5], %s7857
      %s7859 = sshll.u32 [#allocation4], 4
      %s7860 = int_to_ptr.vmem [resolvable:$true] %s7859
      %7865 = dma.vmem_to_hbm [thread:$0]  %s7860, 6144, %s13, [#allocation5], 384, 384, 24
    $region57: #{block35_forward.1} parent=1 // pred_fallthru
      _
    // Predicated region
    $region58: #{block35_forward.1} parent=1 // pred_check
      _
    $region59: #{block35_forward.1} parent=1 // pred_check_branch
      %7867 = sbr.rel (0) target = $region61
    $region60: #{block35_forward.1} parent=1 // pred_region
      %7868 = dma.done [#allocation5], 6144
    $region61: #{block35_forward.1} parent=1 // pred_fallthru
      _
    %7869 = vsyncpa [#allocation5], 1

</llo_original>
